<compile_context>
chip_gen: v6e
topology: v6e:2x2x1
jax: 0.10.0
libtpu: 0.0.40
codegen_flags: <defaults>
</compile_context>

<pallas_src>
import jax
import jax.numpy as jnp
from jax.experimental import pallas as pl
from jax.experimental.pallas import tpu as pltpu

EPS = 1e-5
NPASS = 6   # STN conv1/conv2 stats, STN conv3 stats+pool+fc head, pf conv1/conv2 stats, pf conv3 stats+pool


def _make_kernel(B, N, CH, x_resident):
    NC = N // CH
    INV_CNT = 1.0 / float(B * N)      # conv BatchNorm population size (batch * points)
    GROUPED = (CH % 8 == 0)           # use (8, C) VPU partial accumulators
    G = CH // 8 if GROUPED else 0

    def kernel(x_ref,
               sw1, sg1, sbt1, sw2, sg2, sbt2, sw3, sg3, sbt3,
               sfw1, sg4, sbt4, sfw2, sg5, sbt5, sfw3, sfb3,
               pw1, pg1, pbt1, pw2, pg2, pbt2, pw3, pg3, pbt3,
               feat_ref, trans_ref,
               s1_ref, s2_ref, s3_ref, p1_ref, p2_ref, p3_ref,
               zmax8_ref, zmin8_ref, zmax_ref, zmin_ref, m_ref):
        p = pl.program_id(0)
        b = pl.program_id(1)
        c = pl.program_id(2)
        first = (b == 0) & (c == 0)            # first step of the current pass
        last = (b == B - 1) & (c == NC - 1)    # last step of the current pass
        batch_first = c == 0                   # first chunk of the current batch
        batch_last = c == NC - 1               # last chunk of the current batch

        # ---- point chunk (CH, 3), channel-last, f32 ----
        if x_resident:
            row = b * N + c * CH
            if GROUPED:
                row = pl.multiple_of(row, 8)
            x = x_ref[pl.ds(row, CH), :]
        else:
            x = x_ref[0]

        # ------------------------- helpers -------------------------
        def accum(stat_ref, z):
            # per-channel sum / sumsq; (8, C) VPU partials, XLU reduce deferred
            @pl.when(first)
            def _():
                stat_ref[...] = jnp.zeros_like(stat_ref)
            cdim = z.shape[-1]
            if GROUPED:
                zg = z.reshape(G, 8, cdim)
                stat_ref[0:8, :] += jnp.sum(zg, axis=0)          # VPU vreg adds
                stat_ref[8:16, :] += jnp.sum(zg * zg, axis=0)
            else:
                stat_ref[0:1, :] += jnp.sum(z, axis=0, keepdims=True)
                stat_ref[8:9, :] += jnp.sum(z * z, axis=0, keepdims=True)

        def finalize(stat_ref, g_ref, bt_ref):
            # one 8->1 XLU reduce per pass, then fold BN into a single FMA
            total = jnp.sum(stat_ref[0:8, :], axis=0, keepdims=True)
            totsq = jnp.sum(stat_ref[8:16, :], axis=0, keepdims=True)
            mean = total * INV_CNT
            var = jnp.maximum(totsq * INV_CNT - mean * mean, 0.0)
            scale = g_ref[...] * jax.lax.rsqrt(var + EPS)
            shift = bt_ref[...] - mean * scale
            stat_ref[0:1, :] = scale
            stat_ref[1:2, :] = shift
            return scale, shift

        def apply_bn(z, stat_ref, relu=True):
            y = z * stat_ref[0:1, :] + stat_ref[1:2, :]
            return jnp.maximum(y, 0.0) if relu else y

        def dot_bf16(h, w_ref):
            # large matmuls: bf16 operands, f32 accumulation on the MXU
            return jnp.dot(h.astype(jnp.bfloat16), w_ref[...],
                           preferred_element_type=jnp.float32)

        def k3_fma(a, w):
            # (R,3) x (3,C) contraction on the VPU (K=3 would waste an MXU pass)
            return (a[:, 0:1] * w[0:1, :] + a[:, 1:2] * w[1:2, :]
                    + a[:, 2:3] * w[2:3, :])

        def track_minmax(z):
            # per-batch running max/min of pre-BN z3 via (8,1024) VPU partials
            @pl.when(batch_first)
            def _():
                zmax8_ref[...] = jnp.full_like(zmax8_ref, -jnp.inf)
                zmin8_ref[...] = jnp.full_like(zmin8_ref, jnp.inf)
            if GROUPED:
                zg = z.reshape(G, 8, 1024)
                zmax8_ref[...] = jnp.maximum(zmax8_ref[...], jnp.max(zg, axis=0))
                zmin8_ref[...] = jnp.minimum(zmin8_ref[...], jnp.min(zg, axis=0))
            else:
                zmax8_ref[0:1, :] = jnp.maximum(
                    zmax8_ref[0:1, :], jnp.max(z, axis=0, keepdims=True))
                zmin8_ref[0:1, :] = jnp.minimum(
                    zmin8_ref[0:1, :], jnp.min(z, axis=0, keepdims=True))
            @pl.when(batch_last)
            def _():
                # one 8->1 XLU reduce per batch (not per step)
                zmax_ref[pl.ds(b, 1), :] = jnp.max(zmax8_ref[...], axis=0, keepdims=True)
                zmin_ref[pl.ds(b, 1), :] = jnp.min(zmin8_ref[...], axis=0, keepdims=True)

        # ---------- recompute chains (cheap lower layers recomputed per pass) ----------
        def s_z1(): return k3_fma(x, sw1[...])               # (CH, 64)
        def s_h1(): return apply_bn(s_z1(), s1_ref)
        def s_z2(): return dot_bf16(s_h1(), sw2)             # (CH, 128)
        def s_h2(): return apply_bn(s_z2(), s2_ref)
        def s_z3(): return dot_bf16(s_h2(), sw3)             # (CH, 1024)

        def p_z1():
            # fused bmm(x, trans) + conv1: x @ (trans_b @ pw1); M_b rows in m_ref[b]
            m = m_ref[b]                                     # (3, 64)
            return (x[:, 0:1] * m[0:1, :] + x[:, 1:2] * m[1:2, :]
                    + x[:, 2:3] * m[2:3, :])                 # (CH, 64)

        def p_h1(): return apply_bn(p_z1(), p1_ref)
        def p_z2(): return dot_bf16(p_h1(), pw2)             # (CH, 128)
        def p_h2(): return apply_bn(p_z2(), p2_ref)
        def p_z3(): return dot_bf16(p_h2(), pw3)             # (CH, 1024)

        # ---------- passes 0..1: STN conv1/conv2 BatchNorm statistics ----------
        @pl.when(p == 0)
        def _():
            accum(s1_ref, s_z1())
            @pl.when(last)
            def _():
                finalize(s1_ref, sg1, sbt1)

        @pl.when(p == 1)
        def _():
            accum(s2_ref, s_z2())
            @pl.when(last)
            def _():
                finalize(s2_ref, sg2, sbt2)

        # ---------- pass 2: STN conv3 stats + pre-BN max/min pooling, then
        #            bn3 finalize, max-pool via affine, fc head, trans, M_b ----------
        @pl.when(p == 2)
        def _():
            z3 = s_z3()
            accum(s3_ref, z3)
            track_minmax(z3)

            @pl.when(last)
            def _():
                scale, shift = finalize(s3_ref, sg3, sbt3)
                # max over points of relu(scale*z+shift) == relu(scale*pick+shift)
                zpick = jnp.where(scale > 0.0, zmax_ref[...], zmin_ref[...])
                g = jnp.maximum(zpick * scale + shift, 0.0)        # (B, 1024)

                def fc_bn_relu(h, w_ref, gam_ref, bet_ref):
                    # fc BatchNorm normalizes over the batch only (B rows);
                    # tiny, so use the centered two-pass form directly.
                    z = dot_bf16(h, w_ref)
                    mean = jnp.mean(z, axis=0, keepdims=True)
                    var = jnp.mean((z - mean) ** 2, axis=0, keepdims=True)
                    y = gam_ref[...] * (z - mean) * jax.lax.rsqrt(var + EPS) + bet_ref[...]
                    return jnp.maximum(y, 0.0)

                f = fc_bn_relu(g, sfw1, sg4, sbt4)                 # (B, 512)
                f = fc_bn_relu(f, sfw2, sg5, sbt5)                 # (B, 256)
                t9 = (jnp.dot(f, sfw3[...], preferred_element_type=jnp.float32)
                      + sfb3[...])                                 # identity folded into sfb3
                trans_ref[...] = t9                                # (B, 9)
                # fused first pointfeat conv: M_b = trans_b (3,3) @ pw1 (3,64)
                w1 = pw1[...]
                for i in range(3):
                    m_ref[:, i:i + 1, :] = k3_fma(
                        t9[:, 3 * i:3 * i + 3], w1).reshape(B, 1, 64)

        # ---------- passes 3..4: pointfeat conv1/conv2 BatchNorm statistics ----------
        @pl.when(p == 3)
        def _():
            accum(p1_ref, p_z1())
            @pl.when(last)
            def _():
                finalize(p1_ref, pg1, pbt1)

        @pl.when(p == 4)
        def _():
            accum(p2_ref, p_z2())
            @pl.when(last)
            def _():
                finalize(p2_ref, pg2, pbt2)

        # ---------- pass 5: pointfeat conv3 stats + max/min pooling -> feat ----------
        @pl.when(p == 5)
        def _():
            z3 = p_z3()
            accum(p3_ref, z3)
            track_minmax(z3)

            @pl.when(last)
            def _():
                scale, shift = finalize(p3_ref, pg3, pbt3)
                zpick = jnp.where(scale > 0.0, zmax_ref[...], zmin_ref[...])
                feat_ref[...] = zpick * scale + shift              # bn3(max), no relu

    return kernel


def init_params(key):
    """Deterministic synthetic parameters (shapes follow the module __init__).

    Conv/Linear biases that feed a training-mode BatchNorm are omitted: they
    cancel exactly when the batch mean is subtracted.  Only STN fc3 keeps one.
    """
    keys = iter(jax.random.split(key, 64))
    params = []

    def bn_layer(cin, cout):
        w = 0.1 * jax.random.normal(next(keys), (cin, cout), jnp.float32)
        g = 1.0 + 0.1 * jax.random.normal(next(keys), (1, cout), jnp.float32)
        bt = 0.05 * jax.random.normal(next(keys), (1, cout), jnp.float32)
        params.extend([w, g, bt])

    # STN3d: conv1..3 + fc1..2 (all followed by BN)
    for ci, co in [(3, 64), (64, 128), (128, 1024), (1024, 512), (512, 256)]:
        bn_layer(ci, co)
    # STN3d fc3 (no BN -> bias kept)
    w = 0.1 * jax.random.normal(next(keys), (256, 9), jnp.float32)
    bfc3 = 0.05 * jax.random.normal(next(keys), (1, 9), jnp.float32)
    params.extend([w, bfc3])
    # PointNetfeat: conv1..3 (all followed by BN)
    for ci, co in [(3, 64), (64, 128), (128, 1024)]:
        bn_layer(ci, co)
    return tuple(params)   # 26 arrays


def _default_chunk(N):
    # largest 8-aligned divisor of N <= 1024 (CH is the matmul M dimension)
    best = None
    for ch in range(8, min(N, 1024) + 1, 8):
        if N % ch == 0:
            best = ch
    return best if best is not None else N


def _scratch_dims(B):
    return [(16, 64), (16, 128), (16, 1024),      # STN conv1..3 stats -> scale/shift
            (16, 64), (16, 128), (16, 1024),      # pointfeat conv1..3
            (8, 1024), (8, 1024),                 # per-batch running max/min VPU partials
            (B, 1024), (B, 1024),                 # per-batch pre-BN max / min of conv3
            (B, 3, 64)]                           # fused trans_b @ pw1 matrices


def _pad_bytes(shape, itemsize):
    shape = tuple(int(d) for d in shape)
    if len(shape) == 1:
        shape = (1,) + shape
    lead = 1
    for d in shape[:-2]:
        lead *= d
    sub = 8 if itemsize >= 4 else 16
    rup = lambda v, m: (v + m - 1) // m * m
    return lead * rup(shape[-2], sub) * rup(shape[-1], 128) * itemsize


def _vmem_limit(weights, B, N, ch, x_resident):
    total = sum(_pad_bytes(w.shape, w.dtype.itemsize) for w in weights)
    total += sum(_pad_bytes(s, 4) for s in _scratch_dims(B))
    total += _pad_bytes((B, 1024), 4) + _pad_bytes((B, 9), 4)          # outputs
    total += (_pad_bytes((B * N, 3), 4) if x_resident
              else 2 * _pad_bytes((ch, 3), 4))                          # x (dbl-buffered)
    chp = (ch + 7) // 8 * 8
    total += chp * (128 + 128 + 1024 + 1024) * 4                        # live recompute temps
    limit = int(1.5 * total) + (8 << 20)
    return max(16 << 20, min(40 << 20, limit))                          # headroom on v7x 64 MiB


def pointnetfeat_forward(x_bcn, params, *, ch=None):
    """x_bcn: (B, 3, N) float32, PyTorch NCW layout. Returns (feat, trans, trans_feat)."""
    (sw1, sg1, sbt1, sw2, sg2, sbt2, sw3, sg3, sbt3,
     sfw1, sg4, sbt4, sfw2, sg5, sbt5, sfw3, sfb3,
     pw1, pg1, pbt1, pw2, pg2, pbt2, pw3, pg3, pbt3) = params
    B, C, N = x_bcn.shape
    assert C == 3
    if ch is None:
        ch = _default_chunk(N)
    assert N % ch == 0, "chunk must divide N"
    nc = N // ch

    x_bn3 = jnp.transpose(x_bcn, (0, 2, 1))                 # (B, N, 3), channel-last
    # x fully VMEM-resident when its lane-padded footprint is small
    x_resident = _pad_bytes((B * N, 3), 4) <= 4 * 1024 * 1024
    if not x_resident:
        assert ch % 8 == 0 or ch == N, "chunked x path needs 8-aligned chunks"
    x_in = x_bn3.reshape(B * N, 3) if x_resident else x_bn3

    # fold the 3x3 identity into the fc3 bias on the host (one fewer add in-kernel)
    sfb3_eff = sfb3 + jnp.eye(3, dtype=jnp.float32).reshape(1, 9)
    # pre-cast the large matmul weights to bf16 (2x MXU throughput, half the VMEM)
    bf = lambda w: w.astype(jnp.bfloat16)

    weights = (sw1, sg1, sbt1, bf(sw2), sg2, sbt2, bf(sw3), sg3, sbt3,
               bf(sfw1), sg4, sbt4, bf(sfw2), sg5, sbt5, sfw3, sfb3_eff,
               pw1, pg1, pbt1, bf(pw2), pg2, pbt2, bf(pw3), pg3, pbt3)
    vmem_full = pl.BlockSpec(memory_space=pltpu.MemorySpace.VMEM)   # whole array resident
    x_spec = (vmem_full if x_resident
              else pl.BlockSpec((1, ch, 3), lambda p, b, c: (b, c, 0)))

    feat, trans9 = pl.pallas_call(
        _make_kernel(B, N, ch, x_resident),
        out_shape=(jax.ShapeDtypeStruct((B, 1024), jnp.float32),
                   jax.ShapeDtypeStruct((B, 9), jnp.float32)),
        grid_spec=pltpu.PrefetchScalarGridSpec(
            num_scalar_prefetch=0,
            grid=(NPASS, B, nc),
            in_specs=[x_spec] + [vmem_full] * len(weights),
            out_specs=(pl.BlockSpec((B, 1024), lambda p, b, c: (0, 0)),
                       pl.BlockSpec((B, 9), lambda p, b, c: (0, 0))),
            scratch_shapes=[pltpu.VMEM(s, jnp.float32) for s in _scratch_dims(B)]),
        compiler_params=pltpu.CompilerParams(
            # every grid axis carries BN-stat / pooling state across steps
            dimension_semantics=("arbitrary", "arbitrary", "arbitrary"),
            vmem_limit_bytes=_vmem_limit(weights, B, N, ch, x_resident)),
    )(x_in, *weights)

    trans = trans9.reshape(B, 3, 3)
    # feature_transform=False in the reference module -> trans_feat is None
    return feat, trans, None


# ---------------- pure-JAX reference (correctness check only) ----------------
# Same precision policy as the kernel (bf16 operands / f32 accumulation on the
# large matmuls); BN-cancelled biases omitted (exact algebraic identity).
def reference_forward(x_bcn, params):
    (sw1, sg1, sbt1, sw2, sg2, sbt2, sw3, sg3, sbt3,
     sfw1, sg4, sbt4, sfw2, sg5, sbt5, sfw3, sfb3,
     pw1, pg1, pbt1, pw2, pg2, pbt2, pw3, pg3, pbt3) = params
    B, _, N = x_bcn.shape

    def bn(z, g, bt, relu=True):
        mean = jnp.mean(z, axis=0, keepdims=True)
        var = jnp.mean((z - mean) ** 2, axis=0, keepdims=True)   # biased variance
        y = g * (z - mean) * jax.lax.rsqrt(var + EPS) + bt
        return jnp.maximum(y, 0.0) if relu else y

    def mm(h, w):
        return jnp.dot(h.astype(jnp.bfloat16), w.astype(jnp.bfloat16),
                       preferred_element_type=jnp.float32)

    xt = jnp.transpose(x_bcn, (0, 2, 1))                     # (B, N, 3)
    x2 = xt.reshape(B * N, 3)
    h = bn(jnp.dot(x2, sw1), sg1, sbt1)
    h = bn(mm(h, sw2), sg2, sbt2)
    h = bn(mm(h, sw3), sg3, sbt3)
    g = jnp.max(h.reshape(B, N, 1024), axis=1)
    f = bn(mm(g, sfw1), sg4, sbt4)
    f = bn(mm(f, sfw2), sg5, sbt5)
    t9 = jnp.dot(f, sfw3) + sfb3 + jnp.eye(3, dtype=jnp.float32).reshape(1, 9)
    trans = t9.reshape(B, 3, 3)
    y = jnp.einsum('bnc,bck->bnk', xt, trans).reshape(B * N, 3)
    h = bn(jnp.dot(y, pw1), pg1, pbt1)
    h = bn(mm(h, pw2), pg2, pbt2)
    h = bn(mm(h, pw3), pg3, pbt3, relu=False)
    feat = jnp.max(h.reshape(B, N, 1024), axis=1)
    return feat, trans, None


if __name__ == "__main__":
    key = jax.random.PRNGKey(0)
    kx, kp = jax.random.split(key)
    B, N = 2, 16
    # PyTorch input layout: (batch, 3 coords, n_points)
    x = jax.random.normal(kx, (B, 3, N), dtype=jnp.float32)
    params = init_params(kp)

    # ch=8 -> 2 point-chunks per batch, exercising the chunked streaming-BN path
    feat, trans, trans_feat = pointnetfeat_forward(x, params, ch=8)
    jax.block_until_ready((feat, trans))

    feat_r, trans_r, _ = reference_forward(x, params)
    assert feat.shape == (B, 1024) and trans.shape == (B, 3, 3) and trans_feat is None
    assert bool(jnp.allclose(trans, trans_r, atol=2e-2, rtol=2e-2)), "trans mismatch"
    assert bool(jnp.allclose(feat, feat_r, atol=2e-2, rtol=2e-2)), "feat mismatch"
    print("KERNEL_OK")
</pallas_src>

<mosaic_0001>
module attributes {stable_mosaic.version = 11 : i64} {
  func.func @kernel(%arg0: i32, %arg1: i32, %arg2: i32, %arg3: memref<32x3xf32, #tpu.memory_space<vmem>>, %arg4: memref<3x64xf32, #tpu.memory_space<vmem>>, %arg5: memref<1x64xf32, #tpu.memory_space<vmem>>, %arg6: memref<1x64xf32, #tpu.memory_space<vmem>>, %arg7: memref<64x128xbf16, #tpu.memory_space<vmem>>, %arg8: memref<1x128xf32, #tpu.memory_space<vmem>>, %arg9: memref<1x128xf32, #tpu.memory_space<vmem>>, %arg10: memref<128x1024xbf16, #tpu.memory_space<vmem>>, %arg11: memref<1x1024xf32, #tpu.memory_space<vmem>>, %arg12: memref<1x1024xf32, #tpu.memory_space<vmem>>, %arg13: memref<1024x512xbf16, #tpu.memory_space<vmem>>, %arg14: memref<1x512xf32, #tpu.memory_space<vmem>>, %arg15: memref<1x512xf32, #tpu.memory_space<vmem>>, %arg16: memref<512x256xbf16, #tpu.memory_space<vmem>>, %arg17: memref<1x256xf32, #tpu.memory_space<vmem>>, %arg18: memref<1x256xf32, #tpu.memory_space<vmem>>, %arg19: memref<256x9xf32, #tpu.memory_space<vmem>>, %arg20: memref<1x9xf32, #tpu.memory_space<vmem>>, %arg21: memref<3x64xf32, #tpu.memory_space<vmem>>, %arg22: memref<1x64xf32, #tpu.memory_space<vmem>>, %arg23: memref<1x64xf32, #tpu.memory_space<vmem>>, %arg24: memref<64x128xbf16, #tpu.memory_space<vmem>>, %arg25: memref<1x128xf32, #tpu.memory_space<vmem>>, %arg26: memref<1x128xf32, #tpu.memory_space<vmem>>, %arg27: memref<128x1024xbf16, #tpu.memory_space<vmem>>, %arg28: memref<1x1024xf32, #tpu.memory_space<vmem>>, %arg29: memref<1x1024xf32, #tpu.memory_space<vmem>>, %arg30: memref<2x1024xf32, #tpu.memory_space<vmem>>, %arg31: memref<2x9xf32, #tpu.memory_space<vmem>>, %arg32: memref<16x64xf32, #tpu.memory_space<vmem>>, %arg33: memref<16x128xf32, #tpu.memory_space<vmem>>, %arg34: memref<16x1024xf32, #tpu.memory_space<vmem>>, %arg35: memref<16x64xf32, #tpu.memory_space<vmem>>, %arg36: memref<16x128xf32, #tpu.memory_space<vmem>>, %arg37: memref<16x1024xf32, #tpu.memory_space<vmem>>, %arg38: memref<8x1024xf32, #tpu.memory_space<vmem>>, %arg39: memref<8x1024xf32, #tpu.memory_space<vmem>>, %arg40: memref<2x1024xf32, #tpu.memory_space<vmem>>, %arg41: memref<2x1024xf32, #tpu.memory_space<vmem>>, %arg42: memref<2x3x64xf32, #tpu.memory_space<vmem>>) attributes {dimension_semantics = [#tpu.dimension_semantics<arbitrary>, #tpu.dimension_semantics<arbitrary>, #tpu.dimension_semantics<arbitrary>], iteration_bounds = array<i64: 6, 2, 2>, scalar_prefetch = 0 : i64, scratch_operands = 11 : i64, tpu.core_type = #tpu.core_type<tc>, window_params = [{pipeline_mode = #tpu.pipeline_mode<synchronous>, transform_indices = @transform_0, window_bounds = array<i64: 32, 3>}, {pipeline_mode = #tpu.pipeline_mode<synchronous>, transform_indices = @transform_1, window_bounds = array<i64: 3, 64>}, {pipeline_mode = #tpu.pipeline_mode<synchronous>, transform_indices = @transform_2, window_bounds = array<i64: 1, 64>}, {pipeline_mode = #tpu.pipeline_mode<synchronous>, transform_indices = @transform_3, window_bounds = array<i64: 1, 64>}, {pipeline_mode = #tpu.pipeline_mode<synchronous>, transform_indices = @transform_4, window_bounds = array<i64: 64, 128>}, {pipeline_mode = #tpu.pipeline_mode<synchronous>, transform_indices = @transform_5, window_bounds = array<i64: 1, 128>}, {pipeline_mode = #tpu.pipeline_mode<synchronous>, transform_indices = @transform_6, window_bounds = array<i64: 1, 128>}, {pipeline_mode = #tpu.pipeline_mode<synchronous>, transform_indices = @transform_7, window_bounds = array<i64: 128, 1024>}, {pipeline_mode = #tpu.pipeline_mode<synchronous>, transform_indices = @transform_8, window_bounds = array<i64: 1, 1024>}, {pipeline_mode = #tpu.pipeline_mode<synchronous>, transform_indices = @transform_9, window_bounds = array<i64: 1, 1024>}, {pipeline_mode = #tpu.pipeline_mode<synchronous>, transform_indices = @transform_10, window_bounds = array<i64: 1024, 512>}, {pipeline_mode = #tpu.pipeline_mode<synchronous>, transform_indices = @transform_11, window_bounds = array<i64: 1, 512>}, {pipeline_mode = #tpu.pipeline_mode<synchronous>, transform_indices = @transform_12, window_bounds = array<i64: 1, 512>}, {pipeline_mode = #tpu.pipeline_mode<synchronous>, transform_indices = @transform_13, window_bounds = array<i64: 512, 256>}, {pipeline_mode = #tpu.pipeline_mode<synchronous>, transform_indices = @transform_14, window_bounds = array<i64: 1, 256>}, {pipeline_mode = #tpu.pipeline_mode<synchronous>, transform_indices = @transform_15, window_bounds = array<i64: 1, 256>}, {pipeline_mode = #tpu.pipeline_mode<synchronous>, transform_indices = @transform_16, window_bounds = array<i64: 256, 9>}, {pipeline_mode = #tpu.pipeline_mode<synchronous>, transform_indices = @transform_17, window_bounds = array<i64: 1, 9>}, {pipeline_mode = #tpu.pipeline_mode<synchronous>, transform_indices = @transform_18, window_bounds = array<i64: 3, 64>}, {pipeline_mode = #tpu.pipeline_mode<synchronous>, transform_indices = @transform_19, window_bounds = array<i64: 1, 64>}, {pipeline_mode = #tpu.pipeline_mode<synchronous>, transform_indices = @transform_20, window_bounds = array<i64: 1, 64>}, {pipeline_mode = #tpu.pipeline_mode<synchronous>, transform_indices = @transform_21, window_bounds = array<i64: 64, 128>}, {pipeline_mode = #tpu.pipeline_mode<synchronous>, transform_indices = @transform_22, window_bounds = array<i64: 1, 128>}, {pipeline_mode = #tpu.pipeline_mode<synchronous>, transform_indices = @transform_23, window_bounds = array<i64: 1, 128>}, {pipeline_mode = #tpu.pipeline_mode<synchronous>, transform_indices = @transform_24, window_bounds = array<i64: 128, 1024>}, {pipeline_mode = #tpu.pipeline_mode<synchronous>, transform_indices = @transform_25, window_bounds = array<i64: 1, 1024>}, {pipeline_mode = #tpu.pipeline_mode<synchronous>, transform_indices = @transform_26, window_bounds = array<i64: 1, 1024>}, {pipeline_mode = #tpu.pipeline_mode<synchronous>, transform_indices = @transform_27, window_bounds = array<i64: 2, 1024>}, {pipeline_mode = #tpu.pipeline_mode<synchronous>, transform_indices = @transform_28, window_bounds = array<i64: 2, 9>}]} {
    %c0_i32 = arith.constant 0 : i32
    %0 = arith.cmpi eq, %arg1, %c0_i32 : i32
    %c0_i32_0 = arith.constant 0 : i32
    %1 = arith.cmpi eq, %arg2, %c0_i32_0 : i32
    %2 = arith.andi %0, %1 : i1
    %c1_i32 = arith.constant 1 : i32
    %3 = arith.cmpi eq, %arg1, %c1_i32 : i32
    %c1_i32_1 = arith.constant 1 : i32
    %4 = arith.cmpi eq, %arg2, %c1_i32_1 : i32
    %5 = arith.andi %3, %4 : i1
    %c0_i32_2 = arith.constant 0 : i32
    %6 = arith.cmpi eq, %arg2, %c0_i32_2 : i32
    %c1_i32_3 = arith.constant 1 : i32
    %7 = arith.cmpi eq, %arg2, %c1_i32_3 : i32
    %c16_i32 = arith.constant 16 : i32
    %8 = arith.muli %arg1, %c16_i32 : i32
    %c8_i32 = arith.constant 8 : i32
    %9 = arith.muli %arg2, %c8_i32 : i32
    %10 = arith.addi %8, %9 : i32
    %11 = tpu.assume_multiple %10, 8 : i32
    %12 = arith.index_cast %11 : i32 to index
    %c0 = arith.constant 0 : index
    %13 = vector.load %arg3[%12, %c0] : memref<32x3xf32, #tpu.memory_space<vmem>>, vector<8x3xf32>
    %c0_i32_4 = arith.constant 0 : i32
    %14 = arith.cmpi eq, %arg0, %c0_i32_4 : i32
    %15 = arith.extui %14 : i1 to i32
    %c0_i32_5 = arith.constant 0 : i32
    %16 = arith.cmpi ne, %15, %c0_i32_5 : i32
    scf.if %16 {
      %c0_12 = arith.constant 0 : index
      %c0_13 = arith.constant 0 : index
      %32 = vector.load %arg4[%c0_12, %c0_13] : memref<3x64xf32, #tpu.memory_space<vmem>>, vector<3x64xf32>
      %33 = vector.extract_strided_slice %13 {offsets = [0, 0], sizes = [8, 1], strides = [1, 1]} : vector<8x3xf32> to vector<8x1xf32>
      %34 = vector.extract_strided_slice %32 {offsets = [0, 0], sizes = [1, 64], strides = [1, 1]} : vector<3x64xf32> to vector<1x64xf32>
      %35 = vector.broadcast %33 : vector<8x1xf32> to vector<8x64xf32>
      %36 = vector.broadcast %34 : vector<1x64xf32> to vector<8x64xf32>
      %37 = arith.mulf %35, %36 : vector<8x64xf32>
      %38 = vector.extract_strided_slice %13 {offsets = [0, 1], sizes = [8, 1], strides = [1, 1]} : vector<8x3xf32> to vector<8x1xf32>
      %39 = vector.extract_strided_slice %32 {offsets = [1, 0], sizes = [1, 64], strides = [1, 1]} : vector<3x64xf32> to vector<1x64xf32>
      %40 = vector.broadcast %38 : vector<8x1xf32> to vector<8x64xf32>
      %41 = vector.broadcast %39 : vector<1x64xf32> to vector<8x64xf32>
      %42 = arith.mulf %40, %41 : vector<8x64xf32>
      %43 = arith.addf %37, %42 : vector<8x64xf32>
      %44 = vector.extract_strided_slice %13 {offsets = [0, 2], sizes = [8, 1], strides = [1, 1]} : vector<8x3xf32> to vector<8x1xf32>
      %45 = vector.extract_strided_slice %32 {offsets = [2, 0], sizes = [1, 64], strides = [1, 1]} : vector<3x64xf32> to vector<1x64xf32>
      %46 = vector.broadcast %44 : vector<8x1xf32> to vector<8x64xf32>
      %47 = vector.broadcast %45 : vector<1x64xf32> to vector<8x64xf32>
      %48 = arith.mulf %46, %47 : vector<8x64xf32>
      %49 = arith.addf %43, %48 : vector<8x64xf32>
      %50 = arith.extui %2 : i1 to i32
      %c0_i32_14 = arith.constant 0 : i32
      %51 = arith.cmpi ne, %50, %c0_i32_14 : i32
      scf.if %51 {
        %cst_24 = arith.constant 0.000000e+00 : f32
        %64 = vector.broadcast %cst_24 : f32 to vector<16x64xf32>
        %c0_25 = arith.constant 0 : index
        %c0_26 = arith.constant 0 : index
        %65 = vector.load %arg32[%c0_25, %c0_26] : memref<16x64xf32, #tpu.memory_space<vmem>>, vector<16x64xf32>
        tpu.vector_store %arg32[%c0_25, %c0_26], %64 {strides = array<i32>} : memref<16x64xf32, #tpu.memory_space<vmem>>, vector<16x64xf32>,
      } else {
      }
      %52 = vector.shape_cast %49 : vector<8x64xf32> to vector<1x8x64xf32>
      %c0_15 = arith.constant 0 : index
      %c0_16 = arith.constant 0 : index
      %53 = vector.load %arg32[%c0_15, %c0_16] : memref<16x64xf32, #tpu.memory_space<vmem>>, vector<8x64xf32>
      %cst = arith.constant dense<0.000000e+00> : vector<8x64xf32>
      %54 = vector.multi_reduction <add>, %52, %cst [0] : vector<1x8x64xf32> to vector<8x64xf32>
      %55 = arith.addf %53, %54 : vector<8x64xf32>
      %c0_17 = arith.constant 0 : index
      %c0_18 = arith.constant 0 : index
      %56 = vector.load %arg32[%c0_17, %c0_18] : memref<16x64xf32, #tpu.memory_space<vmem>>, vector<8x64xf32>
      tpu.vector_store %arg32[%c0_17, %c0_18], %55 {strides = array<i32>} : memref<16x64xf32, #tpu.memory_space<vmem>>, vector<8x64xf32>,
      %c8 = arith.constant 8 : index
      %c0_19 = arith.constant 0 : index
      %57 = vector.load %arg32[%c8, %c0_19] : memref<16x64xf32, #tpu.memory_space<vmem>>, vector<8x64xf32>
      %58 = arith.mulf %52, %52 : vector<1x8x64xf32>
      %cst_20 = arith.constant dense<0.000000e+00> : vector<8x64xf32>
      %59 = vector.multi_reduction <add>, %58, %cst_20 [0] : vector<1x8x64xf32> to vector<8x64xf32>
      %60 = arith.addf %57, %59 : vector<8x64xf32>
      %c8_21 = arith.constant 8 : index
      %c0_22 = arith.constant 0 : index
      %61 = vector.load %arg32[%c8_21, %c0_22] : memref<16x64xf32, #tpu.memory_space<vmem>>, vector<8x64xf32>
      tpu.vector_store %arg32[%c8_21, %c0_22], %60 {strides = array<i32>} : memref<16x64xf32, #tpu.memory_space<vmem>>, vector<8x64xf32>,
      %62 = arith.extui %5 : i1 to i32
      %c0_i32_23 = arith.constant 0 : i32
      %63 = arith.cmpi ne, %62, %c0_i32_23 : i32
      scf.if %63 {
        %c0_24 = arith.constant 0 : index
        %c0_25 = arith.constant 0 : index
        %64 = vector.load %arg32[%c0_24, %c0_25] : memref<16x64xf32, #tpu.memory_space<vmem>>, vector<8x64xf32>
        %cst_26 = arith.constant dense<0.000000e+00> : vector<64xf32>
        %65 = vector.multi_reduction <add>, %64, %cst_26 [0] : vector<8x64xf32> to vector<64xf32>
        %66 = vector.shape_cast %65 : vector<64xf32> to vector<1x64xf32>
        %c8_27 = arith.constant 8 : index
        %c0_28 = arith.constant 0 : index
        %67 = vector.load %arg32[%c8_27, %c0_28] : memref<16x64xf32, #tpu.memory_space<vmem>>, vector<8x64xf32>
        %cst_29 = arith.constant dense<0.000000e+00> : vector<64xf32>
        %68 = vector.multi_reduction <add>, %67, %cst_29 [0] : vector<8x64xf32> to vector<64xf32>
        %69 = vector.shape_cast %68 : vector<64xf32> to vector<1x64xf32>
        %cst_30 = arith.constant 3.125000e-02 : f32
        %70 = vector.broadcast %cst_30 : f32 to vector<1x64xf32>
        %71 = arith.mulf %66, %70 : vector<1x64xf32>
        %cst_31 = arith.constant 3.125000e-02 : f32
        %72 = vector.broadcast %cst_31 : f32 to vector<1x64xf32>
        %73 = arith.mulf %69, %72 : vector<1x64xf32>
        %74 = arith.mulf %71, %71 : vector<1x64xf32>
        %75 = arith.subf %73, %74 : vector<1x64xf32>
        %cst_32 = arith.constant 0.000000e+00 : f32
        %76 = vector.broadcast %cst_32 : f32 to vector<1x64xf32>
        %77 = arith.maximumf %75, %76 : vector<1x64xf32>
        %c0_33 = arith.constant 0 : index
        %c0_34 = arith.constant 0 : index
        %78 = vector.load %arg5[%c0_33, %c0_34] : memref<1x64xf32, #tpu.memory_space<vmem>>, vector<1x64xf32>
        %cst_35 = arith.constant 9.99999974E-6 : f32
        %79 = vector.broadcast %cst_35 : f32 to vector<1x64xf32>
        %80 = arith.addf %77, %79 : vector<1x64xf32>
        %81 = math.rsqrt %80 : vector<1x64xf32>
        %82 = arith.mulf %78, %81 : vector<1x64xf32>
        %c0_36 = arith.constant 0 : index
        %c0_37 = arith.constant 0 : index
        %83 = vector.load %arg6[%c0_36, %c0_37] : memref<1x64xf32, #tpu.memory_space<vmem>>, vector<1x64xf32>
        %84 = arith.mulf %71, %82 : vector<1x64xf32>
        %85 = arith.subf %83, %84 : vector<1x64xf32>
        %c0_38 = arith.constant 0 : index
        %c0_39 = arith.constant 0 : index
        %86 = vector.load %arg32[%c0_38, %c0_39] : memref<16x64xf32, #tpu.memory_space<vmem>>, vector<1x64xf32>
        tpu.vector_store %arg32[%c0_38, %c0_39], %82 {strides = array<i32>} : memref<16x64xf32, #tpu.memory_space<vmem>>, vector<1x64xf32>,
        %c1 = arith.constant 1 : index
        %c0_40 = arith.constant 0 : index
        %87 = vector.load %arg32[%c1, %c0_40] : memref<16x64xf32, #tpu.memory_space<vmem>>, vector<1x64xf32>
        tpu.vector_store %arg32[%c1, %c0_40], %85 {strides = array<i32>} : memref<16x64xf32, #tpu.memory_space<vmem>>, vector<1x64xf32>,
      } else {
      }
    } else {
    }
    %c1_i32_6 = arith.constant 1 : i32
    %17 = arith.cmpi eq, %arg0, %c1_i32_6 : i32
    %18 = arith.extui %17 : i1 to i32
    %c0_i32_7 = arith.constant 0 : i32
    %19 = arith.cmpi ne, %18, %c0_i32_7 : i32
    scf.if %19 {
      %c0_12 = arith.constant 0 : index
      %c0_13 = arith.constant 0 : index
      %32 = vector.load %arg4[%c0_12, %c0_13] : memref<3x64xf32, #tpu.memory_space<vmem>>, vector<3x64xf32>
      %33 = vector.extract_strided_slice %13 {offsets = [0, 0], sizes = [8, 1], strides = [1, 1]} : vector<8x3xf32> to vector<8x1xf32>
      %34 = vector.extract_strided_slice %32 {offsets = [0, 0], sizes = [1, 64], strides = [1, 1]} : vector<3x64xf32> to vector<1x64xf32>
      %35 = vector.broadcast %33 : vector<8x1xf32> to vector<8x64xf32>
      %36 = vector.broadcast %34 : vector<1x64xf32> to vector<8x64xf32>
      %37 = arith.mulf %35, %36 : vector<8x64xf32>
      %38 = vector.extract_strided_slice %13 {offsets = [0, 1], sizes = [8, 1], strides = [1, 1]} : vector<8x3xf32> to vector<8x1xf32>
      %39 = vector.extract_strided_slice %32 {offsets = [1, 0], sizes = [1, 64], strides = [1, 1]} : vector<3x64xf32> to vector<1x64xf32>
      %40 = vector.broadcast %38 : vector<8x1xf32> to vector<8x64xf32>
      %41 = vector.broadcast %39 : vector<1x64xf32> to vector<8x64xf32>
      %42 = arith.mulf %40, %41 : vector<8x64xf32>
      %43 = arith.addf %37, %42 : vector<8x64xf32>
      %44 = vector.extract_strided_slice %13 {offsets = [0, 2], sizes = [8, 1], strides = [1, 1]} : vector<8x3xf32> to vector<8x1xf32>
      %45 = vector.extract_strided_slice %32 {offsets = [2, 0], sizes = [1, 64], strides = [1, 1]} : vector<3x64xf32> to vector<1x64xf32>
      %46 = vector.broadcast %44 : vector<8x1xf32> to vector<8x64xf32>
      %47 = vector.broadcast %45 : vector<1x64xf32> to vector<8x64xf32>
      %48 = arith.mulf %46, %47 : vector<8x64xf32>
      %49 = arith.addf %43, %48 : vector<8x64xf32>
      %c0_14 = arith.constant 0 : index
      %c0_15 = arith.constant 0 : index
      %50 = vector.load %arg32[%c0_14, %c0_15] : memref<16x64xf32, #tpu.memory_space<vmem>>, vector<1x64xf32>
      %51 = vector.broadcast %50 : vector<1x64xf32> to vector<8x64xf32>
      %52 = arith.mulf %49, %51 : vector<8x64xf32>
      %c1 = arith.constant 1 : index
      %c0_16 = arith.constant 0 : index
      %53 = vector.load %arg32[%c1, %c0_16] : memref<16x64xf32, #tpu.memory_space<vmem>>, vector<1x64xf32>
      %54 = vector.broadcast %53 : vector<1x64xf32> to vector<8x64xf32>
      %55 = arith.addf %52, %54 : vector<8x64xf32>
      %cst = arith.constant 0.000000e+00 : f32
      %56 = vector.broadcast %cst : f32 to vector<8x64xf32>
      %57 = arith.maximumf %55, %56 : vector<8x64xf32>
      %58 = arith.truncf %57 : vector<8x64xf32> to vector<8x64xbf16>
      %c0_17 = arith.constant 0 : index
      %c0_18 = arith.constant 0 : index
      %59 = vector.load %arg7[%c0_17, %c0_18] : memref<64x128xbf16, #tpu.memory_space<vmem>>, vector<64x128xbf16>
      %cst_19 = arith.constant dense<0.000000e+00> : vector<8x128xf32>
      %60 = tpu.matmul %58, %59, %cst_19 {dimension_numbers = #tpu.dot_dimension_numbers<[1], [0], [0], [1], [0, 0, 1, 1], [], []>} : vector<8x64xbf16>, vector<64x128xbf16>, vector<8x128xf32> -> vector<8x128xf32>
      %61 = arith.extui %2 : i1 to i32
      %c0_i32_20 = arith.constant 0 : i32
      %62 = arith.cmpi ne, %61, %c0_i32_20 : i32
      scf.if %62 {
        %cst_31 = arith.constant 0.000000e+00 : f32
        %75 = vector.broadcast %cst_31 : f32 to vector<16x128xf32>
        %c0_32 = arith.constant 0 : index
        %c0_33 = arith.constant 0 : index
        %76 = vector.load %arg33[%c0_32, %c0_33] : memref<16x128xf32, #tpu.memory_space<vmem>>, vector<16x128xf32>
        tpu.vector_store %arg33[%c0_32, %c0_33], %75 {strides = array<i32>} : memref<16x128xf32, #tpu.memory_space<vmem>>, vector<16x128xf32>,
      } else {
      }
      %63 = vector.shape_cast %60 : vector<8x128xf32> to vector<1x8x128xf32>
      %c0_21 = arith.constant 0 : index
      %c0_22 = arith.constant 0 : index
      %64 = vector.load %arg33[%c0_21, %c0_22] : memref<16x128xf32, #tpu.memory_space<vmem>>, vector<8x128xf32>
      %cst_23 = arith.constant dense<0.000000e+00> : vector<8x128xf32>
      %65 = vector.multi_reduction <add>, %63, %cst_23 [0] : vector<1x8x128xf32> to vector<8x128xf32>
      %66 = arith.addf %64, %65 : vector<8x128xf32>
      %c0_24 = arith.constant 0 : index
      %c0_25 = arith.constant 0 : index
      %67 = vector.load %arg33[%c0_24, %c0_25] : memref<16x128xf32, #tpu.memory_space<vmem>>, vector<8x128xf32>
      tpu.vector_store %arg33[%c0_24, %c0_25], %66 {strides = array<i32>} : memref<16x128xf32, #tpu.memory_space<vmem>>, vector<8x128xf32>,
      %c8 = arith.constant 8 : index
      %c0_26 = arith.constant 0 : index
      %68 = vector.load %arg33[%c8, %c0_26] : memref<16x128xf32, #tpu.memory_space<vmem>>, vector<8x128xf32>
      %69 = arith.mulf %63, %63 : vector<1x8x128xf32>
      %cst_27 = arith.constant dense<0.000000e+00> : vector<8x128xf32>
      %70 = vector.multi_reduction <add>, %69, %cst_27 [0] : vector<1x8x128xf32> to vector<8x128xf32>
      %71 = arith.addf %68, %70 : vector<8x128xf32>
      %c8_28 = arith.constant 8 : index
      %c0_29 = arith.constant 0 : index
      %72 = vector.load %arg33[%c8_28, %c0_29] : memref<16x128xf32, #tpu.memory_space<vmem>>, vector<8x128xf32>
      tpu.vector_store %arg33[%c8_28, %c0_29], %71 {strides = array<i32>} : memref<16x128xf32, #tpu.memory_space<vmem>>, vector<8x128xf32>,
      %73 = arith.extui %5 : i1 to i32
      %c0_i32_30 = arith.constant 0 : i32
      %74 = arith.cmpi ne, %73, %c0_i32_30 : i32
      scf.if %74 {
        %c0_31 = arith.constant 0 : index
        %c0_32 = arith.constant 0 : index
        %75 = vector.load %arg33[%c0_31, %c0_32] : memref<16x128xf32, #tpu.memory_space<vmem>>, vector<8x128xf32>
        %cst_33 = arith.constant dense<0.000000e+00> : vector<128xf32>
        %76 = vector.multi_reduction <add>, %75, %cst_33 [0] : vector<8x128xf32> to vector<128xf32>
        %77 = vector.shape_cast %76 : vector<128xf32> to vector<1x128xf32>
        %c8_34 = arith.constant 8 : index
        %c0_35 = arith.constant 0 : index
        %78 = vector.load %arg33[%c8_34, %c0_35] : memref<16x128xf32, #tpu.memory_space<vmem>>, vector<8x128xf32>
        %cst_36 = arith.constant dense<0.000000e+00> : vector<128xf32>
        %79 = vector.multi_reduction <add>, %78, %cst_36 [0] : vector<8x128xf32> to vector<128xf32>
        %80 = vector.shape_cast %79 : vector<128xf32> to vector<1x128xf32>
        %cst_37 = arith.constant 3.125000e-02 : f32
        %81 = vector.broadcast %cst_37 : f32 to vector<1x128xf32>
        %82 = arith.mulf %77, %81 : vector<1x128xf32>
        %cst_38 = arith.constant 3.125000e-02 : f32
        %83 = vector.broadcast %cst_38 : f32 to vector<1x128xf32>
        %84 = arith.mulf %80, %83 : vector<1x128xf32>
        %85 = arith.mulf %82, %82 : vector<1x128xf32>
        %86 = arith.subf %84, %85 : vector<1x128xf32>
        %cst_39 = arith.constant 0.000000e+00 : f32
        %87 = vector.broadcast %cst_39 : f32 to vector<1x128xf32>
        %88 = arith.maximumf %86, %87 : vector<1x128xf32>
        %c0_40 = arith.constant 0 : index
        %c0_41 = arith.constant 0 : index
        %89 = vector.load %arg8[%c0_40, %c0_41] : memref<1x128xf32, #tpu.memory_space<vmem>>, vector<1x128xf32>
        %cst_42 = arith.constant 9.99999974E-6 : f32
        %90 = vector.broadcast %cst_42 : f32 to vector<1x128xf32>
        %91 = arith.addf %88, %90 : vector<1x128xf32>
        %92 = math.rsqrt %91 : vector<1x128xf32>
        %93 = arith.mulf %89, %92 : vector<1x128xf32>
        %c0_43 = arith.constant 0 : index
        %c0_44 = arith.constant 0 : index
        %94 = vector.load %arg9[%c0_43, %c0_44] : memref<1x128xf32, #tpu.memory_space<vmem>>, vector<1x128xf32>
        %95 = arith.mulf %82, %93 : vector<1x128xf32>
        %96 = arith.subf %94, %95 : vector<1x128xf32>
        %c0_45 = arith.constant 0 : index
        %c0_46 = arith.constant 0 : index
        %97 = vector.load %arg33[%c0_45, %c0_46] : memref<16x128xf32, #tpu.memory_space<vmem>>, vector<1x128xf32>
        tpu.vector_store %arg33[%c0_45, %c0_46], %93 {strides = array<i32>} : memref<16x128xf32, #tpu.memory_space<vmem>>, vector<1x128xf32>,
        %c1_47 = arith.constant 1 : index
        %c0_48 = arith.constant 0 : index
        %98 = vector.load %arg33[%c1_47, %c0_48] : memref<16x128xf32, #tpu.memory_space<vmem>>, vector<1x128xf32>
        tpu.vector_store %arg33[%c1_47, %c0_48], %96 {strides = array<i32>} : memref<16x128xf32, #tpu.memory_space<vmem>>, vector<1x128xf32>,
      } else {
      }
    } else {
    }
    %c2_i32 = arith.constant 2 : i32
    %20 = arith.cmpi eq, %arg0, %c2_i32 : i32
    %21 = arith.extui %20 : i1 to i32
    %c0_i32_8 = arith.constant 0 : i32
    %22 = arith.cmpi ne, %21, %c0_i32_8 : i32
    scf.if %22 {
      %c0_12 = arith.constant 0 : index
      %c0_13 = arith.constant 0 : index
      %32 = vector.load %arg4[%c0_12, %c0_13] : memref<3x64xf32, #tpu.memory_space<vmem>>, vector<3x64xf32>
      %33 = vector.extract_strided_slice %13 {offsets = [0, 0], sizes = [8, 1], strides = [1, 1]} : vector<8x3xf32> to vector<8x1xf32>
      %34 = vector.extract_strided_slice %32 {offsets = [0, 0], sizes = [1, 64], strides = [1, 1]} : vector<3x64xf32> to vector<1x64xf32>
      %35 = vector.broadcast %33 : vector<8x1xf32> to vector<8x64xf32>
      %36 = vector.broadcast %34 : vector<1x64xf32> to vector<8x64xf32>
      %37 = arith.mulf %35, %36 : vector<8x64xf32>
      %38 = vector.extract_strided_slice %13 {offsets = [0, 1], sizes = [8, 1], strides = [1, 1]} : vector<8x3xf32> to vector<8x1xf32>
      %39 = vector.extract_strided_slice %32 {offsets = [1, 0], sizes = [1, 64], strides = [1, 1]} : vector<3x64xf32> to vector<1x64xf32>
      %40 = vector.broadcast %38 : vector<8x1xf32> to vector<8x64xf32>
      %41 = vector.broadcast %39 : vector<1x64xf32> to vector<8x64xf32>
      %42 = arith.mulf %40, %41 : vector<8x64xf32>
      %43 = arith.addf %37, %42 : vector<8x64xf32>
      %44 = vector.extract_strided_slice %13 {offsets = [0, 2], sizes = [8, 1], strides = [1, 1]} : vector<8x3xf32> to vector<8x1xf32>
      %45 = vector.extract_strided_slice %32 {offsets = [2, 0], sizes = [1, 64], strides = [1, 1]} : vector<3x64xf32> to vector<1x64xf32>
      %46 = vector.broadcast %44 : vector<8x1xf32> to vector<8x64xf32>
      %47 = vector.broadcast %45 : vector<1x64xf32> to vector<8x64xf32>
      %48 = arith.mulf %46, %47 : vector<8x64xf32>
      %49 = arith.addf %43, %48 : vector<8x64xf32>
      %c0_14 = arith.constant 0 : index
      %c0_15 = arith.constant 0 : index
      %50 = vector.load %arg32[%c0_14, %c0_15] : memref<16x64xf32, #tpu.memory_space<vmem>>, vector<1x64xf32>
      %51 = vector.broadcast %50 : vector<1x64xf32> to vector<8x64xf32>
      %52 = arith.mulf %49, %51 : vector<8x64xf32>
      %c1 = arith.constant 1 : index
      %c0_16 = arith.constant 0 : index
      %53 = vector.load %arg32[%c1, %c0_16] : memref<16x64xf32, #tpu.memory_space<vmem>>, vector<1x64xf32>
      %54 = vector.broadcast %53 : vector<1x64xf32> to vector<8x64xf32>
      %55 = arith.addf %52, %54 : vector<8x64xf32>
      %cst = arith.constant 0.000000e+00 : f32
      %56 = vector.broadcast %cst : f32 to vector<8x64xf32>
      %57 = arith.maximumf %55, %56 : vector<8x64xf32>
      %58 = arith.truncf %57 : vector<8x64xf32> to vector<8x64xbf16>
      %c0_17 = arith.constant 0 : index
      %c0_18 = arith.constant 0 : index
      %59 = vector.load %arg7[%c0_17, %c0_18] : memref<64x128xbf16, #tpu.memory_space<vmem>>, vector<64x128xbf16>
      %cst_19 = arith.constant dense<0.000000e+00> : vector<8x128xf32>
      %60 = tpu.matmul %58, %59, %cst_19 {dimension_numbers = #tpu.dot_dimension_numbers<[1], [0], [0], [1], [0, 0, 1, 1], [], []>} : vector<8x64xbf16>, vector<64x128xbf16>, vector<8x128xf32> -> vector<8x128xf32>
      %c0_20 = arith.constant 0 : index
      %c0_21 = arith.constant 0 : index
      %61 = vector.load %arg33[%c0_20, %c0_21] : memref<16x128xf32, #tpu.memory_space<vmem>>, vector<1x128xf32>
      %62 = vector.broadcast %61 : vector<1x128xf32> to vector<8x128xf32>
      %63 = arith.mulf %60, %62 : vector<8x128xf32>
      %c1_22 = arith.constant 1 : index
      %c0_23 = arith.constant 0 : index
      %64 = vector.load %arg33[%c1_22, %c0_23] : memref<16x128xf32, #tpu.memory_space<vmem>>, vector<1x128xf32>
      %65 = vector.broadcast %64 : vector<1x128xf32> to vector<8x128xf32>
      %66 = arith.addf %63, %65 : vector<8x128xf32>
      %cst_24 = arith.constant 0.000000e+00 : f32
      %67 = vector.broadcast %cst_24 : f32 to vector<8x128xf32>
      %68 = arith.maximumf %66, %67 : vector<8x128xf32>
      %69 = arith.truncf %68 : vector<8x128xf32> to vector<8x128xbf16>
      %c0_25 = arith.constant 0 : index
      %c0_26 = arith.constant 0 : index
      %70 = vector.load %arg10[%c0_25, %c0_26] : memref<128x1024xbf16, #tpu.memory_space<vmem>>, vector<128x1024xbf16>
      %cst_27 = arith.constant dense<0.000000e+00> : vector<8x1024xf32>
      %71 = tpu.matmul %69, %70, %cst_27 {dimension_numbers = #tpu.dot_dimension_numbers<[1], [0], [0], [1], [0, 0, 1, 1], [], []>} : vector<8x128xbf16>, vector<128x1024xbf16>, vector<8x1024xf32> -> vector<8x1024xf32>
      %72 = arith.extui %2 : i1 to i32
      %c0_i32_28 = arith.constant 0 : i32
      %73 = arith.cmpi ne, %72, %c0_i32_28 : i32
      scf.if %73 {
        %cst_51 = arith.constant 0.000000e+00 : f32
        %99 = vector.broadcast %cst_51 : f32 to vector<16x1024xf32>
        %c0_52 = arith.constant 0 : index
        %c0_53 = arith.constant 0 : index
        %100 = vector.load %arg34[%c0_52, %c0_53] : memref<16x1024xf32, #tpu.memory_space<vmem>>, vector<16x1024xf32>
        tpu.vector_store %arg34[%c0_52, %c0_53], %99 {strides = array<i32>} : memref<16x1024xf32, #tpu.memory_space<vmem>>, vector<16x1024xf32>,
      } else {
      }
      %74 = vector.shape_cast %71 : vector<8x1024xf32> to vector<1x8x1024xf32>
      %c0_29 = arith.constant 0 : index
      %c0_30 = arith.constant 0 : index
      %75 = vector.load %arg34[%c0_29, %c0_30] : memref<16x1024xf32, #tpu.memory_space<vmem>>, vector<8x1024xf32>
      %cst_31 = arith.constant dense<0.000000e+00> : vector<8x1024xf32>
      %76 = vector.multi_reduction <add>, %74, %cst_31 [0] : vector<1x8x1024xf32> to vector<8x1024xf32>
      %77 = arith.addf %75, %76 : vector<8x1024xf32>
      %c0_32 = arith.constant 0 : index
      %c0_33 = arith.constant 0 : index
      %78 = vector.load %arg34[%c0_32, %c0_33] : memref<16x1024xf32, #tpu.memory_space<vmem>>, vector<8x1024xf32>
      tpu.vector_store %arg34[%c0_32, %c0_33], %77 {strides = array<i32>} : memref<16x1024xf32, #tpu.memory_space<vmem>>, vector<8x1024xf32>,
      %c8 = arith.constant 8 : index
      %c0_34 = arith.constant 0 : index
      %79 = vector.load %arg34[%c8, %c0_34] : memref<16x1024xf32, #tpu.memory_space<vmem>>, vector<8x1024xf32>
      %80 = arith.mulf %74, %74 : vector<1x8x1024xf32>
      %cst_35 = arith.constant dense<0.000000e+00> : vector<8x1024xf32>
      %81 = vector.multi_reduction <add>, %80, %cst_35 [0] : vector<1x8x1024xf32> to vector<8x1024xf32>
      %82 = arith.addf %79, %81 : vector<8x1024xf32>
      %c8_36 = arith.constant 8 : index
      %c0_37 = arith.constant 0 : index
      %83 = vector.load %arg34[%c8_36, %c0_37] : memref<16x1024xf32, #tpu.memory_space<vmem>>, vector<8x1024xf32>
      tpu.vector_store %arg34[%c8_36, %c0_37], %82 {strides = array<i32>} : memref<16x1024xf32, #tpu.memory_space<vmem>>, vector<8x1024xf32>,
      %84 = arith.extui %6 : i1 to i32
      %c0_i32_38 = arith.constant 0 : i32
      %85 = arith.cmpi ne, %84, %c0_i32_38 : i32
      scf.if %85 {
        %cst_51 = arith.constant 0xFF800000 : f32
        %99 = vector.broadcast %cst_51 : f32 to vector<8x1024xf32>
        %c0_52 = arith.constant 0 : index
        %c0_53 = arith.constant 0 : index
        %100 = vector.load %arg38[%c0_52, %c0_53] : memref<8x1024xf32, #tpu.memory_space<vmem>>, vector<8x1024xf32>
        tpu.vector_store %arg38[%c0_52, %c0_53], %99 {strides = array<i32>} : memref<8x1024xf32, #tpu.memory_space<vmem>>, vector<8x1024xf32>,
        %cst_54 = arith.constant 0x7F800000 : f32
        %101 = vector.broadcast %cst_54 : f32 to vector<8x1024xf32>
        %c0_55 = arith.constant 0 : index
        %c0_56 = arith.constant 0 : index
        %102 = vector.load %arg39[%c0_55, %c0_56] : memref<8x1024xf32, #tpu.memory_space<vmem>>, vector<8x1024xf32>
        tpu.vector_store %arg39[%c0_55, %c0_56], %101 {strides = array<i32>} : memref<8x1024xf32, #tpu.memory_space<vmem>>, vector<8x1024xf32>,
      } else {
      }
      %86 = vector.shape_cast %71 : vector<8x1024xf32> to vector<1x8x1024xf32>
      %c0_39 = arith.constant 0 : index
      %c0_40 = arith.constant 0 : index
      %87 = vector.load %arg38[%c0_39, %c0_40] : memref<8x1024xf32, #tpu.memory_space<vmem>>, vector<8x1024xf32>
      %cst_41 = arith.constant dense<0xFF800000> : vector<8x1024xf32>
      %88 = vector.multi_reduction <maximumf>, %86, %cst_41 [0] : vector<1x8x1024xf32> to vector<8x1024xf32>
      %89 = arith.maximumf %87, %88 : vector<8x1024xf32>
      %c0_42 = arith.constant 0 : index
      %c0_43 = arith.constant 0 : index
      %90 = vector.load %arg38[%c0_42, %c0_43] : memref<8x1024xf32, #tpu.memory_space<vmem>>, vector<8x1024xf32>
      tpu.vector_store %arg38[%c0_42, %c0_43], %89 {strides = array<i32>} : memref<8x1024xf32, #tpu.memory_space<vmem>>, vector<8x1024xf32>,
      %c0_44 = arith.constant 0 : index
      %c0_45 = arith.constant 0 : index
      %91 = vector.load %arg39[%c0_44, %c0_45] : memref<8x1024xf32, #tpu.memory_space<vmem>>, vector<8x1024xf32>
      %cst_46 = arith.constant dense<0x7F800000> : vector<8x1024xf32>
      %92 = vector.multi_reduction <minimumf>, %86, %cst_46 [0] : vector<1x8x1024xf32> to vector<8x1024xf32>
      %93 = arith.minimumf %91, %92 : vector<8x1024xf32>
      %c0_47 = arith.constant 0 : index
      %c0_48 = arith.constant 0 : index
      %94 = vector.load %arg39[%c0_47, %c0_48] : memref<8x1024xf32, #tpu.memory_space<vmem>>, vector<8x1024xf32>
      tpu.vector_store %arg39[%c0_47, %c0_48], %93 {strides = array<i32>} : memref<8x1024xf32, #tpu.memory_space<vmem>>, vector<8x1024xf32>,
      %95 = arith.extui %7 : i1 to i32
      %c0_i32_49 = arith.constant 0 : i32
      %96 = arith.cmpi ne, %95, %c0_i32_49 : i32
      scf.if %96 {
        %c0_51 = arith.constant 0 : index
        %c0_52 = arith.constant 0 : index
        %99 = vector.load %arg38[%c0_51, %c0_52] : memref<8x1024xf32, #tpu.memory_space<vmem>>, vector<8x1024xf32>
        %cst_53 = arith.constant dense<0xFF800000> : vector<1024xf32>
        %100 = vector.multi_reduction <maximumf>, %99, %cst_53 [0] : vector<8x1024xf32> to vector<1024xf32>
        %101 = vector.shape_cast %100 : vector<1024xf32> to vector<1x1024xf32>
        %102 = arith.index_cast %arg1 : i32 to index
        %c0_54 = arith.constant 0 : index
        %103 = vector.load %arg40[%102, %c0_54] : memref<2x1024xf32, #tpu.memory_space<vmem>>, vector<1x1024xf32>
        tpu.vector_store %arg40[%102, %c0_54], %101 {strides = array<i32>} : memref<2x1024xf32, #tpu.memory_space<vmem>>, vector<1x1024xf32>,
        %c0_55 = arith.constant 0 : index
        %c0_56 = arith.constant 0 : index
        %104 = vector.load %arg39[%c0_55, %c0_56] : memref<8x1024xf32, #tpu.memory_space<vmem>>, vector<8x1024xf32>
        %cst_57 = arith.constant dense<0x7F800000> : vector<1024xf32>
        %105 = vector.multi_reduction <minimumf>, %104, %cst_57 [0] : vector<8x1024xf32> to vector<1024xf32>
        %106 = vector.shape_cast %105 : vector<1024xf32> to vector<1x1024xf32>
        %107 = arith.index_cast %arg1 : i32 to index
        %c0_58 = arith.constant 0 : index
        %108 = vector.load %arg41[%107, %c0_58] : memref<2x1024xf32, #tpu.memory_space<vmem>>, vector<1x1024xf32>
        tpu.vector_store %arg41[%107, %c0_58], %106 {strides = array<i32>} : memref<2x1024xf32, #tpu.memory_space<vmem>>, vector<1x1024xf32>,
      } else {
      }
      %97 = arith.extui %5 : i1 to i32
      %c0_i32_50 = arith.constant 0 : i32
      %98 = arith.cmpi ne, %97, %c0_i32_50 : i32
      scf.if %98 {
        %c0_51 = arith.constant 0 : index
        %c0_52 = arith.constant 0 : index
        %99 = vector.load %arg34[%c0_51, %c0_52] : memref<16x1024xf32, #tpu.memory_space<vmem>>, vector<8x1024xf32>
        %cst_53 = arith.constant dense<0.000000e+00> : vector<1024xf32>
        %100 = vector.multi_reduction <add>, %99, %cst_53 [0] : vector<8x1024xf32> to vector<1024xf32>
        %101 = vector.shape_cast %100 : vector<1024xf32> to vector<1x1024xf32>
        %c8_54 = arith.constant 8 : index
        %c0_55 = arith.constant 0 : index
        %102 = vector.load %arg34[%c8_54, %c0_55] : memref<16x1024xf32, #tpu.memory_space<vmem>>, vector<8x1024xf32>
        %cst_56 = arith.constant dense<0.000000e+00> : vector<1024xf32>
        %103 = vector.multi_reduction <add>, %102, %cst_56 [0] : vector<8x1024xf32> to vector<1024xf32>
        %104 = vector.shape_cast %103 : vector<1024xf32> to vector<1x1024xf32>
        %cst_57 = arith.constant 3.125000e-02 : f32
        %105 = vector.broadcast %cst_57 : f32 to vector<1x1024xf32>
        %106 = arith.mulf %101, %105 : vector<1x1024xf32>
        %cst_58 = arith.constant 3.125000e-02 : f32
        %107 = vector.broadcast %cst_58 : f32 to vector<1x1024xf32>
        %108 = arith.mulf %104, %107 : vector<1x1024xf32>
        %109 = arith.mulf %106, %106 : vector<1x1024xf32>
        %110 = arith.subf %108, %109 : vector<1x1024xf32>
        %cst_59 = arith.constant 0.000000e+00 : f32
        %111 = vector.broadcast %cst_59 : f32 to vector<1x1024xf32>
        %112 = arith.maximumf %110, %111 : vector<1x1024xf32>
        %c0_60 = arith.constant 0 : index
        %c0_61 = arith.constant 0 : index
        %113 = vector.load %arg11[%c0_60, %c0_61] : memref<1x1024xf32, #tpu.memory_space<vmem>>, vector<1x1024xf32>
        %cst_62 = arith.constant 9.99999974E-6 : f32
        %114 = vector.broadcast %cst_62 : f32 to vector<1x1024xf32>
        %115 = arith.addf %112, %114 : vector<1x1024xf32>
        %116 = math.rsqrt %115 : vector<1x1024xf32>
        %117 = arith.mulf %113, %116 : vector<1x1024xf32>
        %c0_63 = arith.constant 0 : index
        %c0_64 = arith.constant 0 : index
        %118 = vector.load %arg12[%c0_63, %c0_64] : memref<1x1024xf32, #tpu.memory_space<vmem>>, vector<1x1024xf32>
        %119 = arith.mulf %106, %117 : vector<1x1024xf32>
        %120 = arith.subf %118, %119 : vector<1x1024xf32>
        %c0_65 = arith.constant 0 : index
        %c0_66 = arith.constant 0 : index
        %121 = vector.load %arg34[%c0_65, %c0_66] : memref<16x1024xf32, #tpu.memory_space<vmem>>, vector<1x1024xf32>
        tpu.vector_store %arg34[%c0_65, %c0_66], %117 {strides = array<i32>} : memref<16x1024xf32, #tpu.memory_space<vmem>>, vector<1x1024xf32>,
        %c1_67 = arith.constant 1 : index
        %c0_68 = arith.constant 0 : index
        %122 = vector.load %arg34[%c1_67, %c0_68] : memref<16x1024xf32, #tpu.memory_space<vmem>>, vector<1x1024xf32>
        tpu.vector_store %arg34[%c1_67, %c0_68], %120 {strides = array<i32>} : memref<16x1024xf32, #tpu.memory_space<vmem>>, vector<1x1024xf32>,
        %cst_69 = arith.constant 0.000000e+00 : f32
        %123 = vector.broadcast %cst_69 : f32 to vector<1x1024xf32>
        %124 = arith.cmpf ogt, %117, %123 : vector<1x1024xf32>
        %c0_70 = arith.constant 0 : index
        %c0_71 = arith.constant 0 : index
        %125 = vector.load %arg40[%c0_70, %c0_71] : memref<2x1024xf32, #tpu.memory_space<vmem>>, vector<2x1024xf32>
        %c0_72 = arith.constant 0 : index
        %c0_73 = arith.constant 0 : index
        %126 = vector.load %arg41[%c0_72, %c0_73] : memref<2x1024xf32, #tpu.memory_space<vmem>>, vector<2x1024xf32>
        %127 = vector.shape_cast %124 : vector<1x1024xi1> to vector<1x1024xi1>
        %128 = vector.broadcast %127 : vector<1x1024xi1> to vector<2x1024xi1>
        %129 = arith.select %128, %125, %126 : vector<2x1024xi1>, vector<2x1024xf32>
        %130 = vector.broadcast %117 : vector<1x1024xf32> to vector<2x1024xf32>
        %131 = arith.mulf %129, %130 : vector<2x1024xf32>
        %132 = vector.broadcast %120 : vector<1x1024xf32> to vector<2x1024xf32>
        %133 = arith.addf %131, %132 : vector<2x1024xf32>
        %cst_74 = arith.constant 0.000000e+00 : f32
        %134 = vector.broadcast %cst_74 : f32 to vector<2x1024xf32>
        %135 = arith.maximumf %133, %134 : vector<2x1024xf32>
        %136 = arith.truncf %135 : vector<2x1024xf32> to vector<2x1024xbf16>
        %c0_75 = arith.constant 0 : index
        %c0_76 = arith.constant 0 : index
        %137 = vector.load %arg13[%c0_75, %c0_76] : memref<1024x512xbf16, #tpu.memory_space<vmem>>, vector<1024x512xbf16>
        %cst_77 = arith.constant dense<0.000000e+00> : vector<2x512xf32>
        %138 = tpu.matmul %136, %137, %cst_77 {dimension_numbers = #tpu.dot_dimension_numbers<[1], [0], [0], [1], [0, 0, 1, 1], [], []>} : vector<2x1024xbf16>, vector<1024x512xbf16>, vector<2x512xf32> -> vector<2x512xf32>
        %cst_78 = arith.constant dense<0.000000e+00> : vector<512xf32>
        %139 = vector.multi_reduction <add>, %138, %cst_78 [0] : vector<2x512xf32> to vector<512xf32>
        %140 = vector.shape_cast %139 : vector<512xf32> to vector<1x512xf32>
        %cst_79 = arith.constant 2.000000e+00 : f32
        %141 = vector.broadcast %cst_79 : f32 to vector<1x512xf32>
        %142 = arith.divf %140, %141 : vector<1x512xf32>
        %143 = vector.broadcast %142 : vector<1x512xf32> to vector<2x512xf32>
        %144 = arith.subf %138, %143 : vector<2x512xf32>
        %145 = arith.mulf %144, %144 : vector<2x512xf32>
        %cst_80 = arith.constant dense<0.000000e+00> : vector<512xf32>
        %146 = vector.multi_reduction <add>, %145, %cst_80 [0] : vector<2x512xf32> to vector<512xf32>
        %147 = vector.shape_cast %146 : vector<512xf32> to vector<1x512xf32>
        %cst_81 = arith.constant 2.000000e+00 : f32
        %148 = vector.broadcast %cst_81 : f32 to vector<1x512xf32>
        %149 = arith.divf %147, %148 : vector<1x512xf32>
        %c0_82 = arith.constant 0 : index
        %c0_83 = arith.constant 0 : index
        %150 = vector.load %arg14[%c0_82, %c0_83] : memref<1x512xf32, #tpu.memory_space<vmem>>, vector<1x512xf32>
        %151 = vector.broadcast %142 : vector<1x512xf32> to vector<2x512xf32>
        %152 = arith.subf %138, %151 : vector<2x512xf32>
        %153 = vector.broadcast %150 : vector<1x512xf32> to vector<2x512xf32>
        %154 = arith.mulf %153, %152 : vector<2x512xf32>
        %cst_84 = arith.constant 9.99999974E-6 : f32
        %155 = vector.broadcast %cst_84 : f32 to vector<1x512xf32>
        %156 = arith.addf %149, %155 : vector<1x512xf32>
        %157 = math.rsqrt %156 : vector<1x512xf32>
        %158 = vector.broadcast %157 : vector<1x512xf32> to vector<2x512xf32>
        %159 = arith.mulf %154, %158 : vector<2x512xf32>
        %c0_85 = arith.constant 0 : index
        %c0_86 = arith.constant 0 : index
        %160 = vector.load %arg15[%c0_85, %c0_86] : memref<1x512xf32, #tpu.memory_space<vmem>>, vector<1x512xf32>
        %161 = vector.broadcast %160 : vector<1x512xf32> to vector<2x512xf32>
        %162 = arith.addf %159, %161 : vector<2x512xf32>
        %cst_87 = arith.constant 0.000000e+00 : f32
        %163 = vector.broadcast %cst_87 : f32 to vector<2x512xf32>
        %164 = arith.maximumf %162, %163 : vector<2x512xf32>
        %165 = arith.truncf %164 : vector<2x512xf32> to vector<2x512xbf16>
        %c0_88 = arith.constant 0 : index
        %c0_89 = arith.constant 0 : index
        %166 = vector.load %arg16[%c0_88, %c0_89] : memref<512x256xbf16, #tpu.memory_space<vmem>>, vector<512x256xbf16>
        %cst_90 = arith.constant dense<0.000000e+00> : vector<2x256xf32>
        %167 = tpu.matmul %165, %166, %cst_90 {dimension_numbers = #tpu.dot_dimension_numbers<[1], [0], [0], [1], [0, 0, 1, 1], [], []>} : vector<2x512xbf16>, vector<512x256xbf16>, vector<2x256xf32> -> vector<2x256xf32>
        %cst_91 = arith.constant dense<0.000000e+00> : vector<256xf32>
        %168 = vector.multi_reduction <add>, %167, %cst_91 [0] : vector<2x256xf32> to vector<256xf32>
        %169 = vector.shape_cast %168 : vector<256xf32> to vector<1x256xf32>
        %cst_92 = arith.constant 2.000000e+00 : f32
        %170 = vector.broadcast %cst_92 : f32 to vector<1x256xf32>
        %171 = arith.divf %169, %170 : vector<1x256xf32>
        %172 = vector.broadcast %171 : vector<1x256xf32> to vector<2x256xf32>
        %173 = arith.subf %167, %172 : vector<2x256xf32>
        %174 = arith.mulf %173, %173 : vector<2x256xf32>
        %cst_93 = arith.constant dense<0.000000e+00> : vector<256xf32>
        %175 = vector.multi_reduction <add>, %174, %cst_93 [0] : vector<2x256xf32> to vector<256xf32>
        %176 = vector.shape_cast %175 : vector<256xf32> to vector<1x256xf32>
        %cst_94 = arith.constant 2.000000e+00 : f32
        %177 = vector.broadcast %cst_94 : f32 to vector<1x256xf32>
        %178 = arith.divf %176, %177 : vector<1x256xf32>
        %c0_95 = arith.constant 0 : index
        %c0_96 = arith.constant 0 : index
        %179 = vector.load %arg17[%c0_95, %c0_96] : memref<1x256xf32, #tpu.memory_space<vmem>>, vector<1x256xf32>
        %180 = vector.broadcast %171 : vector<1x256xf32> to vector<2x256xf32>
        %181 = arith.subf %167, %180 : vector<2x256xf32>
        %182 = vector.broadcast %179 : vector<1x256xf32> to vector<2x256xf32>
        %183 = arith.mulf %182, %181 : vector<2x256xf32>
        %cst_97 = arith.constant 9.99999974E-6 : f32
        %184 = vector.broadcast %cst_97 : f32 to vector<1x256xf32>
        %185 = arith.addf %178, %184 : vector<1x256xf32>
        %186 = math.rsqrt %185 : vector<1x256xf32>
        %187 = vector.broadcast %186 : vector<1x256xf32> to vector<2x256xf32>
        %188 = arith.mulf %183, %187 : vector<2x256xf32>
        %c0_98 = arith.constant 0 : index
        %c0_99 = arith.constant 0 : index
        %189 = vector.load %arg18[%c0_98, %c0_99] : memref<1x256xf32, #tpu.memory_space<vmem>>, vector<1x256xf32>
        %190 = vector.broadcast %189 : vector<1x256xf32> to vector<2x256xf32>
        %191 = arith.addf %188, %190 : vector<2x256xf32>
        %cst_100 = arith.constant 0.000000e+00 : f32
        %192 = vector.broadcast %cst_100 : f32 to vector<2x256xf32>
        %193 = arith.maximumf %191, %192 : vector<2x256xf32>
        %c0_101 = arith.constant 0 : index
        %c0_102 = arith.constant 0 : index
        %194 = vector.load %arg19[%c0_101, %c0_102] : memref<256x9xf32, #tpu.memory_space<vmem>>, vector<256x9xf32>
        %cst_103 = arith.constant dense<0.000000e+00> : vector<2x9xf32>
        %195 = tpu.matmul %193, %194, %cst_103 {dimension_numbers = #tpu.dot_dimension_numbers<[1], [0], [0], [1], [0, 0, 1, 1], [], []>} : vector<2x256xf32>, vector<256x9xf32>, vector<2x9xf32> -> vector<2x9xf32>
        %c0_104 = arith.constant 0 : index
        %c0_105 = arith.constant 0 : index
        %196 = vector.load %arg20[%c0_104, %c0_105] : memref<1x9xf32, #tpu.memory_space<vmem>>, vector<1x9xf32>
        %197 = vector.broadcast %196 : vector<1x9xf32> to vector<2x9xf32>
        %198 = arith.addf %195, %197 : vector<2x9xf32>
        %c0_106 = arith.constant 0 : index
        %c0_107 = arith.constant 0 : index
        %199 = vector.load %arg31[%c0_106, %c0_107] : memref<2x9xf32, #tpu.memory_space<vmem>>, vector<2x9xf32>
        tpu.vector_store %arg31[%c0_106, %c0_107], %198 {strides = array<i32>} : memref<2x9xf32, #tpu.memory_space<vmem>>, vector<2x9xf32>,
        %c0_108 = arith.constant 0 : index
        %c0_109 = arith.constant 0 : index
        %200 = vector.load %arg21[%c0_108, %c0_109] : memref<3x64xf32, #tpu.memory_space<vmem>>, vector<3x64xf32>
        %201 = vector.extract_strided_slice %198 {offsets = [0, 0], sizes = [2, 3], strides = [1, 1]} : vector<2x9xf32> to vector<2x3xf32>
        %202 = vector.extract_strided_slice %201 {offsets = [0, 0], sizes = [2, 1], strides = [1, 1]} : vector<2x3xf32> to vector<2x1xf32>
        %203 = vector.extract_strided_slice %200 {offsets = [0, 0], sizes = [1, 64], strides = [1, 1]} : vector<3x64xf32> to vector<1x64xf32>
        %204 = vector.broadcast %202 : vector<2x1xf32> to vector<2x64xf32>
        %205 = vector.broadcast %203 : vector<1x64xf32> to vector<2x64xf32>
        %206 = arith.mulf %204, %205 : vector<2x64xf32>
        %207 = vector.extract_strided_slice %201 {offsets = [0, 1], sizes = [2, 1], strides = [1, 1]} : vector<2x3xf32> to vector<2x1xf32>
        %208 = vector.extract_strided_slice %200 {offsets = [1, 0], sizes = [1, 64], strides = [1, 1]} : vector<3x64xf32> to vector<1x64xf32>
        %209 = vector.broadcast %207 : vector<2x1xf32> to vector<2x64xf32>
        %210 = vector.broadcast %208 : vector<1x64xf32> to vector<2x64xf32>
        %211 = arith.mulf %209, %210 : vector<2x64xf32>
        %212 = arith.addf %206, %211 : vector<2x64xf32>
        %213 = vector.extract_strided_slice %201 {offsets = [0, 2], sizes = [2, 1], strides = [1, 1]} : vector<2x3xf32> to vector<2x1xf32>
        %214 = vector.extract_strided_slice %200 {offsets = [2, 0], sizes = [1, 64], strides = [1, 1]} : vector<3x64xf32> to vector<1x64xf32>
        %215 = vector.broadcast %213 : vector<2x1xf32> to vector<2x64xf32>
        %216 = vector.broadcast %214 : vector<1x64xf32> to vector<2x64xf32>
        %217 = arith.mulf %215, %216 : vector<2x64xf32>
        %218 = arith.addf %212, %217 : vector<2x64xf32>
        %219 = vector.shape_cast %218 : vector<2x64xf32> to vector<2x1x64xf32>
        %c0_110 = arith.constant 0 : index
        %c0_111 = arith.constant 0 : index
        %c0_112 = arith.constant 0 : index
        %220 = vector.load %arg42[%c0_110, %c0_111, %c0_112] : memref<2x3x64xf32, #tpu.memory_space<vmem>>, vector<2x1x64xf32>
        tpu.vector_store %arg42[%c0_110, %c0_111, %c0_112], %219 {strides = array<i32>} : memref<2x3x64xf32, #tpu.memory_space<vmem>>, vector<2x1x64xf32>,
        %221 = vector.extract_strided_slice %198 {offsets = [0, 3], sizes = [2, 3], strides = [1, 1]} : vector<2x9xf32> to vector<2x3xf32>
        %222 = vector.extract_strided_slice %221 {offsets = [0, 0], sizes = [2, 1], strides = [1, 1]} : vector<2x3xf32> to vector<2x1xf32>
        %223 = vector.extract_strided_slice %200 {offsets = [0, 0], sizes = [1, 64], strides = [1, 1]} : vector<3x64xf32> to vector<1x64xf32>
        %224 = vector.broadcast %222 : vector<2x1xf32> to vector<2x64xf32>
        %225 = vector.broadcast %223 : vector<1x64xf32> to vector<2x64xf32>
        %226 = arith.mulf %224, %225 : vector<2x64xf32>
        %227 = vector.extract_strided_slice %221 {offsets = [0, 1], sizes = [2, 1], strides = [1, 1]} : vector<2x3xf32> to vector<2x1xf32>
        %228 = vector.extract_strided_slice %200 {offsets = [1, 0], sizes = [1, 64], strides = [1, 1]} : vector<3x64xf32> to vector<1x64xf32>
        %229 = vector.broadcast %227 : vector<2x1xf32> to vector<2x64xf32>
        %230 = vector.broadcast %228 : vector<1x64xf32> to vector<2x64xf32>
        %231 = arith.mulf %229, %230 : vector<2x64xf32>
        %232 = arith.addf %226, %231 : vector<2x64xf32>
        %233 = vector.extract_strided_slice %221 {offsets = [0, 2], sizes = [2, 1], strides = [1, 1]} : vector<2x3xf32> to vector<2x1xf32>
        %234 = vector.extract_strided_slice %200 {offsets = [2, 0], sizes = [1, 64], strides = [1, 1]} : vector<3x64xf32> to vector<1x64xf32>
        %235 = vector.broadcast %233 : vector<2x1xf32> to vector<2x64xf32>
        %236 = vector.broadcast %234 : vector<1x64xf32> to vector<2x64xf32>
        %237 = arith.mulf %235, %236 : vector<2x64xf32>
        %238 = arith.addf %232, %237 : vector<2x64xf32>
        %239 = vector.shape_cast %238 : vector<2x64xf32> to vector<2x1x64xf32>
        %c0_113 = arith.constant 0 : index
        %c1_114 = arith.constant 1 : index
        %c0_115 = arith.constant 0 : index
        %240 = vector.load %arg42[%c0_113, %c1_114, %c0_115] : memref<2x3x64xf32, #tpu.memory_space<vmem>>, vector<2x1x64xf32>
        tpu.vector_store %arg42[%c0_113, %c1_114, %c0_115], %239 {strides = array<i32>} : memref<2x3x64xf32, #tpu.memory_space<vmem>>, vector<2x1x64xf32>,
        %241 = vector.extract_strided_slice %198 {offsets = [0, 6], sizes = [2, 3], strides = [1, 1]} : vector<2x9xf32> to vector<2x3xf32>
        %242 = vector.extract_strided_slice %241 {offsets = [0, 0], sizes = [2, 1], strides = [1, 1]} : vector<2x3xf32> to vector<2x1xf32>
        %243 = vector.extract_strided_slice %200 {offsets = [0, 0], sizes = [1, 64], strides = [1, 1]} : vector<3x64xf32> to vector<1x64xf32>
        %244 = vector.broadcast %242 : vector<2x1xf32> to vector<2x64xf32>
        %245 = vector.broadcast %243 : vector<1x64xf32> to vector<2x64xf32>
        %246 = arith.mulf %244, %245 : vector<2x64xf32>
        %247 = vector.extract_strided_slice %241 {offsets = [0, 1], sizes = [2, 1], strides = [1, 1]} : vector<2x3xf32> to vector<2x1xf32>
        %248 = vector.extract_strided_slice %200 {offsets = [1, 0], sizes = [1, 64], strides = [1, 1]} : vector<3x64xf32> to vector<1x64xf32>
        %249 = vector.broadcast %247 : vector<2x1xf32> to vector<2x64xf32>
        %250 = vector.broadcast %248 : vector<1x64xf32> to vector<2x64xf32>
        %251 = arith.mulf %249, %250 : vector<2x64xf32>
        %252 = arith.addf %246, %251 : vector<2x64xf32>
        %253 = vector.extract_strided_slice %241 {offsets = [0, 2], sizes = [2, 1], strides = [1, 1]} : vector<2x3xf32> to vector<2x1xf32>
        %254 = vector.extract_strided_slice %200 {offsets = [2, 0], sizes = [1, 64], strides = [1, 1]} : vector<3x64xf32> to vector<1x64xf32>
        %255 = vector.broadcast %253 : vector<2x1xf32> to vector<2x64xf32>
        %256 = vector.broadcast %254 : vector<1x64xf32> to vector<2x64xf32>
        %257 = arith.mulf %255, %256 : vector<2x64xf32>
        %258 = arith.addf %252, %257 : vector<2x64xf32>
        %259 = vector.shape_cast %258 : vector<2x64xf32> to vector<2x1x64xf32>
        %c0_116 = arith.constant 0 : index
        %c2 = arith.constant 2 : index
        %c0_117 = arith.constant 0 : index
        %260 = vector.load %arg42[%c0_116, %c2, %c0_117] : memref<2x3x64xf32, #tpu.memory_space<vmem>>, vector<2x1x64xf32>
        tpu.vector_store %arg42[%c0_116, %c2, %c0_117], %259 {strides = array<i32>} : memref<2x3x64xf32, #tpu.memory_space<vmem>>, vector<2x1x64xf32>,
      } else {
      }
    } else {
    }
    %c3_i32 = arith.constant 3 : i32
    %23 = arith.cmpi eq, %arg0, %c3_i32 : i32
    %24 = arith.extui %23 : i1 to i32
    %c0_i32_9 = arith.constant 0 : i32
    %25 = arith.cmpi ne, %24, %c0_i32_9 : i32
    scf.if %25 {
      %32 = arith.index_cast %arg1 : i32 to index
      %c0_12 = arith.constant 0 : index
      %c0_13 = arith.constant 0 : index
      %33 = vector.load %arg42[%32, %c0_12, %c0_13] : memref<2x3x64xf32, #tpu.memory_space<vmem>>, vector<1x3x64xf32>
      %34 = vector.shape_cast %33 : vector<1x3x64xf32> to vector<3x64xf32>
      %35 = vector.extract_strided_slice %13 {offsets = [0, 0], sizes = [8, 1], strides = [1, 1]} : vector<8x3xf32> to vector<8x1xf32>
      %36 = vector.extract_strided_slice %34 {offsets = [0, 0], sizes = [1, 64], strides = [1, 1]} : vector<3x64xf32> to vector<1x64xf32>
      %37 = vector.broadcast %35 : vector<8x1xf32> to vector<8x64xf32>
      %38 = vector.broadcast %36 : vector<1x64xf32> to vector<8x64xf32>
      %39 = arith.mulf %37, %38 : vector<8x64xf32>
      %40 = vector.extract_strided_slice %13 {offsets = [0, 1], sizes = [8, 1], strides = [1, 1]} : vector<8x3xf32> to vector<8x1xf32>
      %41 = vector.extract_strided_slice %34 {offsets = [1, 0], sizes = [1, 64], strides = [1, 1]} : vector<3x64xf32> to vector<1x64xf32>
      %42 = vector.broadcast %40 : vector<8x1xf32> to vector<8x64xf32>
      %43 = vector.broadcast %41 : vector<1x64xf32> to vector<8x64xf32>
      %44 = arith.mulf %42, %43 : vector<8x64xf32>
      %45 = arith.addf %39, %44 : vector<8x64xf32>
      %46 = vector.extract_strided_slice %13 {offsets = [0, 2], sizes = [8, 1], strides = [1, 1]} : vector<8x3xf32> to vector<8x1xf32>
      %47 = vector.extract_strided_slice %34 {offsets = [2, 0], sizes = [1, 64], strides = [1, 1]} : vector<3x64xf32> to vector<1x64xf32>
      %48 = vector.broadcast %46 : vector<8x1xf32> to vector<8x64xf32>
      %49 = vector.broadcast %47 : vector<1x64xf32> to vector<8x64xf32>
      %50 = arith.mulf %48, %49 : vector<8x64xf32>
      %51 = arith.addf %45, %50 : vector<8x64xf32>
      %52 = arith.extui %2 : i1 to i32
      %c0_i32_14 = arith.constant 0 : i32
      %53 = arith.cmpi ne, %52, %c0_i32_14 : i32
      scf.if %53 {
        %cst_24 = arith.constant 0.000000e+00 : f32
        %66 = vector.broadcast %cst_24 : f32 to vector<16x64xf32>
        %c0_25 = arith.constant 0 : index
        %c0_26 = arith.constant 0 : index
        %67 = vector.load %arg35[%c0_25, %c0_26] : memref<16x64xf32, #tpu.memory_space<vmem>>, vector<16x64xf32>
        tpu.vector_store %arg35[%c0_25, %c0_26], %66 {strides = array<i32>} : memref<16x64xf32, #tpu.memory_space<vmem>>, vector<16x64xf32>,
      } else {
      }
      %54 = vector.shape_cast %51 : vector<8x64xf32> to vector<1x8x64xf32>
      %c0_15 = arith.constant 0 : index
      %c0_16 = arith.constant 0 : index
      %55 = vector.load %arg35[%c0_15, %c0_16] : memref<16x64xf32, #tpu.memory_space<vmem>>, vector<8x64xf32>
      %cst = arith.constant dense<0.000000e+00> : vector<8x64xf32>
      %56 = vector.multi_reduction <add>, %54, %cst [0] : vector<1x8x64xf32> to vector<8x64xf32>
      %57 = arith.addf %55, %56 : vector<8x64xf32>
      %c0_17 = arith.constant 0 : index
      %c0_18 = arith.constant 0 : index
      %58 = vector.load %arg35[%c0_17, %c0_18] : memref<16x64xf32, #tpu.memory_space<vmem>>, vector<8x64xf32>
      tpu.vector_store %arg35[%c0_17, %c0_18], %57 {strides = array<i32>} : memref<16x64xf32, #tpu.memory_space<vmem>>, vector<8x64xf32>,
      %c8 = arith.constant 8 : index
      %c0_19 = arith.constant 0 : index
      %59 = vector.load %arg35[%c8, %c0_19] : memref<16x64xf32, #tpu.memory_space<vmem>>, vector<8x64xf32>
      %60 = arith.mulf %54, %54 : vector<1x8x64xf32>
      %cst_20 = arith.constant dense<0.000000e+00> : vector<8x64xf32>
      %61 = vector.multi_reduction <add>, %60, %cst_20 [0] : vector<1x8x64xf32> to vector<8x64xf32>
      %62 = arith.addf %59, %61 : vector<8x64xf32>
      %c8_21 = arith.constant 8 : index
      %c0_22 = arith.constant 0 : index
      %63 = vector.load %arg35[%c8_21, %c0_22] : memref<16x64xf32, #tpu.memory_space<vmem>>, vector<8x64xf32>
      tpu.vector_store %arg35[%c8_21, %c0_22], %62 {strides = array<i32>} : memref<16x64xf32, #tpu.memory_space<vmem>>, vector<8x64xf32>,
      %64 = arith.extui %5 : i1 to i32
      %c0_i32_23 = arith.constant 0 : i32
      %65 = arith.cmpi ne, %64, %c0_i32_23 : i32
      scf.if %65 {
        %c0_24 = arith.constant 0 : index
        %c0_25 = arith.constant 0 : index
        %66 = vector.load %arg35[%c0_24, %c0_25] : memref<16x64xf32, #tpu.memory_space<vmem>>, vector<8x64xf32>
        %cst_26 = arith.constant dense<0.000000e+00> : vector<64xf32>
        %67 = vector.multi_reduction <add>, %66, %cst_26 [0] : vector<8x64xf32> to vector<64xf32>
        %68 = vector.shape_cast %67 : vector<64xf32> to vector<1x64xf32>
        %c8_27 = arith.constant 8 : index
        %c0_28 = arith.constant 0 : index
        %69 = vector.load %arg35[%c8_27, %c0_28] : memref<16x64xf32, #tpu.memory_space<vmem>>, vector<8x64xf32>
        %cst_29 = arith.constant dense<0.000000e+00> : vector<64xf32>
        %70 = vector.multi_reduction <add>, %69, %cst_29 [0] : vector<8x64xf32> to vector<64xf32>
        %71 = vector.shape_cast %70 : vector<64xf32> to vector<1x64xf32>
        %cst_30 = arith.constant 3.125000e-02 : f32
        %72 = vector.broadcast %cst_30 : f32 to vector<1x64xf32>
        %73 = arith.mulf %68, %72 : vector<1x64xf32>
        %cst_31 = arith.constant 3.125000e-02 : f32
        %74 = vector.broadcast %cst_31 : f32 to vector<1x64xf32>
        %75 = arith.mulf %71, %74 : vector<1x64xf32>
        %76 = arith.mulf %73, %73 : vector<1x64xf32>
        %77 = arith.subf %75, %76 : vector<1x64xf32>
        %cst_32 = arith.constant 0.000000e+00 : f32
        %78 = vector.broadcast %cst_32 : f32 to vector<1x64xf32>
        %79 = arith.maximumf %77, %78 : vector<1x64xf32>
        %c0_33 = arith.constant 0 : index
        %c0_34 = arith.constant 0 : index
        %80 = vector.load %arg22[%c0_33, %c0_34] : memref<1x64xf32, #tpu.memory_space<vmem>>, vector<1x64xf32>
        %cst_35 = arith.constant 9.99999974E-6 : f32
        %81 = vector.broadcast %cst_35 : f32 to vector<1x64xf32>
        %82 = arith.addf %79, %81 : vector<1x64xf32>
        %83 = math.rsqrt %82 : vector<1x64xf32>
        %84 = arith.mulf %80, %83 : vector<1x64xf32>
        %c0_36 = arith.constant 0 : index
        %c0_37 = arith.constant 0 : index
        %85 = vector.load %arg23[%c0_36, %c0_37] : memref<1x64xf32, #tpu.memory_space<vmem>>, vector<1x64xf32>
        %86 = arith.mulf %73, %84 : vector<1x64xf32>
        %87 = arith.subf %85, %86 : vector<1x64xf32>
        %c0_38 = arith.constant 0 : index
        %c0_39 = arith.constant 0 : index
        %88 = vector.load %arg35[%c0_38, %c0_39] : memref<16x64xf32, #tpu.memory_space<vmem>>, vector<1x64xf32>
        tpu.vector_store %arg35[%c0_38, %c0_39], %84 {strides = array<i32>} : memref<16x64xf32, #tpu.memory_space<vmem>>, vector<1x64xf32>,
        %c1 = arith.constant 1 : index
        %c0_40 = arith.constant 0 : index
        %89 = vector.load %arg35[%c1, %c0_40] : memref<16x64xf32, #tpu.memory_space<vmem>>, vector<1x64xf32>
        tpu.vector_store %arg35[%c1, %c0_40], %87 {strides = array<i32>} : memref<16x64xf32, #tpu.memory_space<vmem>>, vector<1x64xf32>,
      } else {
      }
    } else {
    }
    %c4_i32 = arith.constant 4 : i32
    %26 = arith.cmpi eq, %arg0, %c4_i32 : i32
    %27 = arith.extui %26 : i1 to i32
    %c0_i32_10 = arith.constant 0 : i32
    %28 = arith.cmpi ne, %27, %c0_i32_10 : i32
    scf.if %28 {
      %32 = arith.index_cast %arg1 : i32 to index
      %c0_12 = arith.constant 0 : index
      %c0_13 = arith.constant 0 : index
      %33 = vector.load %arg42[%32, %c0_12, %c0_13] : memref<2x3x64xf32, #tpu.memory_space<vmem>>, vector<1x3x64xf32>
      %34 = vector.shape_cast %33 : vector<1x3x64xf32> to vector<3x64xf32>
      %35 = vector.extract_strided_slice %13 {offsets = [0, 0], sizes = [8, 1], strides = [1, 1]} : vector<8x3xf32> to vector<8x1xf32>
      %36 = vector.extract_strided_slice %34 {offsets = [0, 0], sizes = [1, 64], strides = [1, 1]} : vector<3x64xf32> to vector<1x64xf32>
      %37 = vector.broadcast %35 : vector<8x1xf32> to vector<8x64xf32>
      %38 = vector.broadcast %36 : vector<1x64xf32> to vector<8x64xf32>
      %39 = arith.mulf %37, %38 : vector<8x64xf32>
      %40 = vector.extract_strided_slice %13 {offsets = [0, 1], sizes = [8, 1], strides = [1, 1]} : vector<8x3xf32> to vector<8x1xf32>
      %41 = vector.extract_strided_slice %34 {offsets = [1, 0], sizes = [1, 64], strides = [1, 1]} : vector<3x64xf32> to vector<1x64xf32>
      %42 = vector.broadcast %40 : vector<8x1xf32> to vector<8x64xf32>
      %43 = vector.broadcast %41 : vector<1x64xf32> to vector<8x64xf32>
      %44 = arith.mulf %42, %43 : vector<8x64xf32>
      %45 = arith.addf %39, %44 : vector<8x64xf32>
      %46 = vector.extract_strided_slice %13 {offsets = [0, 2], sizes = [8, 1], strides = [1, 1]} : vector<8x3xf32> to vector<8x1xf32>
      %47 = vector.extract_strided_slice %34 {offsets = [2, 0], sizes = [1, 64], strides = [1, 1]} : vector<3x64xf32> to vector<1x64xf32>
      %48 = vector.broadcast %46 : vector<8x1xf32> to vector<8x64xf32>
      %49 = vector.broadcast %47 : vector<1x64xf32> to vector<8x64xf32>
      %50 = arith.mulf %48, %49 : vector<8x64xf32>
      %51 = arith.addf %45, %50 : vector<8x64xf32>
      %c0_14 = arith.constant 0 : index
      %c0_15 = arith.constant 0 : index
      %52 = vector.load %arg35[%c0_14, %c0_15] : memref<16x64xf32, #tpu.memory_space<vmem>>, vector<1x64xf32>
      %53 = vector.broadcast %52 : vector<1x64xf32> to vector<8x64xf32>
      %54 = arith.mulf %51, %53 : vector<8x64xf32>
      %c1 = arith.constant 1 : index
      %c0_16 = arith.constant 0 : index
      %55 = vector.load %arg35[%c1, %c0_16] : memref<16x64xf32, #tpu.memory_space<vmem>>, vector<1x64xf32>
      %56 = vector.broadcast %55 : vector<1x64xf32> to vector<8x64xf32>
      %57 = arith.addf %54, %56 : vector<8x64xf32>
      %cst = arith.constant 0.000000e+00 : f32
      %58 = vector.broadcast %cst : f32 to vector<8x64xf32>
      %59 = arith.maximumf %57, %58 : vector<8x64xf32>
      %60 = arith.truncf %59 : vector<8x64xf32> to vector<8x64xbf16>
      %c0_17 = arith.constant 0 : index
      %c0_18 = arith.constant 0 : index
      %61 = vector.load %arg24[%c0_17, %c0_18] : memref<64x128xbf16, #tpu.memory_space<vmem>>, vector<64x128xbf16>
      %cst_19 = arith.constant dense<0.000000e+00> : vector<8x128xf32>
      %62 = tpu.matmul %60, %61, %cst_19 {dimension_numbers = #tpu.dot_dimension_numbers<[1], [0], [0], [1], [0, 0, 1, 1], [], []>} : vector<8x64xbf16>, vector<64x128xbf16>, vector<8x128xf32> -> vector<8x128xf32>
      %63 = arith.extui %2 : i1 to i32
      %c0_i32_20 = arith.constant 0 : i32
      %64 = arith.cmpi ne, %63, %c0_i32_20 : i32
      scf.if %64 {
        %cst_31 = arith.constant 0.000000e+00 : f32
        %77 = vector.broadcast %cst_31 : f32 to vector<16x128xf32>
        %c0_32 = arith.constant 0 : index
        %c0_33 = arith.constant 0 : index
        %78 = vector.load %arg36[%c0_32, %c0_33] : memref<16x128xf32, #tpu.memory_space<vmem>>, vector<16x128xf32>
        tpu.vector_store %arg36[%c0_32, %c0_33], %77 {strides = array<i32>} : memref<16x128xf32, #tpu.memory_space<vmem>>, vector<16x128xf32>,
      } else {
      }
      %65 = vector.shape_cast %62 : vector<8x128xf32> to vector<1x8x128xf32>
      %c0_21 = arith.constant 0 : index
      %c0_22 = arith.constant 0 : index
      %66 = vector.load %arg36[%c0_21, %c0_22] : memref<16x128xf32, #tpu.memory_space<vmem>>, vector<8x128xf32>
      %cst_23 = arith.constant dense<0.000000e+00> : vector<8x128xf32>
      %67 = vector.multi_reduction <add>, %65, %cst_23 [0] : vector<1x8x128xf32> to vector<8x128xf32>
      %68 = arith.addf %66, %67 : vector<8x128xf32>
      %c0_24 = arith.constant 0 : index
      %c0_25 = arith.constant 0 : index
      %69 = vector.load %arg36[%c0_24, %c0_25] : memref<16x128xf32, #tpu.memory_space<vmem>>, vector<8x128xf32>
      tpu.vector_store %arg36[%c0_24, %c0_25], %68 {strides = array<i32>} : memref<16x128xf32, #tpu.memory_space<vmem>>, vector<8x128xf32>,
      %c8 = arith.constant 8 : index
      %c0_26 = arith.constant 0 : index
      %70 = vector.load %arg36[%c8, %c0_26] : memref<16x128xf32, #tpu.memory_space<vmem>>, vector<8x128xf32>
      %71 = arith.mulf %65, %65 : vector<1x8x128xf32>
      %cst_27 = arith.constant dense<0.000000e+00> : vector<8x128xf32>
      %72 = vector.multi_reduction <add>, %71, %cst_27 [0] : vector<1x8x128xf32> to vector<8x128xf32>
      %73 = arith.addf %70, %72 : vector<8x128xf32>
      %c8_28 = arith.constant 8 : index
      %c0_29 = arith.constant 0 : index
      %74 = vector.load %arg36[%c8_28, %c0_29] : memref<16x128xf32, #tpu.memory_space<vmem>>, vector<8x128xf32>
      tpu.vector_store %arg36[%c8_28, %c0_29], %73 {strides = array<i32>} : memref<16x128xf32, #tpu.memory_space<vmem>>, vector<8x128xf32>,
      %75 = arith.extui %5 : i1 to i32
      %c0_i32_30 = arith.constant 0 : i32
      %76 = arith.cmpi ne, %75, %c0_i32_30 : i32
      scf.if %76 {
        %c0_31 = arith.constant 0 : index
        %c0_32 = arith.constant 0 : index
        %77 = vector.load %arg36[%c0_31, %c0_32] : memref<16x128xf32, #tpu.memory_space<vmem>>, vector<8x128xf32>
        %cst_33 = arith.constant dense<0.000000e+00> : vector<128xf32>
        %78 = vector.multi_reduction <add>, %77, %cst_33 [0] : vector<8x128xf32> to vector<128xf32>
        %79 = vector.shape_cast %78 : vector<128xf32> to vector<1x128xf32>
        %c8_34 = arith.constant 8 : index
        %c0_35 = arith.constant 0 : index
        %80 = vector.load %arg36[%c8_34, %c0_35] : memref<16x128xf32, #tpu.memory_space<vmem>>, vector<8x128xf32>
        %cst_36 = arith.constant dense<0.000000e+00> : vector<128xf32>
        %81 = vector.multi_reduction <add>, %80, %cst_36 [0] : vector<8x128xf32> to vector<128xf32>
        %82 = vector.shape_cast %81 : vector<128xf32> to vector<1x128xf32>
        %cst_37 = arith.constant 3.125000e-02 : f32
        %83 = vector.broadcast %cst_37 : f32 to vector<1x128xf32>
        %84 = arith.mulf %79, %83 : vector<1x128xf32>
        %cst_38 = arith.constant 3.125000e-02 : f32
        %85 = vector.broadcast %cst_38 : f32 to vector<1x128xf32>
        %86 = arith.mulf %82, %85 : vector<1x128xf32>
        %87 = arith.mulf %84, %84 : vector<1x128xf32>
        %88 = arith.subf %86, %87 : vector<1x128xf32>
        %cst_39 = arith.constant 0.000000e+00 : f32
        %89 = vector.broadcast %cst_39 : f32 to vector<1x128xf32>
        %90 = arith.maximumf %88, %89 : vector<1x128xf32>
        %c0_40 = arith.constant 0 : index
        %c0_41 = arith.constant 0 : index
        %91 = vector.load %arg25[%c0_40, %c0_41] : memref<1x128xf32, #tpu.memory_space<vmem>>, vector<1x128xf32>
        %cst_42 = arith.constant 9.99999974E-6 : f32
        %92 = vector.broadcast %cst_42 : f32 to vector<1x128xf32>
        %93 = arith.addf %90, %92 : vector<1x128xf32>
        %94 = math.rsqrt %93 : vector<1x128xf32>
        %95 = arith.mulf %91, %94 : vector<1x128xf32>
        %c0_43 = arith.constant 0 : index
        %c0_44 = arith.constant 0 : index
        %96 = vector.load %arg26[%c0_43, %c0_44] : memref<1x128xf32, #tpu.memory_space<vmem>>, vector<1x128xf32>
        %97 = arith.mulf %84, %95 : vector<1x128xf32>
        %98 = arith.subf %96, %97 : vector<1x128xf32>
        %c0_45 = arith.constant 0 : index
        %c0_46 = arith.constant 0 : index
        %99 = vector.load %arg36[%c0_45, %c0_46] : memref<16x128xf32, #tpu.memory_space<vmem>>, vector<1x128xf32>
        tpu.vector_store %arg36[%c0_45, %c0_46], %95 {strides = array<i32>} : memref<16x128xf32, #tpu.memory_space<vmem>>, vector<1x128xf32>,
        %c1_47 = arith.constant 1 : index
        %c0_48 = arith.constant 0 : index
        %100 = vector.load %arg36[%c1_47, %c0_48] : memref<16x128xf32, #tpu.memory_space<vmem>>, vector<1x128xf32>
        tpu.vector_store %arg36[%c1_47, %c0_48], %98 {strides = array<i32>} : memref<16x128xf32, #tpu.memory_space<vmem>>, vector<1x128xf32>,
      } else {
      }
    } else {
    }
    %c5_i32 = arith.constant 5 : i32
    %29 = arith.cmpi eq, %arg0, %c5_i32 : i32
    %30 = arith.extui %29 : i1 to i32
    %c0_i32_11 = arith.constant 0 : i32
    %31 = arith.cmpi ne, %30, %c0_i32_11 : i32
    scf.if %31 {
      %32 = arith.index_cast %arg1 : i32 to index
      %c0_12 = arith.constant 0 : index
      %c0_13 = arith.constant 0 : index
      %33 = vector.load %arg42[%32, %c0_12, %c0_13] : memref<2x3x64xf32, #tpu.memory_space<vmem>>, vector<1x3x64xf32>
      %34 = vector.shape_cast %33 : vector<1x3x64xf32> to vector<3x64xf32>
      %35 = vector.extract_strided_slice %13 {offsets = [0, 0], sizes = [8, 1], strides = [1, 1]} : vector<8x3xf32> to vector<8x1xf32>
      %36 = vector.extract_strided_slice %34 {offsets = [0, 0], sizes = [1, 64], strides = [1, 1]} : vector<3x64xf32> to vector<1x64xf32>
      %37 = vector.broadcast %35 : vector<8x1xf32> to vector<8x64xf32>
      %38 = vector.broadcast %36 : vector<1x64xf32> to vector<8x64xf32>
      %39 = arith.mulf %37, %38 : vector<8x64xf32>
      %40 = vector.extract_strided_slice %13 {offsets = [0, 1], sizes = [8, 1], strides = [1, 1]} : vector<8x3xf32> to vector<8x1xf32>
      %41 = vector.extract_strided_slice %34 {offsets = [1, 0], sizes = [1, 64], strides = [1, 1]} : vector<3x64xf32> to vector<1x64xf32>
      %42 = vector.broadcast %40 : vector<8x1xf32> to vector<8x64xf32>
      %43 = vector.broadcast %41 : vector<1x64xf32> to vector<8x64xf32>
      %44 = arith.mulf %42, %43 : vector<8x64xf32>
      %45 = arith.addf %39, %44 : vector<8x64xf32>
      %46 = vector.extract_strided_slice %13 {offsets = [0, 2], sizes = [8, 1], strides = [1, 1]} : vector<8x3xf32> to vector<8x1xf32>
      %47 = vector.extract_strided_slice %34 {offsets = [2, 0], sizes = [1, 64], strides = [1, 1]} : vector<3x64xf32> to vector<1x64xf32>
      %48 = vector.broadcast %46 : vector<8x1xf32> to vector<8x64xf32>
      %49 = vector.broadcast %47 : vector<1x64xf32> to vector<8x64xf32>
      %50 = arith.mulf %48, %49 : vector<8x64xf32>
      %51 = arith.addf %45, %50 : vector<8x64xf32>
      %c0_14 = arith.constant 0 : index
      %c0_15 = arith.constant 0 : index
      %52 = vector.load %arg35[%c0_14, %c0_15] : memref<16x64xf32, #tpu.memory_space<vmem>>, vector<1x64xf32>
      %53 = vector.broadcast %52 : vector<1x64xf32> to vector<8x64xf32>
      %54 = arith.mulf %51, %53 : vector<8x64xf32>
      %c1 = arith.constant 1 : index
      %c0_16 = arith.constant 0 : index
      %55 = vector.load %arg35[%c1, %c0_16] : memref<16x64xf32, #tpu.memory_space<vmem>>, vector<1x64xf32>
      %56 = vector.broadcast %55 : vector<1x64xf32> to vector<8x64xf32>
      %57 = arith.addf %54, %56 : vector<8x64xf32>
      %cst = arith.constant 0.000000e+00 : f32
      %58 = vector.broadcast %cst : f32 to vector<8x64xf32>
      %59 = arith.maximumf %57, %58 : vector<8x64xf32>
      %60 = arith.truncf %59 : vector<8x64xf32> to vector<8x64xbf16>
      %c0_17 = arith.constant 0 : index
      %c0_18 = arith.constant 0 : index
      %61 = vector.load %arg24[%c0_17, %c0_18] : memref<64x128xbf16, #tpu.memory_space<vmem>>, vector<64x128xbf16>
      %cst_19 = arith.constant dense<0.000000e+00> : vector<8x128xf32>
      %62 = tpu.matmul %60, %61, %cst_19 {dimension_numbers = #tpu.dot_dimension_numbers<[1], [0], [0], [1], [0, 0, 1, 1], [], []>} : vector<8x64xbf16>, vector<64x128xbf16>, vector<8x128xf32> -> vector<8x128xf32>
      %c0_20 = arith.constant 0 : index
      %c0_21 = arith.constant 0 : index
      %63 = vector.load %arg36[%c0_20, %c0_21] : memref<16x128xf32, #tpu.memory_space<vmem>>, vector<1x128xf32>
      %64 = vector.broadcast %63 : vector<1x128xf32> to vector<8x128xf32>
      %65 = arith.mulf %62, %64 : vector<8x128xf32>
      %c1_22 = arith.constant 1 : index
      %c0_23 = arith.constant 0 : index
      %66 = vector.load %arg36[%c1_22, %c0_23] : memref<16x128xf32, #tpu.memory_space<vmem>>, vector<1x128xf32>
      %67 = vector.broadcast %66 : vector<1x128xf32> to vector<8x128xf32>
      %68 = arith.addf %65, %67 : vector<8x128xf32>
      %cst_24 = arith.constant 0.000000e+00 : f32
      %69 = vector.broadcast %cst_24 : f32 to vector<8x128xf32>
      %70 = arith.maximumf %68, %69 : vector<8x128xf32>
      %71 = arith.truncf %70 : vector<8x128xf32> to vector<8x128xbf16>
      %c0_25 = arith.constant 0 : index
      %c0_26 = arith.constant 0 : index
      %72 = vector.load %arg27[%c0_25, %c0_26] : memref<128x1024xbf16, #tpu.memory_space<vmem>>, vector<128x1024xbf16>
      %cst_27 = arith.constant dense<0.000000e+00> : vector<8x1024xf32>
      %73 = tpu.matmul %71, %72, %cst_27 {dimension_numbers = #tpu.dot_dimension_numbers<[1], [0], [0], [1], [0, 0, 1, 1], [], []>} : vector<8x128xbf16>, vector<128x1024xbf16>, vector<8x1024xf32> -> vector<8x1024xf32>
      %74 = arith.extui %2 : i1 to i32
      %c0_i32_28 = arith.constant 0 : i32
      %75 = arith.cmpi ne, %74, %c0_i32_28 : i32
      scf.if %75 {
        %cst_51 = arith.constant 0.000000e+00 : f32
        %101 = vector.broadcast %cst_51 : f32 to vector<16x1024xf32>
        %c0_52 = arith.constant 0 : index
        %c0_53 = arith.constant 0 : index
        %102 = vector.load %arg37[%c0_52, %c0_53] : memref<16x1024xf32, #tpu.memory_space<vmem>>, vector<16x1024xf32>
        tpu.vector_store %arg37[%c0_52, %c0_53], %101 {strides = array<i32>} : memref<16x1024xf32, #tpu.memory_space<vmem>>, vector<16x1024xf32>,
      } else {
      }
      %76 = vector.shape_cast %73 : vector<8x1024xf32> to vector<1x8x1024xf32>
      %c0_29 = arith.constant 0 : index
      %c0_30 = arith.constant 0 : index
      %77 = vector.load %arg37[%c0_29, %c0_30] : memref<16x1024xf32, #tpu.memory_space<vmem>>, vector<8x1024xf32>
      %cst_31 = arith.constant dense<0.000000e+00> : vector<8x1024xf32>
      %78 = vector.multi_reduction <add>, %76, %cst_31 [0] : vector<1x8x1024xf32> to vector<8x1024xf32>
      %79 = arith.addf %77, %78 : vector<8x1024xf32>
      %c0_32 = arith.constant 0 : index
      %c0_33 = arith.constant 0 : index
      %80 = vector.load %arg37[%c0_32, %c0_33] : memref<16x1024xf32, #tpu.memory_space<vmem>>, vector<8x1024xf32>
      tpu.vector_store %arg37[%c0_32, %c0_33], %79 {strides = array<i32>} : memref<16x1024xf32, #tpu.memory_space<vmem>>, vector<8x1024xf32>,
      %c8 = arith.constant 8 : index
      %c0_34 = arith.constant 0 : index
      %81 = vector.load %arg37[%c8, %c0_34] : memref<16x1024xf32, #tpu.memory_space<vmem>>, vector<8x1024xf32>
      %82 = arith.mulf %76, %76 : vector<1x8x1024xf32>
      %cst_35 = arith.constant dense<0.000000e+00> : vector<8x1024xf32>
      %83 = vector.multi_reduction <add>, %82, %cst_35 [0] : vector<1x8x1024xf32> to vector<8x1024xf32>
      %84 = arith.addf %81, %83 : vector<8x1024xf32>
      %c8_36 = arith.constant 8 : index
      %c0_37 = arith.constant 0 : index
      %85 = vector.load %arg37[%c8_36, %c0_37] : memref<16x1024xf32, #tpu.memory_space<vmem>>, vector<8x1024xf32>
      tpu.vector_store %arg37[%c8_36, %c0_37], %84 {strides = array<i32>} : memref<16x1024xf32, #tpu.memory_space<vmem>>, vector<8x1024xf32>,
      %86 = arith.extui %6 : i1 to i32
      %c0_i32_38 = arith.constant 0 : i32
      %87 = arith.cmpi ne, %86, %c0_i32_38 : i32
      scf.if %87 {
        %cst_51 = arith.constant 0xFF800000 : f32
        %101 = vector.broadcast %cst_51 : f32 to vector<8x1024xf32>
        %c0_52 = arith.constant 0 : index
        %c0_53 = arith.constant 0 : index
        %102 = vector.load %arg38[%c0_52, %c0_53] : memref<8x1024xf32, #tpu.memory_space<vmem>>, vector<8x1024xf32>
        tpu.vector_store %arg38[%c0_52, %c0_53], %101 {strides = array<i32>} : memref<8x1024xf32, #tpu.memory_space<vmem>>, vector<8x1024xf32>,
        %cst_54 = arith.constant 0x7F800000 : f32
        %103 = vector.broadcast %cst_54 : f32 to vector<8x1024xf32>
        %c0_55 = arith.constant 0 : index
        %c0_56 = arith.constant 0 : index
        %104 = vector.load %arg39[%c0_55, %c0_56] : memref<8x1024xf32, #tpu.memory_space<vmem>>, vector<8x1024xf32>
        tpu.vector_store %arg39[%c0_55, %c0_56], %103 {strides = array<i32>} : memref<8x1024xf32, #tpu.memory_space<vmem>>, vector<8x1024xf32>,
      } else {
      }
      %88 = vector.shape_cast %73 : vector<8x1024xf32> to vector<1x8x1024xf32>
      %c0_39 = arith.constant 0 : index
      %c0_40 = arith.constant 0 : index
      %89 = vector.load %arg38[%c0_39, %c0_40] : memref<8x1024xf32, #tpu.memory_space<vmem>>, vector<8x1024xf32>
      %cst_41 = arith.constant dense<0xFF800000> : vector<8x1024xf32>
      %90 = vector.multi_reduction <maximumf>, %88, %cst_41 [0] : vector<1x8x1024xf32> to vector<8x1024xf32>
      %91 = arith.maximumf %89, %90 : vector<8x1024xf32>
      %c0_42 = arith.constant 0 : index
      %c0_43 = arith.constant 0 : index
      %92 = vector.load %arg38[%c0_42, %c0_43] : memref<8x1024xf32, #tpu.memory_space<vmem>>, vector<8x1024xf32>
      tpu.vector_store %arg38[%c0_42, %c0_43], %91 {strides = array<i32>} : memref<8x1024xf32, #tpu.memory_space<vmem>>, vector<8x1024xf32>,
      %c0_44 = arith.constant 0 : index
      %c0_45 = arith.constant 0 : index
      %93 = vector.load %arg39[%c0_44, %c0_45] : memref<8x1024xf32, #tpu.memory_space<vmem>>, vector<8x1024xf32>
      %cst_46 = arith.constant dense<0x7F800000> : vector<8x1024xf32>
      %94 = vector.multi_reduction <minimumf>, %88, %cst_46 [0] : vector<1x8x1024xf32> to vector<8x1024xf32>
      %95 = arith.minimumf %93, %94 : vector<8x1024xf32>
      %c0_47 = arith.constant 0 : index
      %c0_48 = arith.constant 0 : index
      %96 = vector.load %arg39[%c0_47, %c0_48] : memref<8x1024xf32, #tpu.memory_space<vmem>>, vector<8x1024xf32>
      tpu.vector_store %arg39[%c0_47, %c0_48], %95 {strides = array<i32>} : memref<8x1024xf32, #tpu.memory_space<vmem>>, vector<8x1024xf32>,
      %97 = arith.extui %7 : i1 to i32
      %c0_i32_49 = arith.constant 0 : i32
      %98 = arith.cmpi ne, %97, %c0_i32_49 : i32
      scf.if %98 {
        %c0_51 = arith.constant 0 : index
        %c0_52 = arith.constant 0 : index
        %101 = vector.load %arg38[%c0_51, %c0_52] : memref<8x1024xf32, #tpu.memory_space<vmem>>, vector<8x1024xf32>
        %cst_53 = arith.constant dense<0xFF800000> : vector<1024xf32>
        %102 = vector.multi_reduction <maximumf>, %101, %cst_53 [0] : vector<8x1024xf32> to vector<1024xf32>
        %103 = vector.shape_cast %102 : vector<1024xf32> to vector<1x1024xf32>
        %104 = arith.index_cast %arg1 : i32 to index
        %c0_54 = arith.constant 0 : index
        %105 = vector.load %arg40[%104, %c0_54] : memref<2x1024xf32, #tpu.memory_space<vmem>>, vector<1x1024xf32>
        tpu.vector_store %arg40[%104, %c0_54], %103 {strides = array<i32>} : memref<2x1024xf32, #tpu.memory_space<vmem>>, vector<1x1024xf32>,
        %c0_55 = arith.constant 0 : index
        %c0_56 = arith.constant 0 : index
        %106 = vector.load %arg39[%c0_55, %c0_56] : memref<8x1024xf32, #tpu.memory_space<vmem>>, vector<8x1024xf32>
        %cst_57 = arith.constant dense<0x7F800000> : vector<1024xf32>
        %107 = vector.multi_reduction <minimumf>, %106, %cst_57 [0] : vector<8x1024xf32> to vector<1024xf32>
        %108 = vector.shape_cast %107 : vector<1024xf32> to vector<1x1024xf32>
        %109 = arith.index_cast %arg1 : i32 to index
        %c0_58 = arith.constant 0 : index
        %110 = vector.load %arg41[%109, %c0_58] : memref<2x1024xf32, #tpu.memory_space<vmem>>, vector<1x1024xf32>
        tpu.vector_store %arg41[%109, %c0_58], %108 {strides = array<i32>} : memref<2x1024xf32, #tpu.memory_space<vmem>>, vector<1x1024xf32>,
      } else {
      }
      %99 = arith.extui %5 : i1 to i32
      %c0_i32_50 = arith.constant 0 : i32
      %100 = arith.cmpi ne, %99, %c0_i32_50 : i32
      scf.if %100 {
        %c0_51 = arith.constant 0 : index
        %c0_52 = arith.constant 0 : index
        %101 = vector.load %arg37[%c0_51, %c0_52] : memref<16x1024xf32, #tpu.memory_space<vmem>>, vector<8x1024xf32>
        %cst_53 = arith.constant dense<0.000000e+00> : vector<1024xf32>
        %102 = vector.multi_reduction <add>, %101, %cst_53 [0] : vector<8x1024xf32> to vector<1024xf32>
        %103 = vector.shape_cast %102 : vector<1024xf32> to vector<1x1024xf32>
        %c8_54 = arith.constant 8 : index
        %c0_55 = arith.constant 0 : index
        %104 = vector.load %arg37[%c8_54, %c0_55] : memref<16x1024xf32, #tpu.memory_space<vmem>>, vector<8x1024xf32>
        %cst_56 = arith.constant dense<0.000000e+00> : vector<1024xf32>
        %105 = vector.multi_reduction <add>, %104, %cst_56 [0] : vector<8x1024xf32> to vector<1024xf32>
        %106 = vector.shape_cast %105 : vector<1024xf32> to vector<1x1024xf32>
        %cst_57 = arith.constant 3.125000e-02 : f32
        %107 = vector.broadcast %cst_57 : f32 to vector<1x1024xf32>
        %108 = arith.mulf %103, %107 : vector<1x1024xf32>
        %cst_58 = arith.constant 3.125000e-02 : f32
        %109 = vector.broadcast %cst_58 : f32 to vector<1x1024xf32>
        %110 = arith.mulf %106, %109 : vector<1x1024xf32>
        %111 = arith.mulf %108, %108 : vector<1x1024xf32>
        %112 = arith.subf %110, %111 : vector<1x1024xf32>
        %cst_59 = arith.constant 0.000000e+00 : f32
        %113 = vector.broadcast %cst_59 : f32 to vector<1x1024xf32>
        %114 = arith.maximumf %112, %113 : vector<1x1024xf32>
        %c0_60 = arith.constant 0 : index
        %c0_61 = arith.constant 0 : index
        %115 = vector.load %arg28[%c0_60, %c0_61] : memref<1x1024xf32, #tpu.memory_space<vmem>>, vector<1x1024xf32>
        %cst_62 = arith.constant 9.99999974E-6 : f32
        %116 = vector.broadcast %cst_62 : f32 to vector<1x1024xf32>
        %117 = arith.addf %114, %116 : vector<1x1024xf32>
        %118 = math.rsqrt %117 : vector<1x1024xf32>
        %119 = arith.mulf %115, %118 : vector<1x1024xf32>
        %c0_63 = arith.constant 0 : index
        %c0_64 = arith.constant 0 : index
        %120 = vector.load %arg29[%c0_63, %c0_64] : memref<1x1024xf32, #tpu.memory_space<vmem>>, vector<1x1024xf32>
        %121 = arith.mulf %108, %119 : vector<1x1024xf32>
        %122 = arith.subf %120, %121 : vector<1x1024xf32>
        %c0_65 = arith.constant 0 : index
        %c0_66 = arith.constant 0 : index
        %123 = vector.load %arg37[%c0_65, %c0_66] : memref<16x1024xf32, #tpu.memory_space<vmem>>, vector<1x1024xf32>
        tpu.vector_store %arg37[%c0_65, %c0_66], %119 {strides = array<i32>} : memref<16x1024xf32, #tpu.memory_space<vmem>>, vector<1x1024xf32>,
        %c1_67 = arith.constant 1 : index
        %c0_68 = arith.constant 0 : index
        %124 = vector.load %arg37[%c1_67, %c0_68] : memref<16x1024xf32, #tpu.memory_space<vmem>>, vector<1x1024xf32>
        tpu.vector_store %arg37[%c1_67, %c0_68], %122 {strides = array<i32>} : memref<16x1024xf32, #tpu.memory_space<vmem>>, vector<1x1024xf32>,
        %cst_69 = arith.constant 0.000000e+00 : f32
        %125 = vector.broadcast %cst_69 : f32 to vector<1x1024xf32>
        %126 = arith.cmpf ogt, %119, %125 : vector<1x1024xf32>
        %c0_70 = arith.constant 0 : index
        %c0_71 = arith.constant 0 : index
        %127 = vector.load %arg40[%c0_70, %c0_71] : memref<2x1024xf32, #tpu.memory_space<vmem>>, vector<2x1024xf32>
        %c0_72 = arith.constant 0 : index
        %c0_73 = arith.constant 0 : index
        %128 = vector.load %arg41[%c0_72, %c0_73] : memref<2x1024xf32, #tpu.memory_space<vmem>>, vector<2x1024xf32>
        %129 = vector.shape_cast %126 : vector<1x1024xi1> to vector<1x1024xi1>
        %130 = vector.broadcast %129 : vector<1x1024xi1> to vector<2x1024xi1>
        %131 = arith.select %130, %127, %128 : vector<2x1024xi1>, vector<2x1024xf32>
        %132 = vector.broadcast %119 : vector<1x1024xf32> to vector<2x1024xf32>
        %133 = arith.mulf %131, %132 : vector<2x1024xf32>
        %134 = vector.broadcast %122 : vector<1x1024xf32> to vector<2x1024xf32>
        %135 = arith.addf %133, %134 : vector<2x1024xf32>
        %c0_74 = arith.constant 0 : index
        %c0_75 = arith.constant 0 : index
        %136 = vector.load %arg30[%c0_74, %c0_75] : memref<2x1024xf32, #tpu.memory_space<vmem>>, vector<2x1024xf32>
        tpu.vector_store %arg30[%c0_74, %c0_75], %135 {strides = array<i32>} : memref<2x1024xf32, #tpu.memory_space<vmem>>, vector<2x1024xf32>,
      } else {
      }
    } else {
    }
    return
  }
  func.func @transform_0(%arg0: i32, %arg1: i32, %arg2: i32) -> (i32, i32) {
    %c0_i32 = arith.constant 0 : i32
    %c0_i32_0 = arith.constant 0 : i32
    %c0_i32_1 = arith.constant 0 : i32
    return %c0_i32, %c0_i32_0 : i32, i32
  }
  func.func @transform_1(%arg0: i32, %arg1: i32, %arg2: i32) -> (i32, i32) {
    %c0_i32 = arith.constant 0 : i32
    %c0_i32_0 = arith.constant 0 : i32
    %c0_i32_1 = arith.constant 0 : i32
    return %c0_i32, %c0_i32_0 : i32, i32
  }
  func.func @transform_2(%arg0: i32, %arg1: i32, %arg2: i32) -> (i32, i32) {
    %c0_i32 = arith.constant 0 : i32
    %c0_i32_0 = arith.constant 0 : i32
    %c0_i32_1 = arith.constant 0 : i32
    return %c0_i32, %c0_i32_0 : i32, i32
  }
  func.func @transform_3(%arg0: i32, %arg1: i32, %arg2: i32) -> (i32, i32) {
    %c0_i32 = arith.constant 0 : i32
    %c0_i32_0 = arith.constant 0 : i32
    %c0_i32_1 = arith.constant 0 : i32
    return %c0_i32, %c0_i32_0 : i32, i32
  }
  func.func @transform_4(%arg0: i32, %arg1: i32, %arg2: i32) -> (i32, i32) {
    %c0_i32 = arith.constant 0 : i32
    %c0_i32_0 = arith.constant 0 : i32
    %c0_i32_1 = arith.constant 0 : i32
    return %c0_i32, %c0_i32_0 : i32, i32
  }
  func.func @transform_5(%arg0: i32, %arg1: i32, %arg2: i32) -> (i32, i32) {
    %c0_i32 = arith.constant 0 : i32
    %c0_i32_0 = arith.constant 0 : i32
    %c0_i32_1 = arith.constant 0 : i32
    return %c0_i32, %c0_i32_0 : i32, i32
  }
  func.func @transform_6(%arg0: i32, %arg1: i32, %arg2: i32) -> (i32, i32) {
    %c0_i32 = arith.constant 0 : i32
    %c0_i32_0 = arith.constant 0 : i32
    %c0_i32_1 = arith.constant 0 : i32
    return %c0_i32, %c0_i32_0 : i32, i32
  }
  func.func @transform_7(%arg0: i32, %arg1: i32, %arg2: i32) -> (i32, i32) {
    %c0_i32 = arith.constant 0 : i32
    %c0_i32_0 = arith.constant 0 : i32
    %c0_i32_1 = arith.constant 0 : i32
    return %c0_i32, %c0_i32_0 : i32, i32
  }
  func.func @transform_8(%arg0: i32, %arg1: i32, %arg2: i32) -> (i32, i32) {
    %c0_i32 = arith.constant 0 : i32
    %c0_i32_0 = arith.constant 0 : i32
    %c0_i32_1 = arith.constant 0 : i32
    return %c0_i32, %c0_i32_0 : i32, i32
  }
  func.func @transform_9(%arg0: i32, %arg1: i32, %arg2: i32) -> (i32, i32) {
    %c0_i32 = arith.constant 0 : i32
    %c0_i32_0 = arith.constant 0 : i32
    %c0_i32_1 = arith.constant 0 : i32
    return %c0_i32, %c0_i32_0 : i32, i32
  }
  func.func @transform_10(%arg0: i32, %arg1: i32, %arg2: i32) -> (i32, i32) {
    %c0_i32 = arith.constant 0 : i32
    %c0_i32_0 = arith.constant 0 : i32
    %c0_i32_1 = arith.constant 0 : i32
    return %c0_i32, %c0_i32_0 : i32, i32
  }
  func.func @transform_11(%arg0: i32, %arg1: i32, %arg2: i32) -> (i32, i32) {
    %c0_i32 = arith.constant 0 : i32
    %c0_i32_0 = arith.constant 0 : i32
    %c0_i32_1 = arith.constant 0 : i32
    return %c0_i32, %c0_i32_0 : i32, i32
  }
  func.func @transform_12(%arg0: i32, %arg1: i32, %arg2: i32) -> (i32, i32) {
    %c0_i32 = arith.constant 0 : i32
    %c0_i32_0 = arith.constant 0 : i32
    %c0_i32_1 = arith.constant 0 : i32
    return %c0_i32, %c0_i32_0 : i32, i32
  }
  func.func @transform_13(%arg0: i32, %arg1: i32, %arg2: i32) -> (i32, i32) {
    %c0_i32 = arith.constant 0 : i32
    %c0_i32_0 = arith.constant 0 : i32
    %c0_i32_1 = arith.constant 0 : i32
    return %c0_i32, %c0_i32_0 : i32, i32
  }
  func.func @transform_14(%arg0: i32, %arg1: i32, %arg2: i32) -> (i32, i32) {
    %c0_i32 = arith.constant 0 : i32
    %c0_i32_0 = arith.constant 0 : i32
    %c0_i32_1 = arith.constant 0 : i32
    return %c0_i32, %c0_i32_0 : i32, i32
  }
  func.func @transform_15(%arg0: i32, %arg1: i32, %arg2: i32) -> (i32, i32) {
    %c0_i32 = arith.constant 0 : i32
    %c0_i32_0 = arith.constant 0 : i32
    %c0_i32_1 = arith.constant 0 : i32
    return %c0_i32, %c0_i32_0 : i32, i32
  }
  func.func @transform_16(%arg0: i32, %arg1: i32, %arg2: i32) -> (i32, i32) {
    %c0_i32 = arith.constant 0 : i32
    %c0_i32_0 = arith.constant 0 : i32
    %c0_i32_1 = arith.constant 0 : i32
    return %c0_i32, %c0_i32_0 : i32, i32
  }
  func.func @transform_17(%arg0: i32, %arg1: i32, %arg2: i32) -> (i32, i32) {
    %c0_i32 = arith.constant 0 : i32
    %c0_i32_0 = arith.constant 0 : i32
    %c0_i32_1 = arith.constant 0 : i32
    return %c0_i32, %c0_i32_0 : i32, i32
  }
  func.func @transform_18(%arg0: i32, %arg1: i32, %arg2: i32) -> (i32, i32) {
    %c0_i32 = arith.constant 0 : i32
    %c0_i32_0 = arith.constant 0 : i32
    %c0_i32_1 = arith.constant 0 : i32
    return %c0_i32, %c0_i32_0 : i32, i32
  }
  func.func @transform_19(%arg0: i32, %arg1: i32, %arg2: i32) -> (i32, i32) {
    %c0_i32 = arith.constant 0 : i32
    %c0_i32_0 = arith.constant 0 : i32
    %c0_i32_1 = arith.constant 0 : i32
    return %c0_i32, %c0_i32_0 : i32, i32
  }
  func.func @transform_20(%arg0: i32, %arg1: i32, %arg2: i32) -> (i32, i32) {
    %c0_i32 = arith.constant 0 : i32
    %c0_i32_0 = arith.constant 0 : i32
    %c0_i32_1 = arith.constant 0 : i32
    return %c0_i32, %c0_i32_0 : i32, i32
  }
  func.func @transform_21(%arg0: i32, %arg1: i32, %arg2: i32) -> (i32, i32) {
    %c0_i32 = arith.constant 0 : i32
    %c0_i32_0 = arith.constant 0 : i32
    %c0_i32_1 = arith.constant 0 : i32
    return %c0_i32, %c0_i32_0 : i32, i32
  }
  func.func @transform_22(%arg0: i32, %arg1: i32, %arg2: i32) -> (i32, i32) {
    %c0_i32 = arith.constant 0 : i32
    %c0_i32_0 = arith.constant 0 : i32
    %c0_i32_1 = arith.constant 0 : i32
    return %c0_i32, %c0_i32_0 : i32, i32
  }
  func.func @transform_23(%arg0: i32, %arg1: i32, %arg2: i32) -> (i32, i32) {
    %c0_i32 = arith.constant 0 : i32
    %c0_i32_0 = arith.constant 0 : i32
    %c0_i32_1 = arith.constant 0 : i32
    return %c0_i32, %c0_i32_0 : i32, i32
  }
  func.func @transform_24(%arg0: i32, %arg1: i32, %arg2: i32) -> (i32, i32) {
    %c0_i32 = arith.constant 0 : i32
    %c0_i32_0 = arith.constant 0 : i32
    %c0_i32_1 = arith.constant 0 : i32
    return %c0_i32, %c0_i32_0 : i32, i32
  }
  func.func @transform_25(%arg0: i32, %arg1: i32, %arg2: i32) -> (i32, i32) {
    %c0_i32 = arith.constant 0 : i32
    %c0_i32_0 = arith.constant 0 : i32
    %c0_i32_1 = arith.constant 0 : i32
    return %c0_i32, %c0_i32_0 : i32, i32
  }
  func.func @transform_26(%arg0: i32, %arg1: i32, %arg2: i32) -> (i32, i32) {
    %c0_i32 = arith.constant 0 : i32
    %c0_i32_0 = arith.constant 0 : i32
    %c0_i32_1 = arith.constant 0 : i32
    return %c0_i32, %c0_i32_0 : i32, i32
  }
  func.func @transform_27(%arg0: i32, %arg1: i32, %arg2: i32) -> (i32, i32) {
    %c0_i32 = arith.constant 0 : i32
    %c0_i32_0 = arith.constant 0 : i32
    %c0_i32_1 = arith.constant 0 : i32
    return %c0_i32, %c0_i32_0 : i32, i32
  }
  func.func @transform_28(%arg0: i32, %arg1: i32, %arg2: i32) -> (i32, i32) {
    %c0_i32 = arith.constant 0 : i32
    %c0_i32_0 = arith.constant 0 : i32
    %c0_i32_1 = arith.constant 0 : i32
    return %c0_i32, %c0_i32_0 : i32, i32
  }
}

</mosaic_0001>

<llo_original>
// kernel: tpu_custom_call.1
$region0: #{tpu_custom_call.1}
  #allocation0 [shape = 'u32[]', space=smem, size = 0x4, offset = 0x4, fixed_abs, tag = 'smem constant byte address 0x4 - core index']
  #allocation1 [shape = 'u32[144,128]{1,0:T(1,128)}', space=vmem, size = 0x12000, scoped, tag = 'internal scratch']
  #allocation2 [shape = 'f32[16,64]{1,0:T(8,128)}', space=vmem, size = 0x2000, scoped, tag = 'scratch operand']
  #allocation3 [shape = 'f32[16,128]{1,0:T(8,128)}', space=vmem, size = 0x2000, scoped, tag = 'scratch operand']
  #allocation4 [shape = 'f32[16,1024]{1,0:T(8,128)}', space=vmem, size = 0x10000, scoped, tag = 'scratch operand']
  #allocation5 [shape = 'f32[16,64]{1,0:T(8,128)}', space=vmem, size = 0x2000, scoped, tag = 'scratch operand']
  #allocation6 [shape = 'f32[16,128]{1,0:T(8,128)}', space=vmem, size = 0x2000, scoped, tag = 'scratch operand']
  #allocation7 [shape = 'f32[16,1024]{1,0:T(8,128)}', space=vmem, size = 0x10000, scoped, tag = 'scratch operand']
  #allocation8 [shape = 'f32[8,1024]{1,0:T(8,128)}', space=vmem, size = 0x8000, scoped, tag = 'scratch operand']
  #allocation9 [shape = 'f32[8,1024]{1,0:T(8,128)}', space=vmem, size = 0x8000, scoped, tag = 'scratch operand']
  #allocation10 [shape = 'f32[2,1024]{1,0:T(2,128)}', space=vmem, size = 0x2000, scoped, tag = 'scratch operand']
  #allocation11 [shape = 'f32[2,1024]{1,0:T(2,128)}', space=vmem, size = 0x2000, scoped, tag = 'scratch operand']
  #allocation12 [shape = 'f32[2,3,64]{2,1,0:T(4,128)}', space=vmem, size = 0x1000, scoped, tag = 'scratch operand']
  %s0 = inlined_call_operand.vmem [shape: f32[32,3], index: 0, kind: input, shape index: {}]
  %s1 = inlined_call_operand.vmem [shape: f32[3,64], index: 1, kind: input, shape index: {}]
  %s2 = inlined_call_operand.vmem [shape: f32[1,64], index: 2, kind: input, shape index: {}]
  %s3 = inlined_call_operand.vmem [shape: f32[1,64], index: 3, kind: input, shape index: {}]
  %s4 = inlined_call_operand.vmem [shape: bf16[64,128], index: 4, kind: input, shape index: {}]
  %s5 = inlined_call_operand.vmem [shape: f32[1,128], index: 5, kind: input, shape index: {}]
  %s6 = inlined_call_operand.vmem [shape: f32[1,128], index: 6, kind: input, shape index: {}]
  %s7 = inlined_call_operand.hbm [shape: bf16[128,1024], index: 7, kind: input, shape index: {}]
  %s8 = inlined_call_operand.vmem [shape: f32[1,1024], index: 8, kind: input, shape index: {}]
  %s9 = inlined_call_operand.vmem [shape: f32[1,1024], index: 9, kind: input, shape index: {}]
  %s10 = inlined_call_operand.hbm [shape: bf16[1024,512], index: 10, kind: input, shape index: {}]
  %s11 = inlined_call_operand.vmem [shape: f32[1,512], index: 11, kind: input, shape index: {}]
  %s12 = inlined_call_operand.vmem [shape: f32[1,512], index: 12, kind: input, shape index: {}]
  %s13 = inlined_call_operand.hbm [shape: bf16[512,256], index: 13, kind: input, shape index: {}]
  %s14 = inlined_call_operand.vmem [shape: f32[1,256], index: 14, kind: input, shape index: {}]
  %s15 = inlined_call_operand.vmem [shape: f32[1,256], index: 15, kind: input, shape index: {}]
  %s16 = inlined_call_operand.vmem [shape: f32[256,9], index: 16, kind: input, shape index: {}]
  %s17 = inlined_call_operand.vmem [shape: f32[1,9], index: 17, kind: input, shape index: {}]
  %s18 = inlined_call_operand.vmem [shape: f32[3,64], index: 18, kind: input, shape index: {}]
  %s19 = inlined_call_operand.vmem [shape: f32[1,64], index: 19, kind: input, shape index: {}]
  %s20 = inlined_call_operand.vmem [shape: f32[1,64], index: 20, kind: input, shape index: {}]
  %s21 = inlined_call_operand.vmem [shape: bf16[64,128], index: 21, kind: input, shape index: {}]
  %s22 = inlined_call_operand.vmem [shape: f32[1,128], index: 22, kind: input, shape index: {}]
  %s23 = inlined_call_operand.vmem [shape: f32[1,128], index: 23, kind: input, shape index: {}]
  %s24 = inlined_call_operand.hbm [shape: bf16[128,1024], index: 24, kind: input, shape index: {}]
  %s25 = inlined_call_operand.vmem [shape: f32[1,1024], index: 25, kind: input, shape index: {}]
  %s26 = inlined_call_operand.vmem [shape: f32[1,1024], index: 26, kind: input, shape index: {}]
  %s27 = inlined_call_operand.hbm [shape: f32[2,1024], index: 27, kind: output, shape index: {0}]
  %s28 = inlined_call_operand.hbm [shape: f32[2,9], index: 28, kind: output, shape index: {1}]
  %29 = xla_tuple %s27, %s28
  %s30 = sld [smem:[#allocation0]]
  $region253: #{tpu_custom_call.1} parent=0
    _
  %s32 = ssub.s32 1, %s30
  %s33 = scalar_select 0, %s32, %s30
  $region1: #{tpu_custom_call.1} parent=0
    #allocation13 [shape = 'u8[262144]{0}', space=vmem, size = 0x40000, scoped, tag = 'input window, operand 7, single buffered']
    #allocation14 [shape = 's32[2]{0}', space=sflag, size = 0x8, scoped, tag = 'scoped memory for tpu_custom_call.1']
    #allocation15 [shape = 's32[2]{0}', space=sflag, size = 0x8, scoped, tag = 'scoped memory for tpu_custom_call.1']
    #allocation16 [shape = 'u8[1048576]{0}', space=vmem, size = 0x100000, scoped, tag = 'input window, operand 10, single buffered']
    #allocation17 [shape = 's32[1]{0}', space=sflag, size = 0x4, scoped, tag = 'scoped memory for tpu_custom_call.1']
    #allocation18 [shape = 'u8[262144]{0}', space=vmem, size = 0x40000, scoped, tag = 'input window, operand 13, single buffered']
    #allocation19 [shape = 'u8[262144]{0}', space=vmem, size = 0x40000, scoped, tag = 'input window, operand 24, single buffered']
    #allocation20 [shape = 's32[1]{0}', space=sflag, size = 0x4, scoped, tag = 'scoped memory for tpu_custom_call.1']
    #allocation21 [shape = 'u8[8192]{0}', space=vmem, size = 0x2000, scoped, tag = 'output window, operand 0, single buffered']
    #allocation22 [shape = 'u8[1024]{0}', space=vmem, size = 0x400, scoped, tag = 'output window, operand 1, single buffered']
    #allocation23 [shape = 's32[1]{0}', space=sflag, size = 0x4, scoped, tag = 'scoped memory for tpu_custom_call.1']
    %34 = vsyncpa [#allocation14], 0
    %35 = vsyncpa [#allocation17], 0
    %36 = vsyncpa [#allocation20], 0
    %37 = vsyncpa [#allocation15], 0
    %38 = vsyncpa [#allocation23], 0
    loop: start=0, step=1, limit=26
    $region2: #{tpu_custom_call.1} parent=1 // loop_pre_header
      _
    $region3: #{tpu_custom_call.1} parent=1 // loop_header
      %s40 = sphi 0, %s44
      %p41 = scmp.ge.s32.totalorder %s40, 26
      %s47 = sphi 0, %s66
      %s48 = sphi 0, %s62
      %s49 = sphi 0, %s58
      %s50 = sphi 0, %s47
      %s51 = sphi 0, %s48
      %s52 = sphi 0, %s49
      %s53 = sphi 0, %s50
      %s54 = sphi 0, %s51
      %s55 = sphi 0, %s52
      %s67 = sphi 0, %s67
      %s69 = sphi 0, %s67
      %s70 = sphi 0, %s69
      %s84 = sphi 0, %s70
      %s88 = sphi 0, %s88
      %s90 = sphi 0, %s88
      %s91 = sphi 0, %s90
      %s105 = sphi 0, %s91
      %s109 = sphi 0, %s109
      %s111 = sphi 0, %s109
      %s112 = sphi 0, %s111
      %s126 = sphi 0, %s112
      %s130 = sphi 0, %s130
      %s132 = sphi 0, %s130
      %s133 = sphi 0, %s132
      %s147 = sphi 0, %s133
      %s151 = sphi 0, %s151
      %s153 = sphi 0, %s151
      %s154 = sphi 0, %s153
      %s168 = sphi 0, %s154
      %s172 = sphi 0, %s172
      %s174 = sphi 0, %s172
      %s175 = sphi 0, %s174
      %s189 = sphi 0, %s175
      %s193 = sphi 0, %s193
      %s195 = sphi 0, %s193
      %s196 = sphi 0, %s195
      %s210 = sphi 0, %s196
      %s214 = sphi 0, %s214
      %s216 = sphi 0, %s214
      %s217 = sphi 0, %s216
      %s231 = sphi 0, %s217
      %s235 = sphi 0, %s235
      %s237 = sphi 0, %s235
      %s238 = sphi 0, %s237
      %s252 = sphi 0, %s238
      %s256 = sphi 0, %s256
      %s258 = sphi 0, %s256
      %s259 = sphi 0, %s258
      %s273 = sphi 0, %s259
      %s277 = sphi 0, %s277
      %s279 = sphi 0, %s277
      %s280 = sphi 0, %s279
      %s294 = sphi 0, %s280
      %s298 = sphi 0, %s298
      %s300 = sphi 0, %s298
      %s301 = sphi 0, %s300
      %s315 = sphi 0, %s301
      %s319 = sphi 0, %s319
      %s321 = sphi 0, %s319
      %s322 = sphi 0, %s321
      %s336 = sphi 0, %s322
      %s340 = sphi 0, %s340
      %s342 = sphi 0, %s340
      %s343 = sphi 0, %s342
      %s357 = sphi 0, %s343
      %s361 = sphi 0, %s361
      %s363 = sphi 0, %s361
      %s364 = sphi 0, %s363
      %s378 = sphi 0, %s364
      %s382 = sphi 0, %s382
      %s384 = sphi 0, %s382
      %s385 = sphi 0, %s384
      %s399 = sphi 0, %s385
      %s403 = sphi 0, %s403
      %s405 = sphi 0, %s403
      %s406 = sphi 0, %s405
      %s420 = sphi 0, %s406
      %s424 = sphi 0, %s424
      %s426 = sphi 0, %s424
      %s427 = sphi 0, %s426
      %s441 = sphi 0, %s427
      %s445 = sphi 0, %s445
      %s447 = sphi 0, %s445
      %s448 = sphi 0, %s447
      %s462 = sphi 0, %s448
      %s466 = sphi 0, %s466
      %s468 = sphi 0, %s466
      %s469 = sphi 0, %s468
      %s483 = sphi 0, %s469
      %s487 = sphi 0, %s487
      %s489 = sphi 0, %s487
      %s490 = sphi 0, %s489
      %s504 = sphi 0, %s490
      %s508 = sphi 0, %s508
      %s510 = sphi 0, %s508
      %s511 = sphi 0, %s510
      %s525 = sphi 0, %s511
      %s529 = sphi 0, %s529
      %s531 = sphi 0, %s529
      %s532 = sphi 0, %s531
      %s546 = sphi 0, %s532
      %s550 = sphi 0, %s550
      %s552 = sphi 0, %s550
      %s553 = sphi 0, %s552
      %s567 = sphi 0, %s553
      %s571 = sphi 0, %s571
      %s573 = sphi 0, %s571
      %s574 = sphi 0, %s573
      %s588 = sphi 0, %s574
      %s592 = sphi 0, %s592
      %s594 = sphi 0, %s592
      %s595 = sphi 0, %s594
      %s609 = sphi 0, %s595
      %s613 = sphi 0, %s613
      %s615 = sphi 0, %s613
      %s616 = sphi 0, %s615
      %s630 = sphi 0, %s616
      %s634 = sphi 0, %s634
      %s636 = sphi 0, %s634
      %s637 = sphi 0, %s636
      %s651 = sphi 0, %s637
      %s655 = sphi 0, %s655
      %s657 = sphi 0, %s655
      %s658 = sphi 0, %s657
      %s672 = sphi 0, %s658
    $region4: #{tpu_custom_call.1} parent=1 // loop_header_branch
      %43 = sbr.rel (%p41) target = $region8
    $region5: #{tpu_custom_call.1} parent=1 // loop_body
      %s45 = ssub.s32 %s40, 1
      %s46 = ssub.s32 %s40, 2
      %s56 = sadd.s32 1, %s49
      %p57 = scmp.ge.s32.totalorder %s56, 2
      %s58 = scalar_select %p57, 0, %s56
      %s59 = sadd.s32 1, %s48
      %s60 = scalar_select %p57, %s59, %s48
      %p61 = scmp.ge.s32.totalorder %s60, 2
      %s62 = scalar_select %p61, 0, %s60
      %s63 = sadd.s32 1, %s47
      %s64 = scalar_select %p61, %s63, %s47
      %p65 = scmp.ge.s32.totalorder %s64, 6
      %s66 = scalar_select %p65, 0, %s64
      %s68 = sadd.s32 %s67, 1
      %p71 = scmp.eq.s32.totalorder %s40, 23
      %p72 = scmp.ne.s32.totalorder %s67, %s69
      %p73 = scmp.eq.s32.totalorder %s40, 0
      %p74 = por %p72, %p73
      %p75 = scmp.ne.s32.totalorder %s67, %s69
      %p76 = scmp.eq.s32.totalorder %s45, 23
      %p77 = por %p75, %p76
      %p78 = scmp.ne.s32.totalorder %s69, %s70
      %p79 = scmp.eq.s32.totalorder %s45, 0
      %p80 = por %p78, %p79
      %p81 = scmp.ne.s32.totalorder %s69, %s70
      %p82 = scmp.eq.s32.totalorder %s46, 23
      %p83 = por %p81, %p82
      %p85 = scmp.ne.s32.totalorder %s70, %s84
      %p86 = scmp.eq.s32.totalorder %s46, 0
      %p87 = por %p85, %p86
      %s89 = sadd.s32 %s88, 1
      %p92 = scmp.eq.s32.totalorder %s40, 23
      %p93 = scmp.ne.s32.totalorder %s88, %s90
      %p94 = scmp.eq.s32.totalorder %s40, 0
      %p95 = por %p93, %p94
      %p96 = scmp.ne.s32.totalorder %s88, %s90
      %p97 = scmp.eq.s32.totalorder %s45, 23
      %p98 = por %p96, %p97
      %p99 = scmp.ne.s32.totalorder %s90, %s91
      %p100 = scmp.eq.s32.totalorder %s45, 0
      %p101 = por %p99, %p100
      %p102 = scmp.ne.s32.totalorder %s90, %s91
      %p103 = scmp.eq.s32.totalorder %s46, 23
      %p104 = por %p102, %p103
      %p106 = scmp.ne.s32.totalorder %s91, %s105
      %p107 = scmp.eq.s32.totalorder %s46, 0
      %p108 = por %p106, %p107
      %s110 = sadd.s32 %s109, 1
      %p113 = scmp.eq.s32.totalorder %s40, 23
      %p114 = scmp.ne.s32.totalorder %s109, %s111
      %p115 = scmp.eq.s32.totalorder %s40, 0
      %p116 = por %p114, %p115
      %p117 = scmp.ne.s32.totalorder %s109, %s111
      %p118 = scmp.eq.s32.totalorder %s45, 23
      %p119 = por %p117, %p118
      %p120 = scmp.ne.s32.totalorder %s111, %s112
      %p121 = scmp.eq.s32.totalorder %s45, 0
      %p122 = por %p120, %p121
      %p123 = scmp.ne.s32.totalorder %s111, %s112
      %p124 = scmp.eq.s32.totalorder %s46, 23
      %p125 = por %p123, %p124
      %p127 = scmp.ne.s32.totalorder %s112, %s126
      %p128 = scmp.eq.s32.totalorder %s46, 0
      %p129 = por %p127, %p128
      %s131 = sadd.s32 %s130, 1
      %p134 = scmp.eq.s32.totalorder %s40, 23
      %p135 = scmp.ne.s32.totalorder %s130, %s132
      %p136 = scmp.eq.s32.totalorder %s40, 0
      %p137 = por %p135, %p136
      %p138 = scmp.ne.s32.totalorder %s130, %s132
      %p139 = scmp.eq.s32.totalorder %s45, 23
      %p140 = por %p138, %p139
      %p141 = scmp.ne.s32.totalorder %s132, %s133
      %p142 = scmp.eq.s32.totalorder %s45, 0
      %p143 = por %p141, %p142
      %p144 = scmp.ne.s32.totalorder %s132, %s133
      %p145 = scmp.eq.s32.totalorder %s46, 23
      %p146 = por %p144, %p145
      %p148 = scmp.ne.s32.totalorder %s133, %s147
      %p149 = scmp.eq.s32.totalorder %s46, 0
      %p150 = por %p148, %p149
      %s152 = sadd.s32 %s151, 1
      %p155 = scmp.eq.s32.totalorder %s40, 23
      %p156 = scmp.ne.s32.totalorder %s151, %s153
      %p157 = scmp.eq.s32.totalorder %s40, 0
      %p158 = por %p156, %p157
      %p159 = scmp.ne.s32.totalorder %s151, %s153
      %p160 = scmp.eq.s32.totalorder %s45, 23
      %p161 = por %p159, %p160
      %p162 = scmp.ne.s32.totalorder %s153, %s154
      %p163 = scmp.eq.s32.totalorder %s45, 0
      %p164 = por %p162, %p163
      %p165 = scmp.ne.s32.totalorder %s153, %s154
      %p166 = scmp.eq.s32.totalorder %s46, 23
      %p167 = por %p165, %p166
      %p169 = scmp.ne.s32.totalorder %s154, %s168
      %p170 = scmp.eq.s32.totalorder %s46, 0
      %p171 = por %p169, %p170
      %s173 = sadd.s32 %s172, 1
      %p176 = scmp.eq.s32.totalorder %s40, 23
      %p177 = scmp.ne.s32.totalorder %s172, %s174
      %p178 = scmp.eq.s32.totalorder %s40, 0
      %p179 = por %p177, %p178
      %p180 = scmp.ne.s32.totalorder %s172, %s174
      %p181 = scmp.eq.s32.totalorder %s45, 23
      %p182 = por %p180, %p181
      %p183 = scmp.ne.s32.totalorder %s174, %s175
      %p184 = scmp.eq.s32.totalorder %s45, 0
      %p185 = por %p183, %p184
      %p186 = scmp.ne.s32.totalorder %s174, %s175
      %p187 = scmp.eq.s32.totalorder %s46, 23
      %p188 = por %p186, %p187
      %p190 = scmp.ne.s32.totalorder %s175, %s189
      %p191 = scmp.eq.s32.totalorder %s46, 0
      %p192 = por %p190, %p191
      %s194 = sadd.s32 %s193, 1
      %p197 = scmp.eq.s32.totalorder %s40, 23
      %p198 = scmp.ne.s32.totalorder %s193, %s195
      %p199 = scmp.eq.s32.totalorder %s40, 0
      %p200 = por %p198, %p199
      %p201 = scmp.ne.s32.totalorder %s193, %s195
      %p202 = scmp.eq.s32.totalorder %s45, 23
      %p203 = por %p201, %p202
      %p204 = scmp.ne.s32.totalorder %s195, %s196
      %p205 = scmp.eq.s32.totalorder %s45, 0
      %p206 = por %p204, %p205
      %p207 = scmp.ne.s32.totalorder %s195, %s196
      %p208 = scmp.eq.s32.totalorder %s46, 23
      %p209 = por %p207, %p208
      %p211 = scmp.ne.s32.totalorder %s196, %s210
      %p212 = scmp.eq.s32.totalorder %s46, 0
      %p213 = por %p211, %p212
      %s215 = sadd.s32 %s214, 1
      %p218 = scmp.eq.s32.totalorder %s40, 23
      %p219 = scmp.ne.s32.totalorder %s214, %s216
      %p220 = scmp.eq.s32.totalorder %s40, 0
      %p221 = por %p219, %p220
      %p222 = scmp.ne.s32.totalorder %s214, %s216
      %p223 = scmp.eq.s32.totalorder %s45, 23
      %p224 = por %p222, %p223
      %p225 = scmp.ne.s32.totalorder %s216, %s217
      %p226 = scmp.eq.s32.totalorder %s45, 0
      %p227 = por %p225, %p226
      %p228 = scmp.ne.s32.totalorder %s216, %s217
      %p229 = scmp.eq.s32.totalorder %s46, 23
      %p230 = por %p228, %p229
      %p232 = scmp.ne.s32.totalorder %s217, %s231
      %p233 = scmp.eq.s32.totalorder %s46, 0
      %p234 = por %p232, %p233
      %s236 = sadd.s32 %s235, 1
      %p239 = scmp.eq.s32.totalorder %s40, 23
      %p240 = scmp.ne.s32.totalorder %s235, %s237
      %p241 = scmp.eq.s32.totalorder %s40, 0
      %p242 = por %p240, %p241
      %p243 = scmp.ne.s32.totalorder %s235, %s237
      %p244 = scmp.eq.s32.totalorder %s45, 23
      %p245 = por %p243, %p244
      %p246 = scmp.ne.s32.totalorder %s237, %s238
      %p247 = scmp.eq.s32.totalorder %s45, 0
      %p248 = por %p246, %p247
      %p249 = scmp.ne.s32.totalorder %s237, %s238
      %p250 = scmp.eq.s32.totalorder %s46, 23
      %p251 = por %p249, %p250
      %p253 = scmp.ne.s32.totalorder %s238, %s252
      %p254 = scmp.eq.s32.totalorder %s46, 0
      %p255 = por %p253, %p254
      %s257 = sadd.s32 %s256, 1
      %p260 = scmp.eq.s32.totalorder %s40, 23
      %p261 = scmp.ne.s32.totalorder %s256, %s258
      %p262 = scmp.eq.s32.totalorder %s40, 0
      %p263 = por %p261, %p262
      %p264 = scmp.ne.s32.totalorder %s256, %s258
      %p265 = scmp.eq.s32.totalorder %s45, 23
      %p266 = por %p264, %p265
      %p267 = scmp.ne.s32.totalorder %s258, %s259
      %p268 = scmp.eq.s32.totalorder %s45, 0
      %p269 = por %p267, %p268
      %p270 = scmp.ne.s32.totalorder %s258, %s259
      %p271 = scmp.eq.s32.totalorder %s46, 23
      %p272 = por %p270, %p271
      %p274 = scmp.ne.s32.totalorder %s259, %s273
      %p275 = scmp.eq.s32.totalorder %s46, 0
      %p276 = por %p274, %p275
      %s278 = sadd.s32 %s277, 1
      %p281 = scmp.eq.s32.totalorder %s40, 23
      %p282 = scmp.ne.s32.totalorder %s277, %s279
      %p283 = scmp.eq.s32.totalorder %s40, 0
      %p284 = por %p282, %p283
      %p285 = scmp.ne.s32.totalorder %s277, %s279
      %p286 = scmp.eq.s32.totalorder %s45, 23
      %p287 = por %p285, %p286
      %p288 = scmp.ne.s32.totalorder %s279, %s280
      %p289 = scmp.eq.s32.totalorder %s45, 0
      %p290 = por %p288, %p289
      %p291 = scmp.ne.s32.totalorder %s279, %s280
      %p292 = scmp.eq.s32.totalorder %s46, 23
      %p293 = por %p291, %p292
      %p295 = scmp.ne.s32.totalorder %s280, %s294
      %p296 = scmp.eq.s32.totalorder %s46, 0
      %p297 = por %p295, %p296
      %s299 = sadd.s32 %s298, 1
      %p302 = scmp.eq.s32.totalorder %s40, 23
      %p303 = scmp.ne.s32.totalorder %s298, %s300
      %p304 = scmp.eq.s32.totalorder %s40, 0
      %p305 = por %p303, %p304
      %p306 = scmp.ne.s32.totalorder %s298, %s300
      %p307 = scmp.eq.s32.totalorder %s45, 23
      %p308 = por %p306, %p307
      %p309 = scmp.ne.s32.totalorder %s300, %s301
      %p310 = scmp.eq.s32.totalorder %s45, 0
      %p311 = por %p309, %p310
      %p312 = scmp.ne.s32.totalorder %s300, %s301
      %p313 = scmp.eq.s32.totalorder %s46, 23
      %p314 = por %p312, %p313
      %p316 = scmp.ne.s32.totalorder %s301, %s315
      %p317 = scmp.eq.s32.totalorder %s46, 0
      %p318 = por %p316, %p317
      %s320 = sadd.s32 %s319, 1
      %p323 = scmp.eq.s32.totalorder %s40, 23
      %p324 = scmp.ne.s32.totalorder %s319, %s321
      %p325 = scmp.eq.s32.totalorder %s40, 0
      %p326 = por %p324, %p325
      %p327 = scmp.ne.s32.totalorder %s319, %s321
      %p328 = scmp.eq.s32.totalorder %s45, 23
      %p329 = por %p327, %p328
      %p330 = scmp.ne.s32.totalorder %s321, %s322
      %p331 = scmp.eq.s32.totalorder %s45, 0
      %p332 = por %p330, %p331
      %p333 = scmp.ne.s32.totalorder %s321, %s322
      %p334 = scmp.eq.s32.totalorder %s46, 23
      %p335 = por %p333, %p334
      %p337 = scmp.ne.s32.totalorder %s322, %s336
      %p338 = scmp.eq.s32.totalorder %s46, 0
      %p339 = por %p337, %p338
      %s341 = sadd.s32 %s340, 1
      %p344 = scmp.eq.s32.totalorder %s40, 23
      %p345 = scmp.ne.s32.totalorder %s340, %s342
      %p346 = scmp.eq.s32.totalorder %s40, 0
      %p347 = por %p345, %p346
      %p348 = scmp.ne.s32.totalorder %s340, %s342
      %p349 = scmp.eq.s32.totalorder %s45, 23
      %p350 = por %p348, %p349
      %p351 = scmp.ne.s32.totalorder %s342, %s343
      %p352 = scmp.eq.s32.totalorder %s45, 0
      %p353 = por %p351, %p352
      %p354 = scmp.ne.s32.totalorder %s342, %s343
      %p355 = scmp.eq.s32.totalorder %s46, 23
      %p356 = por %p354, %p355
      %p358 = scmp.ne.s32.totalorder %s343, %s357
      %p359 = scmp.eq.s32.totalorder %s46, 0
      %p360 = por %p358, %p359
      %s362 = sadd.s32 %s361, 1
      %p365 = scmp.eq.s32.totalorder %s40, 23
      %p366 = scmp.ne.s32.totalorder %s361, %s363
      %p367 = scmp.eq.s32.totalorder %s40, 0
      %p368 = por %p366, %p367
      %p369 = scmp.ne.s32.totalorder %s361, %s363
      %p370 = scmp.eq.s32.totalorder %s45, 23
      %p371 = por %p369, %p370
      %p372 = scmp.ne.s32.totalorder %s363, %s364
      %p373 = scmp.eq.s32.totalorder %s45, 0
      %p374 = por %p372, %p373
      %p375 = scmp.ne.s32.totalorder %s363, %s364
      %p376 = scmp.eq.s32.totalorder %s46, 23
      %p377 = por %p375, %p376
      %p379 = scmp.ne.s32.totalorder %s364, %s378
      %p380 = scmp.eq.s32.totalorder %s46, 0
      %p381 = por %p379, %p380
      %s383 = sadd.s32 %s382, 1
      %p386 = scmp.eq.s32.totalorder %s40, 23
      %p387 = scmp.ne.s32.totalorder %s382, %s384
      %p388 = scmp.eq.s32.totalorder %s40, 0
      %p389 = por %p387, %p388
      %p390 = scmp.ne.s32.totalorder %s382, %s384
      %p391 = scmp.eq.s32.totalorder %s45, 23
      %p392 = por %p390, %p391
      %p393 = scmp.ne.s32.totalorder %s384, %s385
      %p394 = scmp.eq.s32.totalorder %s45, 0
      %p395 = por %p393, %p394
      %p396 = scmp.ne.s32.totalorder %s384, %s385
      %p397 = scmp.eq.s32.totalorder %s46, 23
      %p398 = por %p396, %p397
      %p400 = scmp.ne.s32.totalorder %s385, %s399
      %p401 = scmp.eq.s32.totalorder %s46, 0
      %p402 = por %p400, %p401
      %s404 = sadd.s32 %s403, 1
      %p407 = scmp.eq.s32.totalorder %s40, 23
      %p408 = scmp.ne.s32.totalorder %s403, %s405
      %p409 = scmp.eq.s32.totalorder %s40, 0
      %p410 = por %p408, %p409
      %p411 = scmp.ne.s32.totalorder %s403, %s405
      %p412 = scmp.eq.s32.totalorder %s45, 23
      %p413 = por %p411, %p412
      %p414 = scmp.ne.s32.totalorder %s405, %s406
      %p415 = scmp.eq.s32.totalorder %s45, 0
      %p416 = por %p414, %p415
      %p417 = scmp.ne.s32.totalorder %s405, %s406
      %p418 = scmp.eq.s32.totalorder %s46, 23
      %p419 = por %p417, %p418
      %p421 = scmp.ne.s32.totalorder %s406, %s420
      %p422 = scmp.eq.s32.totalorder %s46, 0
      %p423 = por %p421, %p422
      %s425 = sadd.s32 %s424, 1
      %p428 = scmp.eq.s32.totalorder %s40, 23
      %p429 = scmp.ne.s32.totalorder %s424, %s426
      %p430 = scmp.eq.s32.totalorder %s40, 0
      %p431 = por %p429, %p430
      %p432 = scmp.ne.s32.totalorder %s424, %s426
      %p433 = scmp.eq.s32.totalorder %s45, 23
      %p434 = por %p432, %p433
      %p435 = scmp.ne.s32.totalorder %s426, %s427
      %p436 = scmp.eq.s32.totalorder %s45, 0
      %p437 = por %p435, %p436
      %p438 = scmp.ne.s32.totalorder %s426, %s427
      %p439 = scmp.eq.s32.totalorder %s46, 23
      %p440 = por %p438, %p439
      %p442 = scmp.ne.s32.totalorder %s427, %s441
      %p443 = scmp.eq.s32.totalorder %s46, 0
      %p444 = por %p442, %p443
      %s446 = sadd.s32 %s445, 1
      %p449 = scmp.eq.s32.totalorder %s40, 23
      %p450 = scmp.ne.s32.totalorder %s445, %s447
      %p451 = scmp.eq.s32.totalorder %s40, 0
      %p452 = por %p450, %p451
      %p453 = scmp.ne.s32.totalorder %s445, %s447
      %p454 = scmp.eq.s32.totalorder %s45, 23
      %p455 = por %p453, %p454
      %p456 = scmp.ne.s32.totalorder %s447, %s448
      %p457 = scmp.eq.s32.totalorder %s45, 0
      %p458 = por %p456, %p457
      %p459 = scmp.ne.s32.totalorder %s447, %s448
      %p460 = scmp.eq.s32.totalorder %s46, 23
      %p461 = por %p459, %p460
      %p463 = scmp.ne.s32.totalorder %s448, %s462
      %p464 = scmp.eq.s32.totalorder %s46, 0
      %p465 = por %p463, %p464
      %s467 = sadd.s32 %s466, 1
      %p470 = scmp.eq.s32.totalorder %s40, 23
      %p471 = scmp.ne.s32.totalorder %s466, %s468
      %p472 = scmp.eq.s32.totalorder %s40, 0
      %p473 = por %p471, %p472
      %p474 = scmp.ne.s32.totalorder %s466, %s468
      %p475 = scmp.eq.s32.totalorder %s45, 23
      %p476 = por %p474, %p475
      %p477 = scmp.ne.s32.totalorder %s468, %s469
      %p478 = scmp.eq.s32.totalorder %s45, 0
      %p479 = por %p477, %p478
      %p480 = scmp.ne.s32.totalorder %s468, %s469
      %p481 = scmp.eq.s32.totalorder %s46, 23
      %p482 = por %p480, %p481
      %p484 = scmp.ne.s32.totalorder %s469, %s483
      %p485 = scmp.eq.s32.totalorder %s46, 0
      %p486 = por %p484, %p485
      %s488 = sadd.s32 %s487, 1
      %p491 = scmp.eq.s32.totalorder %s40, 23
      %p492 = scmp.ne.s32.totalorder %s487, %s489
      %p493 = scmp.eq.s32.totalorder %s40, 0
      %p494 = por %p492, %p493
      %p495 = scmp.ne.s32.totalorder %s487, %s489
      %p496 = scmp.eq.s32.totalorder %s45, 23
      %p497 = por %p495, %p496
      %p498 = scmp.ne.s32.totalorder %s489, %s490
      %p499 = scmp.eq.s32.totalorder %s45, 0
      %p500 = por %p498, %p499
      %p501 = scmp.ne.s32.totalorder %s489, %s490
      %p502 = scmp.eq.s32.totalorder %s46, 23
      %p503 = por %p501, %p502
      %p505 = scmp.ne.s32.totalorder %s490, %s504
      %p506 = scmp.eq.s32.totalorder %s46, 0
      %p507 = por %p505, %p506
      %s509 = sadd.s32 %s508, 1
      %p512 = scmp.eq.s32.totalorder %s40, 23
      %p513 = scmp.ne.s32.totalorder %s508, %s510
      %p514 = scmp.eq.s32.totalorder %s40, 0
      %p515 = por %p513, %p514
      %p516 = scmp.ne.s32.totalorder %s508, %s510
      %p517 = scmp.eq.s32.totalorder %s45, 23
      %p518 = por %p516, %p517
      %p519 = scmp.ne.s32.totalorder %s510, %s511
      %p520 = scmp.eq.s32.totalorder %s45, 0
      %p521 = por %p519, %p520
      %p522 = scmp.ne.s32.totalorder %s510, %s511
      %p523 = scmp.eq.s32.totalorder %s46, 23
      %p524 = por %p522, %p523
      %p526 = scmp.ne.s32.totalorder %s511, %s525
      %p527 = scmp.eq.s32.totalorder %s46, 0
      %p528 = por %p526, %p527
      %s530 = sadd.s32 %s529, 1
      %p533 = scmp.eq.s32.totalorder %s40, 23
      %p534 = scmp.ne.s32.totalorder %s529, %s531
      %p535 = scmp.eq.s32.totalorder %s40, 0
      %p536 = por %p534, %p535
      %p537 = scmp.ne.s32.totalorder %s529, %s531
      %p538 = scmp.eq.s32.totalorder %s45, 23
      %p539 = por %p537, %p538
      %p540 = scmp.ne.s32.totalorder %s531, %s532
      %p541 = scmp.eq.s32.totalorder %s45, 0
      %p542 = por %p540, %p541
      %p543 = scmp.ne.s32.totalorder %s531, %s532
      %p544 = scmp.eq.s32.totalorder %s46, 23
      %p545 = por %p543, %p544
      %p547 = scmp.ne.s32.totalorder %s532, %s546
      %p548 = scmp.eq.s32.totalorder %s46, 0
      %p549 = por %p547, %p548
      %s551 = sadd.s32 %s550, 1
      %p554 = scmp.eq.s32.totalorder %s40, 23
      %p555 = scmp.ne.s32.totalorder %s550, %s552
      %p556 = scmp.eq.s32.totalorder %s40, 0
      %p557 = por %p555, %p556
      %p558 = scmp.ne.s32.totalorder %s550, %s552
      %p559 = scmp.eq.s32.totalorder %s45, 23
      %p560 = por %p558, %p559
      %p561 = scmp.ne.s32.totalorder %s552, %s553
      %p562 = scmp.eq.s32.totalorder %s45, 0
      %p563 = por %p561, %p562
      %p564 = scmp.ne.s32.totalorder %s552, %s553
      %p565 = scmp.eq.s32.totalorder %s46, 23
      %p566 = por %p564, %p565
      %p568 = scmp.ne.s32.totalorder %s553, %s567
      %p569 = scmp.eq.s32.totalorder %s46, 0
      %p570 = por %p568, %p569
      %s572 = sadd.s32 %s571, 1
      %p575 = scmp.eq.s32.totalorder %s40, 23
      %p576 = scmp.ne.s32.totalorder %s571, %s573
      %p577 = scmp.eq.s32.totalorder %s40, 0
      %p578 = por %p576, %p577
      %p579 = scmp.ne.s32.totalorder %s571, %s573
      %p580 = scmp.eq.s32.totalorder %s45, 23
      %p581 = por %p579, %p580
      %p582 = scmp.ne.s32.totalorder %s573, %s574
      %p583 = scmp.eq.s32.totalorder %s45, 0
      %p584 = por %p582, %p583
      %p585 = scmp.ne.s32.totalorder %s573, %s574
      %p586 = scmp.eq.s32.totalorder %s46, 23
      %p587 = por %p585, %p586
      %p589 = scmp.ne.s32.totalorder %s574, %s588
      %p590 = scmp.eq.s32.totalorder %s46, 0
      %p591 = por %p589, %p590
      %s593 = sadd.s32 %s592, 1
      %p596 = scmp.eq.s32.totalorder %s40, 23
      %p597 = scmp.ne.s32.totalorder %s592, %s594
      %p598 = scmp.eq.s32.totalorder %s40, 0
      %p599 = por %p597, %p598
      %p600 = scmp.ne.s32.totalorder %s592, %s594
      %p601 = scmp.eq.s32.totalorder %s45, 23
      %p602 = por %p600, %p601
      %p603 = scmp.ne.s32.totalorder %s594, %s595
      %p604 = scmp.eq.s32.totalorder %s45, 0
      %p605 = por %p603, %p604
      %p606 = scmp.ne.s32.totalorder %s594, %s595
      %p607 = scmp.eq.s32.totalorder %s46, 23
      %p608 = por %p606, %p607
      %p610 = scmp.ne.s32.totalorder %s595, %s609
      %p611 = scmp.eq.s32.totalorder %s46, 0
      %p612 = por %p610, %p611
      %s614 = sadd.s32 %s613, 1
      %p617 = scmp.eq.s32.totalorder %s40, 23
      %p618 = scmp.ne.s32.totalorder %s613, %s615
      %p619 = scmp.eq.s32.totalorder %s40, 0
      %p620 = por %p618, %p619
      %p621 = scmp.ne.s32.totalorder %s613, %s615
      %p622 = scmp.eq.s32.totalorder %s45, 23
      %p623 = por %p621, %p622
      %p624 = scmp.ne.s32.totalorder %s615, %s616
      %p625 = scmp.eq.s32.totalorder %s45, 0
      %p626 = por %p624, %p625
      %p627 = scmp.ne.s32.totalorder %s615, %s616
      %p628 = scmp.eq.s32.totalorder %s46, 23
      %p629 = por %p627, %p628
      %p631 = scmp.ne.s32.totalorder %s616, %s630
      %p632 = scmp.eq.s32.totalorder %s46, 0
      %p633 = por %p631, %p632
      %s635 = sadd.s32 %s634, 1
      %p638 = scmp.eq.s32.totalorder %s40, 23
      %p639 = scmp.ne.s32.totalorder %s634, %s636
      %p640 = scmp.eq.s32.totalorder %s40, 0
      %p641 = por %p639, %p640
      %p642 = scmp.ne.s32.totalorder %s634, %s636
      %p643 = scmp.eq.s32.totalorder %s45, 23
      %p644 = por %p642, %p643
      %p645 = scmp.ne.s32.totalorder %s636, %s637
      %p646 = scmp.eq.s32.totalorder %s45, 0
      %p647 = por %p645, %p646
      %p648 = scmp.ne.s32.totalorder %s636, %s637
      %p649 = scmp.eq.s32.totalorder %s46, 23
      %p650 = por %p648, %p649
      %p652 = scmp.ne.s32.totalorder %s637, %s651
      %p653 = scmp.eq.s32.totalorder %s46, 0
      %p654 = por %p652, %p653
      %s656 = sadd.s32 %s655, 1
      %p659 = scmp.eq.s32.totalorder %s40, 23
      %p660 = scmp.ne.s32.totalorder %s655, %s657
      %p661 = scmp.eq.s32.totalorder %s40, 0
      %p662 = por %p660, %p661
      %p663 = scmp.ne.s32.totalorder %s655, %s657
      %p664 = scmp.eq.s32.totalorder %s45, 23
      %p665 = por %p663, %p664
      %p666 = scmp.ne.s32.totalorder %s657, %s658
      %p667 = scmp.eq.s32.totalorder %s45, 0
      %p668 = por %p666, %p667
      %p669 = scmp.ne.s32.totalorder %s657, %s658
      %p670 = scmp.eq.s32.totalorder %s46, 23
      %p671 = por %p669, %p670
      %p673 = scmp.ne.s32.totalorder %s658, %s672
      %p674 = scmp.eq.s32.totalorder %s46, 0
      %p675 = por %p673, %p674
      %p676 = scmp.le.s32.totalorder 1, %s40
      %p677 = scmp.lt.s32.totalorder %s40, 25
      %p678 = pnand %p676, %p677
      %p679 = pneg %p678
      // Predicated region
      $region9: #{tpu_custom_call.1} parent=5 // pred_check
        _
      $region10: #{tpu_custom_call.1} parent=5 // pred_check_branch
        %681 = sbr.rel (%p678) target = $region12
      $region11: #{tpu_custom_call.1} parent=5 // pred_region
        %s682 = ssub.s32 %s40, 1
        // Predicated region
        $region13: #{tpu_custom_call.1} parent=11 // pred_check
          %p683 = pneg %p80
        $region14: #{tpu_custom_call.1} parent=11 // pred_check_branch
          %685 = sbr.rel (%p683) target = $region16
        $region15: #{tpu_custom_call.1} parent=11 // pred_region
          _
        $region16: #{tpu_custom_call.1} parent=11 // pred_fallthru
          _
        // Predicated region
        $region17: #{tpu_custom_call.1} parent=11 // pred_check
          %p686 = pneg %p101
        $region18: #{tpu_custom_call.1} parent=11 // pred_check_branch
          %688 = sbr.rel (%p686) target = $region20
        $region19: #{tpu_custom_call.1} parent=11 // pred_region
          _
        $region20: #{tpu_custom_call.1} parent=11 // pred_fallthru
          _
        // Predicated region
        $region21: #{tpu_custom_call.1} parent=11 // pred_check
          %p689 = pneg %p122
        $region22: #{tpu_custom_call.1} parent=11 // pred_check_branch
          %691 = sbr.rel (%p689) target = $region24
        $region23: #{tpu_custom_call.1} parent=11 // pred_region
          _
        $region24: #{tpu_custom_call.1} parent=11 // pred_fallthru
          _
        // Predicated region
        $region25: #{tpu_custom_call.1} parent=11 // pred_check
          %p692 = pneg %p143
        $region26: #{tpu_custom_call.1} parent=11 // pred_check_branch
          %694 = sbr.rel (%p692) target = $region28
        $region27: #{tpu_custom_call.1} parent=11 // pred_region
          _
        $region28: #{tpu_custom_call.1} parent=11 // pred_fallthru
          _
        // Predicated region
        $region29: #{tpu_custom_call.1} parent=11 // pred_check
          %p695 = pneg %p164
        $region30: #{tpu_custom_call.1} parent=11 // pred_check_branch
          %697 = sbr.rel (%p695) target = $region32
        $region31: #{tpu_custom_call.1} parent=11 // pred_region
          _
        $region32: #{tpu_custom_call.1} parent=11 // pred_fallthru
          _
        // Predicated region
        $region33: #{tpu_custom_call.1} parent=11 // pred_check
          %p698 = pneg %p185
        $region34: #{tpu_custom_call.1} parent=11 // pred_check_branch
          %700 = sbr.rel (%p698) target = $region36
        $region35: #{tpu_custom_call.1} parent=11 // pred_region
          _
        $region36: #{tpu_custom_call.1} parent=11 // pred_fallthru
          _
        // Predicated region
        $region37: #{tpu_custom_call.1} parent=11 // pred_check
          %p701 = pneg %p206
        $region38: #{tpu_custom_call.1} parent=11 // pred_check_branch
          %703 = sbr.rel (%p701) target = $region40
        $region39: #{tpu_custom_call.1} parent=11 // pred_region
          _
        $region40: #{tpu_custom_call.1} parent=11 // pred_fallthru
          _
        // Predicated region
        $region41: #{tpu_custom_call.1} parent=11 // pred_check
          %p704 = pneg %p227
        $region42: #{tpu_custom_call.1} parent=11 // pred_check_branch
          %706 = sbr.rel (%p704) target = $region44
        $region43: #{tpu_custom_call.1} parent=11 // pred_region
          %s708 = ssub.s32 8192, 8192
          %709 = vsyncadd [#allocation14], %s708
          %s710 = sshll.u32 [#allocation13], 4
          %s711 = int_to_ptr.vmem [resolvable:$true] %s710
          %716 = dma.hbm_to_vmem [thread:$0]  %s7, 8192, %s711, [#allocation14], 512, 512, 32
        $region44: #{tpu_custom_call.1} parent=11 // pred_fallthru
          _
        // Predicated region
        $region45: #{tpu_custom_call.1} parent=11 // pred_check
          %p717 = pneg %p248
        $region46: #{tpu_custom_call.1} parent=11 // pred_check_branch
          %719 = sbr.rel (%p717) target = $region48
        $region47: #{tpu_custom_call.1} parent=11 // pred_region
          _
        $region48: #{tpu_custom_call.1} parent=11 // pred_fallthru
          _
        // Predicated region
        $region49: #{tpu_custom_call.1} parent=11 // pred_check
          %p720 = pneg %p269
        $region50: #{tpu_custom_call.1} parent=11 // pred_check_branch
          %722 = sbr.rel (%p720) target = $region52
        $region51: #{tpu_custom_call.1} parent=11 // pred_region
          _
        $region52: #{tpu_custom_call.1} parent=11 // pred_fallthru
          _
        // Predicated region
        $region53: #{tpu_custom_call.1} parent=11 // pred_check
          %p723 = pneg %p290
        $region54: #{tpu_custom_call.1} parent=11 // pred_check_branch
          %725 = sbr.rel (%p723) target = $region56
        $region55: #{tpu_custom_call.1} parent=11 // pred_region
          %s727 = ssub.s32 32768, 32768
          %728 = vsyncadd [#allocation17], %s727
          %s729 = sshll.u32 [#allocation16], 4
          %s730 = int_to_ptr.vmem [resolvable:$true] %s729
          %735 = dma.hbm_to_vmem [thread:$0]  %s10, 32768, %s730, [#allocation17], 256, 256, 16
        $region56: #{tpu_custom_call.1} parent=11 // pred_fallthru
          _
        // Predicated region
        $region57: #{tpu_custom_call.1} parent=11 // pred_check
          %p736 = pneg %p311
        $region58: #{tpu_custom_call.1} parent=11 // pred_check_branch
          %738 = sbr.rel (%p736) target = $region60
        $region59: #{tpu_custom_call.1} parent=11 // pred_region
          _
        $region60: #{tpu_custom_call.1} parent=11 // pred_fallthru
          _
        // Predicated region
        $region61: #{tpu_custom_call.1} parent=11 // pred_check
          %p739 = pneg %p332
        $region62: #{tpu_custom_call.1} parent=11 // pred_check_branch
          %741 = sbr.rel (%p739) target = $region64
        $region63: #{tpu_custom_call.1} parent=11 // pred_region
          _
        $region64: #{tpu_custom_call.1} parent=11 // pred_fallthru
          _
        // Predicated region
        $region65: #{tpu_custom_call.1} parent=11 // pred_check
          %p742 = pneg %p353
        $region66: #{tpu_custom_call.1} parent=11 // pred_check_branch
          %744 = sbr.rel (%p742) target = $region68
        $region67: #{tpu_custom_call.1} parent=11 // pred_region
          %s746 = ssub.s32 8192, 8192
          %747 = vsyncadd [#allocation17], %s746
          %s748 = sshll.u32 [#allocation18], 4
          %s749 = int_to_ptr.vmem [resolvable:$true] %s748
          %754 = dma.hbm_to_vmem [thread:$0]  %s13, 8192, %s749, [#allocation17], 128, 128, 8
        $region68: #{tpu_custom_call.1} parent=11 // pred_fallthru
          _
        // Predicated region
        $region69: #{tpu_custom_call.1} parent=11 // pred_check
          %p755 = pneg %p374
        $region70: #{tpu_custom_call.1} parent=11 // pred_check_branch
          %757 = sbr.rel (%p755) target = $region72
        $region71: #{tpu_custom_call.1} parent=11 // pred_region
          _
        $region72: #{tpu_custom_call.1} parent=11 // pred_fallthru
          _
        // Predicated region
        $region73: #{tpu_custom_call.1} parent=11 // pred_check
          %p758 = pneg %p395
        $region74: #{tpu_custom_call.1} parent=11 // pred_check_branch
          %760 = sbr.rel (%p758) target = $region76
        $region75: #{tpu_custom_call.1} parent=11 // pred_region
          _
        $region76: #{tpu_custom_call.1} parent=11 // pred_fallthru
          _
        // Predicated region
        $region77: #{tpu_custom_call.1} parent=11 // pred_check
          %p761 = pneg %p416
        $region78: #{tpu_custom_call.1} parent=11 // pred_check_branch
          %763 = sbr.rel (%p761) target = $region80
        $region79: #{tpu_custom_call.1} parent=11 // pred_region
          _
        $region80: #{tpu_custom_call.1} parent=11 // pred_fallthru
          _
        // Predicated region
        $region81: #{tpu_custom_call.1} parent=11 // pred_check
          %p764 = pneg %p437
        $region82: #{tpu_custom_call.1} parent=11 // pred_check_branch
          %766 = sbr.rel (%p764) target = $region84
        $region83: #{tpu_custom_call.1} parent=11 // pred_region
          _
        $region84: #{tpu_custom_call.1} parent=11 // pred_fallthru
          _
        // Predicated region
        $region85: #{tpu_custom_call.1} parent=11 // pred_check
          %p767 = pneg %p458
        $region86: #{tpu_custom_call.1} parent=11 // pred_check_branch
          %769 = sbr.rel (%p767) target = $region88
        $region87: #{tpu_custom_call.1} parent=11 // pred_region
          _
        $region88: #{tpu_custom_call.1} parent=11 // pred_fallthru
          _
        // Predicated region
        $region89: #{tpu_custom_call.1} parent=11 // pred_check
          %p770 = pneg %p479
        $region90: #{tpu_custom_call.1} parent=11 // pred_check_branch
          %772 = sbr.rel (%p770) target = $region92
        $region91: #{tpu_custom_call.1} parent=11 // pred_region
          _
        $region92: #{tpu_custom_call.1} parent=11 // pred_fallthru
          _
        // Predicated region
        $region93: #{tpu_custom_call.1} parent=11 // pred_check
          %p773 = pneg %p500
        $region94: #{tpu_custom_call.1} parent=11 // pred_check_branch
          %775 = sbr.rel (%p773) target = $region96
        $region95: #{tpu_custom_call.1} parent=11 // pred_region
          _
        $region96: #{tpu_custom_call.1} parent=11 // pred_fallthru
          _
        // Predicated region
        $region97: #{tpu_custom_call.1} parent=11 // pred_check
          %p776 = pneg %p521
        $region98: #{tpu_custom_call.1} parent=11 // pred_check_branch
          %778 = sbr.rel (%p776) target = $region100
        $region99: #{tpu_custom_call.1} parent=11 // pred_region
          _
        $region100: #{tpu_custom_call.1} parent=11 // pred_fallthru
          _
        // Predicated region
        $region101: #{tpu_custom_call.1} parent=11 // pred_check
          %p779 = pneg %p542
        $region102: #{tpu_custom_call.1} parent=11 // pred_check_branch
          %781 = sbr.rel (%p779) target = $region104
        $region103: #{tpu_custom_call.1} parent=11 // pred_region
          _
        $region104: #{tpu_custom_call.1} parent=11 // pred_fallthru
          _
        // Predicated region
        $region105: #{tpu_custom_call.1} parent=11 // pred_check
          %p782 = pneg %p563
        $region106: #{tpu_custom_call.1} parent=11 // pred_check_branch
          %784 = sbr.rel (%p782) target = $region108
        $region107: #{tpu_custom_call.1} parent=11 // pred_region
          _
        $region108: #{tpu_custom_call.1} parent=11 // pred_fallthru
          _
        // Predicated region
        $region109: #{tpu_custom_call.1} parent=11 // pred_check
          %p785 = pneg %p584
        $region110: #{tpu_custom_call.1} parent=11 // pred_check_branch
          %787 = sbr.rel (%p785) target = $region112
        $region111: #{tpu_custom_call.1} parent=11 // pred_region
          %s789 = ssub.s32 8192, 8192
          %790 = vsyncadd [#allocation20], %s789
          %s791 = sshll.u32 [#allocation19], 4
          %s792 = int_to_ptr.vmem [resolvable:$true] %s791
          %797 = dma.hbm_to_vmem [thread:$0]  %s24, 8192, %s792, [#allocation20], 512, 512, 32
        $region112: #{tpu_custom_call.1} parent=11 // pred_fallthru
          _
        // Predicated region
        $region113: #{tpu_custom_call.1} parent=11 // pred_check
          %p798 = pneg %p605
        $region114: #{tpu_custom_call.1} parent=11 // pred_check_branch
          %800 = sbr.rel (%p798) target = $region116
        $region115: #{tpu_custom_call.1} parent=11 // pred_region
          _
        $region116: #{tpu_custom_call.1} parent=11 // pred_fallthru
          _
        // Predicated region
        $region117: #{tpu_custom_call.1} parent=11 // pred_check
          %p801 = pneg %p626
        $region118: #{tpu_custom_call.1} parent=11 // pred_check_branch
          %803 = sbr.rel (%p801) target = $region120
        $region119: #{tpu_custom_call.1} parent=11 // pred_region
          _
        $region120: #{tpu_custom_call.1} parent=11 // pred_fallthru
          _
      $region12: #{tpu_custom_call.1} parent=5 // pred_fallthru
        _
      %p804 = scmp.lt.s32.totalorder %s40, 24
      // Predicated region
      $region121: #{tpu_custom_call.1} parent=5 // pred_check
        %p805 = pneg %p804
      $region122: #{tpu_custom_call.1} parent=5 // pred_check_branch
        %807 = sbr.rel (%p805) target = $region124
      $region123: #{tpu_custom_call.1} parent=5 // pred_region
        _
      $region124: #{tpu_custom_call.1} parent=5 // pred_fallthru
        _
      %p808 = scmp.le.s32.totalorder 1, %s40
      %p809 = scmp.lt.s32.totalorder %s40, 25
      %p810 = pnand %p808, %p809
      %p811 = pneg %p810
      // Predicated region
      $region125: #{tpu_custom_call.1} parent=5 // pred_check
        _
      $region126: #{tpu_custom_call.1} parent=5 // pred_check_branch
        %813 = sbr.rel (%p810) target = $region128
      $region127: #{tpu_custom_call.1} parent=5 // pred_region
        %s814 = ssub.s32 %s40, 1
        // Predicated region
        $region129: #{tpu_custom_call.1} parent=127 // pred_check
          %p815 = pneg %p227
        $region130: #{tpu_custom_call.1} parent=127 // pred_check_branch
          %817 = sbr.rel (%p815) target = $region132
        $region131: #{tpu_custom_call.1} parent=127 // pred_region
          %818 = dma.done [#allocation14], 8192
        $region132: #{tpu_custom_call.1} parent=127 // pred_fallthru
          _
        // Predicated region
        $region133: #{tpu_custom_call.1} parent=127 // pred_check
          %p819 = pneg %p290
        $region134: #{tpu_custom_call.1} parent=127 // pred_check_branch
          %821 = sbr.rel (%p819) target = $region136
        $region135: #{tpu_custom_call.1} parent=127 // pred_region
          %822 = dma.done [#allocation17], 32768
        $region136: #{tpu_custom_call.1} parent=127 // pred_fallthru
          _
        // Predicated region
        $region137: #{tpu_custom_call.1} parent=127 // pred_check
          %p823 = pneg %p353
        $region138: #{tpu_custom_call.1} parent=127 // pred_check_branch
          %825 = sbr.rel (%p823) target = $region140
        $region139: #{tpu_custom_call.1} parent=127 // pred_region
          %826 = dma.done [#allocation17], 8192
        $region140: #{tpu_custom_call.1} parent=127 // pred_fallthru
          _
        // Predicated region
        $region141: #{tpu_custom_call.1} parent=127 // pred_check
          %p827 = pneg %p584
        $region142: #{tpu_custom_call.1} parent=127 // pred_check_branch
          %829 = sbr.rel (%p827) target = $region144
        $region143: #{tpu_custom_call.1} parent=127 // pred_region
          %830 = dma.done [#allocation20], 8192
        $region144: #{tpu_custom_call.1} parent=127 // pred_fallthru
          _
        %p831 = pneg %p80
        %p832 = pneg %p77
        %p833 = pneg %p101
        %p834 = pneg %p98
        %p835 = pneg %p122
        %p836 = pneg %p119
        %p837 = pneg %p143
        %p838 = pneg %p140
        %p839 = pneg %p164
        %p840 = pneg %p161
        %p841 = pneg %p185
        %p842 = pneg %p182
        %p843 = pneg %p206
        %p844 = pneg %p203
        %p845 = pneg %p227
        %p846 = pneg %p224
        %p847 = pneg %p248
        %p848 = pneg %p245
        %p849 = pneg %p269
        %p850 = pneg %p266
        %p851 = pneg %p290
        %p852 = pneg %p287
        %p853 = pneg %p311
        %p854 = pneg %p308
        %p855 = pneg %p332
        %p856 = pneg %p329
        %p857 = pneg %p353
        %p858 = pneg %p350
        %p859 = pneg %p374
        %p860 = pneg %p371
        %p861 = pneg %p395
        %p862 = pneg %p392
        %p863 = pneg %p416
        %p864 = pneg %p413
        %p865 = pneg %p437
        %p866 = pneg %p434
        %p867 = pneg %p458
        %p868 = pneg %p455
        %p869 = pneg %p479
        %p870 = pneg %p476
        %p871 = pneg %p500
        %p872 = pneg %p497
        %p873 = pneg %p521
        %p874 = pneg %p518
        %p875 = pneg %p542
        %p876 = pneg %p539
        %p877 = pneg %p563
        %p878 = pneg %p560
        %p879 = pneg %p584
        %p880 = pneg %p581
        %p881 = pneg %p605
        %p882 = pneg %p602
        %p883 = pneg %p626
        %p884 = pneg %p623
        %p885 = pneg %p647
        %p886 = pneg %p644
        %p887 = pneg %p668
        %p888 = pneg %p665
        %p890 = scmp.eq.s32.totalorder %s51, 0
        %p891 = scmp.eq.s32.totalorder %s52, 0
        %p892 = pnand %p890, %p891
        %p893 = pneg %p892
        %p894 = scmp.eq.s32.totalorder %s51, 1
        %p895 = scmp.eq.s32.totalorder %s52, 1
        %p896 = pnand %p894, %p895
        %p897 = pneg %p896
        %s898 = smul.u32 %s51, 16
        %s899 = smul.u32 %s52, 8
        %s900 = sadd.s32 %s898, %s899
        %s901 = scalar_lea.vmem %s0, %s900
        %v902 = vld [vmem:[%s901] sm:$0xff]
        %p903 = scmp.eq.s32.totalorder %s50, 0
        // Predicated region
        $region145: #{tpu_custom_call.1} parent=127 // pred_check
          %p904 = pneg %p903
        $region146: #{tpu_custom_call.1} parent=127 // pred_check_branch
          %906 = sbr.rel (%p904) target = $region148
        $region147: #{tpu_custom_call.1} parent=127 // pred_region
          %v907 = vld [vmem:[%s1] sm:$0x7]
          %909 = vset.pattern.permute.xlu0 0
          %910 = vperm.xlu0 %909, %v902
          %v911 = vpop.permute.xlu0 %910
          %v913 = vlaneseq
          %v914 = vshrl.u32 %v913, 7
          %v915 = vsub.s32 0, %v914
          %v916 = vrot.slane %v907, %v915
          %v917 = vmul.f32 %v911, %v916
          %918 = vset.pattern.permute.xlu0 1
          %919 = vperm.xlu0 %918, %v902
          %v920 = vpop.permute.xlu0 %919
          %v922 = vlaneseq
          %v923 = vshrl.u32 %v922, 7
          %v924 = vsub.s32 1, %v923
          %v925 = vrot.slane %v907, %v924
          %v926 = vmul.f32 %v920, %v925
          %v927 = vadd.f32 %v917, %v926
          %928 = vset.pattern.permute.xlu0 2
          %929 = vperm.xlu0 %928, %v902
          %v930 = vpop.permute.xlu0 %929
          %v932 = vlaneseq
          %v933 = vshrl.u32 %v932, 7
          %v934 = vsub.s32 2, %v933
          %v935 = vrot.slane %v907, %v934
          %v936 = vmul.f32 %v930, %v935
          %v937 = vadd.f32 %v927, %v936
          // Predicated region
          $region149: #{tpu_custom_call.1} parent=147 // pred_check
            _
          $region150: #{tpu_custom_call.1} parent=147 // pred_check_branch
            %939 = sbr.rel (%p892) target = $region152
          $region151: #{tpu_custom_call.1} parent=147 // pred_region
            %vm940 = vcmask 523264
            %941 = vst.msk [vmem:[#allocation2] sm:$0xff] %vm940, 0.0
            %942 = vst.msk [vmem:[#allocation2 + $0x8] sm:$0xff] %vm940, 0.0
          $region152: #{tpu_custom_call.1} parent=147 // pred_fallthru
            _
          %v943 = vld [vmem:[#allocation2] sm:$0xff]
          %v944 = vadd.f32 %v937, 0.0
          %v945 = vadd.f32 %v943, %v944
          %vm946 = vcmask 523264
          %947 = vst.msk [vmem:[#allocation2] sm:$0xff] %vm946, %v945
          %v948 = vld [vmem:[#allocation2 + $0x8] sm:$0xff]
          %v949 = vmul.f32 %v937, %v937
          %v950 = vadd.f32 %v949, 0.0
          %v951 = vadd.f32 %v948, %v950
          %952 = vst.msk [vmem:[#allocation2 + $0x8] sm:$0xff] %vm946, %v951
          // Predicated region
          $region153: #{tpu_custom_call.1} parent=147 // pred_check
            _
          $region154: #{tpu_custom_call.1} parent=147 // pred_check_branch
            %954 = sbr.rel (%p896) target = $region156
          $region155: #{tpu_custom_call.1} parent=147 // pred_region
            %v955 = vld [vmem:[#allocation2] sm:$0xff]
            %v956 = vsel %vm946, %v955, 0.0
            %v957 = vrot.slane %v956, 4
            %v958 = vadd.f32 %v956, %v957
            %v959 = vrot.slane %v958, 2
            %v960 = vadd.f32 %v958, %v959
            %v961 = vrot.slane %v960, 1
            %v962 = vadd.f32 %v960, %v961
            %v963 = vld [vmem:[#allocation2 + $0x8] sm:$0xff]
            %v964 = vsel %vm946, %v963, 0.0
            %v965 = vrot.slane %v964, 4
            %v966 = vadd.f32 %v964, %v965
            %v967 = vrot.slane %v966, 2
            %v968 = vadd.f32 %v966, %v967
            %v969 = vrot.slane %v968, 1
            %v970 = vadd.f32 %v968, %v969
            %v971 = vmul.f32 %v962, 0.03125
            %v972 = vmul.f32 %v970, 0.03125
            %v973 = vmul.f32 %v971, %v971
            %v974 = vsub.f32 %v972, %v973
            %v975 = vmax.f32 %v974, 0.0
            %v976 = vld [vmem:[%s2] sm:$0x1]
            %v977 = vadd.f32 %v975, 1e-05
            %v978 = vrsqrt.pop %v977
            %v979 = vmul.f32 %v976, %v978
            %v980 = vld [vmem:[%s3] sm:$0x1]
            %v981 = vmul.f32 %v971, %v979
            %v982 = vsub.f32 %v980, %v981
            %vm983 = vcmask 516096
            %984 = vst.msk [vmem:[#allocation2] sm:$0x1] %vm983, %v979
            %985 = vst.msk [vmem:[#allocation2 + $0x1] sm:$0x1] %vm983, %v982
          $region156: #{tpu_custom_call.1} parent=147 // pred_fallthru
            _
        $region148: #{tpu_custom_call.1} parent=127 // pred_fallthru
          _
        %p986 = scmp.eq.s32.totalorder %s50, 1
        // Predicated region
        $region157: #{tpu_custom_call.1} parent=127 // pred_check
          %p987 = pneg %p986
        $region158: #{tpu_custom_call.1} parent=127 // pred_check_branch
          %989 = sbr.rel (%p987) target = $region160
        $region159: #{tpu_custom_call.1} parent=127 // pred_region
          %v990 = vld [vmem:[%s1] sm:$0x7]
          %992 = vset.pattern.permute.xlu0 0
          %993 = vperm.xlu0 %992, %v902
          %v994 = vpop.permute.xlu0 %993
          %v996 = vlaneseq
          %v997 = vshrl.u32 %v996, 7
          %v998 = vsub.s32 0, %v997
          %v999 = vrot.slane %v990, %v998
          %v1000 = vmul.f32 %v994, %v999
          %1001 = vset.pattern.permute.xlu0 1
          %1002 = vperm.xlu0 %1001, %v902
          %v1003 = vpop.permute.xlu0 %1002
          %v1005 = vlaneseq
          %v1006 = vshrl.u32 %v1005, 7
          %v1007 = vsub.s32 1, %v1006
          %v1008 = vrot.slane %v990, %v1007
          %v1009 = vmul.f32 %v1003, %v1008
          %v1010 = vadd.f32 %v1000, %v1009
          %1011 = vset.pattern.permute.xlu0 2
          %1012 = vperm.xlu0 %1011, %v902
          %v1013 = vpop.permute.xlu0 %1012
          %v1015 = vlaneseq
          %v1016 = vshrl.u32 %v1015, 7
          %v1017 = vsub.s32 2, %v1016
          %v1018 = vrot.slane %v990, %v1017
          %v1019 = vmul.f32 %v1013, %v1018
          %v1020 = vadd.f32 %v1010, %v1019
          %v1021 = vld [vmem:[#allocation2] sm:$0x1]
          %v1022 = vlaneseq
          %v1023 = vshrl.u32 %v1022, 7
          %v1024 = vsub.s32 0, %v1023
          %v1025 = vrot.slane %v1021, %v1024
          %v1026 = vmul.f32 %v1020, %v1025
          %v1027 = vld [vmem:[#allocation2 + $0x1] sm:$0x1]
          %v1028 = vlaneseq
          %v1029 = vshrl.u32 %v1028, 7
          %v1030 = vsub.s32 0, %v1029
          %v1031 = vrot.slane %v1027, %v1030
          %v1032 = vadd.f32 %v1026, %v1031
          %v1033 = vmax.f32 %v1032, 0.0
          %v1034 = vpack.c.bf16 %v1033, %v1033
          %v1035 = vld [vmem:[%s4] sm:$0xf]
          %v1036 = vld [vmem:[%s4 + $0x4] sm:$0xf]
          %v1037 = vld [vmem:[%s4 + $0x8] sm:$0xf]
          %v1038 = vld [vmem:[%s4 + $0xc] sm:$0xf]
          %v1039 = vld [vmem:[%s4 + $0x10] sm:$0xf]
          %v1040 = vld [vmem:[%s4 + $0x14] sm:$0xf]
          %v1041 = vld [vmem:[%s4 + $0x18] sm:$0xf]
          %v1042 = vld [vmem:[%s4 + $0x1c] sm:$0xf]
          %v1051 = vunpack.c.l.b16 %v1035
          %v1052 = vunpack.c.l.b16 %v1036
          %v1053 = vunpack.c.l.b16 %v1037
          %v1054 = vunpack.c.l.b16 %v1038
          %v1055 = vunpack.c.l.b16 %v1039
          %v1056 = vunpack.c.l.b16 %v1040
          %v1057 = vunpack.c.l.b16 %v1041
          %v1058 = vunpack.c.l.b16 %v1042
          %v1059 = vpack.c.b16 %v1052, %v1051
          %v1060 = vpack.c.b16 %v1054, %v1053
          %v1061 = vpack.c.b16 %v1056, %v1055
          %v1062 = vpack.c.b16 %v1058, %v1057
          %vm1067 = vcmask 523264
          %v1069 = vsel %vm1067, %v1034, 0
          %1071 = vmatprep.subr.bf16.mxu0 0
          %1072 = vmatpush1.bf16.msra.mxu0 0
          %1073 = vmatprep.subr.bf16.mxu0 0
          %1074 = vmatpush1.bf16.msra.mxu0 0
          %1075 = vmatprep.subr.bf16.mxu0 0
          %1076 = vmatpush1.bf16.msra.mxu0 0
          %1077 = vmatprep.subr.bf16.mxu0 0
          %1078 = vmatpush1.bf16.msra.mxu0 0
          %1079 = vmatprep.subr.bf16.mxu0 0
          %1080 = vmatpush1.bf16.msra.mxu0 %v1062
          %1081 = vmatprep.subr.bf16.mxu0 0
          %1082 = vmatpush1.bf16.msra.mxu0 %v1061
          %1083 = vmatprep.subr.bf16.mxu0 0
          %1084 = vmatpush1.bf16.msra.mxu0 %v1060
          %1085 = vmatprep.subr.bf16.mxu0 0
          %1086 = vmatpush1.bf16.msra.mxu0 %v1059
          %1087 = vmatprep.subr.bf16.mxu0 0
          %1088 = vmatpush2.bf16.msra.mxu0 0
          %1089 = vmatprep.subr.bf16.mxu0 0
          %1090 = vmatpush2.bf16.msra.mxu0 0
          %1091 = vmatprep.subr.bf16.mxu0 0
          %1092 = vmatpush2.bf16.msra.mxu0 0
          %1093 = vmatprep.subr.bf16.mxu0 0
          %1094 = vmatpush2.bf16.msra.mxu0 0
          %1095 = vmatprep.subr.bf16.mxu0 0
          %1096 = vmatpush2.bf16.msra.mxu0 0
          %1097 = vmatprep.subr.bf16.mxu0 0
          %1098 = vmatpush2.bf16.msra.mxu0 0
          %1099 = vmatprep.subr.bf16.mxu0 0
          %1100 = vmatpush2.bf16.msra.mxu0 0
          %1101 = vmatprep.subr.bf16.mxu0 0
          %1102 = vmatpush2.bf16.msra.mxu0 0
          %1103 = vmatprep.mubr.bf16.mxu0 0
          %1104 = vmatmul.mubr.bf16.gmra.mxu0 %v1069
          %v1105 = vpop.f32.mrf.mxu0
          %v1106 = vadd.f32 0.0, %v1105
          %v1107 = vpop.f32.mrf.mxu0
          %v1108 = vpop.f32.mrf.mxu0
          %v1109 = vpop.f32.mrf.mxu0
          %1110 = vdwg.mxu0
          // Predicated region
          $region161: #{tpu_custom_call.1} parent=159 // pred_check
            _
          $region162: #{tpu_custom_call.1} parent=159 // pred_check_branch
            %1112 = sbr.rel (%p892) target = $region164
          $region163: #{tpu_custom_call.1} parent=159 // pred_region
            %1113 = vst [vmem:[#allocation3] sm:$0xff] 0.0
            %1114 = vst [vmem:[#allocation3 + $0x8] sm:$0xff] 0.0
          $region164: #{tpu_custom_call.1} parent=159 // pred_fallthru
            _
          %v1115 = vld [vmem:[#allocation3] sm:$0xff]
          %v1116 = vadd.f32 %v1106, 0.0
          %v1117 = vadd.f32 %v1115, %v1116
          %1118 = vst [vmem:[#allocation3] sm:$0xff] %v1117
          %v1119 = vld [vmem:[#allocation3 + $0x8] sm:$0xff]
          %v1120 = vmul.f32 %v1106, %v1106
          %v1121 = vadd.f32 %v1120, 0.0
          %v1122 = vadd.f32 %v1119, %v1121
          %1123 = vst [vmem:[#allocation3 + $0x8] sm:$0xff] %v1122
          // Predicated region
          $region165: #{tpu_custom_call.1} parent=159 // pred_check
            _
          $region166: #{tpu_custom_call.1} parent=159 // pred_check_branch
            %1125 = sbr.rel (%p896) target = $region168
          $region167: #{tpu_custom_call.1} parent=159 // pred_region
            %v1126 = vld [vmem:[#allocation3] sm:$0xff]
            %v1127 = vrot.slane %v1126, 4
            %v1128 = vadd.f32 %v1126, %v1127
            %v1129 = vrot.slane %v1128, 2
            %v1130 = vadd.f32 %v1128, %v1129
            %v1131 = vrot.slane %v1130, 1
            %v1132 = vadd.f32 %v1130, %v1131
            %v1133 = vld [vmem:[#allocation3 + $0x8] sm:$0xff]
            %v1134 = vrot.slane %v1133, 4
            %v1135 = vadd.f32 %v1133, %v1134
            %v1136 = vrot.slane %v1135, 2
            %v1137 = vadd.f32 %v1135, %v1136
            %v1138 = vrot.slane %v1137, 1
            %v1139 = vadd.f32 %v1137, %v1138
            %v1140 = vmul.f32 %v1132, 0.03125
            %v1141 = vmul.f32 %v1139, 0.03125
            %v1142 = vmul.f32 %v1140, %v1140
            %v1143 = vsub.f32 %v1141, %v1142
            %v1144 = vmax.f32 %v1143, 0.0
            %v1145 = vld [vmem:[%s5] sm:$0x1]
            %v1146 = vadd.f32 %v1144, 1e-05
            %v1147 = vrsqrt.pop %v1146
            %v1148 = vmul.f32 %v1145, %v1147
            %v1149 = vld [vmem:[%s6] sm:$0x1]
            %v1150 = vmul.f32 %v1140, %v1148
            %v1151 = vsub.f32 %v1149, %v1150
            %1152 = vst [vmem:[#allocation3] sm:$0x1] %v1148
            %1153 = vst [vmem:[#allocation3 + $0x1] sm:$0x1] %v1151
          $region168: #{tpu_custom_call.1} parent=159 // pred_fallthru
            _
        $region160: #{tpu_custom_call.1} parent=127 // pred_fallthru
          _
        %p1154 = scmp.eq.s32.totalorder %s50, 2
        // Predicated region
        $region169: #{tpu_custom_call.1} parent=127 // pred_check
          %p1155 = pneg %p1154
        $region170: #{tpu_custom_call.1} parent=127 // pred_check_branch
          %1157 = sbr.rel (%p1155) target = $region172
        $region171: #{tpu_custom_call.1} parent=127 // pred_region
          %v1158 = vld [vmem:[%s1] sm:$0x7]
          %1160 = vset.pattern.permute.xlu0 0
          %1161 = vperm.xlu0 %1160, %v902
          %v1162 = vpop.permute.xlu0 %1161
          %v1164 = vlaneseq
          %v1165 = vshrl.u32 %v1164, 7
          %v1166 = vsub.s32 0, %v1165
          %v1167 = vrot.slane %v1158, %v1166
          %v1168 = vmul.f32 %v1162, %v1167
          %1169 = vset.pattern.permute.xlu0 1
          %1170 = vperm.xlu0 %1169, %v902
          %v1171 = vpop.permute.xlu0 %1170
          %v1173 = vlaneseq
          %v1174 = vshrl.u32 %v1173, 7
          %v1175 = vsub.s32 1, %v1174
          %v1176 = vrot.slane %v1158, %v1175
          %v1177 = vmul.f32 %v1171, %v1176
          %v1178 = vadd.f32 %v1168, %v1177
          %1179 = vset.pattern.permute.xlu0 2
          %1180 = vperm.xlu0 %1179, %v902
          %v1181 = vpop.permute.xlu0 %1180
          %v1183 = vlaneseq
          %v1184 = vshrl.u32 %v1183, 7
          %v1185 = vsub.s32 2, %v1184
          %v1186 = vrot.slane %v1158, %v1185
          %v1187 = vmul.f32 %v1181, %v1186
          %v1188 = vadd.f32 %v1178, %v1187
          %v1189 = vld [vmem:[#allocation2] sm:$0x1]
          %v1190 = vlaneseq
          %v1191 = vshrl.u32 %v1190, 7
          %v1192 = vsub.s32 0, %v1191
          %v1193 = vrot.slane %v1189, %v1192
          %v1194 = vmul.f32 %v1188, %v1193
          %v1195 = vld [vmem:[#allocation2 + $0x1] sm:$0x1]
          %v1196 = vlaneseq
          %v1197 = vshrl.u32 %v1196, 7
          %v1198 = vsub.s32 0, %v1197
          %v1199 = vrot.slane %v1195, %v1198
          %v1200 = vadd.f32 %v1194, %v1199
          %v1201 = vmax.f32 %v1200, 0.0
          %v1202 = vpack.c.bf16 %v1201, %v1201
          %v1203 = vld [vmem:[%s4] sm:$0xf]
          %v1204 = vld [vmem:[%s4 + $0x4] sm:$0xf]
          %v1205 = vld [vmem:[%s4 + $0x8] sm:$0xf]
          %v1206 = vld [vmem:[%s4 + $0xc] sm:$0xf]
          %v1207 = vld [vmem:[%s4 + $0x10] sm:$0xf]
          %v1208 = vld [vmem:[%s4 + $0x14] sm:$0xf]
          %v1209 = vld [vmem:[%s4 + $0x18] sm:$0xf]
          %v1210 = vld [vmem:[%s4 + $0x1c] sm:$0xf]
          %v1219 = vunpack.c.l.b16 %v1203
          %v1220 = vunpack.c.l.b16 %v1204
          %v1221 = vunpack.c.l.b16 %v1205
          %v1222 = vunpack.c.l.b16 %v1206
          %v1223 = vunpack.c.l.b16 %v1207
          %v1224 = vunpack.c.l.b16 %v1208
          %v1225 = vunpack.c.l.b16 %v1209
          %v1226 = vunpack.c.l.b16 %v1210
          %v1227 = vpack.c.b16 %v1220, %v1219
          %v1228 = vpack.c.b16 %v1222, %v1221
          %v1229 = vpack.c.b16 %v1224, %v1223
          %v1230 = vpack.c.b16 %v1226, %v1225
          %vm1235 = vcmask 523264
          %v1237 = vsel %vm1235, %v1202, 0
          %1239 = vmatprep.subr.bf16.mxu0 0
          %1240 = vmatpush1.bf16.msra.mxu0 0
          %1241 = vmatprep.subr.bf16.mxu0 0
          %1242 = vmatpush1.bf16.msra.mxu0 0
          %1243 = vmatprep.subr.bf16.mxu0 0
          %1244 = vmatpush1.bf16.msra.mxu0 0
          %1245 = vmatprep.subr.bf16.mxu0 0
          %1246 = vmatpush1.bf16.msra.mxu0 0
          %1247 = vmatprep.subr.bf16.mxu0 0
          %1248 = vmatpush1.bf16.msra.mxu0 %v1230
          %1249 = vmatprep.subr.bf16.mxu0 0
          %1250 = vmatpush1.bf16.msra.mxu0 %v1229
          %1251 = vmatprep.subr.bf16.mxu0 0
          %1252 = vmatpush1.bf16.msra.mxu0 %v1228
          %1253 = vmatprep.subr.bf16.mxu0 0
          %1254 = vmatpush1.bf16.msra.mxu0 %v1227
          %1255 = vmatprep.subr.bf16.mxu0 0
          %1256 = vmatpush2.bf16.msra.mxu0 0
          %1257 = vmatprep.subr.bf16.mxu0 0
          %1258 = vmatpush2.bf16.msra.mxu0 0
          %1259 = vmatprep.subr.bf16.mxu0 0
          %1260 = vmatpush2.bf16.msra.mxu0 0
          %1261 = vmatprep.subr.bf16.mxu0 0
          %1262 = vmatpush2.bf16.msra.mxu0 0
          %1263 = vmatprep.subr.bf16.mxu0 0
          %1264 = vmatpush2.bf16.msra.mxu0 0
          %1265 = vmatprep.subr.bf16.mxu0 0
          %1266 = vmatpush2.bf16.msra.mxu0 0
          %1267 = vmatprep.subr.bf16.mxu0 0
          %1268 = vmatpush2.bf16.msra.mxu0 0
          %1269 = vmatprep.subr.bf16.mxu0 0
          %1270 = vmatpush2.bf16.msra.mxu0 0
          %1271 = vmatprep.mubr.bf16.mxu0 0
          %1272 = vmatmul.mubr.bf16.gmra.mxu0 %v1237
          %v1273 = vpop.f32.mrf.mxu0
          %v1274 = vadd.f32 0.0, %v1273
          %v1275 = vpop.f32.mrf.mxu0
          %v1276 = vpop.f32.mrf.mxu0
          %v1277 = vpop.f32.mrf.mxu0
          %1278 = vdwg.mxu0
          %v1279 = vld [vmem:[#allocation3] sm:$0x1]
          %v1280 = vlaneseq
          %v1281 = vshrl.u32 %v1280, 7
          %v1282 = vsub.s32 0, %v1281
          %v1283 = vrot.slane %v1279, %v1282
          %v1284 = vmul.f32 %v1274, %v1283
          %v1285 = vld [vmem:[#allocation3 + $0x1] sm:$0x1]
          %v1286 = vlaneseq
          %v1287 = vshrl.u32 %v1286, 7
          %v1288 = vsub.s32 0, %v1287
          %v1289 = vrot.slane %v1285, %v1288
          %v1290 = vadd.f32 %v1284, %v1289
          %v1291 = vmax.f32 %v1290, 0.0
          %v1292 = vpack.c.bf16 %v1291, %v1291
          %v1293 = vld [vmem:[#allocation13] sm:$0xff]
          %v1294 = vld [vmem:[#allocation13 + $0x8] sm:$0xff]
          %v1295 = vld [vmem:[#allocation13 + $0x10] sm:$0xff]
          %v1296 = vld [vmem:[#allocation13 + $0x18] sm:$0xff]
          %v1297 = vld [vmem:[#allocation13 + $0x20] sm:$0xff]
          %v1298 = vld [vmem:[#allocation13 + $0x28] sm:$0xff]
          %v1299 = vld [vmem:[#allocation13 + $0x30] sm:$0xff]
          %v1300 = vld [vmem:[#allocation13 + $0x38] sm:$0xff]
          %v1301 = vld [vmem:[#allocation13 + $0x40] sm:$0xff]
          %v1302 = vld [vmem:[#allocation13 + $0x48] sm:$0xff]
          %v1303 = vld [vmem:[#allocation13 + $0x50] sm:$0xff]
          %v1304 = vld [vmem:[#allocation13 + $0x58] sm:$0xff]
          %v1305 = vld [vmem:[#allocation13 + $0x60] sm:$0xff]
          %v1306 = vld [vmem:[#allocation13 + $0x68] sm:$0xff]
          %v1307 = vld [vmem:[#allocation13 + $0x70] sm:$0xff]
          %v1308 = vld [vmem:[#allocation13 + $0x78] sm:$0xff]
          %v1309 = vld [vmem:[#allocation13 + $0x80] sm:$0xff]
          %v1310 = vld [vmem:[#allocation13 + $0x88] sm:$0xff]
          %v1311 = vld [vmem:[#allocation13 + $0x90] sm:$0xff]
          %v1312 = vld [vmem:[#allocation13 + $0x98] sm:$0xff]
          %v1313 = vld [vmem:[#allocation13 + $0xa0] sm:$0xff]
          %v1314 = vld [vmem:[#allocation13 + $0xa8] sm:$0xff]
          %v1315 = vld [vmem:[#allocation13 + $0xb0] sm:$0xff]
          %v1316 = vld [vmem:[#allocation13 + $0xb8] sm:$0xff]
          %v1317 = vld [vmem:[#allocation13 + $0xc0] sm:$0xff]
          %v1318 = vld [vmem:[#allocation13 + $0xc8] sm:$0xff]
          %v1319 = vld [vmem:[#allocation13 + $0xd0] sm:$0xff]
          %v1320 = vld [vmem:[#allocation13 + $0xd8] sm:$0xff]
          %v1321 = vld [vmem:[#allocation13 + $0xe0] sm:$0xff]
          %v1322 = vld [vmem:[#allocation13 + $0xe8] sm:$0xff]
          %v1323 = vld [vmem:[#allocation13 + $0xf0] sm:$0xff]
          %v1324 = vld [vmem:[#allocation13 + $0xf8] sm:$0xff]
          %v1325 = vld [vmem:[#allocation13 + $0x100] sm:$0xff]
          %v1326 = vld [vmem:[#allocation13 + $0x108] sm:$0xff]
          %v1327 = vld [vmem:[#allocation13 + $0x110] sm:$0xff]
          %v1328 = vld [vmem:[#allocation13 + $0x118] sm:$0xff]
          %v1329 = vld [vmem:[#allocation13 + $0x120] sm:$0xff]
          %v1330 = vld [vmem:[#allocation13 + $0x128] sm:$0xff]
          %v1331 = vld [vmem:[#allocation13 + $0x130] sm:$0xff]
          %v1332 = vld [vmem:[#allocation13 + $0x138] sm:$0xff]
          %v1333 = vld [vmem:[#allocation13 + $0x140] sm:$0xff]
          %v1334 = vld [vmem:[#allocation13 + $0x148] sm:$0xff]
          %v1335 = vld [vmem:[#allocation13 + $0x150] sm:$0xff]
          %v1336 = vld [vmem:[#allocation13 + $0x158] sm:$0xff]
          %v1337 = vld [vmem:[#allocation13 + $0x160] sm:$0xff]
          %v1338 = vld [vmem:[#allocation13 + $0x168] sm:$0xff]
          %v1339 = vld [vmem:[#allocation13 + $0x170] sm:$0xff]
          %v1340 = vld [vmem:[#allocation13 + $0x178] sm:$0xff]
          %v1341 = vld [vmem:[#allocation13 + $0x180] sm:$0xff]
          %v1342 = vld [vmem:[#allocation13 + $0x188] sm:$0xff]
          %v1343 = vld [vmem:[#allocation13 + $0x190] sm:$0xff]
          %v1344 = vld [vmem:[#allocation13 + $0x198] sm:$0xff]
          %v1345 = vld [vmem:[#allocation13 + $0x1a0] sm:$0xff]
          %v1346 = vld [vmem:[#allocation13 + $0x1a8] sm:$0xff]
          %v1347 = vld [vmem:[#allocation13 + $0x1b0] sm:$0xff]
          %v1348 = vld [vmem:[#allocation13 + $0x1b8] sm:$0xff]
          %v1349 = vld [vmem:[#allocation13 + $0x1c0] sm:$0xff]
          %v1350 = vld [vmem:[#allocation13 + $0x1c8] sm:$0xff]
          %v1351 = vld [vmem:[#allocation13 + $0x1d0] sm:$0xff]
          %v1352 = vld [vmem:[#allocation13 + $0x1d8] sm:$0xff]
          %v1353 = vld [vmem:[#allocation13 + $0x1e0] sm:$0xff]
          %v1354 = vld [vmem:[#allocation13 + $0x1e8] sm:$0xff]
          %v1355 = vld [vmem:[#allocation13 + $0x1f0] sm:$0xff]
          %v1356 = vld [vmem:[#allocation13 + $0x1f8] sm:$0xff]
          %v1421 = vunpack.c.l.b16 %v1293
          %v1422 = vunpack.c.h.b16 %v1293
          %v1423 = vunpack.c.l.b16 %v1294
          %v1424 = vunpack.c.h.b16 %v1294
          %v1425 = vunpack.c.l.b16 %v1295
          %v1426 = vunpack.c.h.b16 %v1295
          %v1427 = vunpack.c.l.b16 %v1296
          %v1428 = vunpack.c.h.b16 %v1296
          %v1429 = vunpack.c.l.b16 %v1297
          %v1430 = vunpack.c.h.b16 %v1297
          %v1431 = vunpack.c.l.b16 %v1298
          %v1432 = vunpack.c.h.b16 %v1298
          %v1433 = vunpack.c.l.b16 %v1299
          %v1434 = vunpack.c.h.b16 %v1299
          %v1435 = vunpack.c.l.b16 %v1300
          %v1436 = vunpack.c.h.b16 %v1300
          %v1437 = vunpack.c.l.b16 %v1301
          %v1438 = vunpack.c.h.b16 %v1301
          %v1439 = vunpack.c.l.b16 %v1302
          %v1440 = vunpack.c.h.b16 %v1302
          %v1441 = vunpack.c.l.b16 %v1303
          %v1442 = vunpack.c.h.b16 %v1303
          %v1443 = vunpack.c.l.b16 %v1304
          %v1444 = vunpack.c.h.b16 %v1304
          %v1445 = vunpack.c.l.b16 %v1305
          %v1446 = vunpack.c.h.b16 %v1305
          %v1447 = vunpack.c.l.b16 %v1306
          %v1448 = vunpack.c.h.b16 %v1306
          %v1449 = vunpack.c.l.b16 %v1307
          %v1450 = vunpack.c.h.b16 %v1307
          %v1451 = vunpack.c.l.b16 %v1308
          %v1452 = vunpack.c.h.b16 %v1308
          %v1453 = vunpack.c.l.b16 %v1309
          %v1454 = vunpack.c.h.b16 %v1309
          %v1455 = vunpack.c.l.b16 %v1310
          %v1456 = vunpack.c.h.b16 %v1310
          %v1457 = vunpack.c.l.b16 %v1311
          %v1458 = vunpack.c.h.b16 %v1311
          %v1459 = vunpack.c.l.b16 %v1312
          %v1460 = vunpack.c.h.b16 %v1312
          %v1461 = vunpack.c.l.b16 %v1313
          %v1462 = vunpack.c.h.b16 %v1313
          %v1463 = vunpack.c.l.b16 %v1314
          %v1464 = vunpack.c.h.b16 %v1314
          %v1465 = vunpack.c.l.b16 %v1315
          %v1466 = vunpack.c.h.b16 %v1315
          %v1467 = vunpack.c.l.b16 %v1316
          %v1468 = vunpack.c.h.b16 %v1316
          %v1469 = vunpack.c.l.b16 %v1317
          %v1470 = vunpack.c.h.b16 %v1317
          %v1471 = vunpack.c.l.b16 %v1318
          %v1472 = vunpack.c.h.b16 %v1318
          %v1473 = vunpack.c.l.b16 %v1319
          %v1474 = vunpack.c.h.b16 %v1319
          %v1475 = vunpack.c.l.b16 %v1320
          %v1476 = vunpack.c.h.b16 %v1320
          %v1477 = vunpack.c.l.b16 %v1321
          %v1478 = vunpack.c.h.b16 %v1321
          %v1479 = vunpack.c.l.b16 %v1322
          %v1480 = vunpack.c.h.b16 %v1322
          %v1481 = vunpack.c.l.b16 %v1323
          %v1482 = vunpack.c.h.b16 %v1323
          %v1483 = vunpack.c.l.b16 %v1324
          %v1484 = vunpack.c.h.b16 %v1324
          %v1485 = vunpack.c.l.b16 %v1325
          %v1486 = vunpack.c.h.b16 %v1325
          %v1487 = vunpack.c.l.b16 %v1326
          %v1488 = vunpack.c.h.b16 %v1326
          %v1489 = vunpack.c.l.b16 %v1327
          %v1490 = vunpack.c.h.b16 %v1327
          %v1491 = vunpack.c.l.b16 %v1328
          %v1492 = vunpack.c.h.b16 %v1328
          %v1493 = vunpack.c.l.b16 %v1329
          %v1494 = vunpack.c.h.b16 %v1329
          %v1495 = vunpack.c.l.b16 %v1330
          %v1496 = vunpack.c.h.b16 %v1330
          %v1497 = vunpack.c.l.b16 %v1331
          %v1498 = vunpack.c.h.b16 %v1331
          %v1499 = vunpack.c.l.b16 %v1332
          %v1500 = vunpack.c.h.b16 %v1332
          %v1501 = vunpack.c.l.b16 %v1333
          %v1502 = vunpack.c.h.b16 %v1333
          %v1503 = vunpack.c.l.b16 %v1334
          %v1504 = vunpack.c.h.b16 %v1334
          %v1505 = vunpack.c.l.b16 %v1335
          %v1506 = vunpack.c.h.b16 %v1335
          %v1507 = vunpack.c.l.b16 %v1336
          %v1508 = vunpack.c.h.b16 %v1336
          %v1509 = vunpack.c.l.b16 %v1337
          %v1510 = vunpack.c.h.b16 %v1337
          %v1511 = vunpack.c.l.b16 %v1338
          %v1512 = vunpack.c.h.b16 %v1338
          %v1513 = vunpack.c.l.b16 %v1339
          %v1514 = vunpack.c.h.b16 %v1339
          %v1515 = vunpack.c.l.b16 %v1340
          %v1516 = vunpack.c.h.b16 %v1340
          %v1517 = vunpack.c.l.b16 %v1341
          %v1518 = vunpack.c.h.b16 %v1341
          %v1519 = vunpack.c.l.b16 %v1342
          %v1520 = vunpack.c.h.b16 %v1342
          %v1521 = vunpack.c.l.b16 %v1343
          %v1522 = vunpack.c.h.b16 %v1343
          %v1523 = vunpack.c.l.b16 %v1344
          %v1524 = vunpack.c.h.b16 %v1344
          %v1525 = vunpack.c.l.b16 %v1345
          %v1526 = vunpack.c.h.b16 %v1345
          %v1527 = vunpack.c.l.b16 %v1346
          %v1528 = vunpack.c.h.b16 %v1346
          %v1529 = vunpack.c.l.b16 %v1347
          %v1530 = vunpack.c.h.b16 %v1347
          %v1531 = vunpack.c.l.b16 %v1348
          %v1532 = vunpack.c.h.b16 %v1348
          %v1533 = vunpack.c.l.b16 %v1349
          %v1534 = vunpack.c.h.b16 %v1349
          %v1535 = vunpack.c.l.b16 %v1350
          %v1536 = vunpack.c.h.b16 %v1350
          %v1537 = vunpack.c.l.b16 %v1351
          %v1538 = vunpack.c.h.b16 %v1351
          %v1539 = vunpack.c.l.b16 %v1352
          %v1540 = vunpack.c.h.b16 %v1352
          %v1541 = vunpack.c.l.b16 %v1353
          %v1542 = vunpack.c.h.b16 %v1353
          %v1543 = vunpack.c.l.b16 %v1354
          %v1544 = vunpack.c.h.b16 %v1354
          %v1545 = vunpack.c.l.b16 %v1355
          %v1546 = vunpack.c.h.b16 %v1355
          %v1547 = vunpack.c.l.b16 %v1356
          %v1548 = vunpack.c.h.b16 %v1356
          %v1549 = vpack.c.b16 %v1429, %v1421
          %v1550 = vpack.c.b16 %v1430, %v1422
          %v1551 = vpack.c.b16 %v1431, %v1423
          %v1552 = vpack.c.b16 %v1432, %v1424
          %v1553 = vpack.c.b16 %v1433, %v1425
          %v1554 = vpack.c.b16 %v1434, %v1426
          %v1555 = vpack.c.b16 %v1435, %v1427
          %v1556 = vpack.c.b16 %v1436, %v1428
          %v1557 = vpack.c.b16 %v1445, %v1437
          %v1558 = vpack.c.b16 %v1446, %v1438
          %v1559 = vpack.c.b16 %v1447, %v1439
          %v1560 = vpack.c.b16 %v1448, %v1440
          %v1561 = vpack.c.b16 %v1449, %v1441
          %v1562 = vpack.c.b16 %v1450, %v1442
          %v1563 = vpack.c.b16 %v1451, %v1443
          %v1564 = vpack.c.b16 %v1452, %v1444
          %v1565 = vpack.c.b16 %v1461, %v1453
          %v1566 = vpack.c.b16 %v1462, %v1454
          %v1567 = vpack.c.b16 %v1463, %v1455
          %v1568 = vpack.c.b16 %v1464, %v1456
          %v1569 = vpack.c.b16 %v1465, %v1457
          %v1570 = vpack.c.b16 %v1466, %v1458
          %v1571 = vpack.c.b16 %v1467, %v1459
          %v1572 = vpack.c.b16 %v1468, %v1460
          %v1573 = vpack.c.b16 %v1477, %v1469
          %v1574 = vpack.c.b16 %v1478, %v1470
          %v1575 = vpack.c.b16 %v1479, %v1471
          %v1576 = vpack.c.b16 %v1480, %v1472
          %v1577 = vpack.c.b16 %v1481, %v1473
          %v1578 = vpack.c.b16 %v1482, %v1474
          %v1579 = vpack.c.b16 %v1483, %v1475
          %v1580 = vpack.c.b16 %v1484, %v1476
          %v1581 = vpack.c.b16 %v1493, %v1485
          %v1582 = vpack.c.b16 %v1494, %v1486
          %v1583 = vpack.c.b16 %v1495, %v1487
          %v1584 = vpack.c.b16 %v1496, %v1488
          %v1585 = vpack.c.b16 %v1497, %v1489
          %v1586 = vpack.c.b16 %v1498, %v1490
          %v1587 = vpack.c.b16 %v1499, %v1491
          %v1588 = vpack.c.b16 %v1500, %v1492
          %v1589 = vpack.c.b16 %v1509, %v1501
          %v1590 = vpack.c.b16 %v1510, %v1502
          %v1591 = vpack.c.b16 %v1511, %v1503
          %v1592 = vpack.c.b16 %v1512, %v1504
          %v1593 = vpack.c.b16 %v1513, %v1505
          %v1594 = vpack.c.b16 %v1514, %v1506
          %v1595 = vpack.c.b16 %v1515, %v1507
          %v1596 = vpack.c.b16 %v1516, %v1508
          %v1597 = vpack.c.b16 %v1525, %v1517
          %v1598 = vpack.c.b16 %v1526, %v1518
          %v1599 = vpack.c.b16 %v1527, %v1519
          %v1600 = vpack.c.b16 %v1528, %v1520
          %v1601 = vpack.c.b16 %v1529, %v1521
          %v1602 = vpack.c.b16 %v1530, %v1522
          %v1603 = vpack.c.b16 %v1531, %v1523
          %v1604 = vpack.c.b16 %v1532, %v1524
          %v1605 = vpack.c.b16 %v1541, %v1533
          %v1606 = vpack.c.b16 %v1542, %v1534
          %v1607 = vpack.c.b16 %v1543, %v1535
          %v1608 = vpack.c.b16 %v1544, %v1536
          %v1609 = vpack.c.b16 %v1545, %v1537
          %v1610 = vpack.c.b16 %v1546, %v1538
          %v1611 = vpack.c.b16 %v1547, %v1539
          %v1612 = vpack.c.b16 %v1548, %v1540
          %1677 = vmatprep.subr.bf16.mxu0 %v1606
          %1678 = vmatpush1.bf16.msra.mxu0 %v1605
          %1679 = vmatprep.subr.bf16.mxu0 %v1598
          %1680 = vmatpush1.bf16.msra.mxu0 %v1597
          %1681 = vmatprep.subr.bf16.mxu0 %v1590
          %1682 = vmatpush1.bf16.msra.mxu0 %v1589
          %1683 = vmatprep.subr.bf16.mxu0 %v1582
          %1684 = vmatpush1.bf16.msra.mxu0 %v1581
          %1685 = vmatprep.subr.bf16.mxu0 %v1574
          %1686 = vmatpush1.bf16.msra.mxu0 %v1573
          %1687 = vmatprep.subr.bf16.mxu0 %v1566
          %1688 = vmatpush1.bf16.msra.mxu0 %v1565
          %1689 = vmatprep.subr.bf16.mxu0 %v1558
          %1690 = vmatpush1.bf16.msra.mxu0 %v1557
          %1691 = vmatprep.subr.bf16.mxu0 %v1550
          %1692 = vmatpush1.bf16.msra.mxu0 %v1549
          %1693 = vmatprep.subr.bf16.mxu0 0
          %1694 = vmatpush2.bf16.msra.mxu0 0
          %1695 = vmatprep.subr.bf16.mxu0 0
          %1696 = vmatpush2.bf16.msra.mxu0 0
          %1697 = vmatprep.subr.bf16.mxu0 0
          %1698 = vmatpush2.bf16.msra.mxu0 0
          %1699 = vmatprep.subr.bf16.mxu0 0
          %1700 = vmatpush2.bf16.msra.mxu0 0
          %1701 = vmatprep.subr.bf16.mxu0 0
          %1702 = vmatpush2.bf16.msra.mxu0 0
          %1703 = vmatprep.subr.bf16.mxu0 0
          %1704 = vmatpush2.bf16.msra.mxu0 0
          %1705 = vmatprep.subr.bf16.mxu0 0
          %1706 = vmatpush2.bf16.msra.mxu0 0
          %1707 = vmatprep.subr.bf16.mxu0 0
          %1708 = vmatpush2.bf16.msra.mxu0 0
          %1709 = vmatprep.mubr.bf16.mxu0 0
          %1710 = vmatmul.mubr.bf16.gmra.mxu0 %v1292
          %v1711 = vpop.f32.mrf.mxu0
          %v1712 = vadd.f32 0.0, %v1711
          %v1713 = vpop.f32.mrf.mxu0
          %v1714 = vadd.f32 0.0, %v1713
          %v1715 = vpop.f32.mrf.mxu0
          %v1716 = vpop.f32.mrf.mxu0
          %1717 = vdwg.mxu0
          %1718 = vmatprep.subr.bf16.mxu0 %v1608
          %1719 = vmatpush1.bf16.msra.mxu0 %v1607
          %1720 = vmatprep.subr.bf16.mxu0 %v1600
          %1721 = vmatpush1.bf16.msra.mxu0 %v1599
          %1722 = vmatprep.subr.bf16.mxu0 %v1592
          %1723 = vmatpush1.bf16.msra.mxu0 %v1591
          %1724 = vmatprep.subr.bf16.mxu0 %v1584
          %1725 = vmatpush1.bf16.msra.mxu0 %v1583
          %1726 = vmatprep.subr.bf16.mxu0 %v1576
          %1727 = vmatpush1.bf16.msra.mxu0 %v1575
          %1728 = vmatprep.subr.bf16.mxu0 %v1568
          %1729 = vmatpush1.bf16.msra.mxu0 %v1567
          %1730 = vmatprep.subr.bf16.mxu0 %v1560
          %1731 = vmatpush1.bf16.msra.mxu0 %v1559
          %1732 = vmatprep.subr.bf16.mxu0 %v1552
          %1733 = vmatpush1.bf16.msra.mxu0 %v1551
          %1734 = vmatprep.subr.bf16.mxu0 0
          %1735 = vmatpush2.bf16.msra.mxu0 0
          %1736 = vmatprep.subr.bf16.mxu0 0
          %1737 = vmatpush2.bf16.msra.mxu0 0
          %1738 = vmatprep.subr.bf16.mxu0 0
          %1739 = vmatpush2.bf16.msra.mxu0 0
          %1740 = vmatprep.subr.bf16.mxu0 0
          %1741 = vmatpush2.bf16.msra.mxu0 0
          %1742 = vmatprep.subr.bf16.mxu0 0
          %1743 = vmatpush2.bf16.msra.mxu0 0
          %1744 = vmatprep.subr.bf16.mxu0 0
          %1745 = vmatpush2.bf16.msra.mxu0 0
          %1746 = vmatprep.subr.bf16.mxu0 0
          %1747 = vmatpush2.bf16.msra.mxu0 0
          %1748 = vmatprep.subr.bf16.mxu0 0
          %1749 = vmatpush2.bf16.msra.mxu0 0
          %1750 = vmatprep.mubr.bf16.mxu0 0
          %1751 = vmatmul.mubr.bf16.gmra.mxu0 %v1292
          %v1752 = vpop.f32.mrf.mxu0
          %v1753 = vadd.f32 0.0, %v1752
          %v1754 = vpop.f32.mrf.mxu0
          %v1755 = vadd.f32 0.0, %v1754
          %v1756 = vpop.f32.mrf.mxu0
          %v1757 = vpop.f32.mrf.mxu0
          %1758 = vdwg.mxu0
          %1759 = vmatprep.subr.bf16.mxu0 %v1610
          %1760 = vmatpush1.bf16.msra.mxu0 %v1609
          %1761 = vmatprep.subr.bf16.mxu0 %v1602
          %1762 = vmatpush1.bf16.msra.mxu0 %v1601
          %1763 = vmatprep.subr.bf16.mxu0 %v1594
          %1764 = vmatpush1.bf16.msra.mxu0 %v1593
          %1765 = vmatprep.subr.bf16.mxu0 %v1586
          %1766 = vmatpush1.bf16.msra.mxu0 %v1585
          %1767 = vmatprep.subr.bf16.mxu0 %v1578
          %1768 = vmatpush1.bf16.msra.mxu0 %v1577
          %1769 = vmatprep.subr.bf16.mxu0 %v1570
          %1770 = vmatpush1.bf16.msra.mxu0 %v1569
          %1771 = vmatprep.subr.bf16.mxu0 %v1562
          %1772 = vmatpush1.bf16.msra.mxu0 %v1561
          %1773 = vmatprep.subr.bf16.mxu0 %v1554
          %1774 = vmatpush1.bf16.msra.mxu0 %v1553
          %1775 = vmatprep.subr.bf16.mxu0 0
          %1776 = vmatpush2.bf16.msra.mxu0 0
          %1777 = vmatprep.subr.bf16.mxu0 0
          %1778 = vmatpush2.bf16.msra.mxu0 0
          %1779 = vmatprep.subr.bf16.mxu0 0
          %1780 = vmatpush2.bf16.msra.mxu0 0
          %1781 = vmatprep.subr.bf16.mxu0 0
          %1782 = vmatpush2.bf16.msra.mxu0 0
          %1783 = vmatprep.subr.bf16.mxu0 0
          %1784 = vmatpush2.bf16.msra.mxu0 0
          %1785 = vmatprep.subr.bf16.mxu0 0
          %1786 = vmatpush2.bf16.msra.mxu0 0
          %1787 = vmatprep.subr.bf16.mxu0 0
          %1788 = vmatpush2.bf16.msra.mxu0 0
          %1789 = vmatprep.subr.bf16.mxu0 0
          %1790 = vmatpush2.bf16.msra.mxu0 0
          %1791 = vmatprep.mubr.bf16.mxu0 0
          %1792 = vmatmul.mubr.bf16.gmra.mxu0 %v1292
          %v1793 = vpop.f32.mrf.mxu0
          %v1794 = vadd.f32 0.0, %v1793
          %v1795 = vpop.f32.mrf.mxu0
          %v1796 = vadd.f32 0.0, %v1795
          %v1797 = vpop.f32.mrf.mxu0
          %v1798 = vpop.f32.mrf.mxu0
          %1799 = vdwg.mxu0
          %1800 = vmatprep.subr.bf16.mxu0 %v1612
          %1801 = vmatpush1.bf16.msra.mxu0 %v1611
          %1802 = vmatprep.subr.bf16.mxu0 %v1604
          %1803 = vmatpush1.bf16.msra.mxu0 %v1603
          %1804 = vmatprep.subr.bf16.mxu0 %v1596
          %1805 = vmatpush1.bf16.msra.mxu0 %v1595
          %1806 = vmatprep.subr.bf16.mxu0 %v1588
          %1807 = vmatpush1.bf16.msra.mxu0 %v1587
          %1808 = vmatprep.subr.bf16.mxu0 %v1580
          %1809 = vmatpush1.bf16.msra.mxu0 %v1579
          %1810 = vmatprep.subr.bf16.mxu0 %v1572
          %1811 = vmatpush1.bf16.msra.mxu0 %v1571
          %1812 = vmatprep.subr.bf16.mxu0 %v1564
          %1813 = vmatpush1.bf16.msra.mxu0 %v1563
          %1814 = vmatprep.subr.bf16.mxu0 %v1556
          %1815 = vmatpush1.bf16.msra.mxu0 %v1555
          %1816 = vmatprep.subr.bf16.mxu0 0
          %1817 = vmatpush2.bf16.msra.mxu0 0
          %1818 = vmatprep.subr.bf16.mxu0 0
          %1819 = vmatpush2.bf16.msra.mxu0 0
          %1820 = vmatprep.subr.bf16.mxu0 0
          %1821 = vmatpush2.bf16.msra.mxu0 0
          %1822 = vmatprep.subr.bf16.mxu0 0
          %1823 = vmatpush2.bf16.msra.mxu0 0
          %1824 = vmatprep.subr.bf16.mxu0 0
          %1825 = vmatpush2.bf16.msra.mxu0 0
          %1826 = vmatprep.subr.bf16.mxu0 0
          %1827 = vmatpush2.bf16.msra.mxu0 0
          %1828 = vmatprep.subr.bf16.mxu0 0
          %1829 = vmatpush2.bf16.msra.mxu0 0
          %1830 = vmatprep.subr.bf16.mxu0 0
          %1831 = vmatpush2.bf16.msra.mxu0 0
          %1832 = vmatprep.mubr.bf16.mxu0 0
          %1833 = vmatmul.mubr.bf16.gmra.mxu0 %v1292
          %v1834 = vpop.f32.mrf.mxu0
          %v1835 = vadd.f32 0.0, %v1834
          %v1836 = vpop.f32.mrf.mxu0
          %v1837 = vadd.f32 0.0, %v1836
          %v1838 = vpop.f32.mrf.mxu0
          %v1839 = vpop.f32.mrf.mxu0
          %1840 = vdwg.mxu0
          // Predicated region
          $region173: #{tpu_custom_call.1} parent=171 // pred_check
            _
          $region174: #{tpu_custom_call.1} parent=171 // pred_check_branch
            %1842 = sbr.rel (%p892) target = $region176
          $region175: #{tpu_custom_call.1} parent=171 // pred_region
            %1843 = vst [vmem:[#allocation4] sm:$0xff] 0.0
            %1844 = vst [vmem:[#allocation4 + $0x8] sm:$0xff] 0.0
            %1845 = vst [vmem:[#allocation4 + $0x10] sm:$0xff] 0.0
            %1846 = vst [vmem:[#allocation4 + $0x18] sm:$0xff] 0.0
            %1847 = vst [vmem:[#allocation4 + $0x20] sm:$0xff] 0.0
            %1848 = vst [vmem:[#allocation4 + $0x28] sm:$0xff] 0.0
            %1849 = vst [vmem:[#allocation4 + $0x30] sm:$0xff] 0.0
            %1850 = vst [vmem:[#allocation4 + $0x38] sm:$0xff] 0.0
            %1851 = vst [vmem:[#allocation4 + $0x40] sm:$0xff] 0.0
            %1852 = vst [vmem:[#allocation4 + $0x48] sm:$0xff] 0.0
            %1853 = vst [vmem:[#allocation4 + $0x50] sm:$0xff] 0.0
            %1854 = vst [vmem:[#allocation4 + $0x58] sm:$0xff] 0.0
            %1855 = vst [vmem:[#allocation4 + $0x60] sm:$0xff] 0.0
            %1856 = vst [vmem:[#allocation4 + $0x68] sm:$0xff] 0.0
            %1857 = vst [vmem:[#allocation4 + $0x70] sm:$0xff] 0.0
            %1858 = vst [vmem:[#allocation4 + $0x78] sm:$0xff] 0.0
          $region176: #{tpu_custom_call.1} parent=171 // pred_fallthru
            _
          %v1859 = vld [vmem:[#allocation4] sm:$0xff]
          %v1860 = vld [vmem:[#allocation4 + $0x8] sm:$0xff]
          %v1861 = vld [vmem:[#allocation4 + $0x10] sm:$0xff]
          %v1862 = vld [vmem:[#allocation4 + $0x18] sm:$0xff]
          %v1863 = vld [vmem:[#allocation4 + $0x20] sm:$0xff]
          %v1864 = vld [vmem:[#allocation4 + $0x28] sm:$0xff]
          %v1865 = vld [vmem:[#allocation4 + $0x30] sm:$0xff]
          %v1866 = vld [vmem:[#allocation4 + $0x38] sm:$0xff]
          %v1867 = vadd.f32 %v1712, 0.0
          %v1868 = vadd.f32 %v1714, 0.0
          %v1869 = vadd.f32 %v1753, 0.0
          %v1870 = vadd.f32 %v1755, 0.0
          %v1871 = vadd.f32 %v1794, 0.0
          %v1872 = vadd.f32 %v1796, 0.0
          %v1873 = vadd.f32 %v1835, 0.0
          %v1874 = vadd.f32 %v1837, 0.0
          %v1875 = vadd.f32 %v1859, %v1867
          %v1876 = vadd.f32 %v1860, %v1868
          %v1877 = vadd.f32 %v1861, %v1869
          %v1878 = vadd.f32 %v1862, %v1870
          %v1879 = vadd.f32 %v1863, %v1871
          %v1880 = vadd.f32 %v1864, %v1872
          %v1881 = vadd.f32 %v1865, %v1873
          %v1882 = vadd.f32 %v1866, %v1874
          %1883 = vst [vmem:[#allocation4] sm:$0xff] %v1875
          %1884 = vst [vmem:[#allocation4 + $0x8] sm:$0xff] %v1876
          %1885 = vst [vmem:[#allocation4 + $0x10] sm:$0xff] %v1877
          %1886 = vst [vmem:[#allocation4 + $0x18] sm:$0xff] %v1878
          %1887 = vst [vmem:[#allocation4 + $0x20] sm:$0xff] %v1879
          %1888 = vst [vmem:[#allocation4 + $0x28] sm:$0xff] %v1880
          %1889 = vst [vmem:[#allocation4 + $0x30] sm:$0xff] %v1881
          %1890 = vst [vmem:[#allocation4 + $0x38] sm:$0xff] %v1882
          %v1891 = vld [vmem:[#allocation4 + $0x40] sm:$0xff]
          %v1892 = vld [vmem:[#allocation4 + $0x48] sm:$0xff]
          %v1893 = vld [vmem:[#allocation4 + $0x50] sm:$0xff]
          %v1894 = vld [vmem:[#allocation4 + $0x58] sm:$0xff]
          %v1895 = vld [vmem:[#allocation4 + $0x60] sm:$0xff]
          %v1896 = vld [vmem:[#allocation4 + $0x68] sm:$0xff]
          %v1897 = vld [vmem:[#allocation4 + $0x70] sm:$0xff]
          %v1898 = vld [vmem:[#allocation4 + $0x78] sm:$0xff]
          %v1899 = vmul.f32 %v1712, %v1712
          %v1900 = vmul.f32 %v1714, %v1714
          %v1901 = vmul.f32 %v1753, %v1753
          %v1902 = vmul.f32 %v1755, %v1755
          %v1903 = vmul.f32 %v1794, %v1794
          %v1904 = vmul.f32 %v1796, %v1796
          %v1905 = vmul.f32 %v1835, %v1835
          %v1906 = vmul.f32 %v1837, %v1837
          %v1907 = vadd.f32 %v1899, 0.0
          %v1908 = vadd.f32 %v1900, 0.0
          %v1909 = vadd.f32 %v1901, 0.0
          %v1910 = vadd.f32 %v1902, 0.0
          %v1911 = vadd.f32 %v1903, 0.0
          %v1912 = vadd.f32 %v1904, 0.0
          %v1913 = vadd.f32 %v1905, 0.0
          %v1914 = vadd.f32 %v1906, 0.0
          %v1915 = vadd.f32 %v1891, %v1907
          %v1916 = vadd.f32 %v1892, %v1908
          %v1917 = vadd.f32 %v1893, %v1909
          %v1918 = vadd.f32 %v1894, %v1910
          %v1919 = vadd.f32 %v1895, %v1911
          %v1920 = vadd.f32 %v1896, %v1912
          %v1921 = vadd.f32 %v1897, %v1913
          %v1922 = vadd.f32 %v1898, %v1914
          %1923 = vst [vmem:[#allocation4 + $0x40] sm:$0xff] %v1915
          %1924 = vst [vmem:[#allocation4 + $0x48] sm:$0xff] %v1916
          %1925 = vst [vmem:[#allocation4 + $0x50] sm:$0xff] %v1917
          %1926 = vst [vmem:[#allocation4 + $0x58] sm:$0xff] %v1918
          %1927 = vst [vmem:[#allocation4 + $0x60] sm:$0xff] %v1919
          %1928 = vst [vmem:[#allocation4 + $0x68] sm:$0xff] %v1920
          %1929 = vst [vmem:[#allocation4 + $0x70] sm:$0xff] %v1921
          %1930 = vst [vmem:[#allocation4 + $0x78] sm:$0xff] %v1922
          // Predicated region
          $region177: #{tpu_custom_call.1} parent=171 // pred_check
            %p1931 = pneg %p891
          $region178: #{tpu_custom_call.1} parent=171 // pred_check_branch
            %1933 = sbr.rel (%p1931) target = $region180
          $region179: #{tpu_custom_call.1} parent=171 // pred_region
            %1934 = vst [vmem:[#allocation8] sm:$0xff] -inf
            %1935 = vst [vmem:[#allocation8 + $0x8] sm:$0xff] -inf
            %1936 = vst [vmem:[#allocation8 + $0x10] sm:$0xff] -inf
            %1937 = vst [vmem:[#allocation8 + $0x18] sm:$0xff] -inf
            %1938 = vst [vmem:[#allocation8 + $0x20] sm:$0xff] -inf
            %1939 = vst [vmem:[#allocation8 + $0x28] sm:$0xff] -inf
            %1940 = vst [vmem:[#allocation8 + $0x30] sm:$0xff] -inf
            %1941 = vst [vmem:[#allocation8 + $0x38] sm:$0xff] -inf
            %1942 = vst [vmem:[#allocation9] sm:$0xff] inf
            %1943 = vst [vmem:[#allocation9 + $0x8] sm:$0xff] inf
            %1944 = vst [vmem:[#allocation9 + $0x10] sm:$0xff] inf
            %1945 = vst [vmem:[#allocation9 + $0x18] sm:$0xff] inf
            %1946 = vst [vmem:[#allocation9 + $0x20] sm:$0xff] inf
            %1947 = vst [vmem:[#allocation9 + $0x28] sm:$0xff] inf
            %1948 = vst [vmem:[#allocation9 + $0x30] sm:$0xff] inf
            %1949 = vst [vmem:[#allocation9 + $0x38] sm:$0xff] inf
          $region180: #{tpu_custom_call.1} parent=171 // pred_fallthru
            _
          %v1950 = vld [vmem:[#allocation8] sm:$0xff]
          %v1951 = vld [vmem:[#allocation8 + $0x8] sm:$0xff]
          %v1952 = vld [vmem:[#allocation8 + $0x10] sm:$0xff]
          %v1953 = vld [vmem:[#allocation8 + $0x18] sm:$0xff]
          %v1954 = vld [vmem:[#allocation8 + $0x20] sm:$0xff]
          %v1955 = vld [vmem:[#allocation8 + $0x28] sm:$0xff]
          %v1956 = vld [vmem:[#allocation8 + $0x30] sm:$0xff]
          %v1957 = vld [vmem:[#allocation8 + $0x38] sm:$0xff]
          %v1958 = vmax.f32 %v1950, %v1712
          %v1959 = vmax.f32 %v1951, %v1714
          %v1960 = vmax.f32 %v1952, %v1753
          %v1961 = vmax.f32 %v1953, %v1755
          %v1962 = vmax.f32 %v1954, %v1794
          %v1963 = vmax.f32 %v1955, %v1796
          %v1964 = vmax.f32 %v1956, %v1835
          %v1965 = vmax.f32 %v1957, %v1837
          %1966 = vst [vmem:[#allocation8] sm:$0xff] %v1958
          %1967 = vst [vmem:[#allocation8 + $0x8] sm:$0xff] %v1959
          %1968 = vst [vmem:[#allocation8 + $0x10] sm:$0xff] %v1960
          %1969 = vst [vmem:[#allocation8 + $0x18] sm:$0xff] %v1961
          %1970 = vst [vmem:[#allocation8 + $0x20] sm:$0xff] %v1962
          %1971 = vst [vmem:[#allocation8 + $0x28] sm:$0xff] %v1963
          %1972 = vst [vmem:[#allocation8 + $0x30] sm:$0xff] %v1964
          %1973 = vst [vmem:[#allocation8 + $0x38] sm:$0xff] %v1965
          %v1974 = vld [vmem:[#allocation9] sm:$0xff]
          %v1975 = vld [vmem:[#allocation9 + $0x8] sm:$0xff]
          %v1976 = vld [vmem:[#allocation9 + $0x10] sm:$0xff]
          %v1977 = vld [vmem:[#allocation9 + $0x18] sm:$0xff]
          %v1978 = vld [vmem:[#allocation9 + $0x20] sm:$0xff]
          %v1979 = vld [vmem:[#allocation9 + $0x28] sm:$0xff]
          %v1980 = vld [vmem:[#allocation9 + $0x30] sm:$0xff]
          %v1981 = vld [vmem:[#allocation9 + $0x38] sm:$0xff]
          %v1982 = vmin.f32 %v1974, %v1712
          %v1983 = vmin.f32 %v1975, %v1714
          %v1984 = vmin.f32 %v1976, %v1753
          %v1985 = vmin.f32 %v1977, %v1755
          %v1986 = vmin.f32 %v1978, %v1794
          %v1987 = vmin.f32 %v1979, %v1796
          %v1988 = vmin.f32 %v1980, %v1835
          %v1989 = vmin.f32 %v1981, %v1837
          %1990 = vst [vmem:[#allocation9] sm:$0xff] %v1982
          %1991 = vst [vmem:[#allocation9 + $0x8] sm:$0xff] %v1983
          %1992 = vst [vmem:[#allocation9 + $0x10] sm:$0xff] %v1984
          %1993 = vst [vmem:[#allocation9 + $0x18] sm:$0xff] %v1985
          %1994 = vst [vmem:[#allocation9 + $0x20] sm:$0xff] %v1986
          %1995 = vst [vmem:[#allocation9 + $0x28] sm:$0xff] %v1987
          %1996 = vst [vmem:[#allocation9 + $0x30] sm:$0xff] %v1988
          %1997 = vst [vmem:[#allocation9 + $0x38] sm:$0xff] %v1989
          // Predicated region
          $region181: #{tpu_custom_call.1} parent=171 // pred_check
            %p1998 = pneg %p895
          $region182: #{tpu_custom_call.1} parent=171 // pred_check_branch
            %2000 = sbr.rel (%p1998) target = $region184
          $region183: #{tpu_custom_call.1} parent=171 // pred_region
            %v2001 = vld [vmem:[#allocation8] sm:$0xff]
            %v2002 = vld [vmem:[#allocation8 + $0x8] sm:$0xff]
            %v2003 = vld [vmem:[#allocation8 + $0x10] sm:$0xff]
            %v2004 = vld [vmem:[#allocation8 + $0x18] sm:$0xff]
            %v2005 = vld [vmem:[#allocation8 + $0x20] sm:$0xff]
            %v2006 = vld [vmem:[#allocation8 + $0x28] sm:$0xff]
            %v2007 = vld [vmem:[#allocation8 + $0x30] sm:$0xff]
            %v2008 = vld [vmem:[#allocation8 + $0x38] sm:$0xff]
            %v2009 = vrot.slane %v2001, 4
            %v2010 = vmax.f32 %v2001, %v2009
            %v2011 = vrot.slane %v2010, 2
            %v2012 = vmax.f32 %v2010, %v2011
            %v2013 = vrot.slane %v2012, 1
            %v2014 = vmax.f32 %v2012, %v2013
            %v2015 = vrot.slane %v2002, 4
            %v2016 = vmax.f32 %v2002, %v2015
            %v2017 = vrot.slane %v2016, 2
            %v2018 = vmax.f32 %v2016, %v2017
            %v2019 = vrot.slane %v2018, 1
            %v2020 = vmax.f32 %v2018, %v2019
            %v2021 = vrot.slane %v2003, 4
            %v2022 = vmax.f32 %v2003, %v2021
            %v2023 = vrot.slane %v2022, 2
            %v2024 = vmax.f32 %v2022, %v2023
            %v2025 = vrot.slane %v2024, 1
            %v2026 = vmax.f32 %v2024, %v2025
            %v2027 = vrot.slane %v2004, 4
            %v2028 = vmax.f32 %v2004, %v2027
            %v2029 = vrot.slane %v2028, 2
            %v2030 = vmax.f32 %v2028, %v2029
            %v2031 = vrot.slane %v2030, 1
            %v2032 = vmax.f32 %v2030, %v2031
            %v2033 = vrot.slane %v2005, 4
            %v2034 = vmax.f32 %v2005, %v2033
            %v2035 = vrot.slane %v2034, 2
            %v2036 = vmax.f32 %v2034, %v2035
            %v2037 = vrot.slane %v2036, 1
            %v2038 = vmax.f32 %v2036, %v2037
            %v2039 = vrot.slane %v2006, 4
            %v2040 = vmax.f32 %v2006, %v2039
            %v2041 = vrot.slane %v2040, 2
            %v2042 = vmax.f32 %v2040, %v2041
            %v2043 = vrot.slane %v2042, 1
            %v2044 = vmax.f32 %v2042, %v2043
            %v2045 = vrot.slane %v2007, 4
            %v2046 = vmax.f32 %v2007, %v2045
            %v2047 = vrot.slane %v2046, 2
            %v2048 = vmax.f32 %v2046, %v2047
            %v2049 = vrot.slane %v2048, 1
            %v2050 = vmax.f32 %v2048, %v2049
            %v2051 = vrot.slane %v2008, 4
            %v2052 = vmax.f32 %v2008, %v2051
            %v2053 = vrot.slane %v2052, 2
            %v2054 = vmax.f32 %v2052, %v2053
            %v2055 = vrot.slane %v2054, 1
            %v2056 = vmax.f32 %v2054, %v2055
            %v2065 = vcombine.low %v2014, %v2020
            %v2066 = vcombine.low %v2026, %v2032
            %v2067 = vcombine.low %v2038, %v2044
            %v2068 = vcombine.low %v2050, %v2056
            %v2070 = vunpack.c.l.s4 1966171168
            %v2071 = vunpack.c.0.s8 %v2070
            %v2072 = vlaneseq
            %v2073 = vshrl.u32 %v2072, 7
            %v2074 = vsub.s32 %v2071, %v2073
            %v2075 = vrot.slane %v2065, %v2074
            %v2077 = vunpack.c.l.s4 1966171168
            %v2078 = vunpack.c.0.s8 %v2077
            %v2079 = vlaneseq
            %v2080 = vshrl.u32 %v2079, 7
            %v2081 = vsub.s32 %v2078, %v2080
            %v2082 = vrot.slane %v2066, %v2081
            %v2084 = vunpack.c.l.s4 1966171168
            %v2085 = vunpack.c.0.s8 %v2084
            %v2086 = vlaneseq
            %v2087 = vshrl.u32 %v2086, 7
            %v2088 = vsub.s32 %v2085, %v2087
            %v2089 = vrot.slane %v2067, %v2088
            %v2091 = vunpack.c.l.s4 1966171168
            %v2092 = vunpack.c.0.s8 %v2091
            %v2093 = vlaneseq
            %v2094 = vshrl.u32 %v2093, 7
            %v2095 = vsub.s32 %v2092, %v2094
            %v2096 = vrot.slane %v2068, %v2095
            %v2097 = vcombine.low %v2075, %v2082
            %v2098 = vcombine.low %v2089, %v2096
            %v2100 = vunpack.c.l.s4 1966171168
            %v2101 = vunpack.c.0.s8 %v2100
            %v2102 = vlaneseq
            %v2103 = vshrl.u32 %v2102, 7
            %v2104 = vsub.s32 %v2101, %v2103
            %v2105 = vrot.slane %v2097, %v2104
            %v2107 = vunpack.c.l.s4 1966171168
            %v2108 = vunpack.c.0.s8 %v2107
            %v2109 = vlaneseq
            %v2110 = vshrl.u32 %v2109, 7
            %v2111 = vsub.s32 %v2108, %v2110
            %v2112 = vrot.slane %v2098, %v2111
            %v2113 = vcombine.low %v2105, %v2112
            %s2115 = sshra.s32 %s51, 1
            %s2116 = sand.u32 %s51, 1
            %s2117 = sshra.s32 %s51, 1
            %s2118 = sand.u32 %s51, 1
            %s2119 = smul.u32 %s2115, 8
            %s2120 = smul.u32 %s2119, 2
            %s2121 = sadd.s32 %s2120, %s2118
            %s2122 = scalar_lea.vmem [#allocation10], %s2121
            %2123 = vst [vmem:[%s2122] ss:$2 sm:$0xff] %v2113
            %v2124 = vld [vmem:[#allocation9] sm:$0xff]
            %v2125 = vld [vmem:[#allocation9 + $0x8] sm:$0xff]
            %v2126 = vld [vmem:[#allocation9 + $0x10] sm:$0xff]
            %v2127 = vld [vmem:[#allocation9 + $0x18] sm:$0xff]
            %v2128 = vld [vmem:[#allocation9 + $0x20] sm:$0xff]
            %v2129 = vld [vmem:[#allocation9 + $0x28] sm:$0xff]
            %v2130 = vld [vmem:[#allocation9 + $0x30] sm:$0xff]
            %v2131 = vld [vmem:[#allocation9 + $0x38] sm:$0xff]
            %v2132 = vrot.slane %v2124, 4
            %v2133 = vmin.f32 %v2124, %v2132
            %v2134 = vrot.slane %v2133, 2
            %v2135 = vmin.f32 %v2133, %v2134
            %v2136 = vrot.slane %v2135, 1
            %v2137 = vmin.f32 %v2135, %v2136
            %v2138 = vrot.slane %v2125, 4
            %v2139 = vmin.f32 %v2125, %v2138
            %v2140 = vrot.slane %v2139, 2
            %v2141 = vmin.f32 %v2139, %v2140
            %v2142 = vrot.slane %v2141, 1
            %v2143 = vmin.f32 %v2141, %v2142
            %v2144 = vrot.slane %v2126, 4
            %v2145 = vmin.f32 %v2126, %v2144
            %v2146 = vrot.slane %v2145, 2
            %v2147 = vmin.f32 %v2145, %v2146
            %v2148 = vrot.slane %v2147, 1
            %v2149 = vmin.f32 %v2147, %v2148
            %v2150 = vrot.slane %v2127, 4
            %v2151 = vmin.f32 %v2127, %v2150
            %v2152 = vrot.slane %v2151, 2
            %v2153 = vmin.f32 %v2151, %v2152
            %v2154 = vrot.slane %v2153, 1
            %v2155 = vmin.f32 %v2153, %v2154
            %v2156 = vrot.slane %v2128, 4
            %v2157 = vmin.f32 %v2128, %v2156
            %v2158 = vrot.slane %v2157, 2
            %v2159 = vmin.f32 %v2157, %v2158
            %v2160 = vrot.slane %v2159, 1
            %v2161 = vmin.f32 %v2159, %v2160
            %v2162 = vrot.slane %v2129, 4
            %v2163 = vmin.f32 %v2129, %v2162
            %v2164 = vrot.slane %v2163, 2
            %v2165 = vmin.f32 %v2163, %v2164
            %v2166 = vrot.slane %v2165, 1
            %v2167 = vmin.f32 %v2165, %v2166
            %v2168 = vrot.slane %v2130, 4
            %v2169 = vmin.f32 %v2130, %v2168
            %v2170 = vrot.slane %v2169, 2
            %v2171 = vmin.f32 %v2169, %v2170
            %v2172 = vrot.slane %v2171, 1
            %v2173 = vmin.f32 %v2171, %v2172
            %v2174 = vrot.slane %v2131, 4
            %v2175 = vmin.f32 %v2131, %v2174
            %v2176 = vrot.slane %v2175, 2
            %v2177 = vmin.f32 %v2175, %v2176
            %v2178 = vrot.slane %v2177, 1
            %v2179 = vmin.f32 %v2177, %v2178
            %v2188 = vcombine.low %v2137, %v2143
            %v2189 = vcombine.low %v2149, %v2155
            %v2190 = vcombine.low %v2161, %v2167
            %v2191 = vcombine.low %v2173, %v2179
            %v2193 = vunpack.c.l.s4 1966171168
            %v2194 = vunpack.c.0.s8 %v2193
            %v2195 = vlaneseq
            %v2196 = vshrl.u32 %v2195, 7
            %v2197 = vsub.s32 %v2194, %v2196
            %v2198 = vrot.slane %v2188, %v2197
            %v2200 = vunpack.c.l.s4 1966171168
            %v2201 = vunpack.c.0.s8 %v2200
            %v2202 = vlaneseq
            %v2203 = vshrl.u32 %v2202, 7
            %v2204 = vsub.s32 %v2201, %v2203
            %v2205 = vrot.slane %v2189, %v2204
            %v2207 = vunpack.c.l.s4 1966171168
            %v2208 = vunpack.c.0.s8 %v2207
            %v2209 = vlaneseq
            %v2210 = vshrl.u32 %v2209, 7
            %v2211 = vsub.s32 %v2208, %v2210
            %v2212 = vrot.slane %v2190, %v2211
            %v2214 = vunpack.c.l.s4 1966171168
            %v2215 = vunpack.c.0.s8 %v2214
            %v2216 = vlaneseq
            %v2217 = vshrl.u32 %v2216, 7
            %v2218 = vsub.s32 %v2215, %v2217
            %v2219 = vrot.slane %v2191, %v2218
            %v2220 = vcombine.low %v2198, %v2205
            %v2221 = vcombine.low %v2212, %v2219
            %v2223 = vunpack.c.l.s4 1966171168
            %v2224 = vunpack.c.0.s8 %v2223
            %v2225 = vlaneseq
            %v2226 = vshrl.u32 %v2225, 7
            %v2227 = vsub.s32 %v2224, %v2226
            %v2228 = vrot.slane %v2220, %v2227
            %v2230 = vunpack.c.l.s4 1966171168
            %v2231 = vunpack.c.0.s8 %v2230
            %v2232 = vlaneseq
            %v2233 = vshrl.u32 %v2232, 7
            %v2234 = vsub.s32 %v2231, %v2233
            %v2235 = vrot.slane %v2221, %v2234
            %v2236 = vcombine.low %v2228, %v2235
            %s2238 = scalar_lea.vmem [#allocation11], %s2121
            %2239 = vst [vmem:[%s2238] ss:$2 sm:$0xff] %v2236
          $region184: #{tpu_custom_call.1} parent=171 // pred_fallthru
            _
          // Predicated region
          $region185: #{tpu_custom_call.1} parent=171 // pred_check
            _
          $region186: #{tpu_custom_call.1} parent=171 // pred_check_branch
            %2241 = sbr.rel (%p896) target = $region188
          $region187: #{tpu_custom_call.1} parent=171 // pred_region
            %v2242 = vld [vmem:[#allocation4] sm:$0xff]
            %v2243 = vld [vmem:[#allocation4 + $0x8] sm:$0xff]
            %v2244 = vld [vmem:[#allocation4 + $0x10] sm:$0xff]
            %v2245 = vld [vmem:[#allocation4 + $0x18] sm:$0xff]
            %v2246 = vld [vmem:[#allocation4 + $0x20] sm:$0xff]
            %v2247 = vld [vmem:[#allocation4 + $0x28] sm:$0xff]
            %v2248 = vld [vmem:[#allocation4 + $0x30] sm:$0xff]
            %v2249 = vld [vmem:[#allocation4 + $0x38] sm:$0xff]
            %v2250 = vrot.slane %v2242, 4
            %v2251 = vadd.f32 %v2242, %v2250
            %v2252 = vrot.slane %v2251, 2
            %v2253 = vadd.f32 %v2251, %v2252
            %v2254 = vrot.slane %v2253, 1
            %v2255 = vadd.f32 %v2253, %v2254
            %v2256 = vrot.slane %v2243, 4
            %v2257 = vadd.f32 %v2243, %v2256
            %v2258 = vrot.slane %v2257, 2
            %v2259 = vadd.f32 %v2257, %v2258
            %v2260 = vrot.slane %v2259, 1
            %v2261 = vadd.f32 %v2259, %v2260
            %v2262 = vrot.slane %v2244, 4
            %v2263 = vadd.f32 %v2244, %v2262
            %v2264 = vrot.slane %v2263, 2
            %v2265 = vadd.f32 %v2263, %v2264
            %v2266 = vrot.slane %v2265, 1
            %v2267 = vadd.f32 %v2265, %v2266
            %v2268 = vrot.slane %v2245, 4
            %v2269 = vadd.f32 %v2245, %v2268
            %v2270 = vrot.slane %v2269, 2
            %v2271 = vadd.f32 %v2269, %v2270
            %v2272 = vrot.slane %v2271, 1
            %v2273 = vadd.f32 %v2271, %v2272
            %v2274 = vrot.slane %v2246, 4
            %v2275 = vadd.f32 %v2246, %v2274
            %v2276 = vrot.slane %v2275, 2
            %v2277 = vadd.f32 %v2275, %v2276
            %v2278 = vrot.slane %v2277, 1
            %v2279 = vadd.f32 %v2277, %v2278
            %v2280 = vrot.slane %v2247, 4
            %v2281 = vadd.f32 %v2247, %v2280
            %v2282 = vrot.slane %v2281, 2
            %v2283 = vadd.f32 %v2281, %v2282
            %v2284 = vrot.slane %v2283, 1
            %v2285 = vadd.f32 %v2283, %v2284
            %v2286 = vrot.slane %v2248, 4
            %v2287 = vadd.f32 %v2248, %v2286
            %v2288 = vrot.slane %v2287, 2
            %v2289 = vadd.f32 %v2287, %v2288
            %v2290 = vrot.slane %v2289, 1
            %v2291 = vadd.f32 %v2289, %v2290
            %v2292 = vrot.slane %v2249, 4
            %v2293 = vadd.f32 %v2249, %v2292
            %v2294 = vrot.slane %v2293, 2
            %v2295 = vadd.f32 %v2293, %v2294
            %v2296 = vrot.slane %v2295, 1
            %v2297 = vadd.f32 %v2295, %v2296
            %v2298 = vld [vmem:[#allocation4 + $0x40] sm:$0xff]
            %v2299 = vld [vmem:[#allocation4 + $0x48] sm:$0xff]
            %v2300 = vld [vmem:[#allocation4 + $0x50] sm:$0xff]
            %v2301 = vld [vmem:[#allocation4 + $0x58] sm:$0xff]
            %v2302 = vld [vmem:[#allocation4 + $0x60] sm:$0xff]
            %v2303 = vld [vmem:[#allocation4 + $0x68] sm:$0xff]
            %v2304 = vld [vmem:[#allocation4 + $0x70] sm:$0xff]
            %v2305 = vld [vmem:[#allocation4 + $0x78] sm:$0xff]
            %v2306 = vrot.slane %v2298, 4
            %v2307 = vadd.f32 %v2298, %v2306
            %v2308 = vrot.slane %v2307, 2
            %v2309 = vadd.f32 %v2307, %v2308
            %v2310 = vrot.slane %v2309, 1
            %v2311 = vadd.f32 %v2309, %v2310
            %v2312 = vrot.slane %v2299, 4
            %v2313 = vadd.f32 %v2299, %v2312
            %v2314 = vrot.slane %v2313, 2
            %v2315 = vadd.f32 %v2313, %v2314
            %v2316 = vrot.slane %v2315, 1
            %v2317 = vadd.f32 %v2315, %v2316
            %v2318 = vrot.slane %v2300, 4
            %v2319 = vadd.f32 %v2300, %v2318
            %v2320 = vrot.slane %v2319, 2
            %v2321 = vadd.f32 %v2319, %v2320
            %v2322 = vrot.slane %v2321, 1
            %v2323 = vadd.f32 %v2321, %v2322
            %v2324 = vrot.slane %v2301, 4
            %v2325 = vadd.f32 %v2301, %v2324
            %v2326 = vrot.slane %v2325, 2
            %v2327 = vadd.f32 %v2325, %v2326
            %v2328 = vrot.slane %v2327, 1
            %v2329 = vadd.f32 %v2327, %v2328
            %v2330 = vrot.slane %v2302, 4
            %v2331 = vadd.f32 %v2302, %v2330
            %v2332 = vrot.slane %v2331, 2
            %v2333 = vadd.f32 %v2331, %v2332
            %v2334 = vrot.slane %v2333, 1
            %v2335 = vadd.f32 %v2333, %v2334
            %v2336 = vrot.slane %v2303, 4
            %v2337 = vadd.f32 %v2303, %v2336
            %v2338 = vrot.slane %v2337, 2
            %v2339 = vadd.f32 %v2337, %v2338
            %v2340 = vrot.slane %v2339, 1
            %v2341 = vadd.f32 %v2339, %v2340
            %v2342 = vrot.slane %v2304, 4
            %v2343 = vadd.f32 %v2304, %v2342
            %v2344 = vrot.slane %v2343, 2
            %v2345 = vadd.f32 %v2343, %v2344
            %v2346 = vrot.slane %v2345, 1
            %v2347 = vadd.f32 %v2345, %v2346
            %v2348 = vrot.slane %v2305, 4
            %v2349 = vadd.f32 %v2305, %v2348
            %v2350 = vrot.slane %v2349, 2
            %v2351 = vadd.f32 %v2349, %v2350
            %v2352 = vrot.slane %v2351, 1
            %v2353 = vadd.f32 %v2351, %v2352
            %v2354 = vmul.f32 %v2255, 0.03125
            %v2355 = vmul.f32 %v2261, 0.03125
            %v2356 = vmul.f32 %v2267, 0.03125
            %v2357 = vmul.f32 %v2273, 0.03125
            %v2358 = vmul.f32 %v2279, 0.03125
            %v2359 = vmul.f32 %v2285, 0.03125
            %v2360 = vmul.f32 %v2291, 0.03125
            %v2361 = vmul.f32 %v2297, 0.03125
            %v2362 = vmul.f32 %v2311, 0.03125
            %v2363 = vmul.f32 %v2317, 0.03125
            %v2364 = vmul.f32 %v2323, 0.03125
            %v2365 = vmul.f32 %v2329, 0.03125
            %v2366 = vmul.f32 %v2335, 0.03125
            %v2367 = vmul.f32 %v2341, 0.03125
            %v2368 = vmul.f32 %v2347, 0.03125
            %v2369 = vmul.f32 %v2353, 0.03125
            %v2370 = vmul.f32 %v2354, %v2354
            %v2371 = vmul.f32 %v2355, %v2355
            %v2372 = vmul.f32 %v2356, %v2356
            %v2373 = vmul.f32 %v2357, %v2357
            %v2374 = vmul.f32 %v2358, %v2358
            %v2375 = vmul.f32 %v2359, %v2359
            %v2376 = vmul.f32 %v2360, %v2360
            %v2377 = vmul.f32 %v2361, %v2361
            %v2378 = vsub.f32 %v2362, %v2370
            %v2379 = vsub.f32 %v2363, %v2371
            %v2380 = vsub.f32 %v2364, %v2372
            %v2381 = vsub.f32 %v2365, %v2373
            %v2382 = vsub.f32 %v2366, %v2374
            %v2383 = vsub.f32 %v2367, %v2375
            %v2384 = vsub.f32 %v2368, %v2376
            %v2385 = vsub.f32 %v2369, %v2377
            %v2386 = vmax.f32 %v2378, 0.0
            %v2387 = vmax.f32 %v2379, 0.0
            %v2388 = vmax.f32 %v2380, 0.0
            %v2389 = vmax.f32 %v2381, 0.0
            %v2390 = vmax.f32 %v2382, 0.0
            %v2391 = vmax.f32 %v2383, 0.0
            %v2392 = vmax.f32 %v2384, 0.0
            %v2393 = vmax.f32 %v2385, 0.0
            %v2394 = vld [vmem:[%s8] sm:$0xff]
            %v2395 = vadd.f32 %v2386, 1e-05
            %v2396 = vadd.f32 %v2387, 1e-05
            %v2397 = vadd.f32 %v2388, 1e-05
            %v2398 = vadd.f32 %v2389, 1e-05
            %v2399 = vadd.f32 %v2390, 1e-05
            %v2400 = vadd.f32 %v2391, 1e-05
            %v2401 = vadd.f32 %v2392, 1e-05
            %v2402 = vadd.f32 %v2393, 1e-05
            %v2403 = vrsqrt.pop %v2395
            %v2404 = vrsqrt.pop %v2396
            %v2405 = vrsqrt.pop %v2397
            %v2406 = vrsqrt.pop %v2398
            %v2407 = vrsqrt.pop %v2399
            %v2408 = vrsqrt.pop %v2400
            %v2409 = vrsqrt.pop %v2401
            %v2410 = vrsqrt.pop %v2402
            %v2419 = vcombine.low %v2403, %v2404
            %v2420 = vcombine.low %v2405, %v2406
            %v2421 = vcombine.low %v2407, %v2408
            %v2422 = vcombine.low %v2409, %v2410
            %v2424 = vunpack.c.l.s4 1966171168
            %v2425 = vunpack.c.0.s8 %v2424
            %v2426 = vlaneseq
            %v2427 = vshrl.u32 %v2426, 7
            %v2428 = vsub.s32 %v2425, %v2427
            %v2429 = vrot.slane %v2419, %v2428
            %v2431 = vunpack.c.l.s4 1966171168
            %v2432 = vunpack.c.0.s8 %v2431
            %v2433 = vlaneseq
            %v2434 = vshrl.u32 %v2433, 7
            %v2435 = vsub.s32 %v2432, %v2434
            %v2436 = vrot.slane %v2420, %v2435
            %v2438 = vunpack.c.l.s4 1966171168
            %v2439 = vunpack.c.0.s8 %v2438
            %v2440 = vlaneseq
            %v2441 = vshrl.u32 %v2440, 7
            %v2442 = vsub.s32 %v2439, %v2441
            %v2443 = vrot.slane %v2421, %v2442
            %v2445 = vunpack.c.l.s4 1966171168
            %v2446 = vunpack.c.0.s8 %v2445
            %v2447 = vlaneseq
            %v2448 = vshrl.u32 %v2447, 7
            %v2449 = vsub.s32 %v2446, %v2448
            %v2450 = vrot.slane %v2422, %v2449
            %v2451 = vcombine.low %v2429, %v2436
            %v2452 = vcombine.low %v2443, %v2450
            %v2454 = vunpack.c.l.s4 1966171168
            %v2455 = vunpack.c.0.s8 %v2454
            %v2456 = vlaneseq
            %v2457 = vshrl.u32 %v2456, 7
            %v2458 = vsub.s32 %v2455, %v2457
            %v2459 = vrot.slane %v2451, %v2458
            %v2461 = vunpack.c.l.s4 1966171168
            %v2462 = vunpack.c.0.s8 %v2461
            %v2463 = vlaneseq
            %v2464 = vshrl.u32 %v2463, 7
            %v2465 = vsub.s32 %v2462, %v2464
            %v2466 = vrot.slane %v2452, %v2465
            %v2467 = vcombine.low %v2459, %v2466
            %v2469 = vmul.f32 %v2394, %v2467
            %v2470 = vld [vmem:[%s9] sm:$0xff]
            %v2472 = vlaneseq
            %v2473 = vshrl.u32 %v2472, 7
            %v2474 = vsub.s32 0, %v2473
            %v2475 = vrot.slane %v2469, %v2474
            %v2476 = vlaneseq
            %v2477 = vshrl.u32 %v2476, 7
            %v2478 = vsub.s32 1, %v2477
            %v2479 = vrot.slane %v2469, %v2478
            %v2480 = vlaneseq
            %v2481 = vshrl.u32 %v2480, 7
            %v2482 = vsub.s32 2, %v2481
            %v2483 = vrot.slane %v2469, %v2482
            %v2484 = vlaneseq
            %v2485 = vshrl.u32 %v2484, 7
            %v2486 = vsub.s32 3, %v2485
            %v2487 = vrot.slane %v2469, %v2486
            %v2488 = vlaneseq
            %v2489 = vshrl.u32 %v2488, 7
            %v2490 = vsub.s32 4, %v2489
            %v2491 = vrot.slane %v2469, %v2490
            %v2492 = vlaneseq
            %v2493 = vshrl.u32 %v2492, 7
            %v2494 = vsub.s32 5, %v2493
            %v2495 = vrot.slane %v2469, %v2494
            %v2496 = vlaneseq
            %v2497 = vshrl.u32 %v2496, 7
            %v2498 = vsub.s32 6, %v2497
            %v2499 = vrot.slane %v2469, %v2498
            %v2500 = vlaneseq
            %v2501 = vshrl.u32 %v2500, 7
            %v2502 = vsub.s32 7, %v2501
            %v2503 = vrot.slane %v2469, %v2502
            %v2512 = vmul.f32 %v2354, %v2475
            %v2513 = vmul.f32 %v2355, %v2479
            %v2514 = vmul.f32 %v2356, %v2483
            %v2515 = vmul.f32 %v2357, %v2487
            %v2516 = vmul.f32 %v2358, %v2491
            %v2517 = vmul.f32 %v2359, %v2495
            %v2518 = vmul.f32 %v2360, %v2499
            %v2519 = vmul.f32 %v2361, %v2503
            %v2528 = vcombine.low %v2512, %v2513
            %v2529 = vcombine.low %v2514, %v2515
            %v2530 = vcombine.low %v2516, %v2517
            %v2531 = vcombine.low %v2518, %v2519
            %v2533 = vunpack.c.l.s4 1966171168
            %v2534 = vunpack.c.0.s8 %v2533
            %v2535 = vlaneseq
            %v2536 = vshrl.u32 %v2535, 7
            %v2537 = vsub.s32 %v2534, %v2536
            %v2538 = vrot.slane %v2528, %v2537
            %v2540 = vunpack.c.l.s4 1966171168
            %v2541 = vunpack.c.0.s8 %v2540
            %v2542 = vlaneseq
            %v2543 = vshrl.u32 %v2542, 7
            %v2544 = vsub.s32 %v2541, %v2543
            %v2545 = vrot.slane %v2529, %v2544
            %v2547 = vunpack.c.l.s4 1966171168
            %v2548 = vunpack.c.0.s8 %v2547
            %v2549 = vlaneseq
            %v2550 = vshrl.u32 %v2549, 7
            %v2551 = vsub.s32 %v2548, %v2550
            %v2552 = vrot.slane %v2530, %v2551
            %v2554 = vunpack.c.l.s4 1966171168
            %v2555 = vunpack.c.0.s8 %v2554
            %v2556 = vlaneseq
            %v2557 = vshrl.u32 %v2556, 7
            %v2558 = vsub.s32 %v2555, %v2557
            %v2559 = vrot.slane %v2531, %v2558
            %v2560 = vcombine.low %v2538, %v2545
            %v2561 = vcombine.low %v2552, %v2559
            %v2563 = vunpack.c.l.s4 1966171168
            %v2564 = vunpack.c.0.s8 %v2563
            %v2565 = vlaneseq
            %v2566 = vshrl.u32 %v2565, 7
            %v2567 = vsub.s32 %v2564, %v2566
            %v2568 = vrot.slane %v2560, %v2567
            %v2570 = vunpack.c.l.s4 1966171168
            %v2571 = vunpack.c.0.s8 %v2570
            %v2572 = vlaneseq
            %v2573 = vshrl.u32 %v2572, 7
            %v2574 = vsub.s32 %v2571, %v2573
            %v2575 = vrot.slane %v2561, %v2574
            %v2576 = vcombine.low %v2568, %v2575
            %v2578 = vsub.f32 %v2470, %v2576
            %2579 = vst [vmem:[#allocation4] ss:$8 sm:$0xf] %v2469
            %2580 = vst [vmem:[#allocation4] ss:$8 sm:$0xf0] %v2469
            %s2581 = scalar_lea.vmem [#allocation4], 1
            %2582 = vst [vmem:[%s2581] ss:$8 sm:$0xf] %v2578
            %2583 = vst [vmem:[%s2581] ss:$8 sm:$0xf0] %v2578
            %vm2584 = vcmp.gt.f32.partialorder %v2469, 0.0
            %v2585 = vld [vmem:[#allocation10] sm:$0xff]
            %v2586 = vld [vmem:[#allocation10 + $0x8] sm:$0xff]
            %v2587 = vld [vmem:[#allocation11] sm:$0xff]
            %v2588 = vld [vmem:[#allocation11 + $0x8] sm:$0xff]
            %v2589 = vsel %vm2584, 1, 0
            %v2590 = vlaneseq
            %v2591 = vshrl.u32 %v2590, 7
            %v2592 = vsub.s32 0, %v2591
            %v2593 = vrot.slane %v2589, %v2592
            %v2594 = vlaneseq
            %v2595 = vshrl.u32 %v2594, 7
            %v2596 = vsub.s32 1, %v2595
            %v2597 = vrot.slane %v2589, %v2596
            %v2598 = vlaneseq
            %v2599 = vshrl.u32 %v2598, 7
            %v2600 = vsub.s32 2, %v2599
            %v2601 = vrot.slane %v2589, %v2600
            %v2602 = vlaneseq
            %v2603 = vshrl.u32 %v2602, 7
            %v2604 = vsub.s32 3, %v2603
            %v2605 = vrot.slane %v2589, %v2604
            %v2606 = vlaneseq
            %v2607 = vshrl.u32 %v2606, 7
            %v2608 = vsub.s32 4, %v2607
            %v2609 = vrot.slane %v2589, %v2608
            %v2610 = vlaneseq
            %v2611 = vshrl.u32 %v2610, 7
            %v2612 = vsub.s32 5, %v2611
            %v2613 = vrot.slane %v2589, %v2612
            %v2614 = vlaneseq
            %v2615 = vshrl.u32 %v2614, 7
            %v2616 = vsub.s32 6, %v2615
            %v2617 = vrot.slane %v2589, %v2616
            %v2618 = vlaneseq
            %v2619 = vshrl.u32 %v2618, 7
            %v2620 = vsub.s32 7, %v2619
            %v2621 = vrot.slane %v2589, %v2620
            %vm2622 = vcmp.eq.s32.totalorder %v2593, 1
            %vm2623 = vcmp.eq.s32.totalorder %v2597, 1
            %vm2624 = vcmp.eq.s32.totalorder %v2601, 1
            %vm2625 = vcmp.eq.s32.totalorder %v2605, 1
            %vm2626 = vcmp.eq.s32.totalorder %v2609, 1
            %vm2627 = vcmp.eq.s32.totalorder %v2613, 1
            %vm2628 = vcmp.eq.s32.totalorder %v2617, 1
            %vm2629 = vcmp.eq.s32.totalorder %v2621, 1
            %v2632 = vcombine.high %v2585, %v2585
            %v2634 = vunpack.c.l.s4 1983009808
            %v2635 = vunpack.c.0.s8 %v2634
            %v2636 = vlaneseq
            %v2637 = vshrl.u32 %v2636, 7
            %v2638 = vsub.s32 %v2635, %v2637
            %v2639 = vrot.slane %v2585, %v2638
            %v2641 = vunpack.c.l.s4 1983009808
            %v2642 = vunpack.c.0.s8 %v2641
            %v2643 = vlaneseq
            %v2644 = vshrl.u32 %v2643, 7
            %v2645 = vsub.s32 %v2642, %v2644
            %v2646 = vrot.slane %v2632, %v2645
            %v2647 = vcombine.high %v2639, %v2639
            %v2648 = vcombine.high %v2646, %v2646
            %v2649 = vcombine.high %v2586, %v2586
            %v2651 = vunpack.c.l.s4 1983009808
            %v2652 = vunpack.c.0.s8 %v2651
            %v2653 = vlaneseq
            %v2654 = vshrl.u32 %v2653, 7
            %v2655 = vsub.s32 %v2652, %v2654
            %v2656 = vrot.slane %v2586, %v2655
            %v2658 = vunpack.c.l.s4 1983009808
            %v2659 = vunpack.c.0.s8 %v2658
            %v2660 = vlaneseq
            %v2661 = vshrl.u32 %v2660, 7
            %v2662 = vsub.s32 %v2659, %v2661
            %v2663 = vrot.slane %v2649, %v2662
            %v2664 = vcombine.high %v2656, %v2656
            %v2665 = vcombine.high %v2663, %v2663
            %v2676 = vcombine.high %v2587, %v2587
            %v2678 = vunpack.c.l.s4 1983009808
            %v2679 = vunpack.c.0.s8 %v2678
            %v2680 = vlaneseq
            %v2681 = vshrl.u32 %v2680, 7
            %v2682 = vsub.s32 %v2679, %v2681
            %v2683 = vrot.slane %v2587, %v2682
            %v2685 = vunpack.c.l.s4 1983009808
            %v2686 = vunpack.c.0.s8 %v2685
            %v2687 = vlaneseq
            %v2688 = vshrl.u32 %v2687, 7
            %v2689 = vsub.s32 %v2686, %v2688
            %v2690 = vrot.slane %v2676, %v2689
            %v2691 = vcombine.high %v2683, %v2683
            %v2692 = vcombine.high %v2690, %v2690
            %v2693 = vcombine.high %v2588, %v2588
            %v2695 = vunpack.c.l.s4 1983009808
            %v2696 = vunpack.c.0.s8 %v2695
            %v2697 = vlaneseq
            %v2698 = vshrl.u32 %v2697, 7
            %v2699 = vsub.s32 %v2696, %v2698
            %v2700 = vrot.slane %v2588, %v2699
            %v2702 = vunpack.c.l.s4 1983009808
            %v2703 = vunpack.c.0.s8 %v2702
            %v2704 = vlaneseq
            %v2705 = vshrl.u32 %v2704, 7
            %v2706 = vsub.s32 %v2703, %v2705
            %v2707 = vrot.slane %v2693, %v2706
            %v2708 = vcombine.high %v2700, %v2700
            %v2709 = vcombine.high %v2707, %v2707
            %v2718 = vsel %vm2622, %v2639, %v2683
            %v2719 = vsel %vm2623, %v2647, %v2691
            %v2720 = vsel %vm2624, %v2646, %v2690
            %v2721 = vsel %vm2625, %v2648, %v2692
            %v2722 = vsel %vm2626, %v2656, %v2700
            %v2723 = vsel %vm2627, %v2664, %v2708
            %v2724 = vsel %vm2628, %v2663, %v2707
            %v2725 = vsel %vm2629, %v2665, %v2709
            %v2726 = vmul.f32 %v2718, %v2475
            %v2727 = vmul.f32 %v2719, %v2479
            %v2728 = vmul.f32 %v2720, %v2483
            %v2729 = vmul.f32 %v2721, %v2487
            %v2730 = vmul.f32 %v2722, %v2491
            %v2731 = vmul.f32 %v2723, %v2495
            %v2732 = vmul.f32 %v2724, %v2499
            %v2733 = vmul.f32 %v2725, %v2503
            %v2735 = vlaneseq
            %v2736 = vshrl.u32 %v2735, 7
            %v2737 = vsub.s32 0, %v2736
            %v2738 = vrot.slane %v2578, %v2737
            %v2739 = vlaneseq
            %v2740 = vshrl.u32 %v2739, 7
            %v2741 = vsub.s32 1, %v2740
            %v2742 = vrot.slane %v2578, %v2741
            %v2743 = vlaneseq
            %v2744 = vshrl.u32 %v2743, 7
            %v2745 = vsub.s32 2, %v2744
            %v2746 = vrot.slane %v2578, %v2745
            %v2747 = vlaneseq
            %v2748 = vshrl.u32 %v2747, 7
            %v2749 = vsub.s32 3, %v2748
            %v2750 = vrot.slane %v2578, %v2749
            %v2751 = vlaneseq
            %v2752 = vshrl.u32 %v2751, 7
            %v2753 = vsub.s32 4, %v2752
            %v2754 = vrot.slane %v2578, %v2753
            %v2755 = vlaneseq
            %v2756 = vshrl.u32 %v2755, 7
            %v2757 = vsub.s32 5, %v2756
            %v2758 = vrot.slane %v2578, %v2757
            %v2759 = vlaneseq
            %v2760 = vshrl.u32 %v2759, 7
            %v2761 = vsub.s32 6, %v2760
            %v2762 = vrot.slane %v2578, %v2761
            %v2763 = vlaneseq
            %v2764 = vshrl.u32 %v2763, 7
            %v2765 = vsub.s32 7, %v2764
            %v2766 = vrot.slane %v2578, %v2765
            %v2775 = vadd.f32 %v2726, %v2738
            %v2776 = vadd.f32 %v2727, %v2742
            %v2777 = vadd.f32 %v2728, %v2746
            %v2778 = vadd.f32 %v2729, %v2750
            %v2779 = vadd.f32 %v2730, %v2754
            %v2780 = vadd.f32 %v2731, %v2758
            %v2781 = vadd.f32 %v2732, %v2762
            %v2782 = vadd.f32 %v2733, %v2766
            %v2783 = vmax.f32 %v2775, 0.0
            %v2784 = vmax.f32 %v2776, 0.0
            %v2785 = vmax.f32 %v2777, 0.0
            %v2786 = vmax.f32 %v2778, 0.0
            %v2787 = vmax.f32 %v2779, 0.0
            %v2788 = vmax.f32 %v2780, 0.0
            %v2789 = vmax.f32 %v2781, 0.0
            %v2790 = vmax.f32 %v2782, 0.0
            %v2791 = vpack.c.bf16 %v2783, %v2783
            %v2792 = vpack.c.bf16 %v2784, %v2784
            %v2793 = vpack.c.bf16 %v2785, %v2785
            %v2794 = vpack.c.bf16 %v2786, %v2786
            %v2795 = vpack.c.bf16 %v2787, %v2787
            %v2796 = vpack.c.bf16 %v2788, %v2788
            %v2797 = vpack.c.bf16 %v2789, %v2789
            %v2798 = vpack.c.bf16 %v2790, %v2790
            %v2799 = vld [vmem:[#allocation16] sm:$0xff]
            %v2800 = vld [vmem:[#allocation16 + $0x8] sm:$0xff]
            %v2801 = vld [vmem:[#allocation16 + $0x10] sm:$0xff]
            %v2802 = vld [vmem:[#allocation16 + $0x18] sm:$0xff]
            %v2803 = vld [vmem:[#allocation16 + $0x20] sm:$0xff]
            %v2804 = vld [vmem:[#allocation16 + $0x28] sm:$0xff]
            %v2805 = vld [vmem:[#allocation16 + $0x30] sm:$0xff]
            %v2806 = vld [vmem:[#allocation16 + $0x38] sm:$0xff]
            %v2807 = vld [vmem:[#allocation16 + $0x40] sm:$0xff]
            %v2808 = vld [vmem:[#allocation16 + $0x48] sm:$0xff]
            %v2809 = vld [vmem:[#allocation16 + $0x50] sm:$0xff]
            %v2810 = vld [vmem:[#allocation16 + $0x58] sm:$0xff]
            %v2811 = vld [vmem:[#allocation16 + $0x60] sm:$0xff]
            %v2812 = vld [vmem:[#allocation16 + $0x68] sm:$0xff]
            %v2813 = vld [vmem:[#allocation16 + $0x70] sm:$0xff]
            %v2814 = vld [vmem:[#allocation16 + $0x78] sm:$0xff]
            %v2815 = vld [vmem:[#allocation16 + $0x80] sm:$0xff]
            %v2816 = vld [vmem:[#allocation16 + $0x88] sm:$0xff]
            %v2817 = vld [vmem:[#allocation16 + $0x90] sm:$0xff]
            %v2818 = vld [vmem:[#allocation16 + $0x98] sm:$0xff]
            %v2819 = vld [vmem:[#allocation16 + $0xa0] sm:$0xff]
            %v2820 = vld [vmem:[#allocation16 + $0xa8] sm:$0xff]
            %v2821 = vld [vmem:[#allocation16 + $0xb0] sm:$0xff]
            %v2822 = vld [vmem:[#allocation16 + $0xb8] sm:$0xff]
            %v2823 = vld [vmem:[#allocation16 + $0xc0] sm:$0xff]
            %v2824 = vld [vmem:[#allocation16 + $0xc8] sm:$0xff]
            %v2825 = vld [vmem:[#allocation16 + $0xd0] sm:$0xff]
            %v2826 = vld [vmem:[#allocation16 + $0xd8] sm:$0xff]
            %v2827 = vld [vmem:[#allocation16 + $0xe0] sm:$0xff]
            %v2828 = vld [vmem:[#allocation16 + $0xe8] sm:$0xff]
            %v2829 = vld [vmem:[#allocation16 + $0xf0] sm:$0xff]
            %v2830 = vld [vmem:[#allocation16 + $0xf8] sm:$0xff]
            %v2831 = vld [vmem:[#allocation16 + $0x100] sm:$0xff]
            %v2832 = vld [vmem:[#allocation16 + $0x108] sm:$0xff]
            %v2833 = vld [vmem:[#allocation16 + $0x110] sm:$0xff]
            %v2834 = vld [vmem:[#allocation16 + $0x118] sm:$0xff]
            %v2835 = vld [vmem:[#allocation16 + $0x120] sm:$0xff]
            %v2836 = vld [vmem:[#allocation16 + $0x128] sm:$0xff]
            %v2837 = vld [vmem:[#allocation16 + $0x130] sm:$0xff]
            %v2838 = vld [vmem:[#allocation16 + $0x138] sm:$0xff]
            %v2839 = vld [vmem:[#allocation16 + $0x140] sm:$0xff]
            %v2840 = vld [vmem:[#allocation16 + $0x148] sm:$0xff]
            %v2841 = vld [vmem:[#allocation16 + $0x150] sm:$0xff]
            %v2842 = vld [vmem:[#allocation16 + $0x158] sm:$0xff]
            %v2843 = vld [vmem:[#allocation16 + $0x160] sm:$0xff]
            %v2844 = vld [vmem:[#allocation16 + $0x168] sm:$0xff]
            %v2845 = vld [vmem:[#allocation16 + $0x170] sm:$0xff]
            %v2846 = vld [vmem:[#allocation16 + $0x178] sm:$0xff]
            %v2847 = vld [vmem:[#allocation16 + $0x180] sm:$0xff]
            %v2848 = vld [vmem:[#allocation16 + $0x188] sm:$0xff]
            %v2849 = vld [vmem:[#allocation16 + $0x190] sm:$0xff]
            %v2850 = vld [vmem:[#allocation16 + $0x198] sm:$0xff]
            %v2851 = vld [vmem:[#allocation16 + $0x1a0] sm:$0xff]
            %v2852 = vld [vmem:[#allocation16 + $0x1a8] sm:$0xff]
            %v2853 = vld [vmem:[#allocation16 + $0x1b0] sm:$0xff]
            %v2854 = vld [vmem:[#allocation16 + $0x1b8] sm:$0xff]
            %v2855 = vld [vmem:[#allocation16 + $0x1c0] sm:$0xff]
            %v2856 = vld [vmem:[#allocation16 + $0x1c8] sm:$0xff]
            %v2857 = vld [vmem:[#allocation16 + $0x1d0] sm:$0xff]
            %v2858 = vld [vmem:[#allocation16 + $0x1d8] sm:$0xff]
            %v2859 = vld [vmem:[#allocation16 + $0x1e0] sm:$0xff]
            %v2860 = vld [vmem:[#allocation16 + $0x1e8] sm:$0xff]
            %v2861 = vld [vmem:[#allocation16 + $0x1f0] sm:$0xff]
            %v2862 = vld [vmem:[#allocation16 + $0x1f8] sm:$0xff]
            %v2863 = vld [vmem:[#allocation16 + $0x200] sm:$0xff]
            %v2864 = vld [vmem:[#allocation16 + $0x208] sm:$0xff]
            %v2865 = vld [vmem:[#allocation16 + $0x210] sm:$0xff]
            %v2866 = vld [vmem:[#allocation16 + $0x218] sm:$0xff]
            %v2867 = vld [vmem:[#allocation16 + $0x220] sm:$0xff]
            %v2868 = vld [vmem:[#allocation16 + $0x228] sm:$0xff]
            %v2869 = vld [vmem:[#allocation16 + $0x230] sm:$0xff]
            %v2870 = vld [vmem:[#allocation16 + $0x238] sm:$0xff]
            %v2871 = vld [vmem:[#allocation16 + $0x240] sm:$0xff]
            %v2872 = vld [vmem:[#allocation16 + $0x248] sm:$0xff]
            %v2873 = vld [vmem:[#allocation16 + $0x250] sm:$0xff]
            %v2874 = vld [vmem:[#allocation16 + $0x258] sm:$0xff]
            %v2875 = vld [vmem:[#allocation16 + $0x260] sm:$0xff]
            %v2876 = vld [vmem:[#allocation16 + $0x268] sm:$0xff]
            %v2877 = vld [vmem:[#allocation16 + $0x270] sm:$0xff]
            %v2878 = vld [vmem:[#allocation16 + $0x278] sm:$0xff]
            %v2879 = vld [vmem:[#allocation16 + $0x280] sm:$0xff]
            %v2880 = vld [vmem:[#allocation16 + $0x288] sm:$0xff]
            %v2881 = vld [vmem:[#allocation16 + $0x290] sm:$0xff]
            %v2882 = vld [vmem:[#allocation16 + $0x298] sm:$0xff]
            %v2883 = vld [vmem:[#allocation16 + $0x2a0] sm:$0xff]
            %v2884 = vld [vmem:[#allocation16 + $0x2a8] sm:$0xff]
            %v2885 = vld [vmem:[#allocation16 + $0x2b0] sm:$0xff]
            %v2886 = vld [vmem:[#allocation16 + $0x2b8] sm:$0xff]
            %v2887 = vld [vmem:[#allocation16 + $0x2c0] sm:$0xff]
            %v2888 = vld [vmem:[#allocation16 + $0x2c8] sm:$0xff]
            %v2889 = vld [vmem:[#allocation16 + $0x2d0] sm:$0xff]
            %v2890 = vld [vmem:[#allocation16 + $0x2d8] sm:$0xff]
            %v2891 = vld [vmem:[#allocation16 + $0x2e0] sm:$0xff]
            %v2892 = vld [vmem:[#allocation16 + $0x2e8] sm:$0xff]
            %v2893 = vld [vmem:[#allocation16 + $0x2f0] sm:$0xff]
            %v2894 = vld [vmem:[#allocation16 + $0x2f8] sm:$0xff]
            %v2895 = vld [vmem:[#allocation16 + $0x300] sm:$0xff]
            %v2896 = vld [vmem:[#allocation16 + $0x308] sm:$0xff]
            %v2897 = vld [vmem:[#allocation16 + $0x310] sm:$0xff]
            %v2898 = vld [vmem:[#allocation16 + $0x318] sm:$0xff]
            %v2899 = vld [vmem:[#allocation16 + $0x320] sm:$0xff]
            %v2900 = vld [vmem:[#allocation16 + $0x328] sm:$0xff]
            %v2901 = vld [vmem:[#allocation16 + $0x330] sm:$0xff]
            %v2902 = vld [vmem:[#allocation16 + $0x338] sm:$0xff]
            %v2903 = vld [vmem:[#allocation16 + $0x340] sm:$0xff]
            %v2904 = vld [vmem:[#allocation16 + $0x348] sm:$0xff]
            %v2905 = vld [vmem:[#allocation16 + $0x350] sm:$0xff]
            %v2906 = vld [vmem:[#allocation16 + $0x358] sm:$0xff]
            %v2907 = vld [vmem:[#allocation16 + $0x360] sm:$0xff]
            %v2908 = vld [vmem:[#allocation16 + $0x368] sm:$0xff]
            %v2909 = vld [vmem:[#allocation16 + $0x370] sm:$0xff]
            %v2910 = vld [vmem:[#allocation16 + $0x378] sm:$0xff]
            %v2911 = vld [vmem:[#allocation16 + $0x380] sm:$0xff]
            %v2912 = vld [vmem:[#allocation16 + $0x388] sm:$0xff]
            %v2913 = vld [vmem:[#allocation16 + $0x390] sm:$0xff]
            %v2914 = vld [vmem:[#allocation16 + $0x398] sm:$0xff]
            %v2915 = vld [vmem:[#allocation16 + $0x3a0] sm:$0xff]
            %v2916 = vld [vmem:[#allocation16 + $0x3a8] sm:$0xff]
            %v2917 = vld [vmem:[#allocation16 + $0x3b0] sm:$0xff]
            %v2918 = vld [vmem:[#allocation16 + $0x3b8] sm:$0xff]
            %v2919 = vld [vmem:[#allocation16 + $0x3c0] sm:$0xff]
            %v2920 = vld [vmem:[#allocation16 + $0x3c8] sm:$0xff]
            %v2921 = vld [vmem:[#allocation16 + $0x3d0] sm:$0xff]
            %v2922 = vld [vmem:[#allocation16 + $0x3d8] sm:$0xff]
            %v2923 = vld [vmem:[#allocation16 + $0x3e0] sm:$0xff]
            %v2924 = vld [vmem:[#allocation16 + $0x3e8] sm:$0xff]
            %v2925 = vld [vmem:[#allocation16 + $0x3f0] sm:$0xff]
            %v2926 = vld [vmem:[#allocation16 + $0x3f8] sm:$0xff]
            %v2927 = vld [vmem:[#allocation16 + $0x400] sm:$0xff]
            %v2928 = vld [vmem:[#allocation16 + $0x408] sm:$0xff]
            %v2929 = vld [vmem:[#allocation16 + $0x410] sm:$0xff]
            %v2930 = vld [vmem:[#allocation16 + $0x418] sm:$0xff]
            %v2931 = vld [vmem:[#allocation16 + $0x420] sm:$0xff]
            %v2932 = vld [vmem:[#allocation16 + $0x428] sm:$0xff]
            %v2933 = vld [vmem:[#allocation16 + $0x430] sm:$0xff]
            %v2934 = vld [vmem:[#allocation16 + $0x438] sm:$0xff]
            %v2935 = vld [vmem:[#allocation16 + $0x440] sm:$0xff]
            %v2936 = vld [vmem:[#allocation16 + $0x448] sm:$0xff]
            %v2937 = vld [vmem:[#allocation16 + $0x450] sm:$0xff]
            %v2938 = vld [vmem:[#allocation16 + $0x458] sm:$0xff]
            %v2939 = vld [vmem:[#allocation16 + $0x460] sm:$0xff]
            %v2940 = vld [vmem:[#allocation16 + $0x468] sm:$0xff]
            %v2941 = vld [vmem:[#allocation16 + $0x470] sm:$0xff]
            %v2942 = vld [vmem:[#allocation16 + $0x478] sm:$0xff]
            %v2943 = vld [vmem:[#allocation16 + $0x480] sm:$0xff]
            %v2944 = vld [vmem:[#allocation16 + $0x488] sm:$0xff]
            %v2945 = vld [vmem:[#allocation16 + $0x490] sm:$0xff]
            %v2946 = vld [vmem:[#allocation16 + $0x498] sm:$0xff]
            %v2947 = vld [vmem:[#allocation16 + $0x4a0] sm:$0xff]
            %v2948 = vld [vmem:[#allocation16 + $0x4a8] sm:$0xff]
            %v2949 = vld [vmem:[#allocation16 + $0x4b0] sm:$0xff]
            %v2950 = vld [vmem:[#allocation16 + $0x4b8] sm:$0xff]
            %v2951 = vld [vmem:[#allocation16 + $0x4c0] sm:$0xff]
            %v2952 = vld [vmem:[#allocation16 + $0x4c8] sm:$0xff]
            %v2953 = vld [vmem:[#allocation16 + $0x4d0] sm:$0xff]
            %v2954 = vld [vmem:[#allocation16 + $0x4d8] sm:$0xff]
            %v2955 = vld [vmem:[#allocation16 + $0x4e0] sm:$0xff]
            %v2956 = vld [vmem:[#allocation16 + $0x4e8] sm:$0xff]
            %v2957 = vld [vmem:[#allocation16 + $0x4f0] sm:$0xff]
            %v2958 = vld [vmem:[#allocation16 + $0x4f8] sm:$0xff]
            %v2959 = vld [vmem:[#allocation16 + $0x500] sm:$0xff]
            %v2960 = vld [vmem:[#allocation16 + $0x508] sm:$0xff]
            %v2961 = vld [vmem:[#allocation16 + $0x510] sm:$0xff]
            %v2962 = vld [vmem:[#allocation16 + $0x518] sm:$0xff]
            %v2963 = vld [vmem:[#allocation16 + $0x520] sm:$0xff]
            %v2964 = vld [vmem:[#allocation16 + $0x528] sm:$0xff]
            %v2965 = vld [vmem:[#allocation16 + $0x530] sm:$0xff]
            %v2966 = vld [vmem:[#allocation16 + $0x538] sm:$0xff]
            %v2967 = vld [vmem:[#allocation16 + $0x540] sm:$0xff]
            %v2968 = vld [vmem:[#allocation16 + $0x548] sm:$0xff]
            %v2969 = vld [vmem:[#allocation16 + $0x550] sm:$0xff]
            %v2970 = vld [vmem:[#allocation16 + $0x558] sm:$0xff]
            %v2971 = vld [vmem:[#allocation16 + $0x560] sm:$0xff]
            %v2972 = vld [vmem:[#allocation16 + $0x568] sm:$0xff]
            %v2973 = vld [vmem:[#allocation16 + $0x570] sm:$0xff]
            %v2974 = vld [vmem:[#allocation16 + $0x578] sm:$0xff]
            %v2975 = vld [vmem:[#allocation16 + $0x580] sm:$0xff]
            %v2976 = vld [vmem:[#allocation16 + $0x588] sm:$0xff]
            %v2977 = vld [vmem:[#allocation16 + $0x590] sm:$0xff]
            %v2978 = vld [vmem:[#allocation16 + $0x598] sm:$0xff]
            %v2979 = vld [vmem:[#allocation16 + $0x5a0] sm:$0xff]
            %v2980 = vld [vmem:[#allocation16 + $0x5a8] sm:$0xff]
            %v2981 = vld [vmem:[#allocation16 + $0x5b0] sm:$0xff]
            %v2982 = vld [vmem:[#allocation16 + $0x5b8] sm:$0xff]
            %v2983 = vld [vmem:[#allocation16 + $0x5c0] sm:$0xff]
            %v2984 = vld [vmem:[#allocation16 + $0x5c8] sm:$0xff]
            %v2985 = vld [vmem:[#allocation16 + $0x5d0] sm:$0xff]
            %v2986 = vld [vmem:[#allocation16 + $0x5d8] sm:$0xff]
            %v2987 = vld [vmem:[#allocation16 + $0x5e0] sm:$0xff]
            %v2988 = vld [vmem:[#allocation16 + $0x5e8] sm:$0xff]
            %v2989 = vld [vmem:[#allocation16 + $0x5f0] sm:$0xff]
            %v2990 = vld [vmem:[#allocation16 + $0x5f8] sm:$0xff]
            %v2991 = vld [vmem:[#allocation16 + $0x600] sm:$0xff]
            %v2992 = vld [vmem:[#allocation16 + $0x608] sm:$0xff]
            %v2993 = vld [vmem:[#allocation16 + $0x610] sm:$0xff]
            %v2994 = vld [vmem:[#allocation16 + $0x618] sm:$0xff]
            %v2995 = vld [vmem:[#allocation16 + $0x620] sm:$0xff]
            %v2996 = vld [vmem:[#allocation16 + $0x628] sm:$0xff]
            %v2997 = vld [vmem:[#allocation16 + $0x630] sm:$0xff]
            %v2998 = vld [vmem:[#allocation16 + $0x638] sm:$0xff]
            %v2999 = vld [vmem:[#allocation16 + $0x640] sm:$0xff]
            %v3000 = vld [vmem:[#allocation16 + $0x648] sm:$0xff]
            %v3001 = vld [vmem:[#allocation16 + $0x650] sm:$0xff]
            %v3002 = vld [vmem:[#allocation16 + $0x658] sm:$0xff]
            %v3003 = vld [vmem:[#allocation16 + $0x660] sm:$0xff]
            %v3004 = vld [vmem:[#allocation16 + $0x668] sm:$0xff]
            %v3005 = vld [vmem:[#allocation16 + $0x670] sm:$0xff]
            %v3006 = vld [vmem:[#allocation16 + $0x678] sm:$0xff]
            %v3007 = vld [vmem:[#allocation16 + $0x680] sm:$0xff]
            %v3008 = vld [vmem:[#allocation16 + $0x688] sm:$0xff]
            %v3009 = vld [vmem:[#allocation16 + $0x690] sm:$0xff]
            %v3010 = vld [vmem:[#allocation16 + $0x698] sm:$0xff]
            %v3011 = vld [vmem:[#allocation16 + $0x6a0] sm:$0xff]
            %v3012 = vld [vmem:[#allocation16 + $0x6a8] sm:$0xff]
            %v3013 = vld [vmem:[#allocation16 + $0x6b0] sm:$0xff]
            %v3014 = vld [vmem:[#allocation16 + $0x6b8] sm:$0xff]
            %v3015 = vld [vmem:[#allocation16 + $0x6c0] sm:$0xff]
            %v3016 = vld [vmem:[#allocation16 + $0x6c8] sm:$0xff]
            %v3017 = vld [vmem:[#allocation16 + $0x6d0] sm:$0xff]
            %v3018 = vld [vmem:[#allocation16 + $0x6d8] sm:$0xff]
            %v3019 = vld [vmem:[#allocation16 + $0x6e0] sm:$0xff]
            %v3020 = vld [vmem:[#allocation16 + $0x6e8] sm:$0xff]
            %v3021 = vld [vmem:[#allocation16 + $0x6f0] sm:$0xff]
            %v3022 = vld [vmem:[#allocation16 + $0x6f8] sm:$0xff]
            %v3023 = vld [vmem:[#allocation16 + $0x700] sm:$0xff]
            %v3024 = vld [vmem:[#allocation16 + $0x708] sm:$0xff]
            %v3025 = vld [vmem:[#allocation16 + $0x710] sm:$0xff]
            %v3026 = vld [vmem:[#allocation16 + $0x718] sm:$0xff]
            %v3027 = vld [vmem:[#allocation16 + $0x720] sm:$0xff]
            %v3028 = vld [vmem:[#allocation16 + $0x728] sm:$0xff]
            %v3029 = vld [vmem:[#allocation16 + $0x730] sm:$0xff]
            %v3030 = vld [vmem:[#allocation16 + $0x738] sm:$0xff]
            %v3031 = vld [vmem:[#allocation16 + $0x740] sm:$0xff]
            %v3032 = vld [vmem:[#allocation16 + $0x748] sm:$0xff]
            %v3033 = vld [vmem:[#allocation16 + $0x750] sm:$0xff]
            %v3034 = vld [vmem:[#allocation16 + $0x758] sm:$0xff]
            %v3035 = vld [vmem:[#allocation16 + $0x760] sm:$0xff]
            %v3036 = vld [vmem:[#allocation16 + $0x768] sm:$0xff]
            %v3037 = vld [vmem:[#allocation16 + $0x770] sm:$0xff]
            %v3038 = vld [vmem:[#allocation16 + $0x778] sm:$0xff]
            %v3039 = vld [vmem:[#allocation16 + $0x780] sm:$0xff]
            %v3040 = vld [vmem:[#allocation16 + $0x788] sm:$0xff]
            %v3041 = vld [vmem:[#allocation16 + $0x790] sm:$0xff]
            %v3042 = vld [vmem:[#allocation16 + $0x798] sm:$0xff]
            %v3043 = vld [vmem:[#allocation16 + $0x7a0] sm:$0xff]
            %v3044 = vld [vmem:[#allocation16 + $0x7a8] sm:$0xff]
            %v3045 = vld [vmem:[#allocation16 + $0x7b0] sm:$0xff]
            %v3046 = vld [vmem:[#allocation16 + $0x7b8] sm:$0xff]
            %v3047 = vld [vmem:[#allocation16 + $0x7c0] sm:$0xff]
            %v3048 = vld [vmem:[#allocation16 + $0x7c8] sm:$0xff]
            %v3049 = vld [vmem:[#allocation16 + $0x7d0] sm:$0xff]
            %v3050 = vld [vmem:[#allocation16 + $0x7d8] sm:$0xff]
            %v3051 = vld [vmem:[#allocation16 + $0x7e0] sm:$0xff]
            %v3052 = vld [vmem:[#allocation16 + $0x7e8] sm:$0xff]
            %v3053 = vld [vmem:[#allocation16 + $0x7f0] sm:$0xff]
            %v3054 = vld [vmem:[#allocation16 + $0x7f8] sm:$0xff]
            %v3311 = vunpack.c.l.b16 %v2799
            %v3312 = vunpack.c.h.b16 %v2799
            %v3313 = vunpack.c.l.b16 %v2800
            %v3314 = vunpack.c.h.b16 %v2800
            %v3315 = vunpack.c.l.b16 %v2801
            %v3316 = vunpack.c.h.b16 %v2801
            %v3317 = vunpack.c.l.b16 %v2802
            %v3318 = vunpack.c.h.b16 %v2802
            %v3319 = vunpack.c.l.b16 %v2803
            %v3320 = vunpack.c.h.b16 %v2803
            %v3321 = vunpack.c.l.b16 %v2804
            %v3322 = vunpack.c.h.b16 %v2804
            %v3323 = vunpack.c.l.b16 %v2805
            %v3324 = vunpack.c.h.b16 %v2805
            %v3325 = vunpack.c.l.b16 %v2806
            %v3326 = vunpack.c.h.b16 %v2806
            %v3327 = vunpack.c.l.b16 %v2807
            %v3328 = vunpack.c.h.b16 %v2807
            %v3329 = vunpack.c.l.b16 %v2808
            %v3330 = vunpack.c.h.b16 %v2808
            %v3331 = vunpack.c.l.b16 %v2809
            %v3332 = vunpack.c.h.b16 %v2809
            %v3333 = vunpack.c.l.b16 %v2810
            %v3334 = vunpack.c.h.b16 %v2810
            %v3335 = vunpack.c.l.b16 %v2811
            %v3336 = vunpack.c.h.b16 %v2811
            %v3337 = vunpack.c.l.b16 %v2812
            %v3338 = vunpack.c.h.b16 %v2812
            %v3339 = vunpack.c.l.b16 %v2813
            %v3340 = vunpack.c.h.b16 %v2813
            %v3341 = vunpack.c.l.b16 %v2814
            %v3342 = vunpack.c.h.b16 %v2814
            %v3343 = vunpack.c.l.b16 %v2815
            %v3344 = vunpack.c.h.b16 %v2815
            %v3345 = vunpack.c.l.b16 %v2816
            %v3346 = vunpack.c.h.b16 %v2816
            %v3347 = vunpack.c.l.b16 %v2817
            %v3348 = vunpack.c.h.b16 %v2817
            %v3349 = vunpack.c.l.b16 %v2818
            %v3350 = vunpack.c.h.b16 %v2818
            %v3351 = vunpack.c.l.b16 %v2819
            %v3352 = vunpack.c.h.b16 %v2819
            %v3353 = vunpack.c.l.b16 %v2820
            %v3354 = vunpack.c.h.b16 %v2820
            %v3355 = vunpack.c.l.b16 %v2821
            %v3356 = vunpack.c.h.b16 %v2821
            %v3357 = vunpack.c.l.b16 %v2822
            %v3358 = vunpack.c.h.b16 %v2822
            %v3359 = vunpack.c.l.b16 %v2823
            %v3360 = vunpack.c.h.b16 %v2823
            %v3361 = vunpack.c.l.b16 %v2824
            %v3362 = vunpack.c.h.b16 %v2824
            %v3363 = vunpack.c.l.b16 %v2825
            %v3364 = vunpack.c.h.b16 %v2825
            %v3365 = vunpack.c.l.b16 %v2826
            %v3366 = vunpack.c.h.b16 %v2826
            %v3367 = vunpack.c.l.b16 %v2827
            %v3368 = vunpack.c.h.b16 %v2827
            %v3369 = vunpack.c.l.b16 %v2828
            %v3370 = vunpack.c.h.b16 %v2828
            %v3371 = vunpack.c.l.b16 %v2829
            %v3372 = vunpack.c.h.b16 %v2829
            %v3373 = vunpack.c.l.b16 %v2830
            %v3374 = vunpack.c.h.b16 %v2830
            %v3375 = vunpack.c.l.b16 %v2831
            %v3376 = vunpack.c.h.b16 %v2831
            %v3377 = vunpack.c.l.b16 %v2832
            %v3378 = vunpack.c.h.b16 %v2832
            %v3379 = vunpack.c.l.b16 %v2833
            %v3380 = vunpack.c.h.b16 %v2833
            %v3381 = vunpack.c.l.b16 %v2834
            %v3382 = vunpack.c.h.b16 %v2834
            %v3383 = vunpack.c.l.b16 %v2835
            %v3384 = vunpack.c.h.b16 %v2835
            %v3385 = vunpack.c.l.b16 %v2836
            %v3386 = vunpack.c.h.b16 %v2836
            %v3387 = vunpack.c.l.b16 %v2837
            %v3388 = vunpack.c.h.b16 %v2837
            %v3389 = vunpack.c.l.b16 %v2838
            %v3390 = vunpack.c.h.b16 %v2838
            %v3391 = vunpack.c.l.b16 %v2839
            %v3392 = vunpack.c.h.b16 %v2839
            %v3393 = vunpack.c.l.b16 %v2840
            %v3394 = vunpack.c.h.b16 %v2840
            %v3395 = vunpack.c.l.b16 %v2841
            %v3396 = vunpack.c.h.b16 %v2841
            %v3397 = vunpack.c.l.b16 %v2842
            %v3398 = vunpack.c.h.b16 %v2842
            %v3399 = vunpack.c.l.b16 %v2843
            %v3400 = vunpack.c.h.b16 %v2843
            %v3401 = vunpack.c.l.b16 %v2844
            %v3402 = vunpack.c.h.b16 %v2844
            %v3403 = vunpack.c.l.b16 %v2845
            %v3404 = vunpack.c.h.b16 %v2845
            %v3405 = vunpack.c.l.b16 %v2846
            %v3406 = vunpack.c.h.b16 %v2846
            %v3407 = vunpack.c.l.b16 %v2847
            %v3408 = vunpack.c.h.b16 %v2847
            %v3409 = vunpack.c.l.b16 %v2848
            %v3410 = vunpack.c.h.b16 %v2848
            %v3411 = vunpack.c.l.b16 %v2849
            %v3412 = vunpack.c.h.b16 %v2849
            %v3413 = vunpack.c.l.b16 %v2850
            %v3414 = vunpack.c.h.b16 %v2850
            %v3415 = vunpack.c.l.b16 %v2851
            %v3416 = vunpack.c.h.b16 %v2851
            %v3417 = vunpack.c.l.b16 %v2852
            %v3418 = vunpack.c.h.b16 %v2852
            %v3419 = vunpack.c.l.b16 %v2853
            %v3420 = vunpack.c.h.b16 %v2853
            %v3421 = vunpack.c.l.b16 %v2854
            %v3422 = vunpack.c.h.b16 %v2854
            %v3423 = vunpack.c.l.b16 %v2855
            %v3424 = vunpack.c.h.b16 %v2855
            %v3425 = vunpack.c.l.b16 %v2856
            %v3426 = vunpack.c.h.b16 %v2856
            %v3427 = vunpack.c.l.b16 %v2857
            %v3428 = vunpack.c.h.b16 %v2857
            %v3429 = vunpack.c.l.b16 %v2858
            %v3430 = vunpack.c.h.b16 %v2858
            %v3431 = vunpack.c.l.b16 %v2859
            %v3432 = vunpack.c.h.b16 %v2859
            %v3433 = vunpack.c.l.b16 %v2860
            %v3434 = vunpack.c.h.b16 %v2860
            %v3435 = vunpack.c.l.b16 %v2861
            %v3436 = vunpack.c.h.b16 %v2861
            %v3437 = vunpack.c.l.b16 %v2862
            %v3438 = vunpack.c.h.b16 %v2862
            %v3439 = vunpack.c.l.b16 %v2863
            %v3440 = vunpack.c.h.b16 %v2863
            %v3441 = vunpack.c.l.b16 %v2864
            %v3442 = vunpack.c.h.b16 %v2864
            %v3443 = vunpack.c.l.b16 %v2865
            %v3444 = vunpack.c.h.b16 %v2865
            %v3445 = vunpack.c.l.b16 %v2866
            %v3446 = vunpack.c.h.b16 %v2866
            %v3447 = vunpack.c.l.b16 %v2867
            %v3448 = vunpack.c.h.b16 %v2867
            %v3449 = vunpack.c.l.b16 %v2868
            %v3450 = vunpack.c.h.b16 %v2868
            %v3451 = vunpack.c.l.b16 %v2869
            %v3452 = vunpack.c.h.b16 %v2869
            %v3453 = vunpack.c.l.b16 %v2870
            %v3454 = vunpack.c.h.b16 %v2870
            %v3455 = vunpack.c.l.b16 %v2871
            %v3456 = vunpack.c.h.b16 %v2871
            %v3457 = vunpack.c.l.b16 %v2872
            %v3458 = vunpack.c.h.b16 %v2872
            %v3459 = vunpack.c.l.b16 %v2873
            %v3460 = vunpack.c.h.b16 %v2873
            %v3461 = vunpack.c.l.b16 %v2874
            %v3462 = vunpack.c.h.b16 %v2874
            %v3463 = vunpack.c.l.b16 %v2875
            %v3464 = vunpack.c.h.b16 %v2875
            %v3465 = vunpack.c.l.b16 %v2876
            %v3466 = vunpack.c.h.b16 %v2876
            %v3467 = vunpack.c.l.b16 %v2877
            %v3468 = vunpack.c.h.b16 %v2877
            %v3469 = vunpack.c.l.b16 %v2878
            %v3470 = vunpack.c.h.b16 %v2878
            %v3471 = vunpack.c.l.b16 %v2879
            %v3472 = vunpack.c.h.b16 %v2879
            %v3473 = vunpack.c.l.b16 %v2880
            %v3474 = vunpack.c.h.b16 %v2880
            %v3475 = vunpack.c.l.b16 %v2881
            %v3476 = vunpack.c.h.b16 %v2881
            %v3477 = vunpack.c.l.b16 %v2882
            %v3478 = vunpack.c.h.b16 %v2882
            %v3479 = vunpack.c.l.b16 %v2883
            %v3480 = vunpack.c.h.b16 %v2883
            %v3481 = vunpack.c.l.b16 %v2884
            %v3482 = vunpack.c.h.b16 %v2884
            %v3483 = vunpack.c.l.b16 %v2885
            %v3484 = vunpack.c.h.b16 %v2885
            %v3485 = vunpack.c.l.b16 %v2886
            %v3486 = vunpack.c.h.b16 %v2886
            %v3487 = vunpack.c.l.b16 %v2887
            %v3488 = vunpack.c.h.b16 %v2887
            %v3489 = vunpack.c.l.b16 %v2888
            %v3490 = vunpack.c.h.b16 %v2888
            %v3491 = vunpack.c.l.b16 %v2889
            %v3492 = vunpack.c.h.b16 %v2889
            %v3493 = vunpack.c.l.b16 %v2890
            %v3494 = vunpack.c.h.b16 %v2890
            %v3495 = vunpack.c.l.b16 %v2891
            %v3496 = vunpack.c.h.b16 %v2891
            %v3497 = vunpack.c.l.b16 %v2892
            %v3498 = vunpack.c.h.b16 %v2892
            %v3499 = vunpack.c.l.b16 %v2893
            %v3500 = vunpack.c.h.b16 %v2893
            %v3501 = vunpack.c.l.b16 %v2894
            %v3502 = vunpack.c.h.b16 %v2894
            %v3503 = vunpack.c.l.b16 %v2895
            %v3504 = vunpack.c.h.b16 %v2895
            %v3505 = vunpack.c.l.b16 %v2896
            %v3506 = vunpack.c.h.b16 %v2896
            %v3507 = vunpack.c.l.b16 %v2897
            %v3508 = vunpack.c.h.b16 %v2897
            %v3509 = vunpack.c.l.b16 %v2898
            %v3510 = vunpack.c.h.b16 %v2898
            %v3511 = vunpack.c.l.b16 %v2899
            %v3512 = vunpack.c.h.b16 %v2899
            %v3513 = vunpack.c.l.b16 %v2900
            %v3514 = vunpack.c.h.b16 %v2900
            %v3515 = vunpack.c.l.b16 %v2901
            %v3516 = vunpack.c.h.b16 %v2901
            %v3517 = vunpack.c.l.b16 %v2902
            %v3518 = vunpack.c.h.b16 %v2902
            %v3519 = vunpack.c.l.b16 %v2903
            %v3520 = vunpack.c.h.b16 %v2903
            %v3521 = vunpack.c.l.b16 %v2904
            %v3522 = vunpack.c.h.b16 %v2904
            %v3523 = vunpack.c.l.b16 %v2905
            %v3524 = vunpack.c.h.b16 %v2905
            %v3525 = vunpack.c.l.b16 %v2906
            %v3526 = vunpack.c.h.b16 %v2906
            %v3527 = vunpack.c.l.b16 %v2907
            %v3528 = vunpack.c.h.b16 %v2907
            %v3529 = vunpack.c.l.b16 %v2908
            %v3530 = vunpack.c.h.b16 %v2908
            %v3531 = vunpack.c.l.b16 %v2909
            %v3532 = vunpack.c.h.b16 %v2909
            %v3533 = vunpack.c.l.b16 %v2910
            %v3534 = vunpack.c.h.b16 %v2910
            %v3535 = vunpack.c.l.b16 %v2911
            %v3536 = vunpack.c.h.b16 %v2911
            %v3537 = vunpack.c.l.b16 %v2912
            %v3538 = vunpack.c.h.b16 %v2912
            %v3539 = vunpack.c.l.b16 %v2913
            %v3540 = vunpack.c.h.b16 %v2913
            %v3541 = vunpack.c.l.b16 %v2914
            %v3542 = vunpack.c.h.b16 %v2914
            %v3543 = vunpack.c.l.b16 %v2915
            %v3544 = vunpack.c.h.b16 %v2915
            %v3545 = vunpack.c.l.b16 %v2916
            %v3546 = vunpack.c.h.b16 %v2916
            %v3547 = vunpack.c.l.b16 %v2917
            %v3548 = vunpack.c.h.b16 %v2917
            %v3549 = vunpack.c.l.b16 %v2918
            %v3550 = vunpack.c.h.b16 %v2918
            %v3551 = vunpack.c.l.b16 %v2919
            %v3552 = vunpack.c.h.b16 %v2919
            %v3553 = vunpack.c.l.b16 %v2920
            %v3554 = vunpack.c.h.b16 %v2920
            %v3555 = vunpack.c.l.b16 %v2921
            %v3556 = vunpack.c.h.b16 %v2921
            %v3557 = vunpack.c.l.b16 %v2922
            %v3558 = vunpack.c.h.b16 %v2922
            %v3559 = vunpack.c.l.b16 %v2923
            %v3560 = vunpack.c.h.b16 %v2923
            %v3561 = vunpack.c.l.b16 %v2924
            %v3562 = vunpack.c.h.b16 %v2924
            %v3563 = vunpack.c.l.b16 %v2925
            %v3564 = vunpack.c.h.b16 %v2925
            %v3565 = vunpack.c.l.b16 %v2926
            %v3566 = vunpack.c.h.b16 %v2926
            %v3567 = vunpack.c.l.b16 %v2927
            %v3568 = vunpack.c.h.b16 %v2927
            %v3569 = vunpack.c.l.b16 %v2928
            %v3570 = vunpack.c.h.b16 %v2928
            %v3571 = vunpack.c.l.b16 %v2929
            %v3572 = vunpack.c.h.b16 %v2929
            %v3573 = vunpack.c.l.b16 %v2930
            %v3574 = vunpack.c.h.b16 %v2930
            %v3575 = vunpack.c.l.b16 %v2931
            %v3576 = vunpack.c.h.b16 %v2931
            %v3577 = vunpack.c.l.b16 %v2932
            %v3578 = vunpack.c.h.b16 %v2932
            %v3579 = vunpack.c.l.b16 %v2933
            %v3580 = vunpack.c.h.b16 %v2933
            %v3581 = vunpack.c.l.b16 %v2934
            %v3582 = vunpack.c.h.b16 %v2934
            %v3583 = vunpack.c.l.b16 %v2935
            %v3584 = vunpack.c.h.b16 %v2935
            %v3585 = vunpack.c.l.b16 %v2936
            %v3586 = vunpack.c.h.b16 %v2936
            %v3587 = vunpack.c.l.b16 %v2937
            %v3588 = vunpack.c.h.b16 %v2937
            %v3589 = vunpack.c.l.b16 %v2938
            %v3590 = vunpack.c.h.b16 %v2938
            %v3591 = vunpack.c.l.b16 %v2939
            %v3592 = vunpack.c.h.b16 %v2939
            %v3593 = vunpack.c.l.b16 %v2940
            %v3594 = vunpack.c.h.b16 %v2940
            %v3595 = vunpack.c.l.b16 %v2941
            %v3596 = vunpack.c.h.b16 %v2941
            %v3597 = vunpack.c.l.b16 %v2942
            %v3598 = vunpack.c.h.b16 %v2942
            %v3599 = vunpack.c.l.b16 %v2943
            %v3600 = vunpack.c.h.b16 %v2943
            %v3601 = vunpack.c.l.b16 %v2944
            %v3602 = vunpack.c.h.b16 %v2944
            %v3603 = vunpack.c.l.b16 %v2945
            %v3604 = vunpack.c.h.b16 %v2945
            %v3605 = vunpack.c.l.b16 %v2946
            %v3606 = vunpack.c.h.b16 %v2946
            %v3607 = vunpack.c.l.b16 %v2947
            %v3608 = vunpack.c.h.b16 %v2947
            %v3609 = vunpack.c.l.b16 %v2948
            %v3610 = vunpack.c.h.b16 %v2948
            %v3611 = vunpack.c.l.b16 %v2949
            %v3612 = vunpack.c.h.b16 %v2949
            %v3613 = vunpack.c.l.b16 %v2950
            %v3614 = vunpack.c.h.b16 %v2950
            %v3615 = vunpack.c.l.b16 %v2951
            %v3616 = vunpack.c.h.b16 %v2951
            %v3617 = vunpack.c.l.b16 %v2952
            %v3618 = vunpack.c.h.b16 %v2952
            %v3619 = vunpack.c.l.b16 %v2953
            %v3620 = vunpack.c.h.b16 %v2953
            %v3621 = vunpack.c.l.b16 %v2954
            %v3622 = vunpack.c.h.b16 %v2954
            %v3623 = vunpack.c.l.b16 %v2955
            %v3624 = vunpack.c.h.b16 %v2955
            %v3625 = vunpack.c.l.b16 %v2956
            %v3626 = vunpack.c.h.b16 %v2956
            %v3627 = vunpack.c.l.b16 %v2957
            %v3628 = vunpack.c.h.b16 %v2957
            %v3629 = vunpack.c.l.b16 %v2958
            %v3630 = vunpack.c.h.b16 %v2958
            %v3631 = vunpack.c.l.b16 %v2959
            %v3632 = vunpack.c.h.b16 %v2959
            %v3633 = vunpack.c.l.b16 %v2960
            %v3634 = vunpack.c.h.b16 %v2960
            %v3635 = vunpack.c.l.b16 %v2961
            %v3636 = vunpack.c.h.b16 %v2961
            %v3637 = vunpack.c.l.b16 %v2962
            %v3638 = vunpack.c.h.b16 %v2962
            %v3639 = vunpack.c.l.b16 %v2963
            %v3640 = vunpack.c.h.b16 %v2963
            %v3641 = vunpack.c.l.b16 %v2964
            %v3642 = vunpack.c.h.b16 %v2964
            %v3643 = vunpack.c.l.b16 %v2965
            %v3644 = vunpack.c.h.b16 %v2965
            %v3645 = vunpack.c.l.b16 %v2966
            %v3646 = vunpack.c.h.b16 %v2966
            %v3647 = vunpack.c.l.b16 %v2967
            %v3648 = vunpack.c.h.b16 %v2967
            %v3649 = vunpack.c.l.b16 %v2968
            %v3650 = vunpack.c.h.b16 %v2968
            %v3651 = vunpack.c.l.b16 %v2969
            %v3652 = vunpack.c.h.b16 %v2969
            %v3653 = vunpack.c.l.b16 %v2970
            %v3654 = vunpack.c.h.b16 %v2970
            %v3655 = vunpack.c.l.b16 %v2971
            %v3656 = vunpack.c.h.b16 %v2971
            %v3657 = vunpack.c.l.b16 %v2972
            %v3658 = vunpack.c.h.b16 %v2972
            %v3659 = vunpack.c.l.b16 %v2973
            %v3660 = vunpack.c.h.b16 %v2973
            %v3661 = vunpack.c.l.b16 %v2974
            %v3662 = vunpack.c.h.b16 %v2974
            %v3663 = vunpack.c.l.b16 %v2975
            %v3664 = vunpack.c.h.b16 %v2975
            %v3665 = vunpack.c.l.b16 %v2976
            %v3666 = vunpack.c.h.b16 %v2976
            %v3667 = vunpack.c.l.b16 %v2977
            %v3668 = vunpack.c.h.b16 %v2977
            %v3669 = vunpack.c.l.b16 %v2978
            %v3670 = vunpack.c.h.b16 %v2978
            %v3671 = vunpack.c.l.b16 %v2979
            %v3672 = vunpack.c.h.b16 %v2979
            %v3673 = vunpack.c.l.b16 %v2980
            %v3674 = vunpack.c.h.b16 %v2980
            %v3675 = vunpack.c.l.b16 %v2981
            %v3676 = vunpack.c.h.b16 %v2981
            %v3677 = vunpack.c.l.b16 %v2982
            %v3678 = vunpack.c.h.b16 %v2982
            %v3679 = vunpack.c.l.b16 %v2983
            %v3680 = vunpack.c.h.b16 %v2983
            %v3681 = vunpack.c.l.b16 %v2984
            %v3682 = vunpack.c.h.b16 %v2984
            %v3683 = vunpack.c.l.b16 %v2985
            %v3684 = vunpack.c.h.b16 %v2985
            %v3685 = vunpack.c.l.b16 %v2986
            %v3686 = vunpack.c.h.b16 %v2986
            %v3687 = vunpack.c.l.b16 %v2987
            %v3688 = vunpack.c.h.b16 %v2987
            %v3689 = vunpack.c.l.b16 %v2988
            %v3690 = vunpack.c.h.b16 %v2988
            %v3691 = vunpack.c.l.b16 %v2989
            %v3692 = vunpack.c.h.b16 %v2989
            %v3693 = vunpack.c.l.b16 %v2990
            %v3694 = vunpack.c.h.b16 %v2990
            %v3695 = vunpack.c.l.b16 %v2991
            %v3696 = vunpack.c.h.b16 %v2991
            %v3697 = vunpack.c.l.b16 %v2992
            %v3698 = vunpack.c.h.b16 %v2992
            %v3699 = vunpack.c.l.b16 %v2993
            %v3700 = vunpack.c.h.b16 %v2993
            %v3701 = vunpack.c.l.b16 %v2994
            %v3702 = vunpack.c.h.b16 %v2994
            %v3703 = vunpack.c.l.b16 %v2995
            %v3704 = vunpack.c.h.b16 %v2995
            %v3705 = vunpack.c.l.b16 %v2996
            %v3706 = vunpack.c.h.b16 %v2996
            %v3707 = vunpack.c.l.b16 %v2997
            %v3708 = vunpack.c.h.b16 %v2997
            %v3709 = vunpack.c.l.b16 %v2998
            %v3710 = vunpack.c.h.b16 %v2998
            %v3711 = vunpack.c.l.b16 %v2999
            %v3712 = vunpack.c.h.b16 %v2999
            %v3713 = vunpack.c.l.b16 %v3000
            %v3714 = vunpack.c.h.b16 %v3000
            %v3715 = vunpack.c.l.b16 %v3001
            %v3716 = vunpack.c.h.b16 %v3001
            %v3717 = vunpack.c.l.b16 %v3002
            %v3718 = vunpack.c.h.b16 %v3002
            %v3719 = vunpack.c.l.b16 %v3003
            %v3720 = vunpack.c.h.b16 %v3003
            %v3721 = vunpack.c.l.b16 %v3004
            %v3722 = vunpack.c.h.b16 %v3004
            %v3723 = vunpack.c.l.b16 %v3005
            %v3724 = vunpack.c.h.b16 %v3005
            %v3725 = vunpack.c.l.b16 %v3006
            %v3726 = vunpack.c.h.b16 %v3006
            %v3727 = vunpack.c.l.b16 %v3007
            %v3728 = vunpack.c.h.b16 %v3007
            %v3729 = vunpack.c.l.b16 %v3008
            %v3730 = vunpack.c.h.b16 %v3008
            %v3731 = vunpack.c.l.b16 %v3009
            %v3732 = vunpack.c.h.b16 %v3009
            %v3733 = vunpack.c.l.b16 %v3010
            %v3734 = vunpack.c.h.b16 %v3010
            %v3735 = vunpack.c.l.b16 %v3011
            %v3736 = vunpack.c.h.b16 %v3011
            %v3737 = vunpack.c.l.b16 %v3012
            %v3738 = vunpack.c.h.b16 %v3012
            %v3739 = vunpack.c.l.b16 %v3013
            %v3740 = vunpack.c.h.b16 %v3013
            %v3741 = vunpack.c.l.b16 %v3014
            %v3742 = vunpack.c.h.b16 %v3014
            %v3743 = vunpack.c.l.b16 %v3015
            %v3744 = vunpack.c.h.b16 %v3015
            %v3745 = vunpack.c.l.b16 %v3016
            %v3746 = vunpack.c.h.b16 %v3016
            %v3747 = vunpack.c.l.b16 %v3017
            %v3748 = vunpack.c.h.b16 %v3017
            %v3749 = vunpack.c.l.b16 %v3018
            %v3750 = vunpack.c.h.b16 %v3018
            %v3751 = vunpack.c.l.b16 %v3019
            %v3752 = vunpack.c.h.b16 %v3019
            %v3753 = vunpack.c.l.b16 %v3020
            %v3754 = vunpack.c.h.b16 %v3020
            %v3755 = vunpack.c.l.b16 %v3021
            %v3756 = vunpack.c.h.b16 %v3021
            %v3757 = vunpack.c.l.b16 %v3022
            %v3758 = vunpack.c.h.b16 %v3022
            %v3759 = vunpack.c.l.b16 %v3023
            %v3760 = vunpack.c.h.b16 %v3023
            %v3761 = vunpack.c.l.b16 %v3024
            %v3762 = vunpack.c.h.b16 %v3024
            %v3763 = vunpack.c.l.b16 %v3025
            %v3764 = vunpack.c.h.b16 %v3025
            %v3765 = vunpack.c.l.b16 %v3026
            %v3766 = vunpack.c.h.b16 %v3026
            %v3767 = vunpack.c.l.b16 %v3027
            %v3768 = vunpack.c.h.b16 %v3027
            %v3769 = vunpack.c.l.b16 %v3028
            %v3770 = vunpack.c.h.b16 %v3028
            %v3771 = vunpack.c.l.b16 %v3029
            %v3772 = vunpack.c.h.b16 %v3029
            %v3773 = vunpack.c.l.b16 %v3030
            %v3774 = vunpack.c.h.b16 %v3030
            %v3775 = vunpack.c.l.b16 %v3031
            %v3776 = vunpack.c.h.b16 %v3031
            %v3777 = vunpack.c.l.b16 %v3032
            %v3778 = vunpack.c.h.b16 %v3032
            %v3779 = vunpack.c.l.b16 %v3033
            %v3780 = vunpack.c.h.b16 %v3033
            %v3781 = vunpack.c.l.b16 %v3034
            %v3782 = vunpack.c.h.b16 %v3034
            %v3783 = vunpack.c.l.b16 %v3035
            %v3784 = vunpack.c.h.b16 %v3035
            %v3785 = vunpack.c.l.b16 %v3036
            %v3786 = vunpack.c.h.b16 %v3036
            %v3787 = vunpack.c.l.b16 %v3037
            %v3788 = vunpack.c.h.b16 %v3037
            %v3789 = vunpack.c.l.b16 %v3038
            %v3790 = vunpack.c.h.b16 %v3038
            %v3791 = vunpack.c.l.b16 %v3039
            %v3792 = vunpack.c.h.b16 %v3039
            %v3793 = vunpack.c.l.b16 %v3040
            %v3794 = vunpack.c.h.b16 %v3040
            %v3795 = vunpack.c.l.b16 %v3041
            %v3796 = vunpack.c.h.b16 %v3041
            %v3797 = vunpack.c.l.b16 %v3042
            %v3798 = vunpack.c.h.b16 %v3042
            %v3799 = vunpack.c.l.b16 %v3043
            %v3800 = vunpack.c.h.b16 %v3043
            %v3801 = vunpack.c.l.b16 %v3044
            %v3802 = vunpack.c.h.b16 %v3044
            %v3803 = vunpack.c.l.b16 %v3045
            %v3804 = vunpack.c.h.b16 %v3045
            %v3805 = vunpack.c.l.b16 %v3046
            %v3806 = vunpack.c.h.b16 %v3046
            %v3807 = vunpack.c.l.b16 %v3047
            %v3808 = vunpack.c.h.b16 %v3047
            %v3809 = vunpack.c.l.b16 %v3048
            %v3810 = vunpack.c.h.b16 %v3048
            %v3811 = vunpack.c.l.b16 %v3049
            %v3812 = vunpack.c.h.b16 %v3049
            %v3813 = vunpack.c.l.b16 %v3050
            %v3814 = vunpack.c.h.b16 %v3050
            %v3815 = vunpack.c.l.b16 %v3051
            %v3816 = vunpack.c.h.b16 %v3051
            %v3817 = vunpack.c.l.b16 %v3052
            %v3818 = vunpack.c.h.b16 %v3052
            %v3819 = vunpack.c.l.b16 %v3053
            %v3820 = vunpack.c.h.b16 %v3053
            %v3821 = vunpack.c.l.b16 %v3054
            %v3822 = vunpack.c.h.b16 %v3054
            %v3823 = vpack.c.b16 %v3315, %v3311
            %v3824 = vpack.c.b16 %v3316, %v3312
            %v3825 = vpack.c.b16 %v3317, %v3313
            %v3826 = vpack.c.b16 %v3318, %v3314
            %v3827 = vpack.c.b16 %v3323, %v3319
            %v3828 = vpack.c.b16 %v3324, %v3320
            %v3829 = vpack.c.b16 %v3325, %v3321
            %v3830 = vpack.c.b16 %v3326, %v3322
            %v3831 = vpack.c.b16 %v3331, %v3327
            %v3832 = vpack.c.b16 %v3332, %v3328
            %v3833 = vpack.c.b16 %v3333, %v3329
            %v3834 = vpack.c.b16 %v3334, %v3330
            %v3835 = vpack.c.b16 %v3339, %v3335
            %v3836 = vpack.c.b16 %v3340, %v3336
            %v3837 = vpack.c.b16 %v3341, %v3337
            %v3838 = vpack.c.b16 %v3342, %v3338
            %v3839 = vpack.c.b16 %v3347, %v3343
            %v3840 = vpack.c.b16 %v3348, %v3344
            %v3841 = vpack.c.b16 %v3349, %v3345
            %v3842 = vpack.c.b16 %v3350, %v3346
            %v3843 = vpack.c.b16 %v3355, %v3351
            %v3844 = vpack.c.b16 %v3356, %v3352
            %v3845 = vpack.c.b16 %v3357, %v3353
            %v3846 = vpack.c.b16 %v3358, %v3354
            %v3847 = vpack.c.b16 %v3363, %v3359
            %v3848 = vpack.c.b16 %v3364, %v3360
            %v3849 = vpack.c.b16 %v3365, %v3361
            %v3850 = vpack.c.b16 %v3366, %v3362
            %v3851 = vpack.c.b16 %v3371, %v3367
            %v3852 = vpack.c.b16 %v3372, %v3368
            %v3853 = vpack.c.b16 %v3373, %v3369
            %v3854 = vpack.c.b16 %v3374, %v3370
            %v3855 = vpack.c.b16 %v3379, %v3375
            %v3856 = vpack.c.b16 %v3380, %v3376
            %v3857 = vpack.c.b16 %v3381, %v3377
            %v3858 = vpack.c.b16 %v3382, %v3378
            %v3859 = vpack.c.b16 %v3387, %v3383
            %v3860 = vpack.c.b16 %v3388, %v3384
            %v3861 = vpack.c.b16 %v3389, %v3385
            %v3862 = vpack.c.b16 %v3390, %v3386
            %v3863 = vpack.c.b16 %v3395, %v3391
            %v3864 = vpack.c.b16 %v3396, %v3392
            %v3865 = vpack.c.b16 %v3397, %v3393
            %v3866 = vpack.c.b16 %v3398, %v3394
            %v3867 = vpack.c.b16 %v3403, %v3399
            %v3868 = vpack.c.b16 %v3404, %v3400
            %v3869 = vpack.c.b16 %v3405, %v3401
            %v3870 = vpack.c.b16 %v3406, %v3402
            %v3871 = vpack.c.b16 %v3411, %v3407
            %v3872 = vpack.c.b16 %v3412, %v3408
            %v3873 = vpack.c.b16 %v3413, %v3409
            %v3874 = vpack.c.b16 %v3414, %v3410
            %v3875 = vpack.c.b16 %v3419, %v3415
            %v3876 = vpack.c.b16 %v3420, %v3416
            %v3877 = vpack.c.b16 %v3421, %v3417
            %v3878 = vpack.c.b16 %v3422, %v3418
            %v3879 = vpack.c.b16 %v3427, %v3423
            %v3880 = vpack.c.b16 %v3428, %v3424
            %v3881 = vpack.c.b16 %v3429, %v3425
            %v3882 = vpack.c.b16 %v3430, %v3426
            %v3883 = vpack.c.b16 %v3435, %v3431
            %v3884 = vpack.c.b16 %v3436, %v3432
            %v3885 = vpack.c.b16 %v3437, %v3433
            %v3886 = vpack.c.b16 %v3438, %v3434
            %v3887 = vpack.c.b16 %v3443, %v3439
            %v3888 = vpack.c.b16 %v3444, %v3440
            %v3889 = vpack.c.b16 %v3445, %v3441
            %v3890 = vpack.c.b16 %v3446, %v3442
            %v3891 = vpack.c.b16 %v3451, %v3447
            %v3892 = vpack.c.b16 %v3452, %v3448
            %v3893 = vpack.c.b16 %v3453, %v3449
            %v3894 = vpack.c.b16 %v3454, %v3450
            %v3895 = vpack.c.b16 %v3459, %v3455
            %v3896 = vpack.c.b16 %v3460, %v3456
            %v3897 = vpack.c.b16 %v3461, %v3457
            %v3898 = vpack.c.b16 %v3462, %v3458
            %v3899 = vpack.c.b16 %v3467, %v3463
            %v3900 = vpack.c.b16 %v3468, %v3464
            %v3901 = vpack.c.b16 %v3469, %v3465
            %v3902 = vpack.c.b16 %v3470, %v3466
            %v3903 = vpack.c.b16 %v3475, %v3471
            %v3904 = vpack.c.b16 %v3476, %v3472
            %v3905 = vpack.c.b16 %v3477, %v3473
            %v3906 = vpack.c.b16 %v3478, %v3474
            %v3907 = vpack.c.b16 %v3483, %v3479
            %v3908 = vpack.c.b16 %v3484, %v3480
            %v3909 = vpack.c.b16 %v3485, %v3481
            %v3910 = vpack.c.b16 %v3486, %v3482
            %v3911 = vpack.c.b16 %v3491, %v3487
            %v3912 = vpack.c.b16 %v3492, %v3488
            %v3913 = vpack.c.b16 %v3493, %v3489
            %v3914 = vpack.c.b16 %v3494, %v3490
            %v3915 = vpack.c.b16 %v3499, %v3495
            %v3916 = vpack.c.b16 %v3500, %v3496
            %v3917 = vpack.c.b16 %v3501, %v3497
            %v3918 = vpack.c.b16 %v3502, %v3498
            %v3919 = vpack.c.b16 %v3507, %v3503
            %v3920 = vpack.c.b16 %v3508, %v3504
            %v3921 = vpack.c.b16 %v3509, %v3505
            %v3922 = vpack.c.b16 %v3510, %v3506
            %v3923 = vpack.c.b16 %v3515, %v3511
            %v3924 = vpack.c.b16 %v3516, %v3512
            %v3925 = vpack.c.b16 %v3517, %v3513
            %v3926 = vpack.c.b16 %v3518, %v3514
            %v3927 = vpack.c.b16 %v3523, %v3519
            %v3928 = vpack.c.b16 %v3524, %v3520
            %v3929 = vpack.c.b16 %v3525, %v3521
            %v3930 = vpack.c.b16 %v3526, %v3522
            %v3931 = vpack.c.b16 %v3531, %v3527
            %v3932 = vpack.c.b16 %v3532, %v3528
            %v3933 = vpack.c.b16 %v3533, %v3529
            %v3934 = vpack.c.b16 %v3534, %v3530
            %v3935 = vpack.c.b16 %v3539, %v3535
            %v3936 = vpack.c.b16 %v3540, %v3536
            %v3937 = vpack.c.b16 %v3541, %v3537
            %v3938 = vpack.c.b16 %v3542, %v3538
            %v3939 = vpack.c.b16 %v3547, %v3543
            %v3940 = vpack.c.b16 %v3548, %v3544
            %v3941 = vpack.c.b16 %v3549, %v3545
            %v3942 = vpack.c.b16 %v3550, %v3546
            %v3943 = vpack.c.b16 %v3555, %v3551
            %v3944 = vpack.c.b16 %v3556, %v3552
            %v3945 = vpack.c.b16 %v3557, %v3553
            %v3946 = vpack.c.b16 %v3558, %v3554
            %v3947 = vpack.c.b16 %v3563, %v3559
            %v3948 = vpack.c.b16 %v3564, %v3560
            %v3949 = vpack.c.b16 %v3565, %v3561
            %v3950 = vpack.c.b16 %v3566, %v3562
            %v3951 = vpack.c.b16 %v3571, %v3567
            %v3952 = vpack.c.b16 %v3572, %v3568
            %v3953 = vpack.c.b16 %v3573, %v3569
            %v3954 = vpack.c.b16 %v3574, %v3570
            %v3955 = vpack.c.b16 %v3579, %v3575
            %v3956 = vpack.c.b16 %v3580, %v3576
            %v3957 = vpack.c.b16 %v3581, %v3577
            %v3958 = vpack.c.b16 %v3582, %v3578
            %v3959 = vpack.c.b16 %v3587, %v3583
            %v3960 = vpack.c.b16 %v3588, %v3584
            %v3961 = vpack.c.b16 %v3589, %v3585
            %v3962 = vpack.c.b16 %v3590, %v3586
            %v3963 = vpack.c.b16 %v3595, %v3591
            %v3964 = vpack.c.b16 %v3596, %v3592
            %v3965 = vpack.c.b16 %v3597, %v3593
            %v3966 = vpack.c.b16 %v3598, %v3594
            %v3967 = vpack.c.b16 %v3603, %v3599
            %v3968 = vpack.c.b16 %v3604, %v3600
            %v3969 = vpack.c.b16 %v3605, %v3601
            %v3970 = vpack.c.b16 %v3606, %v3602
            %v3971 = vpack.c.b16 %v3611, %v3607
            %v3972 = vpack.c.b16 %v3612, %v3608
            %v3973 = vpack.c.b16 %v3613, %v3609
            %v3974 = vpack.c.b16 %v3614, %v3610
            %v3975 = vpack.c.b16 %v3619, %v3615
            %v3976 = vpack.c.b16 %v3620, %v3616
            %v3977 = vpack.c.b16 %v3621, %v3617
            %v3978 = vpack.c.b16 %v3622, %v3618
            %v3979 = vpack.c.b16 %v3627, %v3623
            %v3980 = vpack.c.b16 %v3628, %v3624
            %v3981 = vpack.c.b16 %v3629, %v3625
            %v3982 = vpack.c.b16 %v3630, %v3626
            %v3983 = vpack.c.b16 %v3635, %v3631
            %v3984 = vpack.c.b16 %v3636, %v3632
            %v3985 = vpack.c.b16 %v3637, %v3633
            %v3986 = vpack.c.b16 %v3638, %v3634
            %v3987 = vpack.c.b16 %v3643, %v3639
            %v3988 = vpack.c.b16 %v3644, %v3640
            %v3989 = vpack.c.b16 %v3645, %v3641
            %v3990 = vpack.c.b16 %v3646, %v3642
            %v3991 = vpack.c.b16 %v3651, %v3647
            %v3992 = vpack.c.b16 %v3652, %v3648
            %v3993 = vpack.c.b16 %v3653, %v3649
            %v3994 = vpack.c.b16 %v3654, %v3650
            %v3995 = vpack.c.b16 %v3659, %v3655
            %v3996 = vpack.c.b16 %v3660, %v3656
            %v3997 = vpack.c.b16 %v3661, %v3657
            %v3998 = vpack.c.b16 %v3662, %v3658
            %v3999 = vpack.c.b16 %v3667, %v3663
            %v4000 = vpack.c.b16 %v3668, %v3664
            %v4001 = vpack.c.b16 %v3669, %v3665
            %v4002 = vpack.c.b16 %v3670, %v3666
            %v4003 = vpack.c.b16 %v3675, %v3671
            %v4004 = vpack.c.b16 %v3676, %v3672
            %v4005 = vpack.c.b16 %v3677, %v3673
            %v4006 = vpack.c.b16 %v3678, %v3674
            %v4007 = vpack.c.b16 %v3683, %v3679
            %v4008 = vpack.c.b16 %v3684, %v3680
            %v4009 = vpack.c.b16 %v3685, %v3681
            %v4010 = vpack.c.b16 %v3686, %v3682
            %v4011 = vpack.c.b16 %v3691, %v3687
            %v4012 = vpack.c.b16 %v3692, %v3688
            %v4013 = vpack.c.b16 %v3693, %v3689
            %v4014 = vpack.c.b16 %v3694, %v3690
            %v4015 = vpack.c.b16 %v3699, %v3695
            %v4016 = vpack.c.b16 %v3700, %v3696
            %v4017 = vpack.c.b16 %v3701, %v3697
            %v4018 = vpack.c.b16 %v3702, %v3698
            %v4019 = vpack.c.b16 %v3707, %v3703
            %v4020 = vpack.c.b16 %v3708, %v3704
            %v4021 = vpack.c.b16 %v3709, %v3705
            %v4022 = vpack.c.b16 %v3710, %v3706
            %v4023 = vpack.c.b16 %v3715, %v3711
            %v4024 = vpack.c.b16 %v3716, %v3712
            %v4025 = vpack.c.b16 %v3717, %v3713
            %v4026 = vpack.c.b16 %v3718, %v3714
            %v4027 = vpack.c.b16 %v3723, %v3719
            %v4028 = vpack.c.b16 %v3724, %v3720
            %v4029 = vpack.c.b16 %v3725, %v3721
            %v4030 = vpack.c.b16 %v3726, %v3722
            %v4031 = vpack.c.b16 %v3731, %v3727
            %v4032 = vpack.c.b16 %v3732, %v3728
            %v4033 = vpack.c.b16 %v3733, %v3729
            %v4034 = vpack.c.b16 %v3734, %v3730
            %v4035 = vpack.c.b16 %v3739, %v3735
            %v4036 = vpack.c.b16 %v3740, %v3736
            %v4037 = vpack.c.b16 %v3741, %v3737
            %v4038 = vpack.c.b16 %v3742, %v3738
            %v4039 = vpack.c.b16 %v3747, %v3743
            %v4040 = vpack.c.b16 %v3748, %v3744
            %v4041 = vpack.c.b16 %v3749, %v3745
            %v4042 = vpack.c.b16 %v3750, %v3746
            %v4043 = vpack.c.b16 %v3755, %v3751
            %v4044 = vpack.c.b16 %v3756, %v3752
            %v4045 = vpack.c.b16 %v3757, %v3753
            %v4046 = vpack.c.b16 %v3758, %v3754
            %v4047 = vpack.c.b16 %v3763, %v3759
            %v4048 = vpack.c.b16 %v3764, %v3760
            %v4049 = vpack.c.b16 %v3765, %v3761
            %v4050 = vpack.c.b16 %v3766, %v3762
            %v4051 = vpack.c.b16 %v3771, %v3767
            %v4052 = vpack.c.b16 %v3772, %v3768
            %v4053 = vpack.c.b16 %v3773, %v3769
            %v4054 = vpack.c.b16 %v3774, %v3770
            %v4055 = vpack.c.b16 %v3779, %v3775
            %v4056 = vpack.c.b16 %v3780, %v3776
            %v4057 = vpack.c.b16 %v3781, %v3777
            %v4058 = vpack.c.b16 %v3782, %v3778
            %v4059 = vpack.c.b16 %v3787, %v3783
            %v4060 = vpack.c.b16 %v3788, %v3784
            %v4061 = vpack.c.b16 %v3789, %v3785
            %v4062 = vpack.c.b16 %v3790, %v3786
            %v4063 = vpack.c.b16 %v3795, %v3791
            %v4064 = vpack.c.b16 %v3796, %v3792
            %v4065 = vpack.c.b16 %v3797, %v3793
            %v4066 = vpack.c.b16 %v3798, %v3794
            %v4067 = vpack.c.b16 %v3803, %v3799
            %v4068 = vpack.c.b16 %v3804, %v3800
            %v4069 = vpack.c.b16 %v3805, %v3801
            %v4070 = vpack.c.b16 %v3806, %v3802
            %v4071 = vpack.c.b16 %v3811, %v3807
            %v4072 = vpack.c.b16 %v3812, %v3808
            %v4073 = vpack.c.b16 %v3813, %v3809
            %v4074 = vpack.c.b16 %v3814, %v3810
            %v4075 = vpack.c.b16 %v3819, %v3815
            %v4076 = vpack.c.b16 %v3820, %v3816
            %v4077 = vpack.c.b16 %v3821, %v3817
            %v4078 = vpack.c.b16 %v3822, %v3818
            %4335 = vmatprep.subr.bf16.mxu0 %v3852
            %4336 = vmatpush1.bf16.msra.mxu0 %v3851
            %4337 = vmatprep.subr.bf16.mxu0 %v3848
            %4338 = vmatpush1.bf16.msra.mxu0 %v3847
            %4339 = vmatprep.subr.bf16.mxu0 %v3844
            %4340 = vmatpush1.bf16.msra.mxu0 %v3843
            %4341 = vmatprep.subr.bf16.mxu0 %v3840
            %4342 = vmatpush1.bf16.msra.mxu0 %v3839
            %4343 = vmatprep.subr.bf16.mxu0 %v3836
            %4344 = vmatpush1.bf16.msra.mxu0 %v3835
            %4345 = vmatprep.subr.bf16.mxu0 %v3832
            %4346 = vmatpush1.bf16.msra.mxu0 %v3831
            %4347 = vmatprep.subr.bf16.mxu0 %v3828
            %4348 = vmatpush1.bf16.msra.mxu0 %v3827
            %4349 = vmatprep.subr.bf16.mxu0 %v3824
            %4350 = vmatpush1.bf16.msra.mxu0 %v3823
            %4351 = vmatprep.subr.bf16.mxu0 %v3884
            %4352 = vmatpush2.bf16.msra.mxu0 %v3883
            %4353 = vmatprep.subr.bf16.mxu0 %v3880
            %4354 = vmatpush2.bf16.msra.mxu0 %v3879
            %4355 = vmatprep.subr.bf16.mxu0 %v3876
            %4356 = vmatpush2.bf16.msra.mxu0 %v3875
            %4357 = vmatprep.subr.bf16.mxu0 %v3872
            %4358 = vmatpush2.bf16.msra.mxu0 %v3871
            %4359 = vmatprep.subr.bf16.mxu0 %v3868
            %4360 = vmatpush2.bf16.msra.mxu0 %v3867
            %4361 = vmatprep.subr.bf16.mxu0 %v3864
            %4362 = vmatpush2.bf16.msra.mxu0 %v3863
            %4363 = vmatprep.subr.bf16.mxu0 %v3860
            %4364 = vmatpush2.bf16.msra.mxu0 %v3859
            %4365 = vmatprep.subr.bf16.mxu0 %v3856
            %4366 = vmatpush2.bf16.msra.mxu0 %v3855
            %4367 = vmatprep.mubr.bf16.mxu0 %v2792
            %4368 = vmatmul.mubr.bf16.gmra.mxu0 %v2791
            %v4369 = vpop.f32.mrf.mxu0
            %v4370 = vadd.f32 0.0, %v4369
            %v4371 = vpop.f32.mrf.mxu0
            %v4372 = vadd.f32 0.0, %v4371
            %v4373 = vpop.f32.mrf.mxu0
            %v4374 = vpop.f32.mrf.mxu0
            %4375 = vdwg.mxu0
            %4376 = vmatprep.subr.bf16.mxu0 %v3916
            %4377 = vmatpush1.bf16.msra.mxu0 %v3915
            %4378 = vmatprep.subr.bf16.mxu0 %v3912
            %4379 = vmatpush1.bf16.msra.mxu0 %v3911
            %4380 = vmatprep.subr.bf16.mxu0 %v3908
            %4381 = vmatpush1.bf16.msra.mxu0 %v3907
            %4382 = vmatprep.subr.bf16.mxu0 %v3904
            %4383 = vmatpush1.bf16.msra.mxu0 %v3903
            %4384 = vmatprep.subr.bf16.mxu0 %v3900
            %4385 = vmatpush1.bf16.msra.mxu0 %v3899
            %4386 = vmatprep.subr.bf16.mxu0 %v3896
            %4387 = vmatpush1.bf16.msra.mxu0 %v3895
            %4388 = vmatprep.subr.bf16.mxu0 %v3892
            %4389 = vmatpush1.bf16.msra.mxu0 %v3891
            %4390 = vmatprep.subr.bf16.mxu0 %v3888
            %4391 = vmatpush1.bf16.msra.mxu0 %v3887
            %4392 = vmatprep.subr.bf16.mxu0 %v3948
            %4393 = vmatpush2.bf16.msra.mxu0 %v3947
            %4394 = vmatprep.subr.bf16.mxu0 %v3944
            %4395 = vmatpush2.bf16.msra.mxu0 %v3943
            %4396 = vmatprep.subr.bf16.mxu0 %v3940
            %4397 = vmatpush2.bf16.msra.mxu0 %v3939
            %4398 = vmatprep.subr.bf16.mxu0 %v3936
            %4399 = vmatpush2.bf16.msra.mxu0 %v3935
            %4400 = vmatprep.subr.bf16.mxu0 %v3932
            %4401 = vmatpush2.bf16.msra.mxu0 %v3931
            %4402 = vmatprep.subr.bf16.mxu0 %v3928
            %4403 = vmatpush2.bf16.msra.mxu0 %v3927
            %4404 = vmatprep.subr.bf16.mxu0 %v3924
            %4405 = vmatpush2.bf16.msra.mxu0 %v3923
            %4406 = vmatprep.subr.bf16.mxu0 %v3920
            %4407 = vmatpush2.bf16.msra.mxu0 %v3919
            %4408 = vmatprep.mubr.bf16.mxu0 %v2794
            %4409 = vmatmul.mubr.bf16.gmra.mxu0 %v2793
            %v4410 = vpop.f32.mrf.mxu0
            %v4411 = vadd.f32 %v4370, %v4410
            %v4412 = vpop.f32.mrf.mxu0
            %v4413 = vadd.f32 %v4372, %v4412
            %v4414 = vpop.f32.mrf.mxu0
            %v4415 = vpop.f32.mrf.mxu0
            %4416 = vdwg.mxu0
            %4417 = vmatprep.subr.bf16.mxu0 %v3980
            %4418 = vmatpush1.bf16.msra.mxu0 %v3979
            %4419 = vmatprep.subr.bf16.mxu0 %v3976
            %4420 = vmatpush1.bf16.msra.mxu0 %v3975
            %4421 = vmatprep.subr.bf16.mxu0 %v3972
            %4422 = vmatpush1.bf16.msra.mxu0 %v3971
            %4423 = vmatprep.subr.bf16.mxu0 %v3968
            %4424 = vmatpush1.bf16.msra.mxu0 %v3967
            %4425 = vmatprep.subr.bf16.mxu0 %v3964
            %4426 = vmatpush1.bf16.msra.mxu0 %v3963
            %4427 = vmatprep.subr.bf16.mxu0 %v3960
            %4428 = vmatpush1.bf16.msra.mxu0 %v3959
            %4429 = vmatprep.subr.bf16.mxu0 %v3956
            %4430 = vmatpush1.bf16.msra.mxu0 %v3955
            %4431 = vmatprep.subr.bf16.mxu0 %v3952
            %4432 = vmatpush1.bf16.msra.mxu0 %v3951
            %4433 = vmatprep.subr.bf16.mxu0 %v4012
            %4434 = vmatpush2.bf16.msra.mxu0 %v4011
            %4435 = vmatprep.subr.bf16.mxu0 %v4008
            %4436 = vmatpush2.bf16.msra.mxu0 %v4007
            %4437 = vmatprep.subr.bf16.mxu0 %v4004
            %4438 = vmatpush2.bf16.msra.mxu0 %v4003
            %4439 = vmatprep.subr.bf16.mxu0 %v4000
            %4440 = vmatpush2.bf16.msra.mxu0 %v3999
            %4441 = vmatprep.subr.bf16.mxu0 %v3996
            %4442 = vmatpush2.bf16.msra.mxu0 %v3995
            %4443 = vmatprep.subr.bf16.mxu0 %v3992
            %4444 = vmatpush2.bf16.msra.mxu0 %v3991
            %4445 = vmatprep.subr.bf16.mxu0 %v3988
            %4446 = vmatpush2.bf16.msra.mxu0 %v3987
            %4447 = vmatprep.subr.bf16.mxu0 %v3984
            %4448 = vmatpush2.bf16.msra.mxu0 %v3983
            %4449 = vmatprep.mubr.bf16.mxu0 %v2796
            %4450 = vmatmul.mubr.bf16.gmra.mxu0 %v2795
            %v4451 = vpop.f32.mrf.mxu0
            %v4452 = vadd.f32 %v4411, %v4451
            %v4453 = vpop.f32.mrf.mxu0
            %v4454 = vadd.f32 %v4413, %v4453
            %v4455 = vpop.f32.mrf.mxu0
            %v4456 = vpop.f32.mrf.mxu0
            %4457 = vdwg.mxu0
            %4458 = vmatprep.subr.bf16.mxu0 %v4044
            %4459 = vmatpush1.bf16.msra.mxu0 %v4043
            %4460 = vmatprep.subr.bf16.mxu0 %v4040
            %4461 = vmatpush1.bf16.msra.mxu0 %v4039
            %4462 = vmatprep.subr.bf16.mxu0 %v4036
            %4463 = vmatpush1.bf16.msra.mxu0 %v4035
            %4464 = vmatprep.subr.bf16.mxu0 %v4032
            %4465 = vmatpush1.bf16.msra.mxu0 %v4031
            %4466 = vmatprep.subr.bf16.mxu0 %v4028
            %4467 = vmatpush1.bf16.msra.mxu0 %v4027
            %4468 = vmatprep.subr.bf16.mxu0 %v4024
            %4469 = vmatpush1.bf16.msra.mxu0 %v4023
            %4470 = vmatprep.subr.bf16.mxu0 %v4020
            %4471 = vmatpush1.bf16.msra.mxu0 %v4019
            %4472 = vmatprep.subr.bf16.mxu0 %v4016
            %4473 = vmatpush1.bf16.msra.mxu0 %v4015
            %4474 = vmatprep.subr.bf16.mxu0 %v4076
            %4475 = vmatpush2.bf16.msra.mxu0 %v4075
            %4476 = vmatprep.subr.bf16.mxu0 %v4072
            %4477 = vmatpush2.bf16.msra.mxu0 %v4071
            %4478 = vmatprep.subr.bf16.mxu0 %v4068
            %4479 = vmatpush2.bf16.msra.mxu0 %v4067
            %4480 = vmatprep.subr.bf16.mxu0 %v4064
            %4481 = vmatpush2.bf16.msra.mxu0 %v4063
            %4482 = vmatprep.subr.bf16.mxu0 %v4060
            %4483 = vmatpush2.bf16.msra.mxu0 %v4059
            %4484 = vmatprep.subr.bf16.mxu0 %v4056
            %4485 = vmatpush2.bf16.msra.mxu0 %v4055
            %4486 = vmatprep.subr.bf16.mxu0 %v4052
            %4487 = vmatpush2.bf16.msra.mxu0 %v4051
            %4488 = vmatprep.subr.bf16.mxu0 %v4048
            %4489 = vmatpush2.bf16.msra.mxu0 %v4047
            %4490 = vmatprep.mubr.bf16.mxu0 %v2798
            %4491 = vmatmul.mubr.bf16.gmra.mxu0 %v2797
            %v4492 = vpop.f32.mrf.mxu0
            %v4493 = vadd.f32 %v4452, %v4492
            %v4494 = vpop.f32.mrf.mxu0
            %v4495 = vadd.f32 %v4454, %v4494
            %v4496 = vpop.f32.mrf.mxu0
            %v4497 = vpop.f32.mrf.mxu0
            %4498 = vdwg.mxu0
            %4499 = vmatprep.subr.bf16.mxu0 %v3854
            %4500 = vmatpush1.bf16.msra.mxu0 %v3853
            %4501 = vmatprep.subr.bf16.mxu0 %v3850
            %4502 = vmatpush1.bf16.msra.mxu0 %v3849
            %4503 = vmatprep.subr.bf16.mxu0 %v3846
            %4504 = vmatpush1.bf16.msra.mxu0 %v3845
            %4505 = vmatprep.subr.bf16.mxu0 %v3842
            %4506 = vmatpush1.bf16.msra.mxu0 %v3841
            %4507 = vmatprep.subr.bf16.mxu0 %v3838
            %4508 = vmatpush1.bf16.msra.mxu0 %v3837
            %4509 = vmatprep.subr.bf16.mxu0 %v3834
            %4510 = vmatpush1.bf16.msra.mxu0 %v3833
            %4511 = vmatprep.subr.bf16.mxu0 %v3830
            %4512 = vmatpush1.bf16.msra.mxu0 %v3829
            %4513 = vmatprep.subr.bf16.mxu0 %v3826
            %4514 = vmatpush1.bf16.msra.mxu0 %v3825
            %4515 = vmatprep.subr.bf16.mxu0 %v3886
            %4516 = vmatpush2.bf16.msra.mxu0 %v3885
            %4517 = vmatprep.subr.bf16.mxu0 %v3882
            %4518 = vmatpush2.bf16.msra.mxu0 %v3881
            %4519 = vmatprep.subr.bf16.mxu0 %v3878
            %4520 = vmatpush2.bf16.msra.mxu0 %v3877
            %4521 = vmatprep.subr.bf16.mxu0 %v3874
            %4522 = vmatpush2.bf16.msra.mxu0 %v3873
            %4523 = vmatprep.subr.bf16.mxu0 %v3870
            %4524 = vmatpush2.bf16.msra.mxu0 %v3869
            %4525 = vmatprep.subr.bf16.mxu0 %v3866
            %4526 = vmatpush2.bf16.msra.mxu0 %v3865
            %4527 = vmatprep.subr.bf16.mxu0 %v3862
            %4528 = vmatpush2.bf16.msra.mxu0 %v3861
            %4529 = vmatprep.subr.bf16.mxu0 %v3858
            %4530 = vmatpush2.bf16.msra.mxu0 %v3857
            %4531 = vmatprep.mubr.bf16.mxu0 %v2792
            %4532 = vmatmul.mubr.bf16.gmra.mxu0 %v2791
            %v4533 = vpop.f32.mrf.mxu0
            %v4534 = vadd.f32 0.0, %v4533
            %v4535 = vpop.f32.mrf.mxu0
            %v4536 = vadd.f32 0.0, %v4535
            %v4537 = vpop.f32.mrf.mxu0
            %v4538 = vpop.f32.mrf.mxu0
            %4539 = vdwg.mxu0
            %4540 = vmatprep.subr.bf16.mxu0 %v3918
            %4541 = vmatpush1.bf16.msra.mxu0 %v3917
            %4542 = vmatprep.subr.bf16.mxu0 %v3914
            %4543 = vmatpush1.bf16.msra.mxu0 %v3913
            %4544 = vmatprep.subr.bf16.mxu0 %v3910
            %4545 = vmatpush1.bf16.msra.mxu0 %v3909
            %4546 = vmatprep.subr.bf16.mxu0 %v3906
            %4547 = vmatpush1.bf16.msra.mxu0 %v3905
            %4548 = vmatprep.subr.bf16.mxu0 %v3902
            %4549 = vmatpush1.bf16.msra.mxu0 %v3901
            %4550 = vmatprep.subr.bf16.mxu0 %v3898
            %4551 = vmatpush1.bf16.msra.mxu0 %v3897
            %4552 = vmatprep.subr.bf16.mxu0 %v3894
            %4553 = vmatpush1.bf16.msra.mxu0 %v3893
            %4554 = vmatprep.subr.bf16.mxu0 %v3890
            %4555 = vmatpush1.bf16.msra.mxu0 %v3889
            %4556 = vmatprep.subr.bf16.mxu0 %v3950
            %4557 = vmatpush2.bf16.msra.mxu0 %v3949
            %4558 = vmatprep.subr.bf16.mxu0 %v3946
            %4559 = vmatpush2.bf16.msra.mxu0 %v3945
            %4560 = vmatprep.subr.bf16.mxu0 %v3942
            %4561 = vmatpush2.bf16.msra.mxu0 %v3941
            %4562 = vmatprep.subr.bf16.mxu0 %v3938
            %4563 = vmatpush2.bf16.msra.mxu0 %v3937
            %4564 = vmatprep.subr.bf16.mxu0 %v3934
            %4565 = vmatpush2.bf16.msra.mxu0 %v3933
            %4566 = vmatprep.subr.bf16.mxu0 %v3930
            %4567 = vmatpush2.bf16.msra.mxu0 %v3929
            %4568 = vmatprep.subr.bf16.mxu0 %v3926
            %4569 = vmatpush2.bf16.msra.mxu0 %v3925
            %4570 = vmatprep.subr.bf16.mxu0 %v3922
            %4571 = vmatpush2.bf16.msra.mxu0 %v3921
            %4572 = vmatprep.mubr.bf16.mxu0 %v2794
            %4573 = vmatmul.mubr.bf16.gmra.mxu0 %v2793
            %v4574 = vpop.f32.mrf.mxu0
            %v4575 = vadd.f32 %v4534, %v4574
            %v4576 = vpop.f32.mrf.mxu0
            %v4577 = vadd.f32 %v4536, %v4576
            %v4578 = vpop.f32.mrf.mxu0
            %v4579 = vpop.f32.mrf.mxu0
            %4580 = vdwg.mxu0
            %4581 = vmatprep.subr.bf16.mxu0 %v3982
            %4582 = vmatpush1.bf16.msra.mxu0 %v3981
            %4583 = vmatprep.subr.bf16.mxu0 %v3978
            %4584 = vmatpush1.bf16.msra.mxu0 %v3977
            %4585 = vmatprep.subr.bf16.mxu0 %v3974
            %4586 = vmatpush1.bf16.msra.mxu0 %v3973
            %4587 = vmatprep.subr.bf16.mxu0 %v3970
            %4588 = vmatpush1.bf16.msra.mxu0 %v3969
            %4589 = vmatprep.subr.bf16.mxu0 %v3966
            %4590 = vmatpush1.bf16.msra.mxu0 %v3965
            %4591 = vmatprep.subr.bf16.mxu0 %v3962
            %4592 = vmatpush1.bf16.msra.mxu0 %v3961
            %4593 = vmatprep.subr.bf16.mxu0 %v3958
            %4594 = vmatpush1.bf16.msra.mxu0 %v3957
            %4595 = vmatprep.subr.bf16.mxu0 %v3954
            %4596 = vmatpush1.bf16.msra.mxu0 %v3953
            %4597 = vmatprep.subr.bf16.mxu0 %v4014
            %4598 = vmatpush2.bf16.msra.mxu0 %v4013
            %4599 = vmatprep.subr.bf16.mxu0 %v4010
            %4600 = vmatpush2.bf16.msra.mxu0 %v4009
            %4601 = vmatprep.subr.bf16.mxu0 %v4006
            %4602 = vmatpush2.bf16.msra.mxu0 %v4005
            %4603 = vmatprep.subr.bf16.mxu0 %v4002
            %4604 = vmatpush2.bf16.msra.mxu0 %v4001
            %4605 = vmatprep.subr.bf16.mxu0 %v3998
            %4606 = vmatpush2.bf16.msra.mxu0 %v3997
            %4607 = vmatprep.subr.bf16.mxu0 %v3994
            %4608 = vmatpush2.bf16.msra.mxu0 %v3993
            %4609 = vmatprep.subr.bf16.mxu0 %v3990
            %4610 = vmatpush2.bf16.msra.mxu0 %v3989
            %4611 = vmatprep.subr.bf16.mxu0 %v3986
            %4612 = vmatpush2.bf16.msra.mxu0 %v3985
            %4613 = vmatprep.mubr.bf16.mxu0 %v2796
            %4614 = vmatmul.mubr.bf16.gmra.mxu0 %v2795
            %v4615 = vpop.f32.mrf.mxu0
            %v4616 = vadd.f32 %v4575, %v4615
            %v4617 = vpop.f32.mrf.mxu0
            %v4618 = vadd.f32 %v4577, %v4617
            %v4619 = vpop.f32.mrf.mxu0
            %v4620 = vpop.f32.mrf.mxu0
            %4621 = vdwg.mxu0
            %4622 = vmatprep.subr.bf16.mxu0 %v4046
            %4623 = vmatpush1.bf16.msra.mxu0 %v4045
            %4624 = vmatprep.subr.bf16.mxu0 %v4042
            %4625 = vmatpush1.bf16.msra.mxu0 %v4041
            %4626 = vmatprep.subr.bf16.mxu0 %v4038
            %4627 = vmatpush1.bf16.msra.mxu0 %v4037
            %4628 = vmatprep.subr.bf16.mxu0 %v4034
            %4629 = vmatpush1.bf16.msra.mxu0 %v4033
            %4630 = vmatprep.subr.bf16.mxu0 %v4030
            %4631 = vmatpush1.bf16.msra.mxu0 %v4029
            %4632 = vmatprep.subr.bf16.mxu0 %v4026
            %4633 = vmatpush1.bf16.msra.mxu0 %v4025
            %4634 = vmatprep.subr.bf16.mxu0 %v4022
            %4635 = vmatpush1.bf16.msra.mxu0 %v4021
            %4636 = vmatprep.subr.bf16.mxu0 %v4018
            %4637 = vmatpush1.bf16.msra.mxu0 %v4017
            %4638 = vmatprep.subr.bf16.mxu0 %v4078
            %4639 = vmatpush2.bf16.msra.mxu0 %v4077
            %4640 = vmatprep.subr.bf16.mxu0 %v4074
            %4641 = vmatpush2.bf16.msra.mxu0 %v4073
            %4642 = vmatprep.subr.bf16.mxu0 %v4070
            %4643 = vmatpush2.bf16.msra.mxu0 %v4069
            %4644 = vmatprep.subr.bf16.mxu0 %v4066
            %4645 = vmatpush2.bf16.msra.mxu0 %v4065
            %4646 = vmatprep.subr.bf16.mxu0 %v4062
            %4647 = vmatpush2.bf16.msra.mxu0 %v4061
            %4648 = vmatprep.subr.bf16.mxu0 %v4058
            %4649 = vmatpush2.bf16.msra.mxu0 %v4057
            %4650 = vmatprep.subr.bf16.mxu0 %v4054
            %4651 = vmatpush2.bf16.msra.mxu0 %v4053
            %4652 = vmatprep.subr.bf16.mxu0 %v4050
            %4653 = vmatpush2.bf16.msra.mxu0 %v4049
            %4654 = vmatprep.mubr.bf16.mxu0 %v2798
            %4655 = vmatmul.mubr.bf16.gmra.mxu0 %v2797
            %v4656 = vpop.f32.mrf.mxu0
            %v4657 = vadd.f32 %v4616, %v4656
            %v4658 = vpop.f32.mrf.mxu0
            %v4659 = vadd.f32 %v4618, %v4658
            %v4660 = vpop.f32.mrf.mxu0
            %v4661 = vpop.f32.mrf.mxu0
            %4662 = vdwg.mxu0
            %vm4663 = vcmask 1041408
            %v4664 = vsel %vm4663, %v4493, 0.0
            %v4665 = vrot.slane %v4664, 4
            %v4666 = vadd.f32 %v4664, %v4665
            %v4667 = vrot.slane %v4666, 2
            %v4668 = vadd.f32 %v4666, %v4667
            %v4669 = vrot.slane %v4668, 1
            %v4670 = vadd.f32 %v4668, %v4669
            %v4671 = vsel %vm4663, %v4495, 0.0
            %v4672 = vrot.slane %v4671, 4
            %v4673 = vadd.f32 %v4671, %v4672
            %v4674 = vrot.slane %v4673, 2
            %v4675 = vadd.f32 %v4673, %v4674
            %v4676 = vrot.slane %v4675, 1
            %v4677 = vadd.f32 %v4675, %v4676
            %v4678 = vsel %vm4663, %v4657, 0.0
            %v4679 = vrot.slane %v4678, 4
            %v4680 = vadd.f32 %v4678, %v4679
            %v4681 = vrot.slane %v4680, 2
            %v4682 = vadd.f32 %v4680, %v4681
            %v4683 = vrot.slane %v4682, 1
            %v4684 = vadd.f32 %v4682, %v4683
            %v4685 = vsel %vm4663, %v4659, 0.0
            %v4686 = vrot.slane %v4685, 4
            %v4687 = vadd.f32 %v4685, %v4686
            %v4688 = vrot.slane %v4687, 2
            %v4689 = vadd.f32 %v4687, %v4688
            %v4690 = vrot.slane %v4689, 1
            %v4691 = vadd.f32 %v4689, %v4690
            %v4692 = vrcp.pop 2.0
            %v4693 = vmul.f32 %v4670, %v4692
            %v4694 = vmul.f32 %v4677, %v4692
            %v4695 = vmul.f32 %v4684, %v4692
            %v4696 = vmul.f32 %v4691, %v4692
            %v4697 = vsub.f32 %v4493, %v4693
            %v4698 = vsub.f32 %v4495, %v4694
            %v4699 = vsub.f32 %v4657, %v4695
            %v4700 = vsub.f32 %v4659, %v4696
            %v4701 = vmul.f32 %v4697, %v4697
            %v4702 = vmul.f32 %v4698, %v4698
            %v4703 = vmul.f32 %v4699, %v4699
            %v4704 = vmul.f32 %v4700, %v4700
            %v4705 = vsel %vm4663, %v4701, 0.0
            %v4706 = vrot.slane %v4705, 4
            %v4707 = vadd.f32 %v4705, %v4706
            %v4708 = vrot.slane %v4707, 2
            %v4709 = vadd.f32 %v4707, %v4708
            %v4710 = vrot.slane %v4709, 1
            %v4711 = vadd.f32 %v4709, %v4710
            %v4712 = vsel %vm4663, %v4702, 0.0
            %v4713 = vrot.slane %v4712, 4
            %v4714 = vadd.f32 %v4712, %v4713
            %v4715 = vrot.slane %v4714, 2
            %v4716 = vadd.f32 %v4714, %v4715
            %v4717 = vrot.slane %v4716, 1
            %v4718 = vadd.f32 %v4716, %v4717
            %v4719 = vsel %vm4663, %v4703, 0.0
            %v4720 = vrot.slane %v4719, 4
            %v4721 = vadd.f32 %v4719, %v4720
            %v4722 = vrot.slane %v4721, 2
            %v4723 = vadd.f32 %v4721, %v4722
            %v4724 = vrot.slane %v4723, 1
            %v4725 = vadd.f32 %v4723, %v4724
            %v4726 = vsel %vm4663, %v4704, 0.0
            %v4727 = vrot.slane %v4726, 4
            %v4728 = vadd.f32 %v4726, %v4727
            %v4729 = vrot.slane %v4728, 2
            %v4730 = vadd.f32 %v4728, %v4729
            %v4731 = vrot.slane %v4730, 1
            %v4732 = vadd.f32 %v4730, %v4731
            %v4733 = vmul.f32 %v4711, %v4692
            %v4734 = vmul.f32 %v4718, %v4692
            %v4735 = vmul.f32 %v4725, %v4692
            %v4736 = vmul.f32 %v4732, %v4692
            %v4737 = vld [vmem:[%s11] sm:$0xf]
            %v4739 = vlaneseq
            %v4740 = vshrl.u32 %v4739, 7
            %v4741 = vsub.s32 0, %v4740
            %v4742 = vrot.slane %v4737, %v4741
            %v4743 = vlaneseq
            %v4744 = vshrl.u32 %v4743, 7
            %v4745 = vsub.s32 1, %v4744
            %v4746 = vrot.slane %v4737, %v4745
            %v4747 = vlaneseq
            %v4748 = vshrl.u32 %v4747, 7
            %v4749 = vsub.s32 2, %v4748
            %v4750 = vrot.slane %v4737, %v4749
            %v4751 = vlaneseq
            %v4752 = vshrl.u32 %v4751, 7
            %v4753 = vsub.s32 3, %v4752
            %v4754 = vrot.slane %v4737, %v4753
            %v4759 = vmul.f32 %v4742, %v4697
            %v4760 = vmul.f32 %v4746, %v4698
            %v4761 = vmul.f32 %v4750, %v4699
            %v4762 = vmul.f32 %v4754, %v4700
            %v4763 = vadd.f32 %v4733, 1e-05
            %v4764 = vadd.f32 %v4734, 1e-05
            %v4765 = vadd.f32 %v4735, 1e-05
            %v4766 = vadd.f32 %v4736, 1e-05
            %v4767 = vrsqrt.pop %v4763
            %v4768 = vrsqrt.pop %v4764
            %v4769 = vrsqrt.pop %v4765
            %v4770 = vrsqrt.pop %v4766
            %v4771 = vmul.f32 %v4759, %v4767
            %v4772 = vmul.f32 %v4760, %v4768
            %v4773 = vmul.f32 %v4761, %v4769
            %v4774 = vmul.f32 %v4762, %v4770
            %v4775 = vld [vmem:[%s12] sm:$0xf]
            %v4777 = vlaneseq
            %v4778 = vshrl.u32 %v4777, 7
            %v4779 = vsub.s32 0, %v4778
            %v4780 = vrot.slane %v4775, %v4779
            %v4781 = vlaneseq
            %v4782 = vshrl.u32 %v4781, 7
            %v4783 = vsub.s32 1, %v4782
            %v4784 = vrot.slane %v4775, %v4783
            %v4785 = vlaneseq
            %v4786 = vshrl.u32 %v4785, 7
            %v4787 = vsub.s32 2, %v4786
            %v4788 = vrot.slane %v4775, %v4787
            %v4789 = vlaneseq
            %v4790 = vshrl.u32 %v4789, 7
            %v4791 = vsub.s32 3, %v4790
            %v4792 = vrot.slane %v4775, %v4791
            %v4797 = vadd.f32 %v4771, %v4780
            %v4798 = vadd.f32 %v4772, %v4784
            %v4799 = vadd.f32 %v4773, %v4788
            %v4800 = vadd.f32 %v4774, %v4792
            %v4801 = vmax.f32 %v4797, 0.0
            %v4802 = vmax.f32 %v4798, 0.0
            %v4803 = vmax.f32 %v4799, 0.0
            %v4804 = vmax.f32 %v4800, 0.0
            %v4805 = vpack.c.bf16 %v4801, %v4801
            %v4806 = vpack.c.bf16 %v4802, %v4802
            %v4807 = vpack.c.bf16 %v4803, %v4803
            %v4808 = vpack.c.bf16 %v4804, %v4804
            %v4809 = vld [vmem:[#allocation18] sm:$0xff]
            %v4810 = vld [vmem:[#allocation18 + $0x8] sm:$0xff]
            %v4811 = vld [vmem:[#allocation18 + $0x10] sm:$0xff]
            %v4812 = vld [vmem:[#allocation18 + $0x18] sm:$0xff]
            %v4813 = vld [vmem:[#allocation18 + $0x20] sm:$0xff]
            %v4814 = vld [vmem:[#allocation18 + $0x28] sm:$0xff]
            %v4815 = vld [vmem:[#allocation18 + $0x30] sm:$0xff]
            %v4816 = vld [vmem:[#allocation18 + $0x38] sm:$0xff]
            %v4817 = vld [vmem:[#allocation18 + $0x40] sm:$0xff]
            %v4818 = vld [vmem:[#allocation18 + $0x48] sm:$0xff]
            %v4819 = vld [vmem:[#allocation18 + $0x50] sm:$0xff]
            %v4820 = vld [vmem:[#allocation18 + $0x58] sm:$0xff]
            %v4821 = vld [vmem:[#allocation18 + $0x60] sm:$0xff]
            %v4822 = vld [vmem:[#allocation18 + $0x68] sm:$0xff]
            %v4823 = vld [vmem:[#allocation18 + $0x70] sm:$0xff]
            %v4824 = vld [vmem:[#allocation18 + $0x78] sm:$0xff]
            %v4825 = vld [vmem:[#allocation18 + $0x80] sm:$0xff]
            %v4826 = vld [vmem:[#allocation18 + $0x88] sm:$0xff]
            %v4827 = vld [vmem:[#allocation18 + $0x90] sm:$0xff]
            %v4828 = vld [vmem:[#allocation18 + $0x98] sm:$0xff]
            %v4829 = vld [vmem:[#allocation18 + $0xa0] sm:$0xff]
            %v4830 = vld [vmem:[#allocation18 + $0xa8] sm:$0xff]
            %v4831 = vld [vmem:[#allocation18 + $0xb0] sm:$0xff]
            %v4832 = vld [vmem:[#allocation18 + $0xb8] sm:$0xff]
            %v4833 = vld [vmem:[#allocation18 + $0xc0] sm:$0xff]
            %v4834 = vld [vmem:[#allocation18 + $0xc8] sm:$0xff]
            %v4835 = vld [vmem:[#allocation18 + $0xd0] sm:$0xff]
            %v4836 = vld [vmem:[#allocation18 + $0xd8] sm:$0xff]
            %v4837 = vld [vmem:[#allocation18 + $0xe0] sm:$0xff]
            %v4838 = vld [vmem:[#allocation18 + $0xe8] sm:$0xff]
            %v4839 = vld [vmem:[#allocation18 + $0xf0] sm:$0xff]
            %v4840 = vld [vmem:[#allocation18 + $0xf8] sm:$0xff]
            %v4841 = vld [vmem:[#allocation18 + $0x100] sm:$0xff]
            %v4842 = vld [vmem:[#allocation18 + $0x108] sm:$0xff]
            %v4843 = vld [vmem:[#allocation18 + $0x110] sm:$0xff]
            %v4844 = vld [vmem:[#allocation18 + $0x118] sm:$0xff]
            %v4845 = vld [vmem:[#allocation18 + $0x120] sm:$0xff]
            %v4846 = vld [vmem:[#allocation18 + $0x128] sm:$0xff]
            %v4847 = vld [vmem:[#allocation18 + $0x130] sm:$0xff]
            %v4848 = vld [vmem:[#allocation18 + $0x138] sm:$0xff]
            %v4849 = vld [vmem:[#allocation18 + $0x140] sm:$0xff]
            %v4850 = vld [vmem:[#allocation18 + $0x148] sm:$0xff]
            %v4851 = vld [vmem:[#allocation18 + $0x150] sm:$0xff]
            %v4852 = vld [vmem:[#allocation18 + $0x158] sm:$0xff]
            %v4853 = vld [vmem:[#allocation18 + $0x160] sm:$0xff]
            %v4854 = vld [vmem:[#allocation18 + $0x168] sm:$0xff]
            %v4855 = vld [vmem:[#allocation18 + $0x170] sm:$0xff]
            %v4856 = vld [vmem:[#allocation18 + $0x178] sm:$0xff]
            %v4857 = vld [vmem:[#allocation18 + $0x180] sm:$0xff]
            %v4858 = vld [vmem:[#allocation18 + $0x188] sm:$0xff]
            %v4859 = vld [vmem:[#allocation18 + $0x190] sm:$0xff]
            %v4860 = vld [vmem:[#allocation18 + $0x198] sm:$0xff]
            %v4861 = vld [vmem:[#allocation18 + $0x1a0] sm:$0xff]
            %v4862 = vld [vmem:[#allocation18 + $0x1a8] sm:$0xff]
            %v4863 = vld [vmem:[#allocation18 + $0x1b0] sm:$0xff]
            %v4864 = vld [vmem:[#allocation18 + $0x1b8] sm:$0xff]
            %v4865 = vld [vmem:[#allocation18 + $0x1c0] sm:$0xff]
            %v4866 = vld [vmem:[#allocation18 + $0x1c8] sm:$0xff]
            %v4867 = vld [vmem:[#allocation18 + $0x1d0] sm:$0xff]
            %v4868 = vld [vmem:[#allocation18 + $0x1d8] sm:$0xff]
            %v4869 = vld [vmem:[#allocation18 + $0x1e0] sm:$0xff]
            %v4870 = vld [vmem:[#allocation18 + $0x1e8] sm:$0xff]
            %v4871 = vld [vmem:[#allocation18 + $0x1f0] sm:$0xff]
            %v4872 = vld [vmem:[#allocation18 + $0x1f8] sm:$0xff]
            %v4937 = vunpack.c.l.b16 %v4809
            %v4938 = vunpack.c.h.b16 %v4809
            %v4939 = vunpack.c.l.b16 %v4810
            %v4940 = vunpack.c.h.b16 %v4810
            %v4941 = vunpack.c.l.b16 %v4811
            %v4942 = vunpack.c.h.b16 %v4811
            %v4943 = vunpack.c.l.b16 %v4812
            %v4944 = vunpack.c.h.b16 %v4812
            %v4945 = vunpack.c.l.b16 %v4813
            %v4946 = vunpack.c.h.b16 %v4813
            %v4947 = vunpack.c.l.b16 %v4814
            %v4948 = vunpack.c.h.b16 %v4814
            %v4949 = vunpack.c.l.b16 %v4815
            %v4950 = vunpack.c.h.b16 %v4815
            %v4951 = vunpack.c.l.b16 %v4816
            %v4952 = vunpack.c.h.b16 %v4816
            %v4953 = vunpack.c.l.b16 %v4817
            %v4954 = vunpack.c.h.b16 %v4817
            %v4955 = vunpack.c.l.b16 %v4818
            %v4956 = vunpack.c.h.b16 %v4818
            %v4957 = vunpack.c.l.b16 %v4819
            %v4958 = vunpack.c.h.b16 %v4819
            %v4959 = vunpack.c.l.b16 %v4820
            %v4960 = vunpack.c.h.b16 %v4820
            %v4961 = vunpack.c.l.b16 %v4821
            %v4962 = vunpack.c.h.b16 %v4821
            %v4963 = vunpack.c.l.b16 %v4822
            %v4964 = vunpack.c.h.b16 %v4822
            %v4965 = vunpack.c.l.b16 %v4823
            %v4966 = vunpack.c.h.b16 %v4823
            %v4967 = vunpack.c.l.b16 %v4824
            %v4968 = vunpack.c.h.b16 %v4824
            %v4969 = vunpack.c.l.b16 %v4825
            %v4970 = vunpack.c.h.b16 %v4825
            %v4971 = vunpack.c.l.b16 %v4826
            %v4972 = vunpack.c.h.b16 %v4826
            %v4973 = vunpack.c.l.b16 %v4827
            %v4974 = vunpack.c.h.b16 %v4827
            %v4975 = vunpack.c.l.b16 %v4828
            %v4976 = vunpack.c.h.b16 %v4828
            %v4977 = vunpack.c.l.b16 %v4829
            %v4978 = vunpack.c.h.b16 %v4829
            %v4979 = vunpack.c.l.b16 %v4830
            %v4980 = vunpack.c.h.b16 %v4830
            %v4981 = vunpack.c.l.b16 %v4831
            %v4982 = vunpack.c.h.b16 %v4831
            %v4983 = vunpack.c.l.b16 %v4832
            %v4984 = vunpack.c.h.b16 %v4832
            %v4985 = vunpack.c.l.b16 %v4833
            %v4986 = vunpack.c.h.b16 %v4833
            %v4987 = vunpack.c.l.b16 %v4834
            %v4988 = vunpack.c.h.b16 %v4834
            %v4989 = vunpack.c.l.b16 %v4835
            %v4990 = vunpack.c.h.b16 %v4835
            %v4991 = vunpack.c.l.b16 %v4836
            %v4992 = vunpack.c.h.b16 %v4836
            %v4993 = vunpack.c.l.b16 %v4837
            %v4994 = vunpack.c.h.b16 %v4837
            %v4995 = vunpack.c.l.b16 %v4838
            %v4996 = vunpack.c.h.b16 %v4838
            %v4997 = vunpack.c.l.b16 %v4839
            %v4998 = vunpack.c.h.b16 %v4839
            %v4999 = vunpack.c.l.b16 %v4840
            %v5000 = vunpack.c.h.b16 %v4840
            %v5001 = vunpack.c.l.b16 %v4841
            %v5002 = vunpack.c.h.b16 %v4841
            %v5003 = vunpack.c.l.b16 %v4842
            %v5004 = vunpack.c.h.b16 %v4842
            %v5005 = vunpack.c.l.b16 %v4843
            %v5006 = vunpack.c.h.b16 %v4843
            %v5007 = vunpack.c.l.b16 %v4844
            %v5008 = vunpack.c.h.b16 %v4844
            %v5009 = vunpack.c.l.b16 %v4845
            %v5010 = vunpack.c.h.b16 %v4845
            %v5011 = vunpack.c.l.b16 %v4846
            %v5012 = vunpack.c.h.b16 %v4846
            %v5013 = vunpack.c.l.b16 %v4847
            %v5014 = vunpack.c.h.b16 %v4847
            %v5015 = vunpack.c.l.b16 %v4848
            %v5016 = vunpack.c.h.b16 %v4848
            %v5017 = vunpack.c.l.b16 %v4849
            %v5018 = vunpack.c.h.b16 %v4849
            %v5019 = vunpack.c.l.b16 %v4850
            %v5020 = vunpack.c.h.b16 %v4850
            %v5021 = vunpack.c.l.b16 %v4851
            %v5022 = vunpack.c.h.b16 %v4851
            %v5023 = vunpack.c.l.b16 %v4852
            %v5024 = vunpack.c.h.b16 %v4852
            %v5025 = vunpack.c.l.b16 %v4853
            %v5026 = vunpack.c.h.b16 %v4853
            %v5027 = vunpack.c.l.b16 %v4854
            %v5028 = vunpack.c.h.b16 %v4854
            %v5029 = vunpack.c.l.b16 %v4855
            %v5030 = vunpack.c.h.b16 %v4855
            %v5031 = vunpack.c.l.b16 %v4856
            %v5032 = vunpack.c.h.b16 %v4856
            %v5033 = vunpack.c.l.b16 %v4857
            %v5034 = vunpack.c.h.b16 %v4857
            %v5035 = vunpack.c.l.b16 %v4858
            %v5036 = vunpack.c.h.b16 %v4858
            %v5037 = vunpack.c.l.b16 %v4859
            %v5038 = vunpack.c.h.b16 %v4859
            %v5039 = vunpack.c.l.b16 %v4860
            %v5040 = vunpack.c.h.b16 %v4860
            %v5041 = vunpack.c.l.b16 %v4861
            %v5042 = vunpack.c.h.b16 %v4861
            %v5043 = vunpack.c.l.b16 %v4862
            %v5044 = vunpack.c.h.b16 %v4862
            %v5045 = vunpack.c.l.b16 %v4863
            %v5046 = vunpack.c.h.b16 %v4863
            %v5047 = vunpack.c.l.b16 %v4864
            %v5048 = vunpack.c.h.b16 %v4864
            %v5049 = vunpack.c.l.b16 %v4865
            %v5050 = vunpack.c.h.b16 %v4865
            %v5051 = vunpack.c.l.b16 %v4866
            %v5052 = vunpack.c.h.b16 %v4866
            %v5053 = vunpack.c.l.b16 %v4867
            %v5054 = vunpack.c.h.b16 %v4867
            %v5055 = vunpack.c.l.b16 %v4868
            %v5056 = vunpack.c.h.b16 %v4868
            %v5057 = vunpack.c.l.b16 %v4869
            %v5058 = vunpack.c.h.b16 %v4869
            %v5059 = vunpack.c.l.b16 %v4870
            %v5060 = vunpack.c.h.b16 %v4870
            %v5061 = vunpack.c.l.b16 %v4871
            %v5062 = vunpack.c.h.b16 %v4871
            %v5063 = vunpack.c.l.b16 %v4872
            %v5064 = vunpack.c.h.b16 %v4872
            %v5065 = vpack.c.b16 %v4939, %v4937
            %v5066 = vpack.c.b16 %v4940, %v4938
            %v5067 = vpack.c.b16 %v4943, %v4941
            %v5068 = vpack.c.b16 %v4944, %v4942
            %v5069 = vpack.c.b16 %v4947, %v4945
            %v5070 = vpack.c.b16 %v4948, %v4946
            %v5071 = vpack.c.b16 %v4951, %v4949
            %v5072 = vpack.c.b16 %v4952, %v4950
            %v5073 = vpack.c.b16 %v4955, %v4953
            %v5074 = vpack.c.b16 %v4956, %v4954
            %v5075 = vpack.c.b16 %v4959, %v4957
            %v5076 = vpack.c.b16 %v4960, %v4958
            %v5077 = vpack.c.b16 %v4963, %v4961
            %v5078 = vpack.c.b16 %v4964, %v4962
            %v5079 = vpack.c.b16 %v4967, %v4965
            %v5080 = vpack.c.b16 %v4968, %v4966
            %v5081 = vpack.c.b16 %v4971, %v4969
            %v5082 = vpack.c.b16 %v4972, %v4970
            %v5083 = vpack.c.b16 %v4975, %v4973
            %v5084 = vpack.c.b16 %v4976, %v4974
            %v5085 = vpack.c.b16 %v4979, %v4977
            %v5086 = vpack.c.b16 %v4980, %v4978
            %v5087 = vpack.c.b16 %v4983, %v4981
            %v5088 = vpack.c.b16 %v4984, %v4982
            %v5089 = vpack.c.b16 %v4987, %v4985
            %v5090 = vpack.c.b16 %v4988, %v4986
            %v5091 = vpack.c.b16 %v4991, %v4989
            %v5092 = vpack.c.b16 %v4992, %v4990
            %v5093 = vpack.c.b16 %v4995, %v4993
            %v5094 = vpack.c.b16 %v4996, %v4994
            %v5095 = vpack.c.b16 %v4999, %v4997
            %v5096 = vpack.c.b16 %v5000, %v4998
            %v5097 = vpack.c.b16 %v5003, %v5001
            %v5098 = vpack.c.b16 %v5004, %v5002
            %v5099 = vpack.c.b16 %v5007, %v5005
            %v5100 = vpack.c.b16 %v5008, %v5006
            %v5101 = vpack.c.b16 %v5011, %v5009
            %v5102 = vpack.c.b16 %v5012, %v5010
            %v5103 = vpack.c.b16 %v5015, %v5013
            %v5104 = vpack.c.b16 %v5016, %v5014
            %v5105 = vpack.c.b16 %v5019, %v5017
            %v5106 = vpack.c.b16 %v5020, %v5018
            %v5107 = vpack.c.b16 %v5023, %v5021
            %v5108 = vpack.c.b16 %v5024, %v5022
            %v5109 = vpack.c.b16 %v5027, %v5025
            %v5110 = vpack.c.b16 %v5028, %v5026
            %v5111 = vpack.c.b16 %v5031, %v5029
            %v5112 = vpack.c.b16 %v5032, %v5030
            %v5113 = vpack.c.b16 %v5035, %v5033
            %v5114 = vpack.c.b16 %v5036, %v5034
            %v5115 = vpack.c.b16 %v5039, %v5037
            %v5116 = vpack.c.b16 %v5040, %v5038
            %v5117 = vpack.c.b16 %v5043, %v5041
            %v5118 = vpack.c.b16 %v5044, %v5042
            %v5119 = vpack.c.b16 %v5047, %v5045
            %v5120 = vpack.c.b16 %v5048, %v5046
            %v5121 = vpack.c.b16 %v5051, %v5049
            %v5122 = vpack.c.b16 %v5052, %v5050
            %v5123 = vpack.c.b16 %v5055, %v5053
            %v5124 = vpack.c.b16 %v5056, %v5054
            %v5125 = vpack.c.b16 %v5059, %v5057
            %v5126 = vpack.c.b16 %v5060, %v5058
            %v5127 = vpack.c.b16 %v5063, %v5061
            %v5128 = vpack.c.b16 %v5064, %v5062
            %5193 = vmatprep.subr.bf16.mxu0 %v5080
            %5194 = vmatpush1.bf16.msra.mxu0 %v5079
            %5195 = vmatprep.subr.bf16.mxu0 %v5078
            %5196 = vmatpush1.bf16.msra.mxu0 %v5077
            %5197 = vmatprep.subr.bf16.mxu0 %v5076
            %5198 = vmatpush1.bf16.msra.mxu0 %v5075
            %5199 = vmatprep.subr.bf16.mxu0 %v5074
            %5200 = vmatpush1.bf16.msra.mxu0 %v5073
            %5201 = vmatprep.subr.bf16.mxu0 %v5072
            %5202 = vmatpush1.bf16.msra.mxu0 %v5071
            %5203 = vmatprep.subr.bf16.mxu0 %v5070
            %5204 = vmatpush1.bf16.msra.mxu0 %v5069
            %5205 = vmatprep.subr.bf16.mxu0 %v5068
            %5206 = vmatpush1.bf16.msra.mxu0 %v5067
            %5207 = vmatprep.subr.bf16.mxu0 %v5066
            %5208 = vmatpush1.bf16.msra.mxu0 %v5065
            %5209 = vmatprep.subr.bf16.mxu0 %v5096
            %5210 = vmatpush2.bf16.msra.mxu0 %v5095
            %5211 = vmatprep.subr.bf16.mxu0 %v5094
            %5212 = vmatpush2.bf16.msra.mxu0 %v5093
            %5213 = vmatprep.subr.bf16.mxu0 %v5092
            %5214 = vmatpush2.bf16.msra.mxu0 %v5091
            %5215 = vmatprep.subr.bf16.mxu0 %v5090
            %5216 = vmatpush2.bf16.msra.mxu0 %v5089
            %5217 = vmatprep.subr.bf16.mxu0 %v5088
            %5218 = vmatpush2.bf16.msra.mxu0 %v5087
            %5219 = vmatprep.subr.bf16.mxu0 %v5086
            %5220 = vmatpush2.bf16.msra.mxu0 %v5085
            %5221 = vmatprep.subr.bf16.mxu0 %v5084
            %5222 = vmatpush2.bf16.msra.mxu0 %v5083
            %5223 = vmatprep.subr.bf16.mxu0 %v5082
            %5224 = vmatpush2.bf16.msra.mxu0 %v5081
            %5225 = vmatprep.mubr.bf16.mxu0 %v4806
            %5226 = vmatmul.mubr.bf16.gmra.mxu0 %v4805
            %v5227 = vpop.f32.mrf.mxu0
            %v5228 = vadd.f32 0.0, %v5227
            %v5229 = vpop.f32.mrf.mxu0
            %v5230 = vadd.f32 0.0, %v5229
            %v5231 = vpop.f32.mrf.mxu0
            %v5232 = vpop.f32.mrf.mxu0
            %5233 = vdwg.mxu0
            %5234 = vmatprep.subr.bf16.mxu0 %v5112
            %5235 = vmatpush1.bf16.msra.mxu0 %v5111
            %5236 = vmatprep.subr.bf16.mxu0 %v5110
            %5237 = vmatpush1.bf16.msra.mxu0 %v5109
            %5238 = vmatprep.subr.bf16.mxu0 %v5108
            %5239 = vmatpush1.bf16.msra.mxu0 %v5107
            %5240 = vmatprep.subr.bf16.mxu0 %v5106
            %5241 = vmatpush1.bf16.msra.mxu0 %v5105
            %5242 = vmatprep.subr.bf16.mxu0 %v5104
            %5243 = vmatpush1.bf16.msra.mxu0 %v5103
            %5244 = vmatprep.subr.bf16.mxu0 %v5102
            %5245 = vmatpush1.bf16.msra.mxu0 %v5101
            %5246 = vmatprep.subr.bf16.mxu0 %v5100
            %5247 = vmatpush1.bf16.msra.mxu0 %v5099
            %5248 = vmatprep.subr.bf16.mxu0 %v5098
            %5249 = vmatpush1.bf16.msra.mxu0 %v5097
            %5250 = vmatprep.subr.bf16.mxu0 %v5128
            %5251 = vmatpush2.bf16.msra.mxu0 %v5127
            %5252 = vmatprep.subr.bf16.mxu0 %v5126
            %5253 = vmatpush2.bf16.msra.mxu0 %v5125
            %5254 = vmatprep.subr.bf16.mxu0 %v5124
            %5255 = vmatpush2.bf16.msra.mxu0 %v5123
            %5256 = vmatprep.subr.bf16.mxu0 %v5122
            %5257 = vmatpush2.bf16.msra.mxu0 %v5121
            %5258 = vmatprep.subr.bf16.mxu0 %v5120
            %5259 = vmatpush2.bf16.msra.mxu0 %v5119
            %5260 = vmatprep.subr.bf16.mxu0 %v5118
            %5261 = vmatpush2.bf16.msra.mxu0 %v5117
            %5262 = vmatprep.subr.bf16.mxu0 %v5116
            %5263 = vmatpush2.bf16.msra.mxu0 %v5115
            %5264 = vmatprep.subr.bf16.mxu0 %v5114
            %5265 = vmatpush2.bf16.msra.mxu0 %v5113
            %5266 = vmatprep.mubr.bf16.mxu0 %v4808
            %5267 = vmatmul.mubr.bf16.gmra.mxu0 %v4807
            %v5268 = vpop.f32.mrf.mxu0
            %v5269 = vadd.f32 %v5228, %v5268
            %v5270 = vpop.f32.mrf.mxu0
            %v5271 = vadd.f32 %v5230, %v5270
            %v5272 = vpop.f32.mrf.mxu0
            %v5273 = vpop.f32.mrf.mxu0
            %5274 = vdwg.mxu0
            %v5275 = vsel %vm4663, %v5269, 0.0
            %v5276 = vrot.slane %v5275, 4
            %v5277 = vadd.f32 %v5275, %v5276
            %v5278 = vrot.slane %v5277, 2
            %v5279 = vadd.f32 %v5277, %v5278
            %v5280 = vrot.slane %v5279, 1
            %v5281 = vadd.f32 %v5279, %v5280
            %v5282 = vsel %vm4663, %v5271, 0.0
            %v5283 = vrot.slane %v5282, 4
            %v5284 = vadd.f32 %v5282, %v5283
            %v5285 = vrot.slane %v5284, 2
            %v5286 = vadd.f32 %v5284, %v5285
            %v5287 = vrot.slane %v5286, 1
            %v5288 = vadd.f32 %v5286, %v5287
            %v5289 = vmul.f32 %v5281, %v4692
            %v5290 = vmul.f32 %v5288, %v4692
            %v5291 = vsub.f32 %v5269, %v5289
            %v5292 = vsub.f32 %v5271, %v5290
            %v5293 = vmul.f32 %v5291, %v5291
            %v5294 = vmul.f32 %v5292, %v5292
            %v5295 = vsel %vm4663, %v5293, 0.0
            %v5296 = vrot.slane %v5295, 4
            %v5297 = vadd.f32 %v5295, %v5296
            %v5298 = vrot.slane %v5297, 2
            %v5299 = vadd.f32 %v5297, %v5298
            %v5300 = vrot.slane %v5299, 1
            %v5301 = vadd.f32 %v5299, %v5300
            %v5302 = vsel %vm4663, %v5294, 0.0
            %v5303 = vrot.slane %v5302, 4
            %v5304 = vadd.f32 %v5302, %v5303
            %v5305 = vrot.slane %v5304, 2
            %v5306 = vadd.f32 %v5304, %v5305
            %v5307 = vrot.slane %v5306, 1
            %v5308 = vadd.f32 %v5306, %v5307
            %v5309 = vmul.f32 %v5301, %v4692
            %v5310 = vmul.f32 %v5308, %v4692
            %v5311 = vld [vmem:[%s14] sm:$0x3]
            %v5313 = vlaneseq
            %v5314 = vshrl.u32 %v5313, 7
            %v5315 = vsub.s32 0, %v5314
            %v5316 = vrot.slane %v5311, %v5315
            %v5317 = vlaneseq
            %v5318 = vshrl.u32 %v5317, 7
            %v5319 = vsub.s32 1, %v5318
            %v5320 = vrot.slane %v5311, %v5319
            %v5323 = vmul.f32 %v5316, %v5291
            %v5324 = vmul.f32 %v5320, %v5292
            %v5325 = vadd.f32 %v5309, 1e-05
            %v5326 = vadd.f32 %v5310, 1e-05
            %v5327 = vrsqrt.pop %v5325
            %v5328 = vrsqrt.pop %v5326
            %v5329 = vmul.f32 %v5323, %v5327
            %v5330 = vmul.f32 %v5324, %v5328
            %v5331 = vld [vmem:[%s15] sm:$0x3]
            %v5333 = vlaneseq
            %v5334 = vshrl.u32 %v5333, 7
            %v5335 = vsub.s32 0, %v5334
            %v5336 = vrot.slane %v5331, %v5335
            %v5337 = vlaneseq
            %v5338 = vshrl.u32 %v5337, 7
            %v5339 = vsub.s32 1, %v5338
            %v5340 = vrot.slane %v5331, %v5339
            %v5343 = vadd.f32 %v5329, %v5336
            %v5344 = vadd.f32 %v5330, %v5340
            %v5345 = vmax.f32 %v5343, 0.0
            %v5346 = vmax.f32 %v5344, 0.0
            %v5347 = vld [vmem:[%s16] sm:$0xff]
            %v5348 = vld [vmem:[%s16 + $0x8] sm:$0xff]
            %v5349 = vld [vmem:[%s16 + $0x10] sm:$0xff]
            %v5350 = vld [vmem:[%s16 + $0x18] sm:$0xff]
            %v5351 = vld [vmem:[%s16 + $0x20] sm:$0xff]
            %v5352 = vld [vmem:[%s16 + $0x28] sm:$0xff]
            %v5353 = vld [vmem:[%s16 + $0x30] sm:$0xff]
            %v5354 = vld [vmem:[%s16 + $0x38] sm:$0xff]
            %v5355 = vld [vmem:[%s16 + $0x40] sm:$0xff]
            %v5356 = vld [vmem:[%s16 + $0x48] sm:$0xff]
            %v5357 = vld [vmem:[%s16 + $0x50] sm:$0xff]
            %v5358 = vld [vmem:[%s16 + $0x58] sm:$0xff]
            %v5359 = vld [vmem:[%s16 + $0x60] sm:$0xff]
            %v5360 = vld [vmem:[%s16 + $0x68] sm:$0xff]
            %v5361 = vld [vmem:[%s16 + $0x70] sm:$0xff]
            %v5362 = vld [vmem:[%s16 + $0x78] sm:$0xff]
            %v5363 = vld [vmem:[%s16 + $0x80] sm:$0xff]
            %v5364 = vld [vmem:[%s16 + $0x88] sm:$0xff]
            %v5365 = vld [vmem:[%s16 + $0x90] sm:$0xff]
            %v5366 = vld [vmem:[%s16 + $0x98] sm:$0xff]
            %v5367 = vld [vmem:[%s16 + $0xa0] sm:$0xff]
            %v5368 = vld [vmem:[%s16 + $0xa8] sm:$0xff]
            %v5369 = vld [vmem:[%s16 + $0xb0] sm:$0xff]
            %v5370 = vld [vmem:[%s16 + $0xb8] sm:$0xff]
            %v5371 = vld [vmem:[%s16 + $0xc0] sm:$0xff]
            %v5372 = vld [vmem:[%s16 + $0xc8] sm:$0xff]
            %v5373 = vld [vmem:[%s16 + $0xd0] sm:$0xff]
            %v5374 = vld [vmem:[%s16 + $0xd8] sm:$0xff]
            %v5375 = vld [vmem:[%s16 + $0xe0] sm:$0xff]
            %v5376 = vld [vmem:[%s16 + $0xe8] sm:$0xff]
            %v5377 = vld [vmem:[%s16 + $0xf0] sm:$0xff]
            %v5378 = vld [vmem:[%s16 + $0xf8] sm:$0xff]
            %v5379 = vld [vmem:[%s17] sm:$0x1]
            %v5381 = vlaneseq
            %v5382 = vshrl.u32 %v5381, 7
            %v5383 = vsub.s32 0, %v5382
            %v5384 = vrot.slane %v5379, %v5383
            %5386 = vmatprep.subr.mxu0 0.0
            %5387 = vmatpush1.msra.mxu0 %v5362
            %5388 = vmatprep.subr.mxu0 0.0
            %5389 = vmatpush1.msra.mxu0 %v5361
            %5390 = vmatprep.subr.mxu0 0.0
            %5391 = vmatpush1.msra.mxu0 %v5360
            %5392 = vmatprep.subr.mxu0 0.0
            %5393 = vmatpush1.msra.mxu0 %v5359
            %5394 = vmatprep.subr.mxu0 0.0
            %5395 = vmatpush1.msra.mxu0 %v5358
            %5396 = vmatprep.subr.mxu0 0.0
            %5397 = vmatpush1.msra.mxu0 %v5357
            %5398 = vmatprep.subr.mxu0 0.0
            %5399 = vmatpush1.msra.mxu0 %v5356
            %5400 = vmatprep.subr.mxu0 0.0
            %5401 = vmatpush1.msra.mxu0 %v5355
            %5402 = vmatprep.subr.mxu0 0.0
            %5403 = vmatpush1.msra.mxu0 %v5354
            %5404 = vmatprep.subr.mxu0 0.0
            %5405 = vmatpush1.msra.mxu0 %v5353
            %5406 = vmatprep.subr.mxu0 0.0
            %5407 = vmatpush1.msra.mxu0 %v5352
            %5408 = vmatprep.subr.mxu0 0.0
            %5409 = vmatpush1.msra.mxu0 %v5351
            %5410 = vmatprep.subr.mxu0 0.0
            %5411 = vmatpush1.msra.mxu0 %v5350
            %5412 = vmatprep.subr.mxu0 0.0
            %5413 = vmatpush1.msra.mxu0 %v5349
            %5414 = vmatprep.subr.mxu0 0.0
            %5415 = vmatpush1.msra.mxu0 %v5348
            %5416 = vmatprep.subr.mxu0 0.0
            %5417 = vmatpush1.msra.mxu0 %v5347
            %5418 = vmatprep.subr.mxu0 0.0
            %5419 = vmatpush2.msra.mxu0 %v5378
            %5420 = vmatprep.subr.mxu0 0.0
            %5421 = vmatpush2.msra.mxu0 %v5377
            %5422 = vmatprep.subr.mxu0 0.0
            %5423 = vmatpush2.msra.mxu0 %v5376
            %5424 = vmatprep.subr.mxu0 0.0
            %5425 = vmatpush2.msra.mxu0 %v5375
            %5426 = vmatprep.subr.mxu0 0.0
            %5427 = vmatpush2.msra.mxu0 %v5374
            %5428 = vmatprep.subr.mxu0 0.0
            %5429 = vmatpush2.msra.mxu0 %v5373
            %5430 = vmatprep.subr.mxu0 0.0
            %5431 = vmatpush2.msra.mxu0 %v5372
            %5432 = vmatprep.subr.mxu0 0.0
            %5433 = vmatpush2.msra.mxu0 %v5371
            %5434 = vmatprep.subr.mxu0 0.0
            %5435 = vmatpush2.msra.mxu0 %v5370
            %5436 = vmatprep.subr.mxu0 0.0
            %5437 = vmatpush2.msra.mxu0 %v5369
            %5438 = vmatprep.subr.mxu0 0.0
            %5439 = vmatpush2.msra.mxu0 %v5368
            %5440 = vmatprep.subr.mxu0 0.0
            %5441 = vmatpush2.msra.mxu0 %v5367
            %5442 = vmatprep.subr.mxu0 0.0
            %5443 = vmatpush2.msra.mxu0 %v5366
            %5444 = vmatprep.subr.mxu0 0.0
            %5445 = vmatpush2.msra.mxu0 %v5365
            %5446 = vmatprep.subr.mxu0 0.0
            %5447 = vmatpush2.msra.mxu0 %v5364
            %5448 = vmatprep.subr.mxu0 0.0
            %5449 = vmatpush2.msra.mxu0 %v5363
            %5450 = vmatprep.mubr.f32.mxu0 %v5346
            %5451 = vmatmul.mubr.f32.gmra.mxu0 %v5345
            %v5452 = vpop.f32.mrf.mxu0
            %v5453 = vadd.f32 %v5384, %v5452
            %v5454 = vpop.f32.mrf.mxu0
            %5455 = vdwg.mxu0
            %vm5456 = vcmask 66560
            %5457 = vst.msk [vmem:[#allocation22] sm:$0x3] %vm5456, %v5453
            %v5458 = vld [vmem:[%s18] sm:$0x7]
            %5460 = vset.pattern.permute.xlu0 0
            %5461 = vperm.xlu0 %5460, %v5453
            %v5462 = vpop.permute.xlu0 %5461
            %v5464 = vlaneseq
            %v5465 = vshrl.u32 %v5464, 7
            %v5466 = vsub.s32 0, %v5465
            %v5467 = vrot.slane %v5458, %v5466
            %v5468 = vmul.f32 %v5462, %v5467
            %5469 = vset.pattern.permute.xlu0 1
            %5470 = vperm.xlu0 %5469, %v5453
            %v5471 = vpop.permute.xlu0 %5470
            %v5473 = vlaneseq
            %v5474 = vshrl.u32 %v5473, 7
            %v5475 = vsub.s32 1, %v5474
            %v5476 = vrot.slane %v5458, %v5475
            %v5477 = vmul.f32 %v5471, %v5476
            %v5478 = vadd.f32 %v5468, %v5477
            %5479 = vset.pattern.permute.xlu0 2
            %5480 = vperm.xlu0 %5479, %v5453
            %v5481 = vpop.permute.xlu0 %5480
            %v5483 = vlaneseq
            %v5484 = vshrl.u32 %v5483, 7
            %v5485 = vsub.s32 2, %v5484
            %v5486 = vrot.slane %v5458, %v5485
            %v5487 = vmul.f32 %v5481, %v5486
            %v5488 = vadd.f32 %v5478, %v5487
            %v5491 = vunpack.c.l.s4 1966171168
            %v5492 = vunpack.c.0.s8 %v5491
            %v5493 = vlaneseq
            %v5494 = vshrl.u32 %v5493, 7
            %v5495 = vsub.s32 %v5492, %v5494
            %v5496 = vrot.slane %v5488, %v5495
            %v5497 = vcombine.high %v5496, %v5496
            %v5499 = vunpack.c.l.s4 1966171168
            %v5500 = vunpack.c.0.s8 %v5499
            %v5501 = vlaneseq
            %v5502 = vshrl.u32 %v5501, 7
            %v5503 = vsub.s32 %v5500, %v5502
            %v5504 = vrot.slane %v5496, %v5503
            %v5506 = vunpack.c.l.s4 1966171168
            %v5507 = vunpack.c.0.s8 %v5506
            %v5508 = vlaneseq
            %v5509 = vshrl.u32 %v5508, 7
            %v5510 = vsub.s32 %v5507, %v5509
            %v5511 = vrot.slane %v5497, %v5510
            %vm5514 = vcmask 516096
            %5515 = vst.msk [vmem:[#allocation12] sm:$0x1] %vm5514, %v5504
            %5516 = vst.msk [vmem:[#allocation12 + $0x4] sm:$0x1] %vm5514, %v5511
            %5517 = vset.pattern.permute.xlu0 3
            %5518 = vperm.xlu0 %5517, %v5453
            %v5519 = vpop.permute.xlu0 %5518
            %v5521 = vmul.f32 %v5519, %v5467
            %5522 = vset.pattern.permute.xlu0 4
            %5523 = vperm.xlu0 %5522, %v5453
            %v5524 = vpop.permute.xlu0 %5523
            %v5526 = vmul.f32 %v5524, %v5476
            %v5527 = vadd.f32 %v5521, %v5526
            %5528 = vset.pattern.permute.xlu0 5
            %5529 = vperm.xlu0 %5528, %v5453
            %v5530 = vpop.permute.xlu0 %5529
            %v5532 = vmul.f32 %v5530, %v5486
            %v5533 = vadd.f32 %v5527, %v5532
            %v5536 = vunpack.c.l.s4 1966171168
            %v5537 = vunpack.c.0.s8 %v5536
            %v5538 = vlaneseq
            %v5539 = vshrl.u32 %v5538, 7
            %v5540 = vsub.s32 %v5537, %v5539
            %v5541 = vrot.slane %v5533, %v5540
            %v5542 = vcombine.high %v5541, %v5541
            %v5544 = vunpack.c.l.s4 1966171168
            %v5545 = vunpack.c.0.s8 %v5544
            %v5546 = vlaneseq
            %v5547 = vshrl.u32 %v5546, 7
            %v5548 = vsub.s32 %v5545, %v5547
            %v5549 = vrot.slane %v5541, %v5548
            %v5551 = vunpack.c.l.s4 1966171168
            %v5552 = vunpack.c.0.s8 %v5551
            %v5553 = vlaneseq
            %v5554 = vshrl.u32 %v5553, 7
            %v5555 = vsub.s32 %v5552, %v5554
            %v5556 = vrot.slane %v5542, %v5555
            %5559 = vst.msk [vmem:[#allocation12 + $0x1] sm:$0x1] %vm5514, %v5549
            %5560 = vst.msk [vmem:[#allocation12 + $0x5] sm:$0x1] %vm5514, %v5556
            %5561 = vset.pattern.permute.xlu0 6
            %5562 = vperm.xlu0 %5561, %v5453
            %v5563 = vpop.permute.xlu0 %5562
            %v5565 = vmul.f32 %v5563, %v5467
            %5566 = vset.pattern.permute.xlu0 7
            %5567 = vperm.xlu0 %5566, %v5453
            %v5568 = vpop.permute.xlu0 %5567
            %v5570 = vmul.f32 %v5568, %v5476
            %v5571 = vadd.f32 %v5565, %v5570
            %5572 = vset.pattern.permute.xlu0 8
            %5573 = vperm.xlu0 %5572, %v5453
            %v5574 = vpop.permute.xlu0 %5573
            %v5576 = vmul.f32 %v5574, %v5486
            %v5577 = vadd.f32 %v5571, %v5576
            %v5580 = vunpack.c.l.s4 1966171168
            %v5581 = vunpack.c.0.s8 %v5580
            %v5582 = vlaneseq
            %v5583 = vshrl.u32 %v5582, 7
            %v5584 = vsub.s32 %v5581, %v5583
            %v5585 = vrot.slane %v5577, %v5584
            %v5586 = vcombine.high %v5585, %v5585
            %v5588 = vunpack.c.l.s4 1966171168
            %v5589 = vunpack.c.0.s8 %v5588
            %v5590 = vlaneseq
            %v5591 = vshrl.u32 %v5590, 7
            %v5592 = vsub.s32 %v5589, %v5591
            %v5593 = vrot.slane %v5585, %v5592
            %v5595 = vunpack.c.l.s4 1966171168
            %v5596 = vunpack.c.0.s8 %v5595
            %v5597 = vlaneseq
            %v5598 = vshrl.u32 %v5597, 7
            %v5599 = vsub.s32 %v5596, %v5598
            %v5600 = vrot.slane %v5586, %v5599
            %5603 = vst.msk [vmem:[#allocation12 + $0x2] sm:$0x1] %vm5514, %v5593
            %5604 = vst.msk [vmem:[#allocation12 + $0x6] sm:$0x1] %vm5514, %v5600
          $region188: #{tpu_custom_call.1} parent=171 // pred_fallthru
            _
        $region172: #{tpu_custom_call.1} parent=127 // pred_fallthru
          _
        %p5605 = scmp.eq.s32.totalorder %s50, 3
        // Predicated region
        $region189: #{tpu_custom_call.1} parent=127 // pred_check
          %p5606 = pneg %p5605
        $region190: #{tpu_custom_call.1} parent=127 // pred_check_branch
          %5608 = sbr.rel (%p5606) target = $region192
        $region191: #{tpu_custom_call.1} parent=127 // pred_region
          %s5609 = smul.u32 %s51, 4
          %s5610 = scalar_lea.vmem [#allocation12], %s5609
          %v5611 = vld [vmem:[%s5610] sm:$0x7]
          %5613 = vset.pattern.permute.xlu0 0
          %5614 = vperm.xlu0 %5613, %v902
          %v5615 = vpop.permute.xlu0 %5614
          %v5617 = vlaneseq
          %v5618 = vshrl.u32 %v5617, 7
          %v5619 = vsub.s32 0, %v5618
          %v5620 = vrot.slane %v5611, %v5619
          %v5621 = vmul.f32 %v5615, %v5620
          %5622 = vset.pattern.permute.xlu0 1
          %5623 = vperm.xlu0 %5622, %v902
          %v5624 = vpop.permute.xlu0 %5623
          %v5626 = vlaneseq
          %v5627 = vshrl.u32 %v5626, 7
          %v5628 = vsub.s32 1, %v5627
          %v5629 = vrot.slane %v5611, %v5628
          %v5630 = vmul.f32 %v5624, %v5629
          %v5631 = vadd.f32 %v5621, %v5630
          %5632 = vset.pattern.permute.xlu0 2
          %5633 = vperm.xlu0 %5632, %v902
          %v5634 = vpop.permute.xlu0 %5633
          %v5636 = vlaneseq
          %v5637 = vshrl.u32 %v5636, 7
          %v5638 = vsub.s32 2, %v5637
          %v5639 = vrot.slane %v5611, %v5638
          %v5640 = vmul.f32 %v5634, %v5639
          %v5641 = vadd.f32 %v5631, %v5640
          // Predicated region
          $region193: #{tpu_custom_call.1} parent=191 // pred_check
            _
          $region194: #{tpu_custom_call.1} parent=191 // pred_check_branch
            %5643 = sbr.rel (%p892) target = $region196
          $region195: #{tpu_custom_call.1} parent=191 // pred_region
            %vm5644 = vcmask 523264
            %5645 = vst.msk [vmem:[#allocation5] sm:$0xff] %vm5644, 0.0
            %5646 = vst.msk [vmem:[#allocation5 + $0x8] sm:$0xff] %vm5644, 0.0
          $region196: #{tpu_custom_call.1} parent=191 // pred_fallthru
            _
          %v5647 = vld [vmem:[#allocation5] sm:$0xff]
          %v5648 = vadd.f32 %v5641, 0.0
          %v5649 = vadd.f32 %v5647, %v5648
          %vm5650 = vcmask 523264
          %5651 = vst.msk [vmem:[#allocation5] sm:$0xff] %vm5650, %v5649
          %v5652 = vld [vmem:[#allocation5 + $0x8] sm:$0xff]
          %v5653 = vmul.f32 %v5641, %v5641
          %v5654 = vadd.f32 %v5653, 0.0
          %v5655 = vadd.f32 %v5652, %v5654
          %5656 = vst.msk [vmem:[#allocation5 + $0x8] sm:$0xff] %vm5650, %v5655
          // Predicated region
          $region197: #{tpu_custom_call.1} parent=191 // pred_check
            _
          $region198: #{tpu_custom_call.1} parent=191 // pred_check_branch
            %5658 = sbr.rel (%p896) target = $region200
          $region199: #{tpu_custom_call.1} parent=191 // pred_region
            %v5659 = vld [vmem:[#allocation5] sm:$0xff]
            %v5660 = vsel %vm5650, %v5659, 0.0
            %v5661 = vrot.slane %v5660, 4
            %v5662 = vadd.f32 %v5660, %v5661
            %v5663 = vrot.slane %v5662, 2
            %v5664 = vadd.f32 %v5662, %v5663
            %v5665 = vrot.slane %v5664, 1
            %v5666 = vadd.f32 %v5664, %v5665
            %v5667 = vld [vmem:[#allocation5 + $0x8] sm:$0xff]
            %v5668 = vsel %vm5650, %v5667, 0.0
            %v5669 = vrot.slane %v5668, 4
            %v5670 = vadd.f32 %v5668, %v5669
            %v5671 = vrot.slane %v5670, 2
            %v5672 = vadd.f32 %v5670, %v5671
            %v5673 = vrot.slane %v5672, 1
            %v5674 = vadd.f32 %v5672, %v5673
            %v5675 = vmul.f32 %v5666, 0.03125
            %v5676 = vmul.f32 %v5674, 0.03125
            %v5677 = vmul.f32 %v5675, %v5675
            %v5678 = vsub.f32 %v5676, %v5677
            %v5679 = vmax.f32 %v5678, 0.0
            %v5680 = vld [vmem:[%s19] sm:$0x1]
            %v5681 = vadd.f32 %v5679, 1e-05
            %v5682 = vrsqrt.pop %v5681
            %v5683 = vmul.f32 %v5680, %v5682
            %v5684 = vld [vmem:[%s20] sm:$0x1]
            %v5685 = vmul.f32 %v5675, %v5683
            %v5686 = vsub.f32 %v5684, %v5685
            %vm5687 = vcmask 516096
            %5688 = vst.msk [vmem:[#allocation5] sm:$0x1] %vm5687, %v5683
            %5689 = vst.msk [vmem:[#allocation5 + $0x1] sm:$0x1] %vm5687, %v5686
          $region200: #{tpu_custom_call.1} parent=191 // pred_fallthru
            _
        $region192: #{tpu_custom_call.1} parent=127 // pred_fallthru
          _
        %p5690 = scmp.eq.s32.totalorder %s50, 4
        // Predicated region
        $region201: #{tpu_custom_call.1} parent=127 // pred_check
          %p5691 = pneg %p5690
        $region202: #{tpu_custom_call.1} parent=127 // pred_check_branch
          %5693 = sbr.rel (%p5691) target = $region204
        $region203: #{tpu_custom_call.1} parent=127 // pred_region
          %s5694 = smul.u32 %s51, 4
          %s5695 = scalar_lea.vmem [#allocation12], %s5694
          %v5696 = vld [vmem:[%s5695] sm:$0x7]
          %5698 = vset.pattern.permute.xlu0 0
          %5699 = vperm.xlu0 %5698, %v902
          %v5700 = vpop.permute.xlu0 %5699
          %v5702 = vlaneseq
          %v5703 = vshrl.u32 %v5702, 7
          %v5704 = vsub.s32 0, %v5703
          %v5705 = vrot.slane %v5696, %v5704
          %v5706 = vmul.f32 %v5700, %v5705
          %5707 = vset.pattern.permute.xlu0 1
          %5708 = vperm.xlu0 %5707, %v902
          %v5709 = vpop.permute.xlu0 %5708
          %v5711 = vlaneseq
          %v5712 = vshrl.u32 %v5711, 7
          %v5713 = vsub.s32 1, %v5712
          %v5714 = vrot.slane %v5696, %v5713
          %v5715 = vmul.f32 %v5709, %v5714
          %v5716 = vadd.f32 %v5706, %v5715
          %5717 = vset.pattern.permute.xlu0 2
          %5718 = vperm.xlu0 %5717, %v902
          %v5719 = vpop.permute.xlu0 %5718
          %v5721 = vlaneseq
          %v5722 = vshrl.u32 %v5721, 7
          %v5723 = vsub.s32 2, %v5722
          %v5724 = vrot.slane %v5696, %v5723
          %v5725 = vmul.f32 %v5719, %v5724
          %v5726 = vadd.f32 %v5716, %v5725
          %v5727 = vld [vmem:[#allocation5] sm:$0x1]
          %v5728 = vlaneseq
          %v5729 = vshrl.u32 %v5728, 7
          %v5730 = vsub.s32 0, %v5729
          %v5731 = vrot.slane %v5727, %v5730
          %v5732 = vmul.f32 %v5726, %v5731
          %v5733 = vld [vmem:[#allocation5 + $0x1] sm:$0x1]
          %v5734 = vlaneseq
          %v5735 = vshrl.u32 %v5734, 7
          %v5736 = vsub.s32 0, %v5735
          %v5737 = vrot.slane %v5733, %v5736
          %v5738 = vadd.f32 %v5732, %v5737
          %v5739 = vmax.f32 %v5738, 0.0
          %v5740 = vpack.c.bf16 %v5739, %v5739
          %v5741 = vld [vmem:[%s21] sm:$0xf]
          %v5742 = vld [vmem:[%s21 + $0x4] sm:$0xf]
          %v5743 = vld [vmem:[%s21 + $0x8] sm:$0xf]
          %v5744 = vld [vmem:[%s21 + $0xc] sm:$0xf]
          %v5745 = vld [vmem:[%s21 + $0x10] sm:$0xf]
          %v5746 = vld [vmem:[%s21 + $0x14] sm:$0xf]
          %v5747 = vld [vmem:[%s21 + $0x18] sm:$0xf]
          %v5748 = vld [vmem:[%s21 + $0x1c] sm:$0xf]
          %v5757 = vunpack.c.l.b16 %v5741
          %v5758 = vunpack.c.l.b16 %v5742
          %v5759 = vunpack.c.l.b16 %v5743
          %v5760 = vunpack.c.l.b16 %v5744
          %v5761 = vunpack.c.l.b16 %v5745
          %v5762 = vunpack.c.l.b16 %v5746
          %v5763 = vunpack.c.l.b16 %v5747
          %v5764 = vunpack.c.l.b16 %v5748
          %v5765 = vpack.c.b16 %v5758, %v5757
          %v5766 = vpack.c.b16 %v5760, %v5759
          %v5767 = vpack.c.b16 %v5762, %v5761
          %v5768 = vpack.c.b16 %v5764, %v5763
          %vm5773 = vcmask 523264
          %v5775 = vsel %vm5773, %v5740, 0
          %5777 = vmatprep.subr.bf16.mxu0 0
          %5778 = vmatpush1.bf16.msra.mxu0 0
          %5779 = vmatprep.subr.bf16.mxu0 0
          %5780 = vmatpush1.bf16.msra.mxu0 0
          %5781 = vmatprep.subr.bf16.mxu0 0
          %5782 = vmatpush1.bf16.msra.mxu0 0
          %5783 = vmatprep.subr.bf16.mxu0 0
          %5784 = vmatpush1.bf16.msra.mxu0 0
          %5785 = vmatprep.subr.bf16.mxu0 0
          %5786 = vmatpush1.bf16.msra.mxu0 %v5768
          %5787 = vmatprep.subr.bf16.mxu0 0
          %5788 = vmatpush1.bf16.msra.mxu0 %v5767
          %5789 = vmatprep.subr.bf16.mxu0 0
          %5790 = vmatpush1.bf16.msra.mxu0 %v5766
          %5791 = vmatprep.subr.bf16.mxu0 0
          %5792 = vmatpush1.bf16.msra.mxu0 %v5765
          %5793 = vmatprep.subr.bf16.mxu0 0
          %5794 = vmatpush2.bf16.msra.mxu0 0
          %5795 = vmatprep.subr.bf16.mxu0 0
          %5796 = vmatpush2.bf16.msra.mxu0 0
          %5797 = vmatprep.subr.bf16.mxu0 0
          %5798 = vmatpush2.bf16.msra.mxu0 0
          %5799 = vmatprep.subr.bf16.mxu0 0
          %5800 = vmatpush2.bf16.msra.mxu0 0
          %5801 = vmatprep.subr.bf16.mxu0 0
          %5802 = vmatpush2.bf16.msra.mxu0 0
          %5803 = vmatprep.subr.bf16.mxu0 0
          %5804 = vmatpush2.bf16.msra.mxu0 0
          %5805 = vmatprep.subr.bf16.mxu0 0
          %5806 = vmatpush2.bf16.msra.mxu0 0
          %5807 = vmatprep.subr.bf16.mxu0 0
          %5808 = vmatpush2.bf16.msra.mxu0 0
          %5809 = vmatprep.mubr.bf16.mxu0 0
          %5810 = vmatmul.mubr.bf16.gmra.mxu0 %v5775
          %v5811 = vpop.f32.mrf.mxu0
          %v5812 = vadd.f32 0.0, %v5811
          %v5813 = vpop.f32.mrf.mxu0
          %v5814 = vpop.f32.mrf.mxu0
          %v5815 = vpop.f32.mrf.mxu0
          %5816 = vdwg.mxu0
          // Predicated region
          $region205: #{tpu_custom_call.1} parent=203 // pred_check
            _
          $region206: #{tpu_custom_call.1} parent=203 // pred_check_branch
            %5818 = sbr.rel (%p892) target = $region208
          $region207: #{tpu_custom_call.1} parent=203 // pred_region
            %5819 = vst [vmem:[#allocation6] sm:$0xff] 0.0
            %5820 = vst [vmem:[#allocation6 + $0x8] sm:$0xff] 0.0
          $region208: #{tpu_custom_call.1} parent=203 // pred_fallthru
            _
          %v5821 = vld [vmem:[#allocation6] sm:$0xff]
          %v5822 = vadd.f32 %v5812, 0.0
          %v5823 = vadd.f32 %v5821, %v5822
          %5824 = vst [vmem:[#allocation6] sm:$0xff] %v5823
          %v5825 = vld [vmem:[#allocation6 + $0x8] sm:$0xff]
          %v5826 = vmul.f32 %v5812, %v5812
          %v5827 = vadd.f32 %v5826, 0.0
          %v5828 = vadd.f32 %v5825, %v5827
          %5829 = vst [vmem:[#allocation6 + $0x8] sm:$0xff] %v5828
          // Predicated region
          $region209: #{tpu_custom_call.1} parent=203 // pred_check
            _
          $region210: #{tpu_custom_call.1} parent=203 // pred_check_branch
            %5831 = sbr.rel (%p896) target = $region212
          $region211: #{tpu_custom_call.1} parent=203 // pred_region
            %v5832 = vld [vmem:[#allocation6] sm:$0xff]
            %v5833 = vrot.slane %v5832, 4
            %v5834 = vadd.f32 %v5832, %v5833
            %v5835 = vrot.slane %v5834, 2
            %v5836 = vadd.f32 %v5834, %v5835
            %v5837 = vrot.slane %v5836, 1
            %v5838 = vadd.f32 %v5836, %v5837
            %v5839 = vld [vmem:[#allocation6 + $0x8] sm:$0xff]
            %v5840 = vrot.slane %v5839, 4
            %v5841 = vadd.f32 %v5839, %v5840
            %v5842 = vrot.slane %v5841, 2
            %v5843 = vadd.f32 %v5841, %v5842
            %v5844 = vrot.slane %v5843, 1
            %v5845 = vadd.f32 %v5843, %v5844
            %v5846 = vmul.f32 %v5838, 0.03125
            %v5847 = vmul.f32 %v5845, 0.03125
            %v5848 = vmul.f32 %v5846, %v5846
            %v5849 = vsub.f32 %v5847, %v5848
            %v5850 = vmax.f32 %v5849, 0.0
            %v5851 = vld [vmem:[%s22] sm:$0x1]
            %v5852 = vadd.f32 %v5850, 1e-05
            %v5853 = vrsqrt.pop %v5852
            %v5854 = vmul.f32 %v5851, %v5853
            %v5855 = vld [vmem:[%s23] sm:$0x1]
            %v5856 = vmul.f32 %v5846, %v5854
            %v5857 = vsub.f32 %v5855, %v5856
            %5858 = vst [vmem:[#allocation6] sm:$0x1] %v5854
            %5859 = vst [vmem:[#allocation6 + $0x1] sm:$0x1] %v5857
          $region212: #{tpu_custom_call.1} parent=203 // pred_fallthru
            _
        $region204: #{tpu_custom_call.1} parent=127 // pred_fallthru
          _
        %p5860 = scmp.eq.s32.totalorder %s50, 5
        // Predicated region
        $region213: #{tpu_custom_call.1} parent=127 // pred_check
          %p5861 = pneg %p5860
        $region214: #{tpu_custom_call.1} parent=127 // pred_check_branch
          %5863 = sbr.rel (%p5861) target = $region216
        $region215: #{tpu_custom_call.1} parent=127 // pred_region
          %s5864 = smul.u32 %s51, 4
          %s5865 = scalar_lea.vmem [#allocation12], %s5864
          %v5866 = vld [vmem:[%s5865] sm:$0x7]
          %5868 = vset.pattern.permute.xlu0 0
          %5869 = vperm.xlu0 %5868, %v902
          %v5870 = vpop.permute.xlu0 %5869
          %v5872 = vlaneseq
          %v5873 = vshrl.u32 %v5872, 7
          %v5874 = vsub.s32 0, %v5873
          %v5875 = vrot.slane %v5866, %v5874
          %v5876 = vmul.f32 %v5870, %v5875
          %5877 = vset.pattern.permute.xlu0 1
          %5878 = vperm.xlu0 %5877, %v902
          %v5879 = vpop.permute.xlu0 %5878
          %v5881 = vlaneseq
          %v5882 = vshrl.u32 %v5881, 7
          %v5883 = vsub.s32 1, %v5882
          %v5884 = vrot.slane %v5866, %v5883
          %v5885 = vmul.f32 %v5879, %v5884
          %v5886 = vadd.f32 %v5876, %v5885
          %5887 = vset.pattern.permute.xlu0 2
          %5888 = vperm.xlu0 %5887, %v902
          %v5889 = vpop.permute.xlu0 %5888
          %v5891 = vlaneseq
          %v5892 = vshrl.u32 %v5891, 7
          %v5893 = vsub.s32 2, %v5892
          %v5894 = vrot.slane %v5866, %v5893
          %v5895 = vmul.f32 %v5889, %v5894
          %v5896 = vadd.f32 %v5886, %v5895
          %v5897 = vld [vmem:[#allocation5] sm:$0x1]
          %v5898 = vlaneseq
          %v5899 = vshrl.u32 %v5898, 7
          %v5900 = vsub.s32 0, %v5899
          %v5901 = vrot.slane %v5897, %v5900
          %v5902 = vmul.f32 %v5896, %v5901
          %v5903 = vld [vmem:[#allocation5 + $0x1] sm:$0x1]
          %v5904 = vlaneseq
          %v5905 = vshrl.u32 %v5904, 7
          %v5906 = vsub.s32 0, %v5905
          %v5907 = vrot.slane %v5903, %v5906
          %v5908 = vadd.f32 %v5902, %v5907
          %v5909 = vmax.f32 %v5908, 0.0
          %v5910 = vpack.c.bf16 %v5909, %v5909
          %v5911 = vld [vmem:[%s21] sm:$0xf]
          %v5912 = vld [vmem:[%s21 + $0x4] sm:$0xf]
          %v5913 = vld [vmem:[%s21 + $0x8] sm:$0xf]
          %v5914 = vld [vmem:[%s21 + $0xc] sm:$0xf]
          %v5915 = vld [vmem:[%s21 + $0x10] sm:$0xf]
          %v5916 = vld [vmem:[%s21 + $0x14] sm:$0xf]
          %v5917 = vld [vmem:[%s21 + $0x18] sm:$0xf]
          %v5918 = vld [vmem:[%s21 + $0x1c] sm:$0xf]
          %v5927 = vunpack.c.l.b16 %v5911
          %v5928 = vunpack.c.l.b16 %v5912
          %v5929 = vunpack.c.l.b16 %v5913
          %v5930 = vunpack.c.l.b16 %v5914
          %v5931 = vunpack.c.l.b16 %v5915
          %v5932 = vunpack.c.l.b16 %v5916
          %v5933 = vunpack.c.l.b16 %v5917
          %v5934 = vunpack.c.l.b16 %v5918
          %v5935 = vpack.c.b16 %v5928, %v5927
          %v5936 = vpack.c.b16 %v5930, %v5929
          %v5937 = vpack.c.b16 %v5932, %v5931
          %v5938 = vpack.c.b16 %v5934, %v5933
          %vm5943 = vcmask 523264
          %v5945 = vsel %vm5943, %v5910, 0
          %5947 = vmatprep.subr.bf16.mxu0 0
          %5948 = vmatpush1.bf16.msra.mxu0 0
          %5949 = vmatprep.subr.bf16.mxu0 0
          %5950 = vmatpush1.bf16.msra.mxu0 0
          %5951 = vmatprep.subr.bf16.mxu0 0
          %5952 = vmatpush1.bf16.msra.mxu0 0
          %5953 = vmatprep.subr.bf16.mxu0 0
          %5954 = vmatpush1.bf16.msra.mxu0 0
          %5955 = vmatprep.subr.bf16.mxu0 0
          %5956 = vmatpush1.bf16.msra.mxu0 %v5938
          %5957 = vmatprep.subr.bf16.mxu0 0
          %5958 = vmatpush1.bf16.msra.mxu0 %v5937
          %5959 = vmatprep.subr.bf16.mxu0 0
          %5960 = vmatpush1.bf16.msra.mxu0 %v5936
          %5961 = vmatprep.subr.bf16.mxu0 0
          %5962 = vmatpush1.bf16.msra.mxu0 %v5935
          %5963 = vmatprep.subr.bf16.mxu0 0
          %5964 = vmatpush2.bf16.msra.mxu0 0
          %5965 = vmatprep.subr.bf16.mxu0 0
          %5966 = vmatpush2.bf16.msra.mxu0 0
          %5967 = vmatprep.subr.bf16.mxu0 0
          %5968 = vmatpush2.bf16.msra.mxu0 0
          %5969 = vmatprep.subr.bf16.mxu0 0
          %5970 = vmatpush2.bf16.msra.mxu0 0
          %5971 = vmatprep.subr.bf16.mxu0 0
          %5972 = vmatpush2.bf16.msra.mxu0 0
          %5973 = vmatprep.subr.bf16.mxu0 0
          %5974 = vmatpush2.bf16.msra.mxu0 0
          %5975 = vmatprep.subr.bf16.mxu0 0
          %5976 = vmatpush2.bf16.msra.mxu0 0
          %5977 = vmatprep.subr.bf16.mxu0 0
          %5978 = vmatpush2.bf16.msra.mxu0 0
          %5979 = vmatprep.mubr.bf16.mxu0 0
          %5980 = vmatmul.mubr.bf16.gmra.mxu0 %v5945
          %v5981 = vpop.f32.mrf.mxu0
          %v5982 = vadd.f32 0.0, %v5981
          %v5983 = vpop.f32.mrf.mxu0
          %v5984 = vpop.f32.mrf.mxu0
          %v5985 = vpop.f32.mrf.mxu0
          %5986 = vdwg.mxu0
          %v5987 = vld [vmem:[#allocation6] sm:$0x1]
          %v5988 = vlaneseq
          %v5989 = vshrl.u32 %v5988, 7
          %v5990 = vsub.s32 0, %v5989
          %v5991 = vrot.slane %v5987, %v5990
          %v5992 = vmul.f32 %v5982, %v5991
          %v5993 = vld [vmem:[#allocation6 + $0x1] sm:$0x1]
          %v5994 = vlaneseq
          %v5995 = vshrl.u32 %v5994, 7
          %v5996 = vsub.s32 0, %v5995
          %v5997 = vrot.slane %v5993, %v5996
          %v5998 = vadd.f32 %v5992, %v5997
          %v5999 = vmax.f32 %v5998, 0.0
          %v6000 = vpack.c.bf16 %v5999, %v5999
          %v6001 = vld [vmem:[#allocation19] sm:$0xff]
          %v6002 = vld [vmem:[#allocation19 + $0x8] sm:$0xff]
          %v6003 = vld [vmem:[#allocation19 + $0x10] sm:$0xff]
          %v6004 = vld [vmem:[#allocation19 + $0x18] sm:$0xff]
          %v6005 = vld [vmem:[#allocation19 + $0x20] sm:$0xff]
          %v6006 = vld [vmem:[#allocation19 + $0x28] sm:$0xff]
          %v6007 = vld [vmem:[#allocation19 + $0x30] sm:$0xff]
          %v6008 = vld [vmem:[#allocation19 + $0x38] sm:$0xff]
          %v6009 = vld [vmem:[#allocation19 + $0x40] sm:$0xff]
          %v6010 = vld [vmem:[#allocation19 + $0x48] sm:$0xff]
          %v6011 = vld [vmem:[#allocation19 + $0x50] sm:$0xff]
          %v6012 = vld [vmem:[#allocation19 + $0x58] sm:$0xff]
          %v6013 = vld [vmem:[#allocation19 + $0x60] sm:$0xff]
          %v6014 = vld [vmem:[#allocation19 + $0x68] sm:$0xff]
          %v6015 = vld [vmem:[#allocation19 + $0x70] sm:$0xff]
          %v6016 = vld [vmem:[#allocation19 + $0x78] sm:$0xff]
          %v6017 = vld [vmem:[#allocation19 + $0x80] sm:$0xff]
          %v6018 = vld [vmem:[#allocation19 + $0x88] sm:$0xff]
          %v6019 = vld [vmem:[#allocation19 + $0x90] sm:$0xff]
          %v6020 = vld [vmem:[#allocation19 + $0x98] sm:$0xff]
          %v6021 = vld [vmem:[#allocation19 + $0xa0] sm:$0xff]
          %v6022 = vld [vmem:[#allocation19 + $0xa8] sm:$0xff]
          %v6023 = vld [vmem:[#allocation19 + $0xb0] sm:$0xff]
          %v6024 = vld [vmem:[#allocation19 + $0xb8] sm:$0xff]
          %v6025 = vld [vmem:[#allocation19 + $0xc0] sm:$0xff]
          %v6026 = vld [vmem:[#allocation19 + $0xc8] sm:$0xff]
          %v6027 = vld [vmem:[#allocation19 + $0xd0] sm:$0xff]
          %v6028 = vld [vmem:[#allocation19 + $0xd8] sm:$0xff]
          %v6029 = vld [vmem:[#allocation19 + $0xe0] sm:$0xff]
          %v6030 = vld [vmem:[#allocation19 + $0xe8] sm:$0xff]
          %v6031 = vld [vmem:[#allocation19 + $0xf0] sm:$0xff]
          %v6032 = vld [vmem:[#allocation19 + $0xf8] sm:$0xff]
          %v6033 = vld [vmem:[#allocation19 + $0x100] sm:$0xff]
          %v6034 = vld [vmem:[#allocation19 + $0x108] sm:$0xff]
          %v6035 = vld [vmem:[#allocation19 + $0x110] sm:$0xff]
          %v6036 = vld [vmem:[#allocation19 + $0x118] sm:$0xff]
          %v6037 = vld [vmem:[#allocation19 + $0x120] sm:$0xff]
          %v6038 = vld [vmem:[#allocation19 + $0x128] sm:$0xff]
          %v6039 = vld [vmem:[#allocation19 + $0x130] sm:$0xff]
          %v6040 = vld [vmem:[#allocation19 + $0x138] sm:$0xff]
          %v6041 = vld [vmem:[#allocation19 + $0x140] sm:$0xff]
          %v6042 = vld [vmem:[#allocation19 + $0x148] sm:$0xff]
          %v6043 = vld [vmem:[#allocation19 + $0x150] sm:$0xff]
          %v6044 = vld [vmem:[#allocation19 + $0x158] sm:$0xff]
          %v6045 = vld [vmem:[#allocation19 + $0x160] sm:$0xff]
          %v6046 = vld [vmem:[#allocation19 + $0x168] sm:$0xff]
          %v6047 = vld [vmem:[#allocation19 + $0x170] sm:$0xff]
          %v6048 = vld [vmem:[#allocation19 + $0x178] sm:$0xff]
          %v6049 = vld [vmem:[#allocation19 + $0x180] sm:$0xff]
          %v6050 = vld [vmem:[#allocation19 + $0x188] sm:$0xff]
          %v6051 = vld [vmem:[#allocation19 + $0x190] sm:$0xff]
          %v6052 = vld [vmem:[#allocation19 + $0x198] sm:$0xff]
          %v6053 = vld [vmem:[#allocation19 + $0x1a0] sm:$0xff]
          %v6054 = vld [vmem:[#allocation19 + $0x1a8] sm:$0xff]
          %v6055 = vld [vmem:[#allocation19 + $0x1b0] sm:$0xff]
          %v6056 = vld [vmem:[#allocation19 + $0x1b8] sm:$0xff]
          %v6057 = vld [vmem:[#allocation19 + $0x1c0] sm:$0xff]
          %v6058 = vld [vmem:[#allocation19 + $0x1c8] sm:$0xff]
          %v6059 = vld [vmem:[#allocation19 + $0x1d0] sm:$0xff]
          %v6060 = vld [vmem:[#allocation19 + $0x1d8] sm:$0xff]
          %v6061 = vld [vmem:[#allocation19 + $0x1e0] sm:$0xff]
          %v6062 = vld [vmem:[#allocation19 + $0x1e8] sm:$0xff]
          %v6063 = vld [vmem:[#allocation19 + $0x1f0] sm:$0xff]
          %v6064 = vld [vmem:[#allocation19 + $0x1f8] sm:$0xff]
          %v6129 = vunpack.c.l.b16 %v6001
          %v6130 = vunpack.c.h.b16 %v6001
          %v6131 = vunpack.c.l.b16 %v6002
          %v6132 = vunpack.c.h.b16 %v6002
          %v6133 = vunpack.c.l.b16 %v6003
          %v6134 = vunpack.c.h.b16 %v6003
          %v6135 = vunpack.c.l.b16 %v6004
          %v6136 = vunpack.c.h.b16 %v6004
          %v6137 = vunpack.c.l.b16 %v6005
          %v6138 = vunpack.c.h.b16 %v6005
          %v6139 = vunpack.c.l.b16 %v6006
          %v6140 = vunpack.c.h.b16 %v6006
          %v6141 = vunpack.c.l.b16 %v6007
          %v6142 = vunpack.c.h.b16 %v6007
          %v6143 = vunpack.c.l.b16 %v6008
          %v6144 = vunpack.c.h.b16 %v6008
          %v6145 = vunpack.c.l.b16 %v6009
          %v6146 = vunpack.c.h.b16 %v6009
          %v6147 = vunpack.c.l.b16 %v6010
          %v6148 = vunpack.c.h.b16 %v6010
          %v6149 = vunpack.c.l.b16 %v6011
          %v6150 = vunpack.c.h.b16 %v6011
          %v6151 = vunpack.c.l.b16 %v6012
          %v6152 = vunpack.c.h.b16 %v6012
          %v6153 = vunpack.c.l.b16 %v6013
          %v6154 = vunpack.c.h.b16 %v6013
          %v6155 = vunpack.c.l.b16 %v6014
          %v6156 = vunpack.c.h.b16 %v6014
          %v6157 = vunpack.c.l.b16 %v6015
          %v6158 = vunpack.c.h.b16 %v6015
          %v6159 = vunpack.c.l.b16 %v6016
          %v6160 = vunpack.c.h.b16 %v6016
          %v6161 = vunpack.c.l.b16 %v6017
          %v6162 = vunpack.c.h.b16 %v6017
          %v6163 = vunpack.c.l.b16 %v6018
          %v6164 = vunpack.c.h.b16 %v6018
          %v6165 = vunpack.c.l.b16 %v6019
          %v6166 = vunpack.c.h.b16 %v6019
          %v6167 = vunpack.c.l.b16 %v6020
          %v6168 = vunpack.c.h.b16 %v6020
          %v6169 = vunpack.c.l.b16 %v6021
          %v6170 = vunpack.c.h.b16 %v6021
          %v6171 = vunpack.c.l.b16 %v6022
          %v6172 = vunpack.c.h.b16 %v6022
          %v6173 = vunpack.c.l.b16 %v6023
          %v6174 = vunpack.c.h.b16 %v6023
          %v6175 = vunpack.c.l.b16 %v6024
          %v6176 = vunpack.c.h.b16 %v6024
          %v6177 = vunpack.c.l.b16 %v6025
          %v6178 = vunpack.c.h.b16 %v6025
          %v6179 = vunpack.c.l.b16 %v6026
          %v6180 = vunpack.c.h.b16 %v6026
          %v6181 = vunpack.c.l.b16 %v6027
          %v6182 = vunpack.c.h.b16 %v6027
          %v6183 = vunpack.c.l.b16 %v6028
          %v6184 = vunpack.c.h.b16 %v6028
          %v6185 = vunpack.c.l.b16 %v6029
          %v6186 = vunpack.c.h.b16 %v6029
          %v6187 = vunpack.c.l.b16 %v6030
          %v6188 = vunpack.c.h.b16 %v6030
          %v6189 = vunpack.c.l.b16 %v6031
          %v6190 = vunpack.c.h.b16 %v6031
          %v6191 = vunpack.c.l.b16 %v6032
          %v6192 = vunpack.c.h.b16 %v6032
          %v6193 = vunpack.c.l.b16 %v6033
          %v6194 = vunpack.c.h.b16 %v6033
          %v6195 = vunpack.c.l.b16 %v6034
          %v6196 = vunpack.c.h.b16 %v6034
          %v6197 = vunpack.c.l.b16 %v6035
          %v6198 = vunpack.c.h.b16 %v6035
          %v6199 = vunpack.c.l.b16 %v6036
          %v6200 = vunpack.c.h.b16 %v6036
          %v6201 = vunpack.c.l.b16 %v6037
          %v6202 = vunpack.c.h.b16 %v6037
          %v6203 = vunpack.c.l.b16 %v6038
          %v6204 = vunpack.c.h.b16 %v6038
          %v6205 = vunpack.c.l.b16 %v6039
          %v6206 = vunpack.c.h.b16 %v6039
          %v6207 = vunpack.c.l.b16 %v6040
          %v6208 = vunpack.c.h.b16 %v6040
          %v6209 = vunpack.c.l.b16 %v6041
          %v6210 = vunpack.c.h.b16 %v6041
          %v6211 = vunpack.c.l.b16 %v6042
          %v6212 = vunpack.c.h.b16 %v6042
          %v6213 = vunpack.c.l.b16 %v6043
          %v6214 = vunpack.c.h.b16 %v6043
          %v6215 = vunpack.c.l.b16 %v6044
          %v6216 = vunpack.c.h.b16 %v6044
          %v6217 = vunpack.c.l.b16 %v6045
          %v6218 = vunpack.c.h.b16 %v6045
          %v6219 = vunpack.c.l.b16 %v6046
          %v6220 = vunpack.c.h.b16 %v6046
          %v6221 = vunpack.c.l.b16 %v6047
          %v6222 = vunpack.c.h.b16 %v6047
          %v6223 = vunpack.c.l.b16 %v6048
          %v6224 = vunpack.c.h.b16 %v6048
          %v6225 = vunpack.c.l.b16 %v6049
          %v6226 = vunpack.c.h.b16 %v6049
          %v6227 = vunpack.c.l.b16 %v6050
          %v6228 = vunpack.c.h.b16 %v6050
          %v6229 = vunpack.c.l.b16 %v6051
          %v6230 = vunpack.c.h.b16 %v6051
          %v6231 = vunpack.c.l.b16 %v6052
          %v6232 = vunpack.c.h.b16 %v6052
          %v6233 = vunpack.c.l.b16 %v6053
          %v6234 = vunpack.c.h.b16 %v6053
          %v6235 = vunpack.c.l.b16 %v6054
          %v6236 = vunpack.c.h.b16 %v6054
          %v6237 = vunpack.c.l.b16 %v6055
          %v6238 = vunpack.c.h.b16 %v6055
          %v6239 = vunpack.c.l.b16 %v6056
          %v6240 = vunpack.c.h.b16 %v6056
          %v6241 = vunpack.c.l.b16 %v6057
          %v6242 = vunpack.c.h.b16 %v6057
          %v6243 = vunpack.c.l.b16 %v6058
          %v6244 = vunpack.c.h.b16 %v6058
          %v6245 = vunpack.c.l.b16 %v6059
          %v6246 = vunpack.c.h.b16 %v6059
          %v6247 = vunpack.c.l.b16 %v6060
          %v6248 = vunpack.c.h.b16 %v6060
          %v6249 = vunpack.c.l.b16 %v6061
          %v6250 = vunpack.c.h.b16 %v6061
          %v6251 = vunpack.c.l.b16 %v6062
          %v6252 = vunpack.c.h.b16 %v6062
          %v6253 = vunpack.c.l.b16 %v6063
          %v6254 = vunpack.c.h.b16 %v6063
          %v6255 = vunpack.c.l.b16 %v6064
          %v6256 = vunpack.c.h.b16 %v6064
          %v6257 = vpack.c.b16 %v6137, %v6129
          %v6258 = vpack.c.b16 %v6138, %v6130
          %v6259 = vpack.c.b16 %v6139, %v6131
          %v6260 = vpack.c.b16 %v6140, %v6132
          %v6261 = vpack.c.b16 %v6141, %v6133
          %v6262 = vpack.c.b16 %v6142, %v6134
          %v6263 = vpack.c.b16 %v6143, %v6135
          %v6264 = vpack.c.b16 %v6144, %v6136
          %v6265 = vpack.c.b16 %v6153, %v6145
          %v6266 = vpack.c.b16 %v6154, %v6146
          %v6267 = vpack.c.b16 %v6155, %v6147
          %v6268 = vpack.c.b16 %v6156, %v6148
          %v6269 = vpack.c.b16 %v6157, %v6149
          %v6270 = vpack.c.b16 %v6158, %v6150
          %v6271 = vpack.c.b16 %v6159, %v6151
          %v6272 = vpack.c.b16 %v6160, %v6152
          %v6273 = vpack.c.b16 %v6169, %v6161
          %v6274 = vpack.c.b16 %v6170, %v6162
          %v6275 = vpack.c.b16 %v6171, %v6163
          %v6276 = vpack.c.b16 %v6172, %v6164
          %v6277 = vpack.c.b16 %v6173, %v6165
          %v6278 = vpack.c.b16 %v6174, %v6166
          %v6279 = vpack.c.b16 %v6175, %v6167
          %v6280 = vpack.c.b16 %v6176, %v6168
          %v6281 = vpack.c.b16 %v6185, %v6177
          %v6282 = vpack.c.b16 %v6186, %v6178
          %v6283 = vpack.c.b16 %v6187, %v6179
          %v6284 = vpack.c.b16 %v6188, %v6180
          %v6285 = vpack.c.b16 %v6189, %v6181
          %v6286 = vpack.c.b16 %v6190, %v6182
          %v6287 = vpack.c.b16 %v6191, %v6183
          %v6288 = vpack.c.b16 %v6192, %v6184
          %v6289 = vpack.c.b16 %v6201, %v6193
          %v6290 = vpack.c.b16 %v6202, %v6194
          %v6291 = vpack.c.b16 %v6203, %v6195
          %v6292 = vpack.c.b16 %v6204, %v6196
          %v6293 = vpack.c.b16 %v6205, %v6197
          %v6294 = vpack.c.b16 %v6206, %v6198
          %v6295 = vpack.c.b16 %v6207, %v6199
          %v6296 = vpack.c.b16 %v6208, %v6200
          %v6297 = vpack.c.b16 %v6217, %v6209
          %v6298 = vpack.c.b16 %v6218, %v6210
          %v6299 = vpack.c.b16 %v6219, %v6211
          %v6300 = vpack.c.b16 %v6220, %v6212
          %v6301 = vpack.c.b16 %v6221, %v6213
          %v6302 = vpack.c.b16 %v6222, %v6214
          %v6303 = vpack.c.b16 %v6223, %v6215
          %v6304 = vpack.c.b16 %v6224, %v6216
          %v6305 = vpack.c.b16 %v6233, %v6225
          %v6306 = vpack.c.b16 %v6234, %v6226
          %v6307 = vpack.c.b16 %v6235, %v6227
          %v6308 = vpack.c.b16 %v6236, %v6228
          %v6309 = vpack.c.b16 %v6237, %v6229
          %v6310 = vpack.c.b16 %v6238, %v6230
          %v6311 = vpack.c.b16 %v6239, %v6231
          %v6312 = vpack.c.b16 %v6240, %v6232
          %v6313 = vpack.c.b16 %v6249, %v6241
          %v6314 = vpack.c.b16 %v6250, %v6242
          %v6315 = vpack.c.b16 %v6251, %v6243
          %v6316 = vpack.c.b16 %v6252, %v6244
          %v6317 = vpack.c.b16 %v6253, %v6245
          %v6318 = vpack.c.b16 %v6254, %v6246
          %v6319 = vpack.c.b16 %v6255, %v6247
          %v6320 = vpack.c.b16 %v6256, %v6248
          %6385 = vmatprep.subr.bf16.mxu0 %v6314
          %6386 = vmatpush1.bf16.msra.mxu0 %v6313
          %6387 = vmatprep.subr.bf16.mxu0 %v6306
          %6388 = vmatpush1.bf16.msra.mxu0 %v6305
          %6389 = vmatprep.subr.bf16.mxu0 %v6298
          %6390 = vmatpush1.bf16.msra.mxu0 %v6297
          %6391 = vmatprep.subr.bf16.mxu0 %v6290
          %6392 = vmatpush1.bf16.msra.mxu0 %v6289
          %6393 = vmatprep.subr.bf16.mxu0 %v6282
          %6394 = vmatpush1.bf16.msra.mxu0 %v6281
          %6395 = vmatprep.subr.bf16.mxu0 %v6274
          %6396 = vmatpush1.bf16.msra.mxu0 %v6273
          %6397 = vmatprep.subr.bf16.mxu0 %v6266
          %6398 = vmatpush1.bf16.msra.mxu0 %v6265
          %6399 = vmatprep.subr.bf16.mxu0 %v6258
          %6400 = vmatpush1.bf16.msra.mxu0 %v6257
          %6401 = vmatprep.subr.bf16.mxu0 0
          %6402 = vmatpush2.bf16.msra.mxu0 0
          %6403 = vmatprep.subr.bf16.mxu0 0
          %6404 = vmatpush2.bf16.msra.mxu0 0
          %6405 = vmatprep.subr.bf16.mxu0 0
          %6406 = vmatpush2.bf16.msra.mxu0 0
          %6407 = vmatprep.subr.bf16.mxu0 0
          %6408 = vmatpush2.bf16.msra.mxu0 0
          %6409 = vmatprep.subr.bf16.mxu0 0
          %6410 = vmatpush2.bf16.msra.mxu0 0
          %6411 = vmatprep.subr.bf16.mxu0 0
          %6412 = vmatpush2.bf16.msra.mxu0 0
          %6413 = vmatprep.subr.bf16.mxu0 0
          %6414 = vmatpush2.bf16.msra.mxu0 0
          %6415 = vmatprep.subr.bf16.mxu0 0
          %6416 = vmatpush2.bf16.msra.mxu0 0
          %6417 = vmatprep.mubr.bf16.mxu0 0
          %6418 = vmatmul.mubr.bf16.gmra.mxu0 %v6000
          %v6419 = vpop.f32.mrf.mxu0
          %v6420 = vadd.f32 0.0, %v6419
          %v6421 = vpop.f32.mrf.mxu0
          %v6422 = vadd.f32 0.0, %v6421
          %v6423 = vpop.f32.mrf.mxu0
          %v6424 = vpop.f32.mrf.mxu0
          %6425 = vdwg.mxu0
          %6426 = vmatprep.subr.bf16.mxu0 %v6316
          %6427 = vmatpush1.bf16.msra.mxu0 %v6315
          %6428 = vmatprep.subr.bf16.mxu0 %v6308
          %6429 = vmatpush1.bf16.msra.mxu0 %v6307
          %6430 = vmatprep.subr.bf16.mxu0 %v6300
          %6431 = vmatpush1.bf16.msra.mxu0 %v6299
          %6432 = vmatprep.subr.bf16.mxu0 %v6292
          %6433 = vmatpush1.bf16.msra.mxu0 %v6291
          %6434 = vmatprep.subr.bf16.mxu0 %v6284
          %6435 = vmatpush1.bf16.msra.mxu0 %v6283
          %6436 = vmatprep.subr.bf16.mxu0 %v6276
          %6437 = vmatpush1.bf16.msra.mxu0 %v6275
          %6438 = vmatprep.subr.bf16.mxu0 %v6268
          %6439 = vmatpush1.bf16.msra.mxu0 %v6267
          %6440 = vmatprep.subr.bf16.mxu0 %v6260
          %6441 = vmatpush1.bf16.msra.mxu0 %v6259
          %6442 = vmatprep.subr.bf16.mxu0 0
          %6443 = vmatpush2.bf16.msra.mxu0 0
          %6444 = vmatprep.subr.bf16.mxu0 0
          %6445 = vmatpush2.bf16.msra.mxu0 0
          %6446 = vmatprep.subr.bf16.mxu0 0
          %6447 = vmatpush2.bf16.msra.mxu0 0
          %6448 = vmatprep.subr.bf16.mxu0 0
          %6449 = vmatpush2.bf16.msra.mxu0 0
          %6450 = vmatprep.subr.bf16.mxu0 0
          %6451 = vmatpush2.bf16.msra.mxu0 0
          %6452 = vmatprep.subr.bf16.mxu0 0
          %6453 = vmatpush2.bf16.msra.mxu0 0
          %6454 = vmatprep.subr.bf16.mxu0 0
          %6455 = vmatpush2.bf16.msra.mxu0 0
          %6456 = vmatprep.subr.bf16.mxu0 0
          %6457 = vmatpush2.bf16.msra.mxu0 0
          %6458 = vmatprep.mubr.bf16.mxu0 0
          %6459 = vmatmul.mubr.bf16.gmra.mxu0 %v6000
          %v6460 = vpop.f32.mrf.mxu0
          %v6461 = vadd.f32 0.0, %v6460
          %v6462 = vpop.f32.mrf.mxu0
          %v6463 = vadd.f32 0.0, %v6462
          %v6464 = vpop.f32.mrf.mxu0
          %v6465 = vpop.f32.mrf.mxu0
          %6466 = vdwg.mxu0
          %6467 = vmatprep.subr.bf16.mxu0 %v6318
          %6468 = vmatpush1.bf16.msra.mxu0 %v6317
          %6469 = vmatprep.subr.bf16.mxu0 %v6310
          %6470 = vmatpush1.bf16.msra.mxu0 %v6309
          %6471 = vmatprep.subr.bf16.mxu0 %v6302
          %6472 = vmatpush1.bf16.msra.mxu0 %v6301
          %6473 = vmatprep.subr.bf16.mxu0 %v6294
          %6474 = vmatpush1.bf16.msra.mxu0 %v6293
          %6475 = vmatprep.subr.bf16.mxu0 %v6286
          %6476 = vmatpush1.bf16.msra.mxu0 %v6285
          %6477 = vmatprep.subr.bf16.mxu0 %v6278
          %6478 = vmatpush1.bf16.msra.mxu0 %v6277
          %6479 = vmatprep.subr.bf16.mxu0 %v6270
          %6480 = vmatpush1.bf16.msra.mxu0 %v6269
          %6481 = vmatprep.subr.bf16.mxu0 %v6262
          %6482 = vmatpush1.bf16.msra.mxu0 %v6261
          %6483 = vmatprep.subr.bf16.mxu0 0
          %6484 = vmatpush2.bf16.msra.mxu0 0
          %6485 = vmatprep.subr.bf16.mxu0 0
          %6486 = vmatpush2.bf16.msra.mxu0 0
          %6487 = vmatprep.subr.bf16.mxu0 0
          %6488 = vmatpush2.bf16.msra.mxu0 0
          %6489 = vmatprep.subr.bf16.mxu0 0
          %6490 = vmatpush2.bf16.msra.mxu0 0
          %6491 = vmatprep.subr.bf16.mxu0 0
          %6492 = vmatpush2.bf16.msra.mxu0 0
          %6493 = vmatprep.subr.bf16.mxu0 0
          %6494 = vmatpush2.bf16.msra.mxu0 0
          %6495 = vmatprep.subr.bf16.mxu0 0
          %6496 = vmatpush2.bf16.msra.mxu0 0
          %6497 = vmatprep.subr.bf16.mxu0 0
          %6498 = vmatpush2.bf16.msra.mxu0 0
          %6499 = vmatprep.mubr.bf16.mxu0 0
          %6500 = vmatmul.mubr.bf16.gmra.mxu0 %v6000
          %v6501 = vpop.f32.mrf.mxu0
          %v6502 = vadd.f32 0.0, %v6501
          %v6503 = vpop.f32.mrf.mxu0
          %v6504 = vadd.f32 0.0, %v6503
          %v6505 = vpop.f32.mrf.mxu0
          %v6506 = vpop.f32.mrf.mxu0
          %6507 = vdwg.mxu0
          %6508 = vmatprep.subr.bf16.mxu0 %v6320
          %6509 = vmatpush1.bf16.msra.mxu0 %v6319
          %6510 = vmatprep.subr.bf16.mxu0 %v6312
          %6511 = vmatpush1.bf16.msra.mxu0 %v6311
          %6512 = vmatprep.subr.bf16.mxu0 %v6304
          %6513 = vmatpush1.bf16.msra.mxu0 %v6303
          %6514 = vmatprep.subr.bf16.mxu0 %v6296
          %6515 = vmatpush1.bf16.msra.mxu0 %v6295
          %6516 = vmatprep.subr.bf16.mxu0 %v6288
          %6517 = vmatpush1.bf16.msra.mxu0 %v6287
          %6518 = vmatprep.subr.bf16.mxu0 %v6280
          %6519 = vmatpush1.bf16.msra.mxu0 %v6279
          %6520 = vmatprep.subr.bf16.mxu0 %v6272
          %6521 = vmatpush1.bf16.msra.mxu0 %v6271
          %6522 = vmatprep.subr.bf16.mxu0 %v6264
          %6523 = vmatpush1.bf16.msra.mxu0 %v6263
          %6524 = vmatprep.subr.bf16.mxu0 0
          %6525 = vmatpush2.bf16.msra.mxu0 0
          %6526 = vmatprep.subr.bf16.mxu0 0
          %6527 = vmatpush2.bf16.msra.mxu0 0
          %6528 = vmatprep.subr.bf16.mxu0 0
          %6529 = vmatpush2.bf16.msra.mxu0 0
          %6530 = vmatprep.subr.bf16.mxu0 0
          %6531 = vmatpush2.bf16.msra.mxu0 0
          %6532 = vmatprep.subr.bf16.mxu0 0
          %6533 = vmatpush2.bf16.msra.mxu0 0
          %6534 = vmatprep.subr.bf16.mxu0 0
          %6535 = vmatpush2.bf16.msra.mxu0 0
          %6536 = vmatprep.subr.bf16.mxu0 0
          %6537 = vmatpush2.bf16.msra.mxu0 0
          %6538 = vmatprep.subr.bf16.mxu0 0
          %6539 = vmatpush2.bf16.msra.mxu0 0
          %6540 = vmatprep.mubr.bf16.mxu0 0
          %6541 = vmatmul.mubr.bf16.gmra.mxu0 %v6000
          %v6542 = vpop.f32.mrf.mxu0
          %v6543 = vadd.f32 0.0, %v6542
          %v6544 = vpop.f32.mrf.mxu0
          %v6545 = vadd.f32 0.0, %v6544
          %v6546 = vpop.f32.mrf.mxu0
          %v6547 = vpop.f32.mrf.mxu0
          %6548 = vdwg.mxu0
          // Predicated region
          $region217: #{tpu_custom_call.1} parent=215 // pred_check
            _
          $region218: #{tpu_custom_call.1} parent=215 // pred_check_branch
            %6550 = sbr.rel (%p892) target = $region220
          $region219: #{tpu_custom_call.1} parent=215 // pred_region
            %6551 = vst [vmem:[#allocation7] sm:$0xff] 0.0
            %6552 = vst [vmem:[#allocation7 + $0x8] sm:$0xff] 0.0
            %6553 = vst [vmem:[#allocation7 + $0x10] sm:$0xff] 0.0
            %6554 = vst [vmem:[#allocation7 + $0x18] sm:$0xff] 0.0
            %6555 = vst [vmem:[#allocation7 + $0x20] sm:$0xff] 0.0
            %6556 = vst [vmem:[#allocation7 + $0x28] sm:$0xff] 0.0
            %6557 = vst [vmem:[#allocation7 + $0x30] sm:$0xff] 0.0
            %6558 = vst [vmem:[#allocation7 + $0x38] sm:$0xff] 0.0
            %6559 = vst [vmem:[#allocation7 + $0x40] sm:$0xff] 0.0
            %6560 = vst [vmem:[#allocation7 + $0x48] sm:$0xff] 0.0
            %6561 = vst [vmem:[#allocation7 + $0x50] sm:$0xff] 0.0
            %6562 = vst [vmem:[#allocation7 + $0x58] sm:$0xff] 0.0
            %6563 = vst [vmem:[#allocation7 + $0x60] sm:$0xff] 0.0
            %6564 = vst [vmem:[#allocation7 + $0x68] sm:$0xff] 0.0
            %6565 = vst [vmem:[#allocation7 + $0x70] sm:$0xff] 0.0
            %6566 = vst [vmem:[#allocation7 + $0x78] sm:$0xff] 0.0
          $region220: #{tpu_custom_call.1} parent=215 // pred_fallthru
            _
          %v6567 = vld [vmem:[#allocation7] sm:$0xff]
          %v6568 = vld [vmem:[#allocation7 + $0x8] sm:$0xff]
          %v6569 = vld [vmem:[#allocation7 + $0x10] sm:$0xff]
          %v6570 = vld [vmem:[#allocation7 + $0x18] sm:$0xff]
          %v6571 = vld [vmem:[#allocation7 + $0x20] sm:$0xff]
          %v6572 = vld [vmem:[#allocation7 + $0x28] sm:$0xff]
          %v6573 = vld [vmem:[#allocation7 + $0x30] sm:$0xff]
          %v6574 = vld [vmem:[#allocation7 + $0x38] sm:$0xff]
          %v6575 = vadd.f32 %v6420, 0.0
          %v6576 = vadd.f32 %v6422, 0.0
          %v6577 = vadd.f32 %v6461, 0.0
          %v6578 = vadd.f32 %v6463, 0.0
          %v6579 = vadd.f32 %v6502, 0.0
          %v6580 = vadd.f32 %v6504, 0.0
          %v6581 = vadd.f32 %v6543, 0.0
          %v6582 = vadd.f32 %v6545, 0.0
          %v6583 = vadd.f32 %v6567, %v6575
          %v6584 = vadd.f32 %v6568, %v6576
          %v6585 = vadd.f32 %v6569, %v6577
          %v6586 = vadd.f32 %v6570, %v6578
          %v6587 = vadd.f32 %v6571, %v6579
          %v6588 = vadd.f32 %v6572, %v6580
          %v6589 = vadd.f32 %v6573, %v6581
          %v6590 = vadd.f32 %v6574, %v6582
          %6591 = vst [vmem:[#allocation7] sm:$0xff] %v6583
          %6592 = vst [vmem:[#allocation7 + $0x8] sm:$0xff] %v6584
          %6593 = vst [vmem:[#allocation7 + $0x10] sm:$0xff] %v6585
          %6594 = vst [vmem:[#allocation7 + $0x18] sm:$0xff] %v6586
          %6595 = vst [vmem:[#allocation7 + $0x20] sm:$0xff] %v6587
          %6596 = vst [vmem:[#allocation7 + $0x28] sm:$0xff] %v6588
          %6597 = vst [vmem:[#allocation7 + $0x30] sm:$0xff] %v6589
          %6598 = vst [vmem:[#allocation7 + $0x38] sm:$0xff] %v6590
          %v6599 = vld [vmem:[#allocation7 + $0x40] sm:$0xff]
          %v6600 = vld [vmem:[#allocation7 + $0x48] sm:$0xff]
          %v6601 = vld [vmem:[#allocation7 + $0x50] sm:$0xff]
          %v6602 = vld [vmem:[#allocation7 + $0x58] sm:$0xff]
          %v6603 = vld [vmem:[#allocation7 + $0x60] sm:$0xff]
          %v6604 = vld [vmem:[#allocation7 + $0x68] sm:$0xff]
          %v6605 = vld [vmem:[#allocation7 + $0x70] sm:$0xff]
          %v6606 = vld [vmem:[#allocation7 + $0x78] sm:$0xff]
          %v6607 = vmul.f32 %v6420, %v6420
          %v6608 = vmul.f32 %v6422, %v6422
          %v6609 = vmul.f32 %v6461, %v6461
          %v6610 = vmul.f32 %v6463, %v6463
          %v6611 = vmul.f32 %v6502, %v6502
          %v6612 = vmul.f32 %v6504, %v6504
          %v6613 = vmul.f32 %v6543, %v6543
          %v6614 = vmul.f32 %v6545, %v6545
          %v6615 = vadd.f32 %v6607, 0.0
          %v6616 = vadd.f32 %v6608, 0.0
          %v6617 = vadd.f32 %v6609, 0.0
          %v6618 = vadd.f32 %v6610, 0.0
          %v6619 = vadd.f32 %v6611, 0.0
          %v6620 = vadd.f32 %v6612, 0.0
          %v6621 = vadd.f32 %v6613, 0.0
          %v6622 = vadd.f32 %v6614, 0.0
          %v6623 = vadd.f32 %v6599, %v6615
          %v6624 = vadd.f32 %v6600, %v6616
          %v6625 = vadd.f32 %v6601, %v6617
          %v6626 = vadd.f32 %v6602, %v6618
          %v6627 = vadd.f32 %v6603, %v6619
          %v6628 = vadd.f32 %v6604, %v6620
          %v6629 = vadd.f32 %v6605, %v6621
          %v6630 = vadd.f32 %v6606, %v6622
          %6631 = vst [vmem:[#allocation7 + $0x40] sm:$0xff] %v6623
          %6632 = vst [vmem:[#allocation7 + $0x48] sm:$0xff] %v6624
          %6633 = vst [vmem:[#allocation7 + $0x50] sm:$0xff] %v6625
          %6634 = vst [vmem:[#allocation7 + $0x58] sm:$0xff] %v6626
          %6635 = vst [vmem:[#allocation7 + $0x60] sm:$0xff] %v6627
          %6636 = vst [vmem:[#allocation7 + $0x68] sm:$0xff] %v6628
          %6637 = vst [vmem:[#allocation7 + $0x70] sm:$0xff] %v6629
          %6638 = vst [vmem:[#allocation7 + $0x78] sm:$0xff] %v6630
          // Predicated region
          $region221: #{tpu_custom_call.1} parent=215 // pred_check
            %p6639 = pneg %p891
          $region222: #{tpu_custom_call.1} parent=215 // pred_check_branch
            %6641 = sbr.rel (%p6639) target = $region224
          $region223: #{tpu_custom_call.1} parent=215 // pred_region
            %6642 = vst [vmem:[#allocation8] sm:$0xff] -inf
            %6643 = vst [vmem:[#allocation8 + $0x8] sm:$0xff] -inf
            %6644 = vst [vmem:[#allocation8 + $0x10] sm:$0xff] -inf
            %6645 = vst [vmem:[#allocation8 + $0x18] sm:$0xff] -inf
            %6646 = vst [vmem:[#allocation8 + $0x20] sm:$0xff] -inf
            %6647 = vst [vmem:[#allocation8 + $0x28] sm:$0xff] -inf
            %6648 = vst [vmem:[#allocation8 + $0x30] sm:$0xff] -inf
            %6649 = vst [vmem:[#allocation8 + $0x38] sm:$0xff] -inf
            %6650 = vst [vmem:[#allocation9] sm:$0xff] inf
            %6651 = vst [vmem:[#allocation9 + $0x8] sm:$0xff] inf
            %6652 = vst [vmem:[#allocation9 + $0x10] sm:$0xff] inf
            %6653 = vst [vmem:[#allocation9 + $0x18] sm:$0xff] inf
            %6654 = vst [vmem:[#allocation9 + $0x20] sm:$0xff] inf
            %6655 = vst [vmem:[#allocation9 + $0x28] sm:$0xff] inf
            %6656 = vst [vmem:[#allocation9 + $0x30] sm:$0xff] inf
            %6657 = vst [vmem:[#allocation9 + $0x38] sm:$0xff] inf
          $region224: #{tpu_custom_call.1} parent=215 // pred_fallthru
            _
          %v6658 = vld [vmem:[#allocation8] sm:$0xff]
          %v6659 = vld [vmem:[#allocation8 + $0x8] sm:$0xff]
          %v6660 = vld [vmem:[#allocation8 + $0x10] sm:$0xff]
          %v6661 = vld [vmem:[#allocation8 + $0x18] sm:$0xff]
          %v6662 = vld [vmem:[#allocation8 + $0x20] sm:$0xff]
          %v6663 = vld [vmem:[#allocation8 + $0x28] sm:$0xff]
          %v6664 = vld [vmem:[#allocation8 + $0x30] sm:$0xff]
          %v6665 = vld [vmem:[#allocation8 + $0x38] sm:$0xff]
          %v6666 = vmax.f32 %v6658, %v6420
          %v6667 = vmax.f32 %v6659, %v6422
          %v6668 = vmax.f32 %v6660, %v6461
          %v6669 = vmax.f32 %v6661, %v6463
          %v6670 = vmax.f32 %v6662, %v6502
          %v6671 = vmax.f32 %v6663, %v6504
          %v6672 = vmax.f32 %v6664, %v6543
          %v6673 = vmax.f32 %v6665, %v6545
          %6674 = vst [vmem:[#allocation8] sm:$0xff] %v6666
          %6675 = vst [vmem:[#allocation8 + $0x8] sm:$0xff] %v6667
          %6676 = vst [vmem:[#allocation8 + $0x10] sm:$0xff] %v6668
          %6677 = vst [vmem:[#allocation8 + $0x18] sm:$0xff] %v6669
          %6678 = vst [vmem:[#allocation8 + $0x20] sm:$0xff] %v6670
          %6679 = vst [vmem:[#allocation8 + $0x28] sm:$0xff] %v6671
          %6680 = vst [vmem:[#allocation8 + $0x30] sm:$0xff] %v6672
          %6681 = vst [vmem:[#allocation8 + $0x38] sm:$0xff] %v6673
          %v6682 = vld [vmem:[#allocation9] sm:$0xff]
          %v6683 = vld [vmem:[#allocation9 + $0x8] sm:$0xff]
          %v6684 = vld [vmem:[#allocation9 + $0x10] sm:$0xff]
          %v6685 = vld [vmem:[#allocation9 + $0x18] sm:$0xff]
          %v6686 = vld [vmem:[#allocation9 + $0x20] sm:$0xff]
          %v6687 = vld [vmem:[#allocation9 + $0x28] sm:$0xff]
          %v6688 = vld [vmem:[#allocation9 + $0x30] sm:$0xff]
          %v6689 = vld [vmem:[#allocation9 + $0x38] sm:$0xff]
          %v6690 = vmin.f32 %v6682, %v6420
          %v6691 = vmin.f32 %v6683, %v6422
          %v6692 = vmin.f32 %v6684, %v6461
          %v6693 = vmin.f32 %v6685, %v6463
          %v6694 = vmin.f32 %v6686, %v6502
          %v6695 = vmin.f32 %v6687, %v6504
          %v6696 = vmin.f32 %v6688, %v6543
          %v6697 = vmin.f32 %v6689, %v6545
          %6698 = vst [vmem:[#allocation9] sm:$0xff] %v6690
          %6699 = vst [vmem:[#allocation9 + $0x8] sm:$0xff] %v6691
          %6700 = vst [vmem:[#allocation9 + $0x10] sm:$0xff] %v6692
          %6701 = vst [vmem:[#allocation9 + $0x18] sm:$0xff] %v6693
          %6702 = vst [vmem:[#allocation9 + $0x20] sm:$0xff] %v6694
          %6703 = vst [vmem:[#allocation9 + $0x28] sm:$0xff] %v6695
          %6704 = vst [vmem:[#allocation9 + $0x30] sm:$0xff] %v6696
          %6705 = vst [vmem:[#allocation9 + $0x38] sm:$0xff] %v6697
          // Predicated region
          $region225: #{tpu_custom_call.1} parent=215 // pred_check
            %p6706 = pneg %p895
          $region226: #{tpu_custom_call.1} parent=215 // pred_check_branch
            %6708 = sbr.rel (%p6706) target = $region228
          $region227: #{tpu_custom_call.1} parent=215 // pred_region
            %v6709 = vld [vmem:[#allocation8] sm:$0xff]
            %v6710 = vld [vmem:[#allocation8 + $0x8] sm:$0xff]
            %v6711 = vld [vmem:[#allocation8 + $0x10] sm:$0xff]
            %v6712 = vld [vmem:[#allocation8 + $0x18] sm:$0xff]
            %v6713 = vld [vmem:[#allocation8 + $0x20] sm:$0xff]
            %v6714 = vld [vmem:[#allocation8 + $0x28] sm:$0xff]
            %v6715 = vld [vmem:[#allocation8 + $0x30] sm:$0xff]
            %v6716 = vld [vmem:[#allocation8 + $0x38] sm:$0xff]
            %v6717 = vrot.slane %v6709, 4
            %v6718 = vmax.f32 %v6709, %v6717
            %v6719 = vrot.slane %v6718, 2
            %v6720 = vmax.f32 %v6718, %v6719
            %v6721 = vrot.slane %v6720, 1
            %v6722 = vmax.f32 %v6720, %v6721
            %v6723 = vrot.slane %v6710, 4
            %v6724 = vmax.f32 %v6710, %v6723
            %v6725 = vrot.slane %v6724, 2
            %v6726 = vmax.f32 %v6724, %v6725
            %v6727 = vrot.slane %v6726, 1
            %v6728 = vmax.f32 %v6726, %v6727
            %v6729 = vrot.slane %v6711, 4
            %v6730 = vmax.f32 %v6711, %v6729
            %v6731 = vrot.slane %v6730, 2
            %v6732 = vmax.f32 %v6730, %v6731
            %v6733 = vrot.slane %v6732, 1
            %v6734 = vmax.f32 %v6732, %v6733
            %v6735 = vrot.slane %v6712, 4
            %v6736 = vmax.f32 %v6712, %v6735
            %v6737 = vrot.slane %v6736, 2
            %v6738 = vmax.f32 %v6736, %v6737
            %v6739 = vrot.slane %v6738, 1
            %v6740 = vmax.f32 %v6738, %v6739
            %v6741 = vrot.slane %v6713, 4
            %v6742 = vmax.f32 %v6713, %v6741
            %v6743 = vrot.slane %v6742, 2
            %v6744 = vmax.f32 %v6742, %v6743
            %v6745 = vrot.slane %v6744, 1
            %v6746 = vmax.f32 %v6744, %v6745
            %v6747 = vrot.slane %v6714, 4
            %v6748 = vmax.f32 %v6714, %v6747
            %v6749 = vrot.slane %v6748, 2
            %v6750 = vmax.f32 %v6748, %v6749
            %v6751 = vrot.slane %v6750, 1
            %v6752 = vmax.f32 %v6750, %v6751
            %v6753 = vrot.slane %v6715, 4
            %v6754 = vmax.f32 %v6715, %v6753
            %v6755 = vrot.slane %v6754, 2
            %v6756 = vmax.f32 %v6754, %v6755
            %v6757 = vrot.slane %v6756, 1
            %v6758 = vmax.f32 %v6756, %v6757
            %v6759 = vrot.slane %v6716, 4
            %v6760 = vmax.f32 %v6716, %v6759
            %v6761 = vrot.slane %v6760, 2
            %v6762 = vmax.f32 %v6760, %v6761
            %v6763 = vrot.slane %v6762, 1
            %v6764 = vmax.f32 %v6762, %v6763
            %v6773 = vcombine.low %v6722, %v6728
            %v6774 = vcombine.low %v6734, %v6740
            %v6775 = vcombine.low %v6746, %v6752
            %v6776 = vcombine.low %v6758, %v6764
            %v6778 = vunpack.c.l.s4 1966171168
            %v6779 = vunpack.c.0.s8 %v6778
            %v6780 = vlaneseq
            %v6781 = vshrl.u32 %v6780, 7
            %v6782 = vsub.s32 %v6779, %v6781
            %v6783 = vrot.slane %v6773, %v6782
            %v6785 = vunpack.c.l.s4 1966171168
            %v6786 = vunpack.c.0.s8 %v6785
            %v6787 = vlaneseq
            %v6788 = vshrl.u32 %v6787, 7
            %v6789 = vsub.s32 %v6786, %v6788
            %v6790 = vrot.slane %v6774, %v6789
            %v6792 = vunpack.c.l.s4 1966171168
            %v6793 = vunpack.c.0.s8 %v6792
            %v6794 = vlaneseq
            %v6795 = vshrl.u32 %v6794, 7
            %v6796 = vsub.s32 %v6793, %v6795
            %v6797 = vrot.slane %v6775, %v6796
            %v6799 = vunpack.c.l.s4 1966171168
            %v6800 = vunpack.c.0.s8 %v6799
            %v6801 = vlaneseq
            %v6802 = vshrl.u32 %v6801, 7
            %v6803 = vsub.s32 %v6800, %v6802
            %v6804 = vrot.slane %v6776, %v6803
            %v6805 = vcombine.low %v6783, %v6790
            %v6806 = vcombine.low %v6797, %v6804
            %v6808 = vunpack.c.l.s4 1966171168
            %v6809 = vunpack.c.0.s8 %v6808
            %v6810 = vlaneseq
            %v6811 = vshrl.u32 %v6810, 7
            %v6812 = vsub.s32 %v6809, %v6811
            %v6813 = vrot.slane %v6805, %v6812
            %v6815 = vunpack.c.l.s4 1966171168
            %v6816 = vunpack.c.0.s8 %v6815
            %v6817 = vlaneseq
            %v6818 = vshrl.u32 %v6817, 7
            %v6819 = vsub.s32 %v6816, %v6818
            %v6820 = vrot.slane %v6806, %v6819
            %v6821 = vcombine.low %v6813, %v6820
            %s6823 = sshra.s32 %s51, 1
            %s6824 = sand.u32 %s51, 1
            %s6825 = sshra.s32 %s51, 1
            %s6826 = sand.u32 %s51, 1
            %s6827 = smul.u32 %s6823, 8
            %s6828 = smul.u32 %s6827, 2
            %s6829 = sadd.s32 %s6828, %s6826
            %s6830 = scalar_lea.vmem [#allocation10], %s6829
            %6831 = vst [vmem:[%s6830] ss:$2 sm:$0xff] %v6821
            %v6832 = vld [vmem:[#allocation9] sm:$0xff]
            %v6833 = vld [vmem:[#allocation9 + $0x8] sm:$0xff]
            %v6834 = vld [vmem:[#allocation9 + $0x10] sm:$0xff]
            %v6835 = vld [vmem:[#allocation9 + $0x18] sm:$0xff]
            %v6836 = vld [vmem:[#allocation9 + $0x20] sm:$0xff]
            %v6837 = vld [vmem:[#allocation9 + $0x28] sm:$0xff]
            %v6838 = vld [vmem:[#allocation9 + $0x30] sm:$0xff]
            %v6839 = vld [vmem:[#allocation9 + $0x38] sm:$0xff]
            %v6840 = vrot.slane %v6832, 4
            %v6841 = vmin.f32 %v6832, %v6840
            %v6842 = vrot.slane %v6841, 2
            %v6843 = vmin.f32 %v6841, %v6842
            %v6844 = vrot.slane %v6843, 1
            %v6845 = vmin.f32 %v6843, %v6844
            %v6846 = vrot.slane %v6833, 4
            %v6847 = vmin.f32 %v6833, %v6846
            %v6848 = vrot.slane %v6847, 2
            %v6849 = vmin.f32 %v6847, %v6848
            %v6850 = vrot.slane %v6849, 1
            %v6851 = vmin.f32 %v6849, %v6850
            %v6852 = vrot.slane %v6834, 4
            %v6853 = vmin.f32 %v6834, %v6852
            %v6854 = vrot.slane %v6853, 2
            %v6855 = vmin.f32 %v6853, %v6854
            %v6856 = vrot.slane %v6855, 1
            %v6857 = vmin.f32 %v6855, %v6856
            %v6858 = vrot.slane %v6835, 4
            %v6859 = vmin.f32 %v6835, %v6858
            %v6860 = vrot.slane %v6859, 2
            %v6861 = vmin.f32 %v6859, %v6860
            %v6862 = vrot.slane %v6861, 1
            %v6863 = vmin.f32 %v6861, %v6862
            %v6864 = vrot.slane %v6836, 4
            %v6865 = vmin.f32 %v6836, %v6864
            %v6866 = vrot.slane %v6865, 2
            %v6867 = vmin.f32 %v6865, %v6866
            %v6868 = vrot.slane %v6867, 1
            %v6869 = vmin.f32 %v6867, %v6868
            %v6870 = vrot.slane %v6837, 4
            %v6871 = vmin.f32 %v6837, %v6870
            %v6872 = vrot.slane %v6871, 2
            %v6873 = vmin.f32 %v6871, %v6872
            %v6874 = vrot.slane %v6873, 1
            %v6875 = vmin.f32 %v6873, %v6874
            %v6876 = vrot.slane %v6838, 4
            %v6877 = vmin.f32 %v6838, %v6876
            %v6878 = vrot.slane %v6877, 2
            %v6879 = vmin.f32 %v6877, %v6878
            %v6880 = vrot.slane %v6879, 1
            %v6881 = vmin.f32 %v6879, %v6880
            %v6882 = vrot.slane %v6839, 4
            %v6883 = vmin.f32 %v6839, %v6882
            %v6884 = vrot.slane %v6883, 2
            %v6885 = vmin.f32 %v6883, %v6884
            %v6886 = vrot.slane %v6885, 1
            %v6887 = vmin.f32 %v6885, %v6886
            %v6896 = vcombine.low %v6845, %v6851
            %v6897 = vcombine.low %v6857, %v6863
            %v6898 = vcombine.low %v6869, %v6875
            %v6899 = vcombine.low %v6881, %v6887
            %v6901 = vunpack.c.l.s4 1966171168
            %v6902 = vunpack.c.0.s8 %v6901
            %v6903 = vlaneseq
            %v6904 = vshrl.u32 %v6903, 7
            %v6905 = vsub.s32 %v6902, %v6904
            %v6906 = vrot.slane %v6896, %v6905
            %v6908 = vunpack.c.l.s4 1966171168
            %v6909 = vunpack.c.0.s8 %v6908
            %v6910 = vlaneseq
            %v6911 = vshrl.u32 %v6910, 7
            %v6912 = vsub.s32 %v6909, %v6911
            %v6913 = vrot.slane %v6897, %v6912
            %v6915 = vunpack.c.l.s4 1966171168
            %v6916 = vunpack.c.0.s8 %v6915
            %v6917 = vlaneseq
            %v6918 = vshrl.u32 %v6917, 7
            %v6919 = vsub.s32 %v6916, %v6918
            %v6920 = vrot.slane %v6898, %v6919
            %v6922 = vunpack.c.l.s4 1966171168
            %v6923 = vunpack.c.0.s8 %v6922
            %v6924 = vlaneseq
            %v6925 = vshrl.u32 %v6924, 7
            %v6926 = vsub.s32 %v6923, %v6925
            %v6927 = vrot.slane %v6899, %v6926
            %v6928 = vcombine.low %v6906, %v6913
            %v6929 = vcombine.low %v6920, %v6927
            %v6931 = vunpack.c.l.s4 1966171168
            %v6932 = vunpack.c.0.s8 %v6931
            %v6933 = vlaneseq
            %v6934 = vshrl.u32 %v6933, 7
            %v6935 = vsub.s32 %v6932, %v6934
            %v6936 = vrot.slane %v6928, %v6935
            %v6938 = vunpack.c.l.s4 1966171168
            %v6939 = vunpack.c.0.s8 %v6938
            %v6940 = vlaneseq
            %v6941 = vshrl.u32 %v6940, 7
            %v6942 = vsub.s32 %v6939, %v6941
            %v6943 = vrot.slane %v6929, %v6942
            %v6944 = vcombine.low %v6936, %v6943
            %s6946 = scalar_lea.vmem [#allocation11], %s6829
            %6947 = vst [vmem:[%s6946] ss:$2 sm:$0xff] %v6944
          $region228: #{tpu_custom_call.1} parent=215 // pred_fallthru
            _
          // Predicated region
          $region229: #{tpu_custom_call.1} parent=215 // pred_check
            _
          $region230: #{tpu_custom_call.1} parent=215 // pred_check_branch
            %6949 = sbr.rel (%p896) target = $region232
          $region231: #{tpu_custom_call.1} parent=215 // pred_region
            %v6950 = vld [vmem:[#allocation7] sm:$0xff]
            %v6951 = vld [vmem:[#allocation7 + $0x8] sm:$0xff]
            %v6952 = vld [vmem:[#allocation7 + $0x10] sm:$0xff]
            %v6953 = vld [vmem:[#allocation7 + $0x18] sm:$0xff]
            %v6954 = vld [vmem:[#allocation7 + $0x20] sm:$0xff]
            %v6955 = vld [vmem:[#allocation7 + $0x28] sm:$0xff]
            %v6956 = vld [vmem:[#allocation7 + $0x30] sm:$0xff]
            %v6957 = vld [vmem:[#allocation7 + $0x38] sm:$0xff]
            %v6958 = vrot.slane %v6950, 4
            %v6959 = vadd.f32 %v6950, %v6958
            %v6960 = vrot.slane %v6959, 2
            %v6961 = vadd.f32 %v6959, %v6960
            %v6962 = vrot.slane %v6961, 1
            %v6963 = vadd.f32 %v6961, %v6962
            %v6964 = vrot.slane %v6951, 4
            %v6965 = vadd.f32 %v6951, %v6964
            %v6966 = vrot.slane %v6965, 2
            %v6967 = vadd.f32 %v6965, %v6966
            %v6968 = vrot.slane %v6967, 1
            %v6969 = vadd.f32 %v6967, %v6968
            %v6970 = vrot.slane %v6952, 4
            %v6971 = vadd.f32 %v6952, %v6970
            %v6972 = vrot.slane %v6971, 2
            %v6973 = vadd.f32 %v6971, %v6972
            %v6974 = vrot.slane %v6973, 1
            %v6975 = vadd.f32 %v6973, %v6974
            %v6976 = vrot.slane %v6953, 4
            %v6977 = vadd.f32 %v6953, %v6976
            %v6978 = vrot.slane %v6977, 2
            %v6979 = vadd.f32 %v6977, %v6978
            %v6980 = vrot.slane %v6979, 1
            %v6981 = vadd.f32 %v6979, %v6980
            %v6982 = vrot.slane %v6954, 4
            %v6983 = vadd.f32 %v6954, %v6982
            %v6984 = vrot.slane %v6983, 2
            %v6985 = vadd.f32 %v6983, %v6984
            %v6986 = vrot.slane %v6985, 1
            %v6987 = vadd.f32 %v6985, %v6986
            %v6988 = vrot.slane %v6955, 4
            %v6989 = vadd.f32 %v6955, %v6988
            %v6990 = vrot.slane %v6989, 2
            %v6991 = vadd.f32 %v6989, %v6990
            %v6992 = vrot.slane %v6991, 1
            %v6993 = vadd.f32 %v6991, %v6992
            %v6994 = vrot.slane %v6956, 4
            %v6995 = vadd.f32 %v6956, %v6994
            %v6996 = vrot.slane %v6995, 2
            %v6997 = vadd.f32 %v6995, %v6996
            %v6998 = vrot.slane %v6997, 1
            %v6999 = vadd.f32 %v6997, %v6998
            %v7000 = vrot.slane %v6957, 4
            %v7001 = vadd.f32 %v6957, %v7000
            %v7002 = vrot.slane %v7001, 2
            %v7003 = vadd.f32 %v7001, %v7002
            %v7004 = vrot.slane %v7003, 1
            %v7005 = vadd.f32 %v7003, %v7004
            %v7006 = vld [vmem:[#allocation7 + $0x40] sm:$0xff]
            %v7007 = vld [vmem:[#allocation7 + $0x48] sm:$0xff]
            %v7008 = vld [vmem:[#allocation7 + $0x50] sm:$0xff]
            %v7009 = vld [vmem:[#allocation7 + $0x58] sm:$0xff]
            %v7010 = vld [vmem:[#allocation7 + $0x60] sm:$0xff]
            %v7011 = vld [vmem:[#allocation7 + $0x68] sm:$0xff]
            %v7012 = vld [vmem:[#allocation7 + $0x70] sm:$0xff]
            %v7013 = vld [vmem:[#allocation7 + $0x78] sm:$0xff]
            %v7014 = vrot.slane %v7006, 4
            %v7015 = vadd.f32 %v7006, %v7014
            %v7016 = vrot.slane %v7015, 2
            %v7017 = vadd.f32 %v7015, %v7016
            %v7018 = vrot.slane %v7017, 1
            %v7019 = vadd.f32 %v7017, %v7018
            %v7020 = vrot.slane %v7007, 4
            %v7021 = vadd.f32 %v7007, %v7020
            %v7022 = vrot.slane %v7021, 2
            %v7023 = vadd.f32 %v7021, %v7022
            %v7024 = vrot.slane %v7023, 1
            %v7025 = vadd.f32 %v7023, %v7024
            %v7026 = vrot.slane %v7008, 4
            %v7027 = vadd.f32 %v7008, %v7026
            %v7028 = vrot.slane %v7027, 2
            %v7029 = vadd.f32 %v7027, %v7028
            %v7030 = vrot.slane %v7029, 1
            %v7031 = vadd.f32 %v7029, %v7030
            %v7032 = vrot.slane %v7009, 4
            %v7033 = vadd.f32 %v7009, %v7032
            %v7034 = vrot.slane %v7033, 2
            %v7035 = vadd.f32 %v7033, %v7034
            %v7036 = vrot.slane %v7035, 1
            %v7037 = vadd.f32 %v7035, %v7036
            %v7038 = vrot.slane %v7010, 4
            %v7039 = vadd.f32 %v7010, %v7038
            %v7040 = vrot.slane %v7039, 2
            %v7041 = vadd.f32 %v7039, %v7040
            %v7042 = vrot.slane %v7041, 1
            %v7043 = vadd.f32 %v7041, %v7042
            %v7044 = vrot.slane %v7011, 4
            %v7045 = vadd.f32 %v7011, %v7044
            %v7046 = vrot.slane %v7045, 2
            %v7047 = vadd.f32 %v7045, %v7046
            %v7048 = vrot.slane %v7047, 1
            %v7049 = vadd.f32 %v7047, %v7048
            %v7050 = vrot.slane %v7012, 4
            %v7051 = vadd.f32 %v7012, %v7050
            %v7052 = vrot.slane %v7051, 2
            %v7053 = vadd.f32 %v7051, %v7052
            %v7054 = vrot.slane %v7053, 1
            %v7055 = vadd.f32 %v7053, %v7054
            %v7056 = vrot.slane %v7013, 4
            %v7057 = vadd.f32 %v7013, %v7056
            %v7058 = vrot.slane %v7057, 2
            %v7059 = vadd.f32 %v7057, %v7058
            %v7060 = vrot.slane %v7059, 1
            %v7061 = vadd.f32 %v7059, %v7060
            %v7062 = vmul.f32 %v6963, 0.03125
            %v7063 = vmul.f32 %v6969, 0.03125
            %v7064 = vmul.f32 %v6975, 0.03125
            %v7065 = vmul.f32 %v6981, 0.03125
            %v7066 = vmul.f32 %v6987, 0.03125
            %v7067 = vmul.f32 %v6993, 0.03125
            %v7068 = vmul.f32 %v6999, 0.03125
            %v7069 = vmul.f32 %v7005, 0.03125
            %v7070 = vmul.f32 %v7019, 0.03125
            %v7071 = vmul.f32 %v7025, 0.03125
            %v7072 = vmul.f32 %v7031, 0.03125
            %v7073 = vmul.f32 %v7037, 0.03125
            %v7074 = vmul.f32 %v7043, 0.03125
            %v7075 = vmul.f32 %v7049, 0.03125
            %v7076 = vmul.f32 %v7055, 0.03125
            %v7077 = vmul.f32 %v7061, 0.03125
            %v7078 = vmul.f32 %v7062, %v7062
            %v7079 = vmul.f32 %v7063, %v7063
            %v7080 = vmul.f32 %v7064, %v7064
            %v7081 = vmul.f32 %v7065, %v7065
            %v7082 = vmul.f32 %v7066, %v7066
            %v7083 = vmul.f32 %v7067, %v7067
            %v7084 = vmul.f32 %v7068, %v7068
            %v7085 = vmul.f32 %v7069, %v7069
            %v7086 = vsub.f32 %v7070, %v7078
            %v7087 = vsub.f32 %v7071, %v7079
            %v7088 = vsub.f32 %v7072, %v7080
            %v7089 = vsub.f32 %v7073, %v7081
            %v7090 = vsub.f32 %v7074, %v7082
            %v7091 = vsub.f32 %v7075, %v7083
            %v7092 = vsub.f32 %v7076, %v7084
            %v7093 = vsub.f32 %v7077, %v7085
            %v7094 = vmax.f32 %v7086, 0.0
            %v7095 = vmax.f32 %v7087, 0.0
            %v7096 = vmax.f32 %v7088, 0.0
            %v7097 = vmax.f32 %v7089, 0.0
            %v7098 = vmax.f32 %v7090, 0.0
            %v7099 = vmax.f32 %v7091, 0.0
            %v7100 = vmax.f32 %v7092, 0.0
            %v7101 = vmax.f32 %v7093, 0.0
            %v7102 = vld [vmem:[%s25] sm:$0xff]
            %v7103 = vadd.f32 %v7094, 1e-05
            %v7104 = vadd.f32 %v7095, 1e-05
            %v7105 = vadd.f32 %v7096, 1e-05
            %v7106 = vadd.f32 %v7097, 1e-05
            %v7107 = vadd.f32 %v7098, 1e-05
            %v7108 = vadd.f32 %v7099, 1e-05
            %v7109 = vadd.f32 %v7100, 1e-05
            %v7110 = vadd.f32 %v7101, 1e-05
            %v7111 = vrsqrt.pop %v7103
            %v7112 = vrsqrt.pop %v7104
            %v7113 = vrsqrt.pop %v7105
            %v7114 = vrsqrt.pop %v7106
            %v7115 = vrsqrt.pop %v7107
            %v7116 = vrsqrt.pop %v7108
            %v7117 = vrsqrt.pop %v7109
            %v7118 = vrsqrt.pop %v7110
            %v7127 = vcombine.low %v7111, %v7112
            %v7128 = vcombine.low %v7113, %v7114
            %v7129 = vcombine.low %v7115, %v7116
            %v7130 = vcombine.low %v7117, %v7118
            %v7132 = vunpack.c.l.s4 1966171168
            %v7133 = vunpack.c.0.s8 %v7132
            %v7134 = vlaneseq
            %v7135 = vshrl.u32 %v7134, 7
            %v7136 = vsub.s32 %v7133, %v7135
            %v7137 = vrot.slane %v7127, %v7136
            %v7139 = vunpack.c.l.s4 1966171168
            %v7140 = vunpack.c.0.s8 %v7139
            %v7141 = vlaneseq
            %v7142 = vshrl.u32 %v7141, 7
            %v7143 = vsub.s32 %v7140, %v7142
            %v7144 = vrot.slane %v7128, %v7143
            %v7146 = vunpack.c.l.s4 1966171168
            %v7147 = vunpack.c.0.s8 %v7146
            %v7148 = vlaneseq
            %v7149 = vshrl.u32 %v7148, 7
            %v7150 = vsub.s32 %v7147, %v7149
            %v7151 = vrot.slane %v7129, %v7150
            %v7153 = vunpack.c.l.s4 1966171168
            %v7154 = vunpack.c.0.s8 %v7153
            %v7155 = vlaneseq
            %v7156 = vshrl.u32 %v7155, 7
            %v7157 = vsub.s32 %v7154, %v7156
            %v7158 = vrot.slane %v7130, %v7157
            %v7159 = vcombine.low %v7137, %v7144
            %v7160 = vcombine.low %v7151, %v7158
            %v7162 = vunpack.c.l.s4 1966171168
            %v7163 = vunpack.c.0.s8 %v7162
            %v7164 = vlaneseq
            %v7165 = vshrl.u32 %v7164, 7
            %v7166 = vsub.s32 %v7163, %v7165
            %v7167 = vrot.slane %v7159, %v7166
            %v7169 = vunpack.c.l.s4 1966171168
            %v7170 = vunpack.c.0.s8 %v7169
            %v7171 = vlaneseq
            %v7172 = vshrl.u32 %v7171, 7
            %v7173 = vsub.s32 %v7170, %v7172
            %v7174 = vrot.slane %v7160, %v7173
            %v7175 = vcombine.low %v7167, %v7174
            %v7177 = vmul.f32 %v7102, %v7175
            %v7178 = vld [vmem:[%s26] sm:$0xff]
            %v7180 = vlaneseq
            %v7181 = vshrl.u32 %v7180, 7
            %v7182 = vsub.s32 0, %v7181
            %v7183 = vrot.slane %v7177, %v7182
            %v7184 = vlaneseq
            %v7185 = vshrl.u32 %v7184, 7
            %v7186 = vsub.s32 1, %v7185
            %v7187 = vrot.slane %v7177, %v7186
            %v7188 = vlaneseq
            %v7189 = vshrl.u32 %v7188, 7
            %v7190 = vsub.s32 2, %v7189
            %v7191 = vrot.slane %v7177, %v7190
            %v7192 = vlaneseq
            %v7193 = vshrl.u32 %v7192, 7
            %v7194 = vsub.s32 3, %v7193
            %v7195 = vrot.slane %v7177, %v7194
            %v7196 = vlaneseq
            %v7197 = vshrl.u32 %v7196, 7
            %v7198 = vsub.s32 4, %v7197
            %v7199 = vrot.slane %v7177, %v7198
            %v7200 = vlaneseq
            %v7201 = vshrl.u32 %v7200, 7
            %v7202 = vsub.s32 5, %v7201
            %v7203 = vrot.slane %v7177, %v7202
            %v7204 = vlaneseq
            %v7205 = vshrl.u32 %v7204, 7
            %v7206 = vsub.s32 6, %v7205
            %v7207 = vrot.slane %v7177, %v7206
            %v7208 = vlaneseq
            %v7209 = vshrl.u32 %v7208, 7
            %v7210 = vsub.s32 7, %v7209
            %v7211 = vrot.slane %v7177, %v7210
            %v7220 = vmul.f32 %v7062, %v7183
            %v7221 = vmul.f32 %v7063, %v7187
            %v7222 = vmul.f32 %v7064, %v7191
            %v7223 = vmul.f32 %v7065, %v7195
            %v7224 = vmul.f32 %v7066, %v7199
            %v7225 = vmul.f32 %v7067, %v7203
            %v7226 = vmul.f32 %v7068, %v7207
            %v7227 = vmul.f32 %v7069, %v7211
            %v7236 = vcombine.low %v7220, %v7221
            %v7237 = vcombine.low %v7222, %v7223
            %v7238 = vcombine.low %v7224, %v7225
            %v7239 = vcombine.low %v7226, %v7227
            %v7241 = vunpack.c.l.s4 1966171168
            %v7242 = vunpack.c.0.s8 %v7241
            %v7243 = vlaneseq
            %v7244 = vshrl.u32 %v7243, 7
            %v7245 = vsub.s32 %v7242, %v7244
            %v7246 = vrot.slane %v7236, %v7245
            %v7248 = vunpack.c.l.s4 1966171168
            %v7249 = vunpack.c.0.s8 %v7248
            %v7250 = vlaneseq
            %v7251 = vshrl.u32 %v7250, 7
            %v7252 = vsub.s32 %v7249, %v7251
            %v7253 = vrot.slane %v7237, %v7252
            %v7255 = vunpack.c.l.s4 1966171168
            %v7256 = vunpack.c.0.s8 %v7255
            %v7257 = vlaneseq
            %v7258 = vshrl.u32 %v7257, 7
            %v7259 = vsub.s32 %v7256, %v7258
            %v7260 = vrot.slane %v7238, %v7259
            %v7262 = vunpack.c.l.s4 1966171168
            %v7263 = vunpack.c.0.s8 %v7262
            %v7264 = vlaneseq
            %v7265 = vshrl.u32 %v7264, 7
            %v7266 = vsub.s32 %v7263, %v7265
            %v7267 = vrot.slane %v7239, %v7266
            %v7268 = vcombine.low %v7246, %v7253
            %v7269 = vcombine.low %v7260, %v7267
            %v7271 = vunpack.c.l.s4 1966171168
            %v7272 = vunpack.c.0.s8 %v7271
            %v7273 = vlaneseq
            %v7274 = vshrl.u32 %v7273, 7
            %v7275 = vsub.s32 %v7272, %v7274
            %v7276 = vrot.slane %v7268, %v7275
            %v7278 = vunpack.c.l.s4 1966171168
            %v7279 = vunpack.c.0.s8 %v7278
            %v7280 = vlaneseq
            %v7281 = vshrl.u32 %v7280, 7
            %v7282 = vsub.s32 %v7279, %v7281
            %v7283 = vrot.slane %v7269, %v7282
            %v7284 = vcombine.low %v7276, %v7283
            %v7286 = vsub.f32 %v7178, %v7284
            %7287 = vst [vmem:[#allocation7] ss:$8 sm:$0xf] %v7177
            %7288 = vst [vmem:[#allocation7] ss:$8 sm:$0xf0] %v7177
            %s7289 = scalar_lea.vmem [#allocation7], 1
            %7290 = vst [vmem:[%s7289] ss:$8 sm:$0xf] %v7286
            %7291 = vst [vmem:[%s7289] ss:$8 sm:$0xf0] %v7286
            %vm7292 = vcmp.gt.f32.partialorder %v7177, 0.0
            %v7293 = vld [vmem:[#allocation10] sm:$0xff]
            %v7294 = vld [vmem:[#allocation10 + $0x8] sm:$0xff]
            %v7295 = vld [vmem:[#allocation11] sm:$0xff]
            %v7296 = vld [vmem:[#allocation11 + $0x8] sm:$0xff]
            %v7297 = vsel %vm7292, 1, 0
            %v7298 = vlaneseq
            %v7299 = vshrl.u32 %v7298, 7
            %v7300 = vsub.s32 0, %v7299
            %v7301 = vrot.slane %v7297, %v7300
            %v7302 = vlaneseq
            %v7303 = vshrl.u32 %v7302, 7
            %v7304 = vsub.s32 1, %v7303
            %v7305 = vrot.slane %v7297, %v7304
            %v7306 = vlaneseq
            %v7307 = vshrl.u32 %v7306, 7
            %v7308 = vsub.s32 2, %v7307
            %v7309 = vrot.slane %v7297, %v7308
            %v7310 = vlaneseq
            %v7311 = vshrl.u32 %v7310, 7
            %v7312 = vsub.s32 3, %v7311
            %v7313 = vrot.slane %v7297, %v7312
            %v7314 = vlaneseq
            %v7315 = vshrl.u32 %v7314, 7
            %v7316 = vsub.s32 4, %v7315
            %v7317 = vrot.slane %v7297, %v7316
            %v7318 = vlaneseq
            %v7319 = vshrl.u32 %v7318, 7
            %v7320 = vsub.s32 5, %v7319
            %v7321 = vrot.slane %v7297, %v7320
            %v7322 = vlaneseq
            %v7323 = vshrl.u32 %v7322, 7
            %v7324 = vsub.s32 6, %v7323
            %v7325 = vrot.slane %v7297, %v7324
            %v7326 = vlaneseq
            %v7327 = vshrl.u32 %v7326, 7
            %v7328 = vsub.s32 7, %v7327
            %v7329 = vrot.slane %v7297, %v7328
            %vm7330 = vcmp.eq.s32.totalorder %v7301, 1
            %vm7331 = vcmp.eq.s32.totalorder %v7305, 1
            %vm7332 = vcmp.eq.s32.totalorder %v7309, 1
            %vm7333 = vcmp.eq.s32.totalorder %v7313, 1
            %vm7334 = vcmp.eq.s32.totalorder %v7317, 1
            %vm7335 = vcmp.eq.s32.totalorder %v7321, 1
            %vm7336 = vcmp.eq.s32.totalorder %v7325, 1
            %vm7337 = vcmp.eq.s32.totalorder %v7329, 1
            %v7340 = vcombine.high %v7293, %v7293
            %v7342 = vunpack.c.l.s4 1983009808
            %v7343 = vunpack.c.0.s8 %v7342
            %v7344 = vlaneseq
            %v7345 = vshrl.u32 %v7344, 7
            %v7346 = vsub.s32 %v7343, %v7345
            %v7347 = vrot.slane %v7293, %v7346
            %v7349 = vunpack.c.l.s4 1983009808
            %v7350 = vunpack.c.0.s8 %v7349
            %v7351 = vlaneseq
            %v7352 = vshrl.u32 %v7351, 7
            %v7353 = vsub.s32 %v7350, %v7352
            %v7354 = vrot.slane %v7340, %v7353
            %v7355 = vcombine.high %v7347, %v7347
            %v7356 = vcombine.high %v7354, %v7354
            %v7357 = vcombine.high %v7294, %v7294
            %v7359 = vunpack.c.l.s4 1983009808
            %v7360 = vunpack.c.0.s8 %v7359
            %v7361 = vlaneseq
            %v7362 = vshrl.u32 %v7361, 7
            %v7363 = vsub.s32 %v7360, %v7362
            %v7364 = vrot.slane %v7294, %v7363
            %v7366 = vunpack.c.l.s4 1983009808
            %v7367 = vunpack.c.0.s8 %v7366
            %v7368 = vlaneseq
            %v7369 = vshrl.u32 %v7368, 7
            %v7370 = vsub.s32 %v7367, %v7369
            %v7371 = vrot.slane %v7357, %v7370
            %v7372 = vcombine.high %v7364, %v7364
            %v7373 = vcombine.high %v7371, %v7371
            %v7384 = vcombine.high %v7295, %v7295
            %v7386 = vunpack.c.l.s4 1983009808
            %v7387 = vunpack.c.0.s8 %v7386
            %v7388 = vlaneseq
            %v7389 = vshrl.u32 %v7388, 7
            %v7390 = vsub.s32 %v7387, %v7389
            %v7391 = vrot.slane %v7295, %v7390
            %v7393 = vunpack.c.l.s4 1983009808
            %v7394 = vunpack.c.0.s8 %v7393
            %v7395 = vlaneseq
            %v7396 = vshrl.u32 %v7395, 7
            %v7397 = vsub.s32 %v7394, %v7396
            %v7398 = vrot.slane %v7384, %v7397
            %v7399 = vcombine.high %v7391, %v7391
            %v7400 = vcombine.high %v7398, %v7398
            %v7401 = vcombine.high %v7296, %v7296
            %v7403 = vunpack.c.l.s4 1983009808
            %v7404 = vunpack.c.0.s8 %v7403
            %v7405 = vlaneseq
            %v7406 = vshrl.u32 %v7405, 7
            %v7407 = vsub.s32 %v7404, %v7406
            %v7408 = vrot.slane %v7296, %v7407
            %v7410 = vunpack.c.l.s4 1983009808
            %v7411 = vunpack.c.0.s8 %v7410
            %v7412 = vlaneseq
            %v7413 = vshrl.u32 %v7412, 7
            %v7414 = vsub.s32 %v7411, %v7413
            %v7415 = vrot.slane %v7401, %v7414
            %v7416 = vcombine.high %v7408, %v7408
            %v7417 = vcombine.high %v7415, %v7415
            %v7426 = vsel %vm7330, %v7347, %v7391
            %v7427 = vsel %vm7331, %v7355, %v7399
            %v7428 = vsel %vm7332, %v7354, %v7398
            %v7429 = vsel %vm7333, %v7356, %v7400
            %v7430 = vsel %vm7334, %v7364, %v7408
            %v7431 = vsel %vm7335, %v7372, %v7416
            %v7432 = vsel %vm7336, %v7371, %v7415
            %v7433 = vsel %vm7337, %v7373, %v7417
            %v7434 = vmul.f32 %v7426, %v7183
            %v7435 = vmul.f32 %v7427, %v7187
            %v7436 = vmul.f32 %v7428, %v7191
            %v7437 = vmul.f32 %v7429, %v7195
            %v7438 = vmul.f32 %v7430, %v7199
            %v7439 = vmul.f32 %v7431, %v7203
            %v7440 = vmul.f32 %v7432, %v7207
            %v7441 = vmul.f32 %v7433, %v7211
            %v7443 = vlaneseq
            %v7444 = vshrl.u32 %v7443, 7
            %v7445 = vsub.s32 0, %v7444
            %v7446 = vrot.slane %v7286, %v7445
            %v7447 = vlaneseq
            %v7448 = vshrl.u32 %v7447, 7
            %v7449 = vsub.s32 1, %v7448
            %v7450 = vrot.slane %v7286, %v7449
            %v7451 = vlaneseq
            %v7452 = vshrl.u32 %v7451, 7
            %v7453 = vsub.s32 2, %v7452
            %v7454 = vrot.slane %v7286, %v7453
            %v7455 = vlaneseq
            %v7456 = vshrl.u32 %v7455, 7
            %v7457 = vsub.s32 3, %v7456
            %v7458 = vrot.slane %v7286, %v7457
            %v7459 = vlaneseq
            %v7460 = vshrl.u32 %v7459, 7
            %v7461 = vsub.s32 4, %v7460
            %v7462 = vrot.slane %v7286, %v7461
            %v7463 = vlaneseq
            %v7464 = vshrl.u32 %v7463, 7
            %v7465 = vsub.s32 5, %v7464
            %v7466 = vrot.slane %v7286, %v7465
            %v7467 = vlaneseq
            %v7468 = vshrl.u32 %v7467, 7
            %v7469 = vsub.s32 6, %v7468
            %v7470 = vrot.slane %v7286, %v7469
            %v7471 = vlaneseq
            %v7472 = vshrl.u32 %v7471, 7
            %v7473 = vsub.s32 7, %v7472
            %v7474 = vrot.slane %v7286, %v7473
            %v7483 = vadd.f32 %v7434, %v7446
            %v7484 = vadd.f32 %v7435, %v7450
            %v7485 = vadd.f32 %v7436, %v7454
            %v7486 = vadd.f32 %v7437, %v7458
            %v7487 = vadd.f32 %v7438, %v7462
            %v7488 = vadd.f32 %v7439, %v7466
            %v7489 = vadd.f32 %v7440, %v7470
            %v7490 = vadd.f32 %v7441, %v7474
            %v7499 = vcombine.low %v7483, %v7484
            %v7500 = vcombine.low %v7485, %v7486
            %v7502 = vunpack.c.l.s4 1983009808
            %v7503 = vunpack.c.0.s8 %v7502
            %v7504 = vlaneseq
            %v7505 = vshrl.u32 %v7504, 7
            %v7506 = vsub.s32 %v7503, %v7505
            %v7507 = vrot.slane %v7499, %v7506
            %v7509 = vunpack.c.l.s4 1983009808
            %v7510 = vunpack.c.0.s8 %v7509
            %v7511 = vlaneseq
            %v7512 = vshrl.u32 %v7511, 7
            %v7513 = vsub.s32 %v7510, %v7512
            %v7514 = vrot.slane %v7500, %v7513
            %v7515 = vcombine.low %v7507, %v7514
            %v7516 = vcombine.low %v7487, %v7488
            %v7517 = vcombine.low %v7489, %v7490
            %v7519 = vunpack.c.l.s4 1983009808
            %v7520 = vunpack.c.0.s8 %v7519
            %v7521 = vlaneseq
            %v7522 = vshrl.u32 %v7521, 7
            %v7523 = vsub.s32 %v7520, %v7522
            %v7524 = vrot.slane %v7516, %v7523
            %v7526 = vunpack.c.l.s4 1983009808
            %v7527 = vunpack.c.0.s8 %v7526
            %v7528 = vlaneseq
            %v7529 = vshrl.u32 %v7528, 7
            %v7530 = vsub.s32 %v7527, %v7529
            %v7531 = vrot.slane %v7517, %v7530
            %v7532 = vcombine.low %v7524, %v7531
            %7535 = vst [vmem:[#allocation21] sm:$0xff] %v7515
            %7536 = vst [vmem:[#allocation21 + $0x8] sm:$0xff] %v7532
          $region232: #{tpu_custom_call.1} parent=215 // pred_fallthru
            _
        $region216: #{tpu_custom_call.1} parent=127 // pred_fallthru
          _
        // Predicated region
        $region233: #{tpu_custom_call.1} parent=127 // pred_check
          %p7537 = pneg %p644
        $region234: #{tpu_custom_call.1} parent=127 // pred_check_branch
          %7539 = sbr.rel (%p7537) target = $region236
        $region235: #{tpu_custom_call.1} parent=127 // pred_region
          %s7541 = ssub.s32 256, 256
          %7542 = vsyncadd [#allocation15], %s7541
          %s7544 = sshll.u32 [#allocation21], 4
          %s7545 = int_to_ptr.vmem [resolvable:$true] %s7544
          %7547 = dma.vmem_to_hbm [thread:$0]  %s7545, 256, %s27, [#allocation15]
        $region236: #{tpu_custom_call.1} parent=127 // pred_fallthru
          _
        // Predicated region
        $region237: #{tpu_custom_call.1} parent=127 // pred_check
          %p7548 = pneg %p665
        $region238: #{tpu_custom_call.1} parent=127 // pred_check_branch
          %7550 = sbr.rel (%p7548) target = $region240
        $region239: #{tpu_custom_call.1} parent=127 // pred_region
          %s7552 = ssub.s32 32, 32
          %7553 = vsyncadd [#allocation23], %s7552
          %s7555 = sshll.u32 [#allocation22], 4
          %s7556 = int_to_ptr.vmem [resolvable:$true] %s7555
          %7558 = dma.vmem_to_hbm [thread:$0]  %s7556, 32, %s28, [#allocation23]
        $region240: #{tpu_custom_call.1} parent=127 // pred_fallthru
          _
        // Predicated region
        $region241: #{tpu_custom_call.1} parent=127 // pred_check
          %p7559 = pneg %p644
        $region242: #{tpu_custom_call.1} parent=127 // pred_check_branch
          %7561 = sbr.rel (%p7559) target = $region244
        $region243: #{tpu_custom_call.1} parent=127 // pred_region
          %7562 = dma.done [#allocation15], 256
        $region244: #{tpu_custom_call.1} parent=127 // pred_fallthru
          _
        // Predicated region
        $region245: #{tpu_custom_call.1} parent=127 // pred_check
          %p7563 = pneg %p665
        $region246: #{tpu_custom_call.1} parent=127 // pred_check_branch
          %7565 = sbr.rel (%p7563) target = $region248
        $region247: #{tpu_custom_call.1} parent=127 // pred_region
          %7566 = dma.done [#allocation23], 32
        $region248: #{tpu_custom_call.1} parent=127 // pred_fallthru
          _
      $region128: #{tpu_custom_call.1} parent=5 // pred_fallthru
        _
      %p7567 = scmp.le.s32.totalorder 2, %s40
      // Predicated region
      $region249: #{tpu_custom_call.1} parent=5 // pred_check
        %p7568 = pneg %p7567
      $region250: #{tpu_custom_call.1} parent=5 // pred_check_branch
        %7570 = sbr.rel (%p7568) target = $region252
      $region251: #{tpu_custom_call.1} parent=5 // pred_region
        %s7571 = ssub.s32 %s40, 2
      $region252: #{tpu_custom_call.1} parent=5 // pred_fallthru
        _
    $region6: #{tpu_custom_call.1} parent=1 // loop_footer
      %s44 = sadd.s32 1, %s40
    $region7: #{tpu_custom_call.1} parent=1 // loop_footer_branch
      %39 = sbr.rel target = $region3
    $region8: #{tpu_custom_call.1} parent=1 // loop_exit
      _
    %7572 = vsyncpa [#allocation14], 1
    %s7573 = scalar_lea.sflag [#allocation14], 1
    %7574 = vsyncpa %s7573, 1
    %7575 = vsyncpa [#allocation17], 1
    %7576 = vsyncpa [#allocation20], 1
    %7577 = vsyncpa [#allocation15], 1
    %s7578 = scalar_lea.sflag [#allocation15], 1
    %7579 = vsyncpa %s7578, 1
    %7580 = vsyncpa [#allocation23], 1

</llo_original>
